<compile_context>
chip_gen: v6e
topology: v6e:2x2x1
jax: 0.10.0
libtpu: 0.0.40
codegen_flags: <defaults>
</compile_context>

<pallas_src>
import functools
import math

import jax
import jax.numpy as jnp
from jax.experimental import pallas as pl
from jax.experimental.pallas import tpu as pltpu


# ----------------------------------------------------------------------------------------------
# Small helpers
# ----------------------------------------------------------------------------------------------
def _pick_row_tile(M, target=512):
    """Largest row tile <= target that divides M and is a multiple of 8 (or M itself)."""
    if M <= target:
        return M
    for t in range(target, 7, -1):
        if t % 8 == 0 and M % t == 0:
            return t
    return M


def _bcast_spec(shape):
    nd = len(shape)
    return pl.BlockSpec(shape, lambda *_: (0,) * nd)


def _ln(y, g, b, eps):
    """LayerNorm over the last axis, f32 statistics."""
    mean = jnp.mean(y, axis=-1, keepdims=True)
    var = jnp.mean((y - mean) ** 2, axis=-1, keepdims=True)
    return (y - mean) * jax.lax.rsqrt(var + eps) * g + b


def _mha(q, k, v, nheads, scale):
    """Per-head softmax attention, heads sliced in-lane (no transposes).

    q: (Sq, D) f32, k/v: (Sk, D) f32.  Returns (Sq, D) f32.
    """
    D = q.shape[-1]
    Dh = D // nheads
    outs = []
    for h in range(nheads):
        qh = q[:, h * Dh:(h + 1) * Dh].astype(jnp.bfloat16)
        kh = k[:, h * Dh:(h + 1) * Dh].astype(jnp.bfloat16)
        vh = v[:, h * Dh:(h + 1) * Dh].astype(jnp.bfloat16)
        # contract the head dim directly; no materialized transpose of K.
        s = jax.lax.dot_general(qh, kh, (((1,), (1,)), ((), ())),
                                preferred_element_type=jnp.float32) * scale
        m = jnp.max(s, axis=-1, keepdims=True)
        p = jnp.exp(s - m)
        p = p * pl.reciprocal(jnp.sum(p, axis=-1, keepdims=True), approx=True)
        outs.append(jnp.dot(p.astype(jnp.bfloat16), vh, preferred_element_type=jnp.float32))
    return jnp.concatenate(outs, axis=-1)


# ----------------------------------------------------------------------------------------------
# Pallas kernels
# ----------------------------------------------------------------------------------------------
def _linear_kernel(x_ref, w_ref, b_ref, o_ref, *, activation):
    acc = jnp.dot(x_ref[...].astype(jnp.bfloat16), w_ref[...],
                  preferred_element_type=jnp.float32) + b_ref[...]
    if activation == "relu":
        acc = jnp.maximum(acc, 0.0)
    o_ref[...] = acc.astype(o_ref.dtype)


def _ffn_block_kernel(x_ref, w1_ref, b1_ref, w2_ref, b2_ref, g_ref, bln_ref, o_ref, *, eps):
    """LN(x + W2 relu(W1 x)) fused into one kernel."""
    x = x_ref[...].astype(jnp.float32)
    h = jnp.dot(x.astype(jnp.bfloat16), w1_ref[...], preferred_element_type=jnp.float32) + b1_ref[...]
    h = jnp.maximum(h, 0.0)
    y = jnp.dot(h.astype(jnp.bfloat16), w2_ref[...], preferred_element_type=jnp.float32) + b2_ref[...]
    o_ref[...] = _ln(x + y, g_ref[...], bln_ref[...], eps).astype(o_ref.dtype)


def _self_attn_block_kernel(x_ref, pos_ref, wqk_ref, bqk_ref, wv_ref, bv_ref,
                            wo_ref, bo_ref, g_ref, bln_ref, o_ref, *, nheads, eps):
    """LN(x + OutProj(MHA(q=k=x+pos, v=x))) with fused QK projection, one batch element per step."""
    x = x_ref[0].astype(jnp.float32)      # (S, D)
    pos = pos_ref[0].astype(jnp.float32)
    D = x.shape[-1]
    qk = jnp.dot((x + pos).astype(jnp.bfloat16), wqk_ref[...],
                 preferred_element_type=jnp.float32) + bqk_ref[...]          # (S, 2D)
    v = jnp.dot(x.astype(jnp.bfloat16), wv_ref[...],
                preferred_element_type=jnp.float32) + bv_ref[...]            # (S, D)
    attn = _mha(qk[:, :D], qk[:, D:], v, nheads, 1.0 / math.sqrt(D // nheads))
    o = jnp.dot(attn.astype(jnp.bfloat16), wo_ref[...],
                preferred_element_type=jnp.float32) + bo_ref[...]
    o_ref[0] = _ln(x + o, g_ref[...], bln_ref[...], eps).astype(o_ref.dtype)


def _cross_attn_block_kernel(tgt_ref, qpos_ref, mem_ref, mpos_ref,
                             wq_ref, bq_ref, wk_ref, bk_ref, wv_ref, bv_ref,
                             wo_ref, bo_ref, g_ref, bln_ref, o_ref, *, nheads, eps):
    """LN(tgt + OutProj(MHA(q=tgt+qpos, k=mem+mpos, v=mem)))."""
    tgt = tgt_ref[0].astype(jnp.float32)   # (Q, D)
    qpos = qpos_ref[0].astype(jnp.float32)
    mem = mem_ref[0].astype(jnp.float32)   # (S, D)
    mpos = mpos_ref[0].astype(jnp.float32)
    D = tgt.shape[-1]
    q = jnp.dot((tgt + qpos).astype(jnp.bfloat16), wq_ref[...],
                preferred_element_type=jnp.float32) + bq_ref[...]
    k = jnp.dot((mem + mpos).astype(jnp.bfloat16), wk_ref[...],
                preferred_element_type=jnp.float32) + bk_ref[...]
    v = jnp.dot(mem.astype(jnp.bfloat16), wv_ref[...],
                preferred_element_type=jnp.float32) + bv_ref[...]
    attn = _mha(q, k, v, nheads, 1.0 / math.sqrt(D // nheads))
    o = jnp.dot(attn.astype(jnp.bfloat16), wo_ref[...],
                preferred_element_type=jnp.float32) + bo_ref[...]
    o_ref[0] = _ln(tgt + o, g_ref[...], bln_ref[...], eps).astype(o_ref.dtype)


def _enc_head_kernel(x_ref, we_ref, be_ref, g_ref, bln_ref,
                     wb1_ref, bb1_ref, wb2_ref, bb2_ref, om_ref, h_ref, *, eps):
    """output_memory = LN(mem @ We + be); h = relu(relu(om W1) W2)  (bbox hidden layers)."""
    om = jnp.dot(x_ref[...].astype(jnp.bfloat16), we_ref[...],
                 preferred_element_type=jnp.float32) + be_ref[...]
    om = _ln(om, g_ref[...], bln_ref[...], eps)
    om_ref[...] = om.astype(om_ref.dtype)
    h = jnp.maximum(jnp.dot(om.astype(jnp.bfloat16), wb1_ref[...],
                            preferred_element_type=jnp.float32) + bb1_ref[...], 0.0)
    h = jnp.maximum(jnp.dot(h.astype(jnp.bfloat16), wb2_ref[...],
                            preferred_element_type=jnp.float32) + bb2_ref[...], 0.0)
    h_ref[...] = h.astype(h_ref.dtype)


def _dec_head_kernel(x_ref, g_ref, bln_ref, wb1_ref, bb1_ref, wb2_ref, bb2_ref,
                     hs_ref, h_ref, *, eps):
    """hs = LN(tgt) (decoder norm); h = relu(relu(hs W1) W2)  (shared bbox hidden layers)."""
    hs = _ln(x_ref[...].astype(jnp.float32), g_ref[...], bln_ref[...], eps)
    hs_ref[...] = hs.astype(hs_ref.dtype)
    h = jnp.maximum(jnp.dot(hs.astype(jnp.bfloat16), wb1_ref[...],
                            preferred_element_type=jnp.float32) + bb1_ref[...], 0.0)
    h = jnp.maximum(jnp.dot(h.astype(jnp.bfloat16), wb2_ref[...],
                            preferred_element_type=jnp.float32) + bb2_ref[...], 0.0)
    h_ref[...] = h.astype(h_ref.dtype)


# ----------------------------------------------------------------------------------------------
# Pallas wrappers
# ----------------------------------------------------------------------------------------------
def _row_call(kernel, x2d, consts, out_widths, n_out=1):
    """Row-tiled pallas_call: x2d (M, K) is tiled over rows; consts (weights/biases) broadcast."""
    M, K = x2d.shape
    tm = _pick_row_tile(M)
    grid = (M // tm,)
    in_specs = [pl.BlockSpec((tm, K), lambda i: (i, 0))]
    in_specs += [_bcast_spec(c.shape) for c in consts]
    if n_out == 1:
        out_shape = jax.ShapeDtypeStruct((M, out_widths[0]), jnp.float32)
        out_specs = pl.BlockSpec((tm, out_widths[0]), lambda i: (i, 0))
    else:
        out_shape = tuple(jax.ShapeDtypeStruct((M, w), jnp.float32) for w in out_widths)
        out_specs = tuple(pl.BlockSpec((tm, w), lambda i: (i, 0)) for w in out_widths)
    return pl.pallas_call(
        kernel, grid=grid, out_shape=out_shape, in_specs=in_specs, out_specs=out_specs,
        compiler_params=pltpu.CompilerParams(dimension_semantics=("parallel",)),
    )(x2d, *consts)


def linear(x, p, activation=None):
    shp = x.shape
    K = shp[-1]
    M = int(math.prod(shp[:-1]))
    N = p["w"].shape[1]
    out = _row_call(functools.partial(_linear_kernel, activation=activation),
                    x.reshape(M, K).astype(jnp.float32),
                    [p["w"], p["b"].reshape(1, N)], [N])
    return out.reshape(shp[:-1] + (N,))


def ffn_block(x, lin1, lin2, ln, eps=1e-5):
    B, S, D = x.shape
    F = lin1["w"].shape[1]
    out = _row_call(functools.partial(_ffn_block_kernel, eps=eps),
                    x.reshape(B * S, D),
                    [lin1["w"], lin1["b"].reshape(1, F),
                     lin2["w"], lin2["b"].reshape(1, D),
                     ln["g"].reshape(1, D), ln["b"].reshape(1, D)], [D])
    return out.reshape(B, S, D)


def enc_head(memory, enc_out, enc_ln, bb1, bb2, eps=1e-5):
    B, S, D = memory.shape
    om, h = _row_call(functools.partial(_enc_head_kernel, eps=eps),
                      memory.reshape(B * S, D),
                      [enc_out["w"], enc_out["b"].reshape(1, D),
                       enc_ln["g"].reshape(1, D), enc_ln["b"].reshape(1, D),
                       bb1["w"], bb1["b"].reshape(1, D),
                       bb2["w"], bb2["b"].reshape(1, D)], [D, D], n_out=2)
    return om.reshape(B, S, D), h.reshape(B, S, D)


def dec_head(tgt, dec_norm, bb1, bb2, eps=1e-5):
    B, Q, D = tgt.shape
    hs, h = _row_call(functools.partial(_dec_head_kernel, eps=eps),
                      tgt.reshape(B * Q, D),
                      [dec_norm["g"].reshape(1, D), dec_norm["b"].reshape(1, D),
                       bb1["w"], bb1["b"].reshape(1, D),
                       bb2["w"], bb2["b"].reshape(1, D)], [D, D], n_out=2)
    return hs.reshape(B, Q, D), h.reshape(B, Q, D)


def self_attn_block(p, ln, x, pos, nheads, eps=1e-5):
    B, S, D = x.shape
    consts = [p["wqk"], p["bqk"].reshape(1, 2 * D),
              p["wv"], p["bv"].reshape(1, D),
              p["wo"], p["bo"].reshape(1, D),
              ln["g"].reshape(1, D), ln["b"].reshape(1, D)]
    return pl.pallas_call(
        functools.partial(_self_attn_block_kernel, nheads=nheads, eps=eps),
        grid=(B,),
        out_shape=jax.ShapeDtypeStruct((B, S, D), jnp.float32),
        in_specs=[pl.BlockSpec((1, S, D), lambda b: (b, 0, 0)),
                  pl.BlockSpec((1, S, D), lambda b: (b, 0, 0))]
                 + [_bcast_spec(c.shape) for c in consts],
        out_specs=pl.BlockSpec((1, S, D), lambda b: (b, 0, 0)),
        compiler_params=pltpu.CompilerParams(dimension_semantics=("parallel",)),
    )(x, pos, *consts)


def cross_attn_block(p, ln, tgt, qpos, mem, mpos, nheads, eps=1e-5):
    B, Q, D = tgt.shape
    S = mem.shape[1]
    consts = [p["wq"], p["bq"].reshape(1, D), p["wk"], p["bk"].reshape(1, D),
              p["wv"], p["bv"].reshape(1, D), p["wo"], p["bo"].reshape(1, D),
              ln["g"].reshape(1, D), ln["b"].reshape(1, D)]
    return pl.pallas_call(
        functools.partial(_cross_attn_block_kernel, nheads=nheads, eps=eps),
        grid=(B,),
        out_shape=jax.ShapeDtypeStruct((B, Q, D), jnp.float32),
        in_specs=[pl.BlockSpec((1, Q, D), lambda b: (b, 0, 0)),
                  pl.BlockSpec((1, Q, D), lambda b: (b, 0, 0)),
                  pl.BlockSpec((1, S, D), lambda b: (b, 0, 0)),
                  pl.BlockSpec((1, S, D), lambda b: (b, 0, 0))]
                 + [_bcast_spec(c.shape) for c in consts],
        out_specs=pl.BlockSpec((1, Q, D), lambda b: (b, 0, 0)),
        compiler_params=pltpu.CompilerParams(dimension_semantics=("parallel",)),
    )(tgt, qpos, mem, mpos, *consts)


def dense_jnp(x, p):
    """Tiny lane-sparse heads (nc / 4-wide outputs, 4-d inputs) stay in plain XLA."""
    return x @ p["w"].astype(jnp.float32) + p["b"]


# ----------------------------------------------------------------------------------------------
# Non-kernel glue (positional embeddings, patchify, proposals)
# ----------------------------------------------------------------------------------------------
def patchify(x_nhwc, p):
    B, H, W, C = x_nhwc.shape
    x = x_nhwc.reshape(B, H // p, p, W // p, p, C)
    x = x.transpose(0, 1, 3, 2, 4, 5).reshape(B, (H // p) * (W // p), p * p * C)
    return x


def pos_embed_sine_hw(H, W, num_pos_feats, tH, tW):
    """PositionEmbeddingSineHW with normalize=True (eps=1e-6, scale=2*pi)."""
    eps = 1e-6
    scale = 2.0 * math.pi
    y = (jnp.arange(1, H + 1, dtype=jnp.float32) / (H + eps)) * scale
    x = (jnp.arange(1, W + 1, dtype=jnp.float32) / (W + eps)) * scale
    i = jnp.arange(num_pos_feats, dtype=jnp.float32)
    dim_tx = tW ** (2.0 * (i // 2) / num_pos_feats)
    dim_ty = tH ** (2.0 * (i // 2) / num_pos_feats)
    pos_x = x[:, None] / dim_tx
    pos_y = y[:, None] / dim_ty
    pos_x = jnp.stack([jnp.sin(pos_x[:, 0::2]), jnp.cos(pos_x[:, 1::2])], axis=2).reshape(W, num_pos_feats)
    pos_y = jnp.stack([jnp.sin(pos_y[:, 0::2]), jnp.cos(pos_y[:, 1::2])], axis=2).reshape(H, num_pos_feats)
    pos = jnp.concatenate(
        [jnp.broadcast_to(pos_y[:, None, :], (H, W, num_pos_feats)),
         jnp.broadcast_to(pos_x[None, :, :], (H, W, num_pos_feats))],
        axis=-1,
    )
    return pos.reshape(H * W, 2 * num_pos_feats)


def inverse_sigmoid(x, eps=1e-3):
    x = jnp.clip(x, 0.0, 1.0)
    x1 = jnp.clip(x, eps, None)
    x2 = jnp.clip(1.0 - x, eps, None)
    return jnp.log(x1 / x2)


def make_proposals(level_shapes, B):
    """gen_encoder_output_proposals (all positions valid): grid centres + per-level wh."""
    props = []
    for lvl, (H, W) in enumerate(level_shapes):
        ys = (jnp.arange(H, dtype=jnp.float32) + 0.5) / H
        xs = (jnp.arange(W, dtype=jnp.float32) + 0.5) / W
        gy, gx = jnp.meshgrid(ys, xs, indexing="ij")
        wh = jnp.full((H, W), 0.05 * (2.0 ** lvl), dtype=jnp.float32)
        props.append(jnp.stack([gx, gy, wh, wh], axis=-1).reshape(H * W, 4))
    props = inverse_sigmoid(jnp.concatenate(props, axis=0))
    return jnp.broadcast_to(props[None], (B,) + props.shape)


# ----------------------------------------------------------------------------------------------
# Parameter init (deterministic, synthetic).  Pallas-consumed weights stored bf16, biases/LN f32.
# ----------------------------------------------------------------------------------------------
class KeyGen:
    def __init__(self, key):
        self.key = key

    def __call__(self):
        self.key, sub = jax.random.split(self.key)
        return sub


def init_linear(kg, din, dout, scale=0.02, wdtype=jnp.bfloat16):
    return {"w": (scale * jax.random.normal(kg(), (din, dout))).astype(wdtype),
            "b": jnp.zeros((dout,), jnp.float32)}


def init_ln(d):
    return {"g": jnp.ones((d,), jnp.float32), "b": jnp.zeros((d,), jnp.float32)}


def init_self_mha(kg, d, scale=0.02):
    wq = scale * jax.random.normal(kg(), (d, d))
    wk = scale * jax.random.normal(kg(), (d, d))
    return {
        "wqk": jnp.concatenate([wq, wk], axis=1).astype(jnp.bfloat16),   # fused Q|K projection
        "bqk": jnp.zeros((2 * d,), jnp.float32),
        "wv": (scale * jax.random.normal(kg(), (d, d))).astype(jnp.bfloat16),
        "bv": jnp.zeros((d,), jnp.float32),
        "wo": (scale * jax.random.normal(kg(), (d, d))).astype(jnp.bfloat16),
        "bo": jnp.zeros((d,), jnp.float32),
    }


def init_cross_mha(kg, d, scale=0.02):
    p = {}
    for n in ("q", "k", "v", "o"):
        p["w" + n] = (scale * jax.random.normal(kg(), (d, d))).astype(jnp.bfloat16)
        p["b" + n] = jnp.zeros((d,), jnp.float32)
    return p


def init_params(cfg, seed=0):
    kg = KeyGen(jax.random.PRNGKey(seed))
    D, F, nq, nc = cfg["hidden_dim"], cfg["dim_feedforward"], cfg["num_queries"], cfg["num_classes"]
    params = {
        # TODO(synk): ResNet-50 backbone (frozen BN) replaced by a 2-level patchify-conv stem.
        "patch0": init_linear(kg, 3 * 8 * 8, cfg["backbone_c0"]),
        "patch1": init_linear(kg, cfg["backbone_c0"] * 2 * 2, cfg["backbone_c1"]),
        # TODO(synk): GroupNorm(32, hidden_dim) after each 1x1 input projection is omitted.
        "input_proj": [init_linear(kg, cfg["backbone_c0"], D), init_linear(kg, cfg["backbone_c1"], D)],
        "level_embed": (0.02 * jax.random.normal(kg(), (cfg["num_feature_levels"], D))).astype(jnp.float32),
        "enc_layers": [
            {"attn": init_self_mha(kg, D), "lin1": init_linear(kg, D, F), "lin2": init_linear(kg, F, D),
             "ln1": init_ln(D), "ln2": init_ln(D)}
            for _ in range(cfg["enc_layers"])
        ],
        "enc_out": init_linear(kg, D, D),
        "enc_out_ln": init_ln(D),
        "enc_class": init_linear(kg, D, nc, wdtype=jnp.float32),          # tiny head -> XLA
        "enc_bbox_h1": init_linear(kg, D, D),
        "enc_bbox_h2": init_linear(kg, D, D),
        "enc_bbox_out": init_linear(kg, D, 4, wdtype=jnp.float32),        # tiny head -> XLA
        "tgt_embed": (0.02 * jax.random.normal(kg(), (nq, D))).astype(jnp.float32),
        # TODO(synk): ref_point_head really consumes a sine embedding of the 4-d reference box;
        #             here it maps the raw sigmoid box (4) -> D -> D (tiny, kept in XLA).
        "ref_point_head": [init_linear(kg, 4, D, wdtype=jnp.float32),
                           init_linear(kg, D, D, wdtype=jnp.float32)],
        "dec_layers": [
            {"sa": init_self_mha(kg, D), "ca": init_cross_mha(kg, D),
             "lin1": init_linear(kg, D, F), "lin2": init_linear(kg, F, D),
             "ln1": init_ln(D), "ln2": init_ln(D), "ln3": init_ln(D)}
            for _ in range(cfg["dec_layers"])
        ],
        "dec_norm": init_ln(D),
        "class_embed": init_linear(kg, D, nc, wdtype=jnp.float32),        # shared, tiny -> XLA
        "bbox_h1": init_linear(kg, D, D),                                 # shared bbox MLP hidden
        "bbox_h2": init_linear(kg, D, D),
        "bbox_out": init_linear(kg, D, 4, wdtype=jnp.float32),            # tiny head -> XLA
    }
    return params


# ----------------------------------------------------------------------------------------------
# DINO forward
# ----------------------------------------------------------------------------------------------
def dino_forward(params, x_nchw, cfg):
    B = x_nchw.shape[0]
    D, nheads, nq = cfg["hidden_dim"], cfg["nheads"], cfg["num_queries"]

    # ---- backbone (2 feature levels) ----
    x = jnp.transpose(x_nchw, (0, 2, 3, 1)).astype(jnp.float32)  # NCHW -> NHWC
    H0, W0 = x.shape[1] // 8, x.shape[2] // 8
    f0 = linear(patchify(x, 8), params["patch0"], activation="relu")
    f0_map = f0.reshape(B, H0, W0, cfg["backbone_c0"])
    H1, W1 = H0 // 2, W0 // 2
    f1 = linear(patchify(f0_map, 2), params["patch1"], activation="relu")
    feats = [(f0, H0, W0), (f1, H1, W1)]

    # ---- input projection + sine HW positional embedding + level embed ----
    srcs, poss = [], []
    for lvl, (f, H, W) in enumerate(feats):
        s = linear(f, params["input_proj"][lvl])
        pe = pos_embed_sine_hw(H, W, D // 2, cfg["pe_temperatureH"], cfg["pe_temperatureW"])
        pe = jnp.broadcast_to(pe[None], (B, H * W, D)) + params["level_embed"][lvl][None, None, :]
        srcs.append(s)
        poss.append(pe)
    memory = jnp.concatenate(srcs, axis=1)   # (B, S, D)
    pos = jnp.concatenate(poss, axis=1)      # (B, S, D)

    # ---- transformer encoder ----
    # TODO(synk): multi-scale deformable self-attention replaced by dense global self-attention.
    for p in params["enc_layers"]:
        memory = self_attn_block(p["attn"], p["ln1"], memory, pos, nheads)
        memory = ffn_block(memory, p["lin1"], p["lin2"], p["ln2"])

    # ---- two-stage "standard": encoder proposals -> top-k queries ----
    output_memory, enc_h = enc_head(memory, params["enc_out"], params["enc_out_ln"],
                                    params["enc_bbox_h1"], params["enc_bbox_h2"])
    proposals_unsig = make_proposals([(H0, W0), (H1, W1)], B)
    enc_logits = dense_jnp(output_memory, params["enc_class"])
    enc_coord_unsig = dense_jnp(enc_h, params["enc_bbox_out"]) + proposals_unsig

    scores = jnp.max(enc_logits, axis=-1)                      # (B, S)
    _, topk_idx = jax.lax.top_k(scores, nq)                    # (B, nq)
    idx4 = jnp.broadcast_to(topk_idx[..., None], (B, nq, 4))
    idxc = jnp.broadcast_to(topk_idx[..., None], (B, nq, cfg["num_classes"]))
    ref_unsig = jnp.take_along_axis(enc_coord_unsig, idx4, axis=1)
    interm_logits = jnp.take_along_axis(enc_logits, idxc, axis=1)
    interm_boxes = jax.nn.sigmoid(ref_unsig)
    ref = jax.lax.stop_gradient(interm_boxes)

    # embed_init_tgt=True -> learned target embedding
    tgt = jnp.broadcast_to(params["tgt_embed"][None], (B, nq, D))

    # ---- transformer decoder + shared prediction heads (dec_pred_*_embed_share=True) ----
    rp1, rp2 = params["ref_point_head"]
    logits_list, boxes_list = [], []
    for p in params["dec_layers"]:
        query_pos = jnp.maximum(dense_jnp(ref, rp1), 0.0)
        query_pos = dense_jnp(query_pos, rp2)
        # module_seq = ['sa', 'ca', 'ffn'] (post-norm, eval mode so dropout is identity)
        tgt = self_attn_block(p["sa"], p["ln1"], tgt, query_pos, nheads)
        # TODO(synk): deformable cross-attention (sampling offsets + bilinear interp) replaced by
        #             dense cross-attention against the flattened multi-level memory.
        tgt = cross_attn_block(p["ca"], p["ln2"], tgt, query_pos, memory, pos, nheads)
        tgt = ffn_block(tgt, p["lin1"], p["lin2"], p["ln3"])
        hs, h = dec_head(tgt, params["dec_norm"], params["bbox_h1"], params["bbox_h2"])
        delta = dense_jnp(h, params["bbox_out"])
        boxes = jax.nn.sigmoid(delta + inverse_sigmoid(ref))
        logits = dense_jnp(hs, params["class_embed"])
        logits_list.append(logits)
        boxes_list.append(boxes)
        ref = jax.lax.stop_gradient(boxes)  # use_detached_boxes_dec_out semantics for next layer

    out = {"pred_logits": logits_list[-1], "pred_boxes": boxes_list[-1]}
    # aux_loss=True -> per-intermediate-layer outputs
    out["aux_outputs"] = [{"pred_logits": l, "pred_boxes": b}
                          for l, b in zip(logits_list[:-1], boxes_list[:-1])]
    out["interm_outputs"] = {"pred_logits": interm_logits, "pred_boxes": interm_boxes}
    # TODO(synk): contrastive de-noising (dn_number>0) branch only runs with training targets; with
    #             targets=None (eval) it is a no-op, so it is not implemented here.
    return out


# ----------------------------------------------------------------------------------------------
if __name__ == "__main__":
    cfg = dict(
        num_classes=4,
        hidden_dim=64,          # scaled-down from 256
        nheads=4,               # scaled-down from 8
        enc_layers=2,           # scaled-down from 6
        dec_layers=2,           # scaled-down from 6
        dim_feedforward=128,    # scaled-down from 1024
        num_queries=16,         # scaled-down from 300
        num_feature_levels=2,
        pe_temperatureH=20,
        pe_temperatureW=20,
        backbone_c0=32,
        backbone_c1=64,
    )

    key = jax.random.PRNGKey(0)
    x = jax.random.normal(key, (2, 3, 32, 32), dtype=jnp.float32)  # NCHW like PyTorch
    params = init_params(cfg, seed=0)

    fwd = jax.jit(functools.partial(dino_forward, cfg=cfg))
    out = fwd(params, x)
    jax.block_until_ready(out["pred_logits"])
    jax.block_until_ready(out["pred_boxes"])

    assert out["pred_logits"].shape == (2, cfg["num_queries"], cfg["num_classes"])
    assert out["pred_boxes"].shape == (2, cfg["num_queries"], 4)
    assert len(out["aux_outputs"]) == cfg["dec_layers"] - 1
    assert out["interm_outputs"]["pred_boxes"].shape == (2, cfg["num_queries"], 4)
    assert bool(jnp.all(jnp.isfinite(out["pred_logits"])))
    assert bool(jnp.all((out["pred_boxes"] >= 0.0) & (out["pred_boxes"] <= 1.0)))

    print("KERNEL_OK")
</pallas_src>

<mosaic_0001>
module attributes {stable_mosaic.version = 11 : i64} {
  func.func @_linear_kernel(%arg0: i32, %arg1: memref<32x192xf32, #tpu.memory_space<vmem>>, %arg2: memref<192x32xbf16, #tpu.memory_space<vmem>>, %arg3: memref<1x32xf32, #tpu.memory_space<vmem>>, %arg4: memref<32x32xf32, #tpu.memory_space<vmem>>) attributes {dimension_semantics = [#tpu.dimension_semantics<parallel>], iteration_bounds = array<i64: 1>, scalar_prefetch = 0 : i64, scratch_operands = 0 : i64, tpu.core_type = #tpu.core_type<tc>, window_params = [{transform_indices = @transform_0, window_bounds = array<i64: 32, 192>}, {pipeline_mode = #tpu.pipeline_mode<synchronous>, transform_indices = @transform_1, window_bounds = array<i64: 192, 32>}, {pipeline_mode = #tpu.pipeline_mode<synchronous>, transform_indices = @transform_2, window_bounds = array<i64: 1, 32>}, {transform_indices = @transform_3, window_bounds = array<i64: 32, 32>}]} {
    %c0 = arith.constant 0 : index
    %c0_0 = arith.constant 0 : index
    %0 = vector.load %arg1[%c0, %c0_0] : memref<32x192xf32, #tpu.memory_space<vmem>>, vector<32x192xf32>
    %1 = arith.truncf %0 : vector<32x192xf32> to vector<32x192xbf16>
    %c0_1 = arith.constant 0 : index
    %c0_2 = arith.constant 0 : index
    %2 = vector.load %arg2[%c0_1, %c0_2] : memref<192x32xbf16, #tpu.memory_space<vmem>>, vector<192x32xbf16>
    %cst = arith.constant dense<0.000000e+00> : vector<32x32xf32>
    %3 = tpu.matmul %1, %2, %cst {dimension_numbers = #tpu.dot_dimension_numbers<[1], [0], [0], [1], [0, 0, 1, 1], [], []>} : vector<32x192xbf16>, vector<192x32xbf16>, vector<32x32xf32> -> vector<32x32xf32>
    %c0_3 = arith.constant 0 : index
    %c0_4 = arith.constant 0 : index
    %4 = vector.load %arg3[%c0_3, %c0_4] : memref<1x32xf32, #tpu.memory_space<vmem>>, vector<1x32xf32>
    %5 = vector.broadcast %4 : vector<1x32xf32> to vector<32x32xf32>
    %6 = arith.addf %3, %5 : vector<32x32xf32>
    %cst_5 = arith.constant 0.000000e+00 : f32
    %7 = vector.broadcast %cst_5 : f32 to vector<32x32xf32>
    %8 = arith.maximumf %6, %7 : vector<32x32xf32>
    %c0_6 = arith.constant 0 : index
    %c0_7 = arith.constant 0 : index
    %9 = vector.load %arg4[%c0_6, %c0_7] : memref<32x32xf32, #tpu.memory_space<vmem>>, vector<32x32xf32>
    tpu.vector_store %arg4[%c0_6, %c0_7], %8 {strides = array<i32>} : memref<32x32xf32, #tpu.memory_space<vmem>>, vector<32x32xf32>,
    return
  }
  func.func @transform_0(%arg0: i32) -> (i32, i32) {
    %c0_i32 = arith.constant 0 : i32
    %c0_i32_0 = arith.constant 0 : i32
    return %arg0, %c0_i32 : i32, i32
  }
  func.func @transform_1(%arg0: i32) -> (i32, i32) {
    %c0_i32 = arith.constant 0 : i32
    %c0_i32_0 = arith.constant 0 : i32
    %c0_i32_1 = arith.constant 0 : i32
    return %c0_i32, %c0_i32_0 : i32, i32
  }
  func.func @transform_2(%arg0: i32) -> (i32, i32) {
    %c0_i32 = arith.constant 0 : i32
    %c0_i32_0 = arith.constant 0 : i32
    %c0_i32_1 = arith.constant 0 : i32
    return %c0_i32, %c0_i32_0 : i32, i32
  }
  func.func @transform_3(%arg0: i32) -> (i32, i32) {
    %c0_i32 = arith.constant 0 : i32
    %c0_i32_0 = arith.constant 0 : i32
    return %arg0, %c0_i32 : i32, i32
  }
}

module attributes {stable_mosaic.version = 11 : i64} {
  func.func @_linear_kernel(%arg0: i32, %arg1: memref<8x128xf32, #tpu.memory_space<vmem>>, %arg2: memref<128x64xbf16, #tpu.memory_space<vmem>>, %arg3: memref<1x64xf32, #tpu.memory_space<vmem>>, %arg4: memref<8x64xf32, #tpu.memory_space<vmem>>) attributes {dimension_semantics = [#tpu.dimension_semantics<parallel>], iteration_bounds = array<i64: 1>, scalar_prefetch = 0 : i64, scratch_operands = 0 : i64, tpu.core_type = #tpu.core_type<tc>, window_params = [{transform_indices = @transform_0, window_bounds = array<i64: 8, 128>}, {pipeline_mode = #tpu.pipeline_mode<synchronous>, transform_indices = @transform_1, window_bounds = array<i64: 128, 64>}, {pipeline_mode = #tpu.pipeline_mode<synchronous>, transform_indices = @transform_2, window_bounds = array<i64: 1, 64>}, {transform_indices = @transform_3, window_bounds = array<i64: 8, 64>}]} {
    %c0 = arith.constant 0 : index
    %c0_0 = arith.constant 0 : index
    %0 = vector.load %arg1[%c0, %c0_0] : memref<8x128xf32, #tpu.memory_space<vmem>>, vector<8x128xf32>
    %1 = arith.truncf %0 : vector<8x128xf32> to vector<8x128xbf16>
    %c0_1 = arith.constant 0 : index
    %c0_2 = arith.constant 0 : index
    %2 = vector.load %arg2[%c0_1, %c0_2] : memref<128x64xbf16, #tpu.memory_space<vmem>>, vector<128x64xbf16>
    %cst = arith.constant dense<0.000000e+00> : vector<8x64xf32>
    %3 = tpu.matmul %1, %2, %cst {dimension_numbers = #tpu.dot_dimension_numbers<[1], [0], [0], [1], [0, 0, 1, 1], [], []>} : vector<8x128xbf16>, vector<128x64xbf16>, vector<8x64xf32> -> vector<8x64xf32>
    %c0_3 = arith.constant 0 : index
    %c0_4 = arith.constant 0 : index
    %4 = vector.load %arg3[%c0_3, %c0_4] : memref<1x64xf32, #tpu.memory_space<vmem>>, vector<1x64xf32>
    %5 = vector.broadcast %4 : vector<1x64xf32> to vector<8x64xf32>
    %6 = arith.addf %3, %5 : vector<8x64xf32>
    %cst_5 = arith.constant 0.000000e+00 : f32
    %7 = vector.broadcast %cst_5 : f32 to vector<8x64xf32>
    %8 = arith.maximumf %6, %7 : vector<8x64xf32>
    %c0_6 = arith.constant 0 : index
    %c0_7 = arith.constant 0 : index
    %9 = vector.load %arg4[%c0_6, %c0_7] : memref<8x64xf32, #tpu.memory_space<vmem>>, vector<8x64xf32>
    tpu.vector_store %arg4[%c0_6, %c0_7], %8 {strides = array<i32>} : memref<8x64xf32, #tpu.memory_space<vmem>>, vector<8x64xf32>,
    return
  }
  func.func @transform_0(%arg0: i32) -> (i32, i32) {
    %c0_i32 = arith.constant 0 : i32
    %c0_i32_0 = arith.constant 0 : i32
    return %arg0, %c0_i32 : i32, i32
  }
  func.func @transform_1(%arg0: i32) -> (i32, i32) {
    %c0_i32 = arith.constant 0 : i32
    %c0_i32_0 = arith.constant 0 : i32
    %c0_i32_1 = arith.constant 0 : i32
    return %c0_i32, %c0_i32_0 : i32, i32
  }
  func.func @transform_2(%arg0: i32) -> (i32, i32) {
    %c0_i32 = arith.constant 0 : i32
    %c0_i32_0 = arith.constant 0 : i32
    %c0_i32_1 = arith.constant 0 : i32
    return %c0_i32, %c0_i32_0 : i32, i32
  }
  func.func @transform_3(%arg0: i32) -> (i32, i32) {
    %c0_i32 = arith.constant 0 : i32
    %c0_i32_0 = arith.constant 0 : i32
    return %arg0, %c0_i32 : i32, i32
  }
}

module attributes {stable_mosaic.version = 11 : i64} {
  func.func @_linear_kernel(%arg0: i32, %arg1: memref<8x64xf32, #tpu.memory_space<vmem>>, %arg2: memref<64x64xbf16, #tpu.memory_space<vmem>>, %arg3: memref<1x64xf32, #tpu.memory_space<vmem>>, %arg4: memref<8x64xf32, #tpu.memory_space<vmem>>) attributes {dimension_semantics = [#tpu.dimension_semantics<parallel>], iteration_bounds = array<i64: 1>, scalar_prefetch = 0 : i64, scratch_operands = 0 : i64, tpu.core_type = #tpu.core_type<tc>, window_params = [{transform_indices = @transform_0, window_bounds = array<i64: 8, 64>}, {pipeline_mode = #tpu.pipeline_mode<synchronous>, transform_indices = @transform_1, window_bounds = array<i64: 64, 64>}, {pipeline_mode = #tpu.pipeline_mode<synchronous>, transform_indices = @transform_2, window_bounds = array<i64: 1, 64>}, {transform_indices = @transform_3, window_bounds = array<i64: 8, 64>}]} {
    %c0 = arith.constant 0 : index
    %c0_0 = arith.constant 0 : index
    %0 = vector.load %arg1[%c0, %c0_0] : memref<8x64xf32, #tpu.memory_space<vmem>>, vector<8x64xf32>
    %1 = arith.truncf %0 : vector<8x64xf32> to vector<8x64xbf16>
    %c0_1 = arith.constant 0 : index
    %c0_2 = arith.constant 0 : index
    %2 = vector.load %arg2[%c0_1, %c0_2] : memref<64x64xbf16, #tpu.memory_space<vmem>>, vector<64x64xbf16>
    %cst = arith.constant dense<0.000000e+00> : vector<8x64xf32>
    %3 = tpu.matmul %1, %2, %cst {dimension_numbers = #tpu.dot_dimension_numbers<[1], [0], [0], [1], [0, 0, 1, 1], [], []>} : vector<8x64xbf16>, vector<64x64xbf16>, vector<8x64xf32> -> vector<8x64xf32>
    %c0_3 = arith.constant 0 : index
    %c0_4 = arith.constant 0 : index
    %4 = vector.load %arg3[%c0_3, %c0_4] : memref<1x64xf32, #tpu.memory_space<vmem>>, vector<1x64xf32>
    %5 = vector.broadcast %4 : vector<1x64xf32> to vector<8x64xf32>
    %6 = arith.addf %3, %5 : vector<8x64xf32>
    %c0_5 = arith.constant 0 : index
    %c0_6 = arith.constant 0 : index
    %7 = vector.load %arg4[%c0_5, %c0_6] : memref<8x64xf32, #tpu.memory_space<vmem>>, vector<8x64xf32>
    tpu.vector_store %arg4[%c0_5, %c0_6], %6 {strides = array<i32>} : memref<8x64xf32, #tpu.memory_space<vmem>>, vector<8x64xf32>,
    return
  }
  func.func @transform_0(%arg0: i32) -> (i32, i32) {
    %c0_i32 = arith.constant 0 : i32
    %c0_i32_0 = arith.constant 0 : i32
    return %arg0, %c0_i32 : i32, i32
  }
  func.func @transform_1(%arg0: i32) -> (i32, i32) {
    %c0_i32 = arith.constant 0 : i32
    %c0_i32_0 = arith.constant 0 : i32
    %c0_i32_1 = arith.constant 0 : i32
    return %c0_i32, %c0_i32_0 : i32, i32
  }
  func.func @transform_2(%arg0: i32) -> (i32, i32) {
    %c0_i32 = arith.constant 0 : i32
    %c0_i32_0 = arith.constant 0 : i32
    %c0_i32_1 = arith.constant 0 : i32
    return %c0_i32, %c0_i32_0 : i32, i32
  }
  func.func @transform_3(%arg0: i32) -> (i32, i32) {
    %c0_i32 = arith.constant 0 : i32
    %c0_i32_0 = arith.constant 0 : i32
    return %arg0, %c0_i32 : i32, i32
  }
}

module attributes {stable_mosaic.version = 11 : i64} {
  func.func @_linear_kernel(%arg0: i32, %arg1: memref<32x32xf32, #tpu.memory_space<vmem>>, %arg2: memref<32x64xbf16, #tpu.memory_space<vmem>>, %arg3: memref<1x64xf32, #tpu.memory_space<vmem>>, %arg4: memref<32x64xf32, #tpu.memory_space<vmem>>) attributes {dimension_semantics = [#tpu.dimension_semantics<parallel>], iteration_bounds = array<i64: 1>, scalar_prefetch = 0 : i64, scratch_operands = 0 : i64, tpu.core_type = #tpu.core_type<tc>, window_params = [{transform_indices = @transform_0, window_bounds = array<i64: 32, 32>}, {pipeline_mode = #tpu.pipeline_mode<synchronous>, transform_indices = @transform_1, window_bounds = array<i64: 32, 64>}, {pipeline_mode = #tpu.pipeline_mode<synchronous>, transform_indices = @transform_2, window_bounds = array<i64: 1, 64>}, {transform_indices = @transform_3, window_bounds = array<i64: 32, 64>}]} {
    %c0 = arith.constant 0 : index
    %c0_0 = arith.constant 0 : index
    %0 = vector.load %arg1[%c0, %c0_0] : memref<32x32xf32, #tpu.memory_space<vmem>>, vector<32x32xf32>
    %1 = arith.truncf %0 : vector<32x32xf32> to vector<32x32xbf16>
    %c0_1 = arith.constant 0 : index
    %c0_2 = arith.constant 0 : index
    %2 = vector.load %arg2[%c0_1, %c0_2] : memref<32x64xbf16, #tpu.memory_space<vmem>>, vector<32x64xbf16>
    %cst = arith.constant dense<0.000000e+00> : vector<32x64xf32>
    %3 = tpu.matmul %1, %2, %cst {dimension_numbers = #tpu.dot_dimension_numbers<[1], [0], [0], [1], [0, 0, 1, 1], [], []>} : vector<32x32xbf16>, vector<32x64xbf16>, vector<32x64xf32> -> vector<32x64xf32>
    %c0_3 = arith.constant 0 : index
    %c0_4 = arith.constant 0 : index
    %4 = vector.load %arg3[%c0_3, %c0_4] : memref<1x64xf32, #tpu.memory_space<vmem>>, vector<1x64xf32>
    %5 = vector.broadcast %4 : vector<1x64xf32> to vector<32x64xf32>
    %6 = arith.addf %3, %5 : vector<32x64xf32>
    %c0_5 = arith.constant 0 : index
    %c0_6 = arith.constant 0 : index
    %7 = vector.load %arg4[%c0_5, %c0_6] : memref<32x64xf32, #tpu.memory_space<vmem>>, vector<32x64xf32>
    tpu.vector_store %arg4[%c0_5, %c0_6], %6 {strides = array<i32>} : memref<32x64xf32, #tpu.memory_space<vmem>>, vector<32x64xf32>,
    return
  }
  func.func @transform_0(%arg0: i32) -> (i32, i32) {
    %c0_i32 = arith.constant 0 : i32
    %c0_i32_0 = arith.constant 0 : i32
    return %arg0, %c0_i32 : i32, i32
  }
  func.func @transform_1(%arg0: i32) -> (i32, i32) {
    %c0_i32 = arith.constant 0 : i32
    %c0_i32_0 = arith.constant 0 : i32
    %c0_i32_1 = arith.constant 0 : i32
    return %c0_i32, %c0_i32_0 : i32, i32
  }
  func.func @transform_2(%arg0: i32) -> (i32, i32) {
    %c0_i32 = arith.constant 0 : i32
    %c0_i32_0 = arith.constant 0 : i32
    %c0_i32_1 = arith.constant 0 : i32
    return %c0_i32, %c0_i32_0 : i32, i32
  }
  func.func @transform_3(%arg0: i32) -> (i32, i32) {
    %c0_i32 = arith.constant 0 : i32
    %c0_i32_0 = arith.constant 0 : i32
    return %arg0, %c0_i32 : i32, i32
  }
}

module attributes {stable_mosaic.version = 11 : i64} {
  func.func @_ffn_block_kernel(%arg0: i32, %arg1: memref<40x64xf32, #tpu.memory_space<vmem>>, %arg2: memref<64x128xbf16, #tpu.memory_space<vmem>>, %arg3: memref<1x128xf32, #tpu.memory_space<vmem>>, %arg4: memref<128x64xbf16, #tpu.memory_space<vmem>>, %arg5: memref<1x64xf32, #tpu.memory_space<vmem>>, %arg6: memref<1x64xf32, #tpu.memory_space<vmem>>, %arg7: memref<1x64xf32, #tpu.memory_space<vmem>>, %arg8: memref<40x64xf32, #tpu.memory_space<vmem>>) attributes {dimension_semantics = [#tpu.dimension_semantics<parallel>], iteration_bounds = array<i64: 1>, scalar_prefetch = 0 : i64, scratch_operands = 0 : i64, tpu.core_type = #tpu.core_type<tc>, window_params = [{transform_indices = @transform_0, window_bounds = array<i64: 40, 64>}, {pipeline_mode = #tpu.pipeline_mode<synchronous>, transform_indices = @transform_1, window_bounds = array<i64: 64, 128>}, {pipeline_mode = #tpu.pipeline_mode<synchronous>, transform_indices = @transform_2, window_bounds = array<i64: 1, 128>}, {pipeline_mode = #tpu.pipeline_mode<synchronous>, transform_indices = @transform_3, window_bounds = array<i64: 128, 64>}, {pipeline_mode = #tpu.pipeline_mode<synchronous>, transform_indices = @transform_4, window_bounds = array<i64: 1, 64>}, {pipeline_mode = #tpu.pipeline_mode<synchronous>, transform_indices = @transform_5, window_bounds = array<i64: 1, 64>}, {pipeline_mode = #tpu.pipeline_mode<synchronous>, transform_indices = @transform_6, window_bounds = array<i64: 1, 64>}, {transform_indices = @transform_7, window_bounds = array<i64: 40, 64>}]} {
    %c0 = arith.constant 0 : index
    %c0_0 = arith.constant 0 : index
    %0 = vector.load %arg1[%c0, %c0_0] : memref<40x64xf32, #tpu.memory_space<vmem>>, vector<40x64xf32>
    %1 = arith.truncf %0 : vector<40x64xf32> to vector<40x64xbf16>
    %c0_1 = arith.constant 0 : index
    %c0_2 = arith.constant 0 : index
    %2 = vector.load %arg2[%c0_1, %c0_2] : memref<64x128xbf16, #tpu.memory_space<vmem>>, vector<64x128xbf16>
    %cst = arith.constant dense<0.000000e+00> : vector<40x128xf32>
    %3 = tpu.matmul %1, %2, %cst {dimension_numbers = #tpu.dot_dimension_numbers<[1], [0], [0], [1], [0, 0, 1, 1], [], []>} : vector<40x64xbf16>, vector<64x128xbf16>, vector<40x128xf32> -> vector<40x128xf32>
    %c0_3 = arith.constant 0 : index
    %c0_4 = arith.constant 0 : index
    %4 = vector.load %arg3[%c0_3, %c0_4] : memref<1x128xf32, #tpu.memory_space<vmem>>, vector<1x128xf32>
    %5 = vector.broadcast %4 : vector<1x128xf32> to vector<40x128xf32>
    %6 = arith.addf %3, %5 : vector<40x128xf32>
    %cst_5 = arith.constant 0.000000e+00 : f32
    %7 = vector.broadcast %cst_5 : f32 to vector<40x128xf32>
    %8 = arith.maximumf %6, %7 : vector<40x128xf32>
    %9 = arith.truncf %8 : vector<40x128xf32> to vector<40x128xbf16>
    %c0_6 = arith.constant 0 : index
    %c0_7 = arith.constant 0 : index
    %10 = vector.load %arg4[%c0_6, %c0_7] : memref<128x64xbf16, #tpu.memory_space<vmem>>, vector<128x64xbf16>
    %cst_8 = arith.constant dense<0.000000e+00> : vector<40x64xf32>
    %11 = tpu.matmul %9, %10, %cst_8 {dimension_numbers = #tpu.dot_dimension_numbers<[1], [0], [0], [1], [0, 0, 1, 1], [], []>} : vector<40x128xbf16>, vector<128x64xbf16>, vector<40x64xf32> -> vector<40x64xf32>
    %c0_9 = arith.constant 0 : index
    %c0_10 = arith.constant 0 : index
    %12 = vector.load %arg5[%c0_9, %c0_10] : memref<1x64xf32, #tpu.memory_space<vmem>>, vector<1x64xf32>
    %13 = vector.broadcast %12 : vector<1x64xf32> to vector<40x64xf32>
    %14 = arith.addf %11, %13 : vector<40x64xf32>
    %15 = arith.addf %0, %14 : vector<40x64xf32>
    %c0_11 = arith.constant 0 : index
    %c0_12 = arith.constant 0 : index
    %16 = vector.load %arg6[%c0_11, %c0_12] : memref<1x64xf32, #tpu.memory_space<vmem>>, vector<1x64xf32>
    %c0_13 = arith.constant 0 : index
    %c0_14 = arith.constant 0 : index
    %17 = vector.load %arg7[%c0_13, %c0_14] : memref<1x64xf32, #tpu.memory_space<vmem>>, vector<1x64xf32>
    %cst_15 = arith.constant dense<0.000000e+00> : vector<40xf32>
    %18 = vector.multi_reduction <add>, %15, %cst_15 [1] : vector<40x64xf32> to vector<40xf32>
    %19 = vector.shape_cast %18 : vector<40xf32> to vector<40x1xf32>
    %cst_16 = arith.constant 6.400000e+01 : f32
    %20 = vector.broadcast %cst_16 : f32 to vector<40x1xf32>
    %21 = arith.divf %19, %20 : vector<40x1xf32>
    %22 = vector.broadcast %21 : vector<40x1xf32> to vector<40x64xf32>
    %23 = arith.subf %15, %22 : vector<40x64xf32>
    %24 = arith.mulf %23, %23 : vector<40x64xf32>
    %cst_17 = arith.constant dense<0.000000e+00> : vector<40xf32>
    %25 = vector.multi_reduction <add>, %24, %cst_17 [1] : vector<40x64xf32> to vector<40xf32>
    %26 = vector.shape_cast %25 : vector<40xf32> to vector<40x1xf32>
    %cst_18 = arith.constant 6.400000e+01 : f32
    %27 = vector.broadcast %cst_18 : f32 to vector<40x1xf32>
    %28 = arith.divf %26, %27 : vector<40x1xf32>
    %29 = vector.broadcast %21 : vector<40x1xf32> to vector<40x64xf32>
    %30 = arith.subf %15, %29 : vector<40x64xf32>
    %cst_19 = arith.constant 9.99999974E-6 : f32
    %31 = vector.broadcast %cst_19 : f32 to vector<40x1xf32>
    %32 = arith.addf %28, %31 : vector<40x1xf32>
    %33 = math.rsqrt %32 : vector<40x1xf32>
    %34 = vector.broadcast %33 : vector<40x1xf32> to vector<40x64xf32>
    %35 = arith.mulf %30, %34 : vector<40x64xf32>
    %36 = vector.broadcast %16 : vector<1x64xf32> to vector<40x64xf32>
    %37 = arith.mulf %35, %36 : vector<40x64xf32>
    %38 = vector.broadcast %17 : vector<1x64xf32> to vector<40x64xf32>
    %39 = arith.addf %37, %38 : vector<40x64xf32>
    %c0_20 = arith.constant 0 : index
    %c0_21 = arith.constant 0 : index
    %40 = vector.load %arg8[%c0_20, %c0_21] : memref<40x64xf32, #tpu.memory_space<vmem>>, vector<40x64xf32>
    tpu.vector_store %arg8[%c0_20, %c0_21], %39 {strides = array<i32>} : memref<40x64xf32, #tpu.memory_space<vmem>>, vector<40x64xf32>,
    return
  }
  func.func @transform_0(%arg0: i32) -> (i32, i32) {
    %c0_i32 = arith.constant 0 : i32
    %c0_i32_0 = arith.constant 0 : i32
    return %arg0, %c0_i32 : i32, i32
  }
  func.func @transform_1(%arg0: i32) -> (i32, i32) {
    %c0_i32 = arith.constant 0 : i32
    %c0_i32_0 = arith.constant 0 : i32
    %c0_i32_1 = arith.constant 0 : i32
    return %c0_i32, %c0_i32_0 : i32, i32
  }
  func.func @transform_2(%arg0: i32) -> (i32, i32) {
    %c0_i32 = arith.constant 0 : i32
    %c0_i32_0 = arith.constant 0 : i32
    %c0_i32_1 = arith.constant 0 : i32
    return %c0_i32, %c0_i32_0 : i32, i32
  }
  func.func @transform_3(%arg0: i32) -> (i32, i32) {
    %c0_i32 = arith.constant 0 : i32
    %c0_i32_0 = arith.constant 0 : i32
    %c0_i32_1 = arith.constant 0 : i32
    return %c0_i32, %c0_i32_0 : i32, i32
  }
  func.func @transform_4(%arg0: i32) -> (i32, i32) {
    %c0_i32 = arith.constant 0 : i32
    %c0_i32_0 = arith.constant 0 : i32
    %c0_i32_1 = arith.constant 0 : i32
    return %c0_i32, %c0_i32_0 : i32, i32
  }
  func.func @transform_5(%arg0: i32) -> (i32, i32) {
    %c0_i32 = arith.constant 0 : i32
    %c0_i32_0 = arith.constant 0 : i32
    %c0_i32_1 = arith.constant 0 : i32
    return %c0_i32, %c0_i32_0 : i32, i32
  }
  func.func @transform_6(%arg0: i32) -> (i32, i32) {
    %c0_i32 = arith.constant 0 : i32
    %c0_i32_0 = arith.constant 0 : i32
    %c0_i32_1 = arith.constant 0 : i32
    return %c0_i32, %c0_i32_0 : i32, i32
  }
  func.func @transform_7(%arg0: i32) -> (i32, i32) {
    %c0_i32 = arith.constant 0 : i32
    %c0_i32_0 = arith.constant 0 : i32
    return %arg0, %c0_i32 : i32, i32
  }
}

module attributes {stable_mosaic.version = 11 : i64} {
  func.func @_self_attn_block_kernel(%arg0: i32, %arg1: memref<1x20x64xf32, #tpu.memory_space<vmem>>, %arg2: memref<1x20x64xf32, #tpu.memory_space<vmem>>, %arg3: memref<64x128xbf16, #tpu.memory_space<vmem>>, %arg4: memref<1x128xf32, #tpu.memory_space<vmem>>, %arg5: memref<64x64xbf16, #tpu.memory_space<vmem>>, %arg6: memref<1x64xf32, #tpu.memory_space<vmem>>, %arg7: memref<64x64xbf16, #tpu.memory_space<vmem>>, %arg8: memref<1x64xf32, #tpu.memory_space<vmem>>, %arg9: memref<1x64xf32, #tpu.memory_space<vmem>>, %arg10: memref<1x64xf32, #tpu.memory_space<vmem>>, %arg11: memref<1x20x64xf32, #tpu.memory_space<vmem>>) attributes {dimension_semantics = [#tpu.dimension_semantics<parallel>], iteration_bounds = array<i64: 2>, scalar_prefetch = 0 : i64, scratch_operands = 0 : i64, tpu.core_type = #tpu.core_type<tc>, window_params = [{transform_indices = @transform_0, window_bounds = array<i64: 1, 20, 64>}, {transform_indices = @transform_1, window_bounds = array<i64: 1, 20, 64>}, {pipeline_mode = #tpu.pipeline_mode<synchronous>, transform_indices = @transform_2, window_bounds = array<i64: 64, 128>}, {pipeline_mode = #tpu.pipeline_mode<synchronous>, transform_indices = @transform_3, window_bounds = array<i64: 1, 128>}, {pipeline_mode = #tpu.pipeline_mode<synchronous>, transform_indices = @transform_4, window_bounds = array<i64: 64, 64>}, {pipeline_mode = #tpu.pipeline_mode<synchronous>, transform_indices = @transform_5, window_bounds = array<i64: 1, 64>}, {pipeline_mode = #tpu.pipeline_mode<synchronous>, transform_indices = @transform_6, window_bounds = array<i64: 64, 64>}, {pipeline_mode = #tpu.pipeline_mode<synchronous>, transform_indices = @transform_7, window_bounds = array<i64: 1, 64>}, {pipeline_mode = #tpu.pipeline_mode<synchronous>, transform_indices = @transform_8, window_bounds = array<i64: 1, 64>}, {pipeline_mode = #tpu.pipeline_mode<synchronous>, transform_indices = @transform_9, window_bounds = array<i64: 1, 64>}, {transform_indices = @transform_10, window_bounds = array<i64: 1, 20, 64>}]} {
    %c0 = arith.constant 0 : index
    %c0_0 = arith.constant 0 : index
    %c0_1 = arith.constant 0 : index
    %0 = vector.load %arg1[%c0, %c0_0, %c0_1] : memref<1x20x64xf32, #tpu.memory_space<vmem>>, vector<1x20x64xf32>
    %1 = vector.shape_cast %0 : vector<1x20x64xf32> to vector<20x64xf32>
    %c0_2 = arith.constant 0 : index
    %c0_3 = arith.constant 0 : index
    %c0_4 = arith.constant 0 : index
    %2 = vector.load %arg2[%c0_2, %c0_3, %c0_4] : memref<1x20x64xf32, #tpu.memory_space<vmem>>, vector<1x20x64xf32>
    %3 = vector.shape_cast %2 : vector<1x20x64xf32> to vector<20x64xf32>
    %4 = arith.addf %1, %3 : vector<20x64xf32>
    %5 = arith.truncf %4 : vector<20x64xf32> to vector<20x64xbf16>
    %c0_5 = arith.constant 0 : index
    %c0_6 = arith.constant 0 : index
    %6 = vector.load %arg3[%c0_5, %c0_6] : memref<64x128xbf16, #tpu.memory_space<vmem>>, vector<64x128xbf16>
    %cst = arith.constant dense<0.000000e+00> : vector<20x128xf32>
    %7 = tpu.matmul %5, %6, %cst {dimension_numbers = #tpu.dot_dimension_numbers<[1], [0], [0], [1], [0, 0, 1, 1], [], []>} : vector<20x64xbf16>, vector<64x128xbf16>, vector<20x128xf32> -> vector<20x128xf32>
    %c0_7 = arith.constant 0 : index
    %c0_8 = arith.constant 0 : index
    %8 = vector.load %arg4[%c0_7, %c0_8] : memref<1x128xf32, #tpu.memory_space<vmem>>, vector<1x128xf32>
    %9 = vector.broadcast %8 : vector<1x128xf32> to vector<20x128xf32>
    %10 = arith.addf %7, %9 : vector<20x128xf32>
    %11 = arith.truncf %1 : vector<20x64xf32> to vector<20x64xbf16>
    %c0_9 = arith.constant 0 : index
    %c0_10 = arith.constant 0 : index
    %12 = vector.load %arg5[%c0_9, %c0_10] : memref<64x64xbf16, #tpu.memory_space<vmem>>, vector<64x64xbf16>
    %cst_11 = arith.constant dense<0.000000e+00> : vector<20x64xf32>
    %13 = tpu.matmul %11, %12, %cst_11 {dimension_numbers = #tpu.dot_dimension_numbers<[1], [0], [0], [1], [0, 0, 1, 1], [], []>} : vector<20x64xbf16>, vector<64x64xbf16>, vector<20x64xf32> -> vector<20x64xf32>
    %c0_12 = arith.constant 0 : index
    %c0_13 = arith.constant 0 : index
    %14 = vector.load %arg6[%c0_12, %c0_13] : memref<1x64xf32, #tpu.memory_space<vmem>>, vector<1x64xf32>
    %15 = vector.broadcast %14 : vector<1x64xf32> to vector<20x64xf32>
    %16 = arith.addf %13, %15 : vector<20x64xf32>
    %17 = vector.extract_strided_slice %10 {offsets = [0, 0], sizes = [20, 64], strides = [1, 1]} : vector<20x128xf32> to vector<20x64xf32>
    %18 = vector.extract_strided_slice %10 {offsets = [0, 64], sizes = [20, 64], strides = [1, 1]} : vector<20x128xf32> to vector<20x64xf32>
    %19 = vector.extract_strided_slice %17 {offsets = [0, 0], sizes = [20, 16], strides = [1, 1]} : vector<20x64xf32> to vector<20x16xf32>
    %20 = arith.truncf %19 : vector<20x16xf32> to vector<20x16xbf16>
    %21 = vector.extract_strided_slice %18 {offsets = [0, 0], sizes = [20, 16], strides = [1, 1]} : vector<20x64xf32> to vector<20x16xf32>
    %22 = arith.truncf %21 : vector<20x16xf32> to vector<20x16xbf16>
    %23 = vector.extract_strided_slice %16 {offsets = [0, 0], sizes = [20, 16], strides = [1, 1]} : vector<20x64xf32> to vector<20x16xf32>
    %24 = arith.truncf %23 : vector<20x16xf32> to vector<20x16xbf16>
    %cst_14 = arith.constant dense<0.000000e+00> : vector<20x20xf32>
    %25 = tpu.matmul %20, %22, %cst_14 {dimension_numbers = #tpu.dot_dimension_numbers<[1], [1], [0], [0], [0, 0, 1, 0], [], []>} : vector<20x16xbf16>, vector<20x16xbf16>, vector<20x20xf32> -> vector<20x20xf32>
    %cst_15 = arith.constant 2.500000e-01 : f32
    %26 = vector.broadcast %cst_15 : f32 to vector<20x20xf32>
    %27 = arith.mulf %25, %26 : vector<20x20xf32>
    %cst_16 = arith.constant dense<0xFF800000> : vector<20xf32>
    %28 = vector.multi_reduction <maximumf>, %27, %cst_16 [1] : vector<20x20xf32> to vector<20xf32>
    %29 = vector.shape_cast %28 : vector<20xf32> to vector<20x1xf32>
    %30 = vector.broadcast %29 : vector<20x1xf32> to vector<20x20xf32>
    %31 = arith.subf %27, %30 : vector<20x20xf32>
    %32 = math.exp %31 : vector<20x20xf32>
    %cst_17 = arith.constant dense<0.000000e+00> : vector<20xf32>
    %33 = vector.multi_reduction <add>, %32, %cst_17 [1] : vector<20x20xf32> to vector<20xf32>
    %34 = vector.shape_cast %33 : vector<20xf32> to vector<20x1xf32>
    %35 = tpu.reciprocal %34 {approx = true} : vector<20x1xf32> -> vector<20x1xf32>
    %36 = vector.broadcast %35 : vector<20x1xf32> to vector<20x20xf32>
    %37 = arith.mulf %32, %36 : vector<20x20xf32>
    %38 = arith.truncf %37 : vector<20x20xf32> to vector<20x20xbf16>
    %cst_18 = arith.constant dense<0.000000e+00> : vector<20x16xf32>
    %39 = tpu.matmul %38, %24, %cst_18 {dimension_numbers = #tpu.dot_dimension_numbers<[1], [0], [0], [1], [0, 0, 1, 1], [], []>} : vector<20x20xbf16>, vector<20x16xbf16>, vector<20x16xf32> -> vector<20x16xf32>
    %40 = vector.extract_strided_slice %17 {offsets = [0, 16], sizes = [20, 16], strides = [1, 1]} : vector<20x64xf32> to vector<20x16xf32>
    %41 = arith.truncf %40 : vector<20x16xf32> to vector<20x16xbf16>
    %42 = vector.extract_strided_slice %18 {offsets = [0, 16], sizes = [20, 16], strides = [1, 1]} : vector<20x64xf32> to vector<20x16xf32>
    %43 = arith.truncf %42 : vector<20x16xf32> to vector<20x16xbf16>
    %44 = vector.extract_strided_slice %16 {offsets = [0, 16], sizes = [20, 16], strides = [1, 1]} : vector<20x64xf32> to vector<20x16xf32>
    %45 = arith.truncf %44 : vector<20x16xf32> to vector<20x16xbf16>
    %cst_19 = arith.constant dense<0.000000e+00> : vector<20x20xf32>
    %46 = tpu.matmul %41, %43, %cst_19 {dimension_numbers = #tpu.dot_dimension_numbers<[1], [1], [0], [0], [0, 0, 1, 0], [], []>} : vector<20x16xbf16>, vector<20x16xbf16>, vector<20x20xf32> -> vector<20x20xf32>
    %cst_20 = arith.constant 2.500000e-01 : f32
    %47 = vector.broadcast %cst_20 : f32 to vector<20x20xf32>
    %48 = arith.mulf %46, %47 : vector<20x20xf32>
    %cst_21 = arith.constant dense<0xFF800000> : vector<20xf32>
    %49 = vector.multi_reduction <maximumf>, %48, %cst_21 [1] : vector<20x20xf32> to vector<20xf32>
    %50 = vector.shape_cast %49 : vector<20xf32> to vector<20x1xf32>
    %51 = vector.broadcast %50 : vector<20x1xf32> to vector<20x20xf32>
    %52 = arith.subf %48, %51 : vector<20x20xf32>
    %53 = math.exp %52 : vector<20x20xf32>
    %cst_22 = arith.constant dense<0.000000e+00> : vector<20xf32>
    %54 = vector.multi_reduction <add>, %53, %cst_22 [1] : vector<20x20xf32> to vector<20xf32>
    %55 = vector.shape_cast %54 : vector<20xf32> to vector<20x1xf32>
    %56 = tpu.reciprocal %55 {approx = true} : vector<20x1xf32> -> vector<20x1xf32>
    %57 = vector.broadcast %56 : vector<20x1xf32> to vector<20x20xf32>
    %58 = arith.mulf %53, %57 : vector<20x20xf32>
    %59 = arith.truncf %58 : vector<20x20xf32> to vector<20x20xbf16>
    %cst_23 = arith.constant dense<0.000000e+00> : vector<20x16xf32>
    %60 = tpu.matmul %59, %45, %cst_23 {dimension_numbers = #tpu.dot_dimension_numbers<[1], [0], [0], [1], [0, 0, 1, 1], [], []>} : vector<20x20xbf16>, vector<20x16xbf16>, vector<20x16xf32> -> vector<20x16xf32>
    %61 = vector.extract_strided_slice %17 {offsets = [0, 32], sizes = [20, 16], strides = [1, 1]} : vector<20x64xf32> to vector<20x16xf32>
    %62 = arith.truncf %61 : vector<20x16xf32> to vector<20x16xbf16>
    %63 = vector.extract_strided_slice %18 {offsets = [0, 32], sizes = [20, 16], strides = [1, 1]} : vector<20x64xf32> to vector<20x16xf32>
    %64 = arith.truncf %63 : vector<20x16xf32> to vector<20x16xbf16>
    %65 = vector.extract_strided_slice %16 {offsets = [0, 32], sizes = [20, 16], strides = [1, 1]} : vector<20x64xf32> to vector<20x16xf32>
    %66 = arith.truncf %65 : vector<20x16xf32> to vector<20x16xbf16>
    %cst_24 = arith.constant dense<0.000000e+00> : vector<20x20xf32>
    %67 = tpu.matmul %62, %64, %cst_24 {dimension_numbers = #tpu.dot_dimension_numbers<[1], [1], [0], [0], [0, 0, 1, 0], [], []>} : vector<20x16xbf16>, vector<20x16xbf16>, vector<20x20xf32> -> vector<20x20xf32>
    %cst_25 = arith.constant 2.500000e-01 : f32
    %68 = vector.broadcast %cst_25 : f32 to vector<20x20xf32>
    %69 = arith.mulf %67, %68 : vector<20x20xf32>
    %cst_26 = arith.constant dense<0xFF800000> : vector<20xf32>
    %70 = vector.multi_reduction <maximumf>, %69, %cst_26 [1] : vector<20x20xf32> to vector<20xf32>
    %71 = vector.shape_cast %70 : vector<20xf32> to vector<20x1xf32>
    %72 = vector.broadcast %71 : vector<20x1xf32> to vector<20x20xf32>
    %73 = arith.subf %69, %72 : vector<20x20xf32>
    %74 = math.exp %73 : vector<20x20xf32>
    %cst_27 = arith.constant dense<0.000000e+00> : vector<20xf32>
    %75 = vector.multi_reduction <add>, %74, %cst_27 [1] : vector<20x20xf32> to vector<20xf32>
    %76 = vector.shape_cast %75 : vector<20xf32> to vector<20x1xf32>
    %77 = tpu.reciprocal %76 {approx = true} : vector<20x1xf32> -> vector<20x1xf32>
    %78 = vector.broadcast %77 : vector<20x1xf32> to vector<20x20xf32>
    %79 = arith.mulf %74, %78 : vector<20x20xf32>
    %80 = arith.truncf %79 : vector<20x20xf32> to vector<20x20xbf16>
    %cst_28 = arith.constant dense<0.000000e+00> : vector<20x16xf32>
    %81 = tpu.matmul %80, %66, %cst_28 {dimension_numbers = #tpu.dot_dimension_numbers<[1], [0], [0], [1], [0, 0, 1, 1], [], []>} : vector<20x20xbf16>, vector<20x16xbf16>, vector<20x16xf32> -> vector<20x16xf32>
    %82 = vector.extract_strided_slice %17 {offsets = [0, 48], sizes = [20, 16], strides = [1, 1]} : vector<20x64xf32> to vector<20x16xf32>
    %83 = arith.truncf %82 : vector<20x16xf32> to vector<20x16xbf16>
    %84 = vector.extract_strided_slice %18 {offsets = [0, 48], sizes = [20, 16], strides = [1, 1]} : vector<20x64xf32> to vector<20x16xf32>
    %85 = arith.truncf %84 : vector<20x16xf32> to vector<20x16xbf16>
    %86 = vector.extract_strided_slice %16 {offsets = [0, 48], sizes = [20, 16], strides = [1, 1]} : vector<20x64xf32> to vector<20x16xf32>
    %87 = arith.truncf %86 : vector<20x16xf32> to vector<20x16xbf16>
    %cst_29 = arith.constant dense<0.000000e+00> : vector<20x20xf32>
    %88 = tpu.matmul %83, %85, %cst_29 {dimension_numbers = #tpu.dot_dimension_numbers<[1], [1], [0], [0], [0, 0, 1, 0], [], []>} : vector<20x16xbf16>, vector<20x16xbf16>, vector<20x20xf32> -> vector<20x20xf32>
    %cst_30 = arith.constant 2.500000e-01 : f32
    %89 = vector.broadcast %cst_30 : f32 to vector<20x20xf32>
    %90 = arith.mulf %88, %89 : vector<20x20xf32>
    %cst_31 = arith.constant dense<0xFF800000> : vector<20xf32>
    %91 = vector.multi_reduction <maximumf>, %90, %cst_31 [1] : vector<20x20xf32> to vector<20xf32>
    %92 = vector.shape_cast %91 : vector<20xf32> to vector<20x1xf32>
    %93 = vector.broadcast %92 : vector<20x1xf32> to vector<20x20xf32>
    %94 = arith.subf %90, %93 : vector<20x20xf32>
    %95 = math.exp %94 : vector<20x20xf32>
    %cst_32 = arith.constant dense<0.000000e+00> : vector<20xf32>
    %96 = vector.multi_reduction <add>, %95, %cst_32 [1] : vector<20x20xf32> to vector<20xf32>
    %97 = vector.shape_cast %96 : vector<20xf32> to vector<20x1xf32>
    %98 = tpu.reciprocal %97 {approx = true} : vector<20x1xf32> -> vector<20x1xf32>
    %99 = vector.broadcast %98 : vector<20x1xf32> to vector<20x20xf32>
    %100 = arith.mulf %95, %99 : vector<20x20xf32>
    %101 = arith.truncf %100 : vector<20x20xf32> to vector<20x20xbf16>
    %cst_33 = arith.constant dense<0.000000e+00> : vector<20x16xf32>
    %102 = tpu.matmul %101, %87, %cst_33 {dimension_numbers = #tpu.dot_dimension_numbers<[1], [0], [0], [1], [0, 0, 1, 1], [], []>} : vector<20x20xbf16>, vector<20x16xbf16>, vector<20x16xf32> -> vector<20x16xf32>
    %103 = tpu.concatenate %39, %60, %81, %102 in 1 : vector<20x16xf32>, vector<20x16xf32>, vector<20x16xf32>, vector<20x16xf32> -> vector<20x64xf32>
    %104 = arith.truncf %103 : vector<20x64xf32> to vector<20x64xbf16>
    %c0_34 = arith.constant 0 : index
    %c0_35 = arith.constant 0 : index
    %105 = vector.load %arg7[%c0_34, %c0_35] : memref<64x64xbf16, #tpu.memory_space<vmem>>, vector<64x64xbf16>
    %cst_36 = arith.constant dense<0.000000e+00> : vector<20x64xf32>
    %106 = tpu.matmul %104, %105, %cst_36 {dimension_numbers = #tpu.dot_dimension_numbers<[1], [0], [0], [1], [0, 0, 1, 1], [], []>} : vector<20x64xbf16>, vector<64x64xbf16>, vector<20x64xf32> -> vector<20x64xf32>
    %c0_37 = arith.constant 0 : index
    %c0_38 = arith.constant 0 : index
    %107 = vector.load %arg8[%c0_37, %c0_38] : memref<1x64xf32, #tpu.memory_space<vmem>>, vector<1x64xf32>
    %108 = vector.broadcast %107 : vector<1x64xf32> to vector<20x64xf32>
    %109 = arith.addf %106, %108 : vector<20x64xf32>
    %110 = arith.addf %1, %109 : vector<20x64xf32>
    %c0_39 = arith.constant 0 : index
    %c0_40 = arith.constant 0 : index
    %111 = vector.load %arg9[%c0_39, %c0_40] : memref<1x64xf32, #tpu.memory_space<vmem>>, vector<1x64xf32>
    %c0_41 = arith.constant 0 : index
    %c0_42 = arith.constant 0 : index
    %112 = vector.load %arg10[%c0_41, %c0_42] : memref<1x64xf32, #tpu.memory_space<vmem>>, vector<1x64xf32>
    %cst_43 = arith.constant dense<0.000000e+00> : vector<20xf32>
    %113 = vector.multi_reduction <add>, %110, %cst_43 [1] : vector<20x64xf32> to vector<20xf32>
    %114 = vector.shape_cast %113 : vector<20xf32> to vector<20x1xf32>
    %cst_44 = arith.constant 6.400000e+01 : f32
    %115 = vector.broadcast %cst_44 : f32 to vector<20x1xf32>
    %116 = arith.divf %114, %115 : vector<20x1xf32>
    %117 = vector.broadcast %116 : vector<20x1xf32> to vector<20x64xf32>
    %118 = arith.subf %110, %117 : vector<20x64xf32>
    %119 = arith.mulf %118, %118 : vector<20x64xf32>
    %cst_45 = arith.constant dense<0.000000e+00> : vector<20xf32>
    %120 = vector.multi_reduction <add>, %119, %cst_45 [1] : vector<20x64xf32> to vector<20xf32>
    %121 = vector.shape_cast %120 : vector<20xf32> to vector<20x1xf32>
    %cst_46 = arith.constant 6.400000e+01 : f32
    %122 = vector.broadcast %cst_46 : f32 to vector<20x1xf32>
    %123 = arith.divf %121, %122 : vector<20x1xf32>
    %124 = vector.broadcast %116 : vector<20x1xf32> to vector<20x64xf32>
    %125 = arith.subf %110, %124 : vector<20x64xf32>
    %cst_47 = arith.constant 9.99999974E-6 : f32
    %126 = vector.broadcast %cst_47 : f32 to vector<20x1xf32>
    %127 = arith.addf %123, %126 : vector<20x1xf32>
    %128 = math.rsqrt %127 : vector<20x1xf32>
    %129 = vector.broadcast %128 : vector<20x1xf32> to vector<20x64xf32>
    %130 = arith.mulf %125, %129 : vector<20x64xf32>
    %131 = vector.broadcast %111 : vector<1x64xf32> to vector<20x64xf32>
    %132 = arith.mulf %130, %131 : vector<20x64xf32>
    %133 = vector.broadcast %112 : vector<1x64xf32> to vector<20x64xf32>
    %134 = arith.addf %132, %133 : vector<20x64xf32>
    %c0_48 = arith.constant 0 : index
    %c0_49 = arith.constant 0 : index
    %c0_50 = arith.constant 0 : index
    %135 = vector.load %arg11[%c0_48, %c0_49, %c0_50] : memref<1x20x64xf32, #tpu.memory_space<vmem>>, vector<1x20x64xf32>
    %136 = vector.shape_cast %135 : vector<1x20x64xf32> to vector<20x64xf32>
    %137 = vector.shape_cast %134 : vector<20x64xf32> to vector<1x20x64xf32>
    tpu.vector_store %arg11[%c0_48, %c0_49, %c0_50], %137 {strides = array<i32>} : memref<1x20x64xf32, #tpu.memory_space<vmem>>, vector<1x20x64xf32>,
    return
  }
  func.func @transform_0(%arg0: i32) -> (i32, i32, i32) {
    %c0_i32 = arith.constant 0 : i32
    %c0_i32_0 = arith.constant 0 : i32
    %c0_i32_1 = arith.constant 0 : i32
    return %arg0, %c0_i32, %c0_i32_0 : i32, i32, i32
  }
  func.func @transform_1(%arg0: i32) -> (i32, i32, i32) {
    %c0_i32 = arith.constant 0 : i32
    %c0_i32_0 = arith.constant 0 : i32
    %c0_i32_1 = arith.constant 0 : i32
    return %arg0, %c0_i32, %c0_i32_0 : i32, i32, i32
  }
  func.func @transform_2(%arg0: i32) -> (i32, i32) {
    %c0_i32 = arith.constant 0 : i32
    %c0_i32_0 = arith.constant 0 : i32
    %c0_i32_1 = arith.constant 0 : i32
    return %c0_i32, %c0_i32_0 : i32, i32
  }
  func.func @transform_3(%arg0: i32) -> (i32, i32) {
    %c0_i32 = arith.constant 0 : i32
    %c0_i32_0 = arith.constant 0 : i32
    %c0_i32_1 = arith.constant 0 : i32
    return %c0_i32, %c0_i32_0 : i32, i32
  }
  func.func @transform_4(%arg0: i32) -> (i32, i32) {
    %c0_i32 = arith.constant 0 : i32
    %c0_i32_0 = arith.constant 0 : i32
    %c0_i32_1 = arith.constant 0 : i32
    return %c0_i32, %c0_i32_0 : i32, i32
  }
  func.func @transform_5(%arg0: i32) -> (i32, i32) {
    %c0_i32 = arith.constant 0 : i32
    %c0_i32_0 = arith.constant 0 : i32
    %c0_i32_1 = arith.constant 0 : i32
    return %c0_i32, %c0_i32_0 : i32, i32
  }
  func.func @transform_6(%arg0: i32) -> (i32, i32) {
    %c0_i32 = arith.constant 0 : i32
    %c0_i32_0 = arith.constant 0 : i32
    %c0_i32_1 = arith.constant 0 : i32
    return %c0_i32, %c0_i32_0 : i32, i32
  }
  func.func @transform_7(%arg0: i32) -> (i32, i32) {
    %c0_i32 = arith.constant 0 : i32
    %c0_i32_0 = arith.constant 0 : i32
    %c0_i32_1 = arith.constant 0 : i32
    return %c0_i32, %c0_i32_0 : i32, i32
  }
  func.func @transform_8(%arg0: i32) -> (i32, i32) {
    %c0_i32 = arith.constant 0 : i32
    %c0_i32_0 = arith.constant 0 : i32
    %c0_i32_1 = arith.constant 0 : i32
    return %c0_i32, %c0_i32_0 : i32, i32
  }
  func.func @transform_9(%arg0: i32) -> (i32, i32) {
    %c0_i32 = arith.constant 0 : i32
    %c0_i32_0 = arith.constant 0 : i32
    %c0_i32_1 = arith.constant 0 : i32
    return %c0_i32, %c0_i32_0 : i32, i32
  }
  func.func @transform_10(%arg0: i32) -> (i32, i32, i32) {
    %c0_i32 = arith.constant 0 : i32
    %c0_i32_0 = arith.constant 0 : i32
    %c0_i32_1 = arith.constant 0 : i32
    return %arg0, %c0_i32, %c0_i32_0 : i32, i32, i32
  }
}

module attributes {stable_mosaic.version = 11 : i64} {
  func.func @_enc_head_kernel(%arg0: i32, %arg1: memref<40x64xf32, #tpu.memory_space<vmem>>, %arg2: memref<64x64xbf16, #tpu.memory_space<vmem>>, %arg3: memref<1x64xf32, #tpu.memory_space<vmem>>, %arg4: memref<1x64xf32, #tpu.memory_space<vmem>>, %arg5: memref<1x64xf32, #tpu.memory_space<vmem>>, %arg6: memref<64x64xbf16, #tpu.memory_space<vmem>>, %arg7: memref<1x64xf32, #tpu.memory_space<vmem>>, %arg8: memref<64x64xbf16, #tpu.memory_space<vmem>>, %arg9: memref<1x64xf32, #tpu.memory_space<vmem>>, %arg10: memref<40x64xf32, #tpu.memory_space<vmem>>, %arg11: memref<40x64xf32, #tpu.memory_space<vmem>>) attributes {dimension_semantics = [#tpu.dimension_semantics<parallel>], iteration_bounds = array<i64: 1>, scalar_prefetch = 0 : i64, scratch_operands = 0 : i64, tpu.core_type = #tpu.core_type<tc>, window_params = [{transform_indices = @transform_0, window_bounds = array<i64: 40, 64>}, {pipeline_mode = #tpu.pipeline_mode<synchronous>, transform_indices = @transform_1, window_bounds = array<i64: 64, 64>}, {pipeline_mode = #tpu.pipeline_mode<synchronous>, transform_indices = @transform_2, window_bounds = array<i64: 1, 64>}, {pipeline_mode = #tpu.pipeline_mode<synchronous>, transform_indices = @transform_3, window_bounds = array<i64: 1, 64>}, {pipeline_mode = #tpu.pipeline_mode<synchronous>, transform_indices = @transform_4, window_bounds = array<i64: 1, 64>}, {pipeline_mode = #tpu.pipeline_mode<synchronous>, transform_indices = @transform_5, window_bounds = array<i64: 64, 64>}, {pipeline_mode = #tpu.pipeline_mode<synchronous>, transform_indices = @transform_6, window_bounds = array<i64: 1, 64>}, {pipeline_mode = #tpu.pipeline_mode<synchronous>, transform_indices = @transform_7, window_bounds = array<i64: 64, 64>}, {pipeline_mode = #tpu.pipeline_mode<synchronous>, transform_indices = @transform_8, window_bounds = array<i64: 1, 64>}, {transform_indices = @transform_9, window_bounds = array<i64: 40, 64>}, {transform_indices = @transform_10, window_bounds = array<i64: 40, 64>}]} {
    %c0 = arith.constant 0 : index
    %c0_0 = arith.constant 0 : index
    %0 = vector.load %arg1[%c0, %c0_0] : memref<40x64xf32, #tpu.memory_space<vmem>>, vector<40x64xf32>
    %1 = arith.truncf %0 : vector<40x64xf32> to vector<40x64xbf16>
    %c0_1 = arith.constant 0 : index
    %c0_2 = arith.constant 0 : index
    %2 = vector.load %arg2[%c0_1, %c0_2] : memref<64x64xbf16, #tpu.memory_space<vmem>>, vector<64x64xbf16>
    %cst = arith.constant dense<0.000000e+00> : vector<40x64xf32>
    %3 = tpu.matmul %1, %2, %cst {dimension_numbers = #tpu.dot_dimension_numbers<[1], [0], [0], [1], [0, 0, 1, 1], [], []>} : vector<40x64xbf16>, vector<64x64xbf16>, vector<40x64xf32> -> vector<40x64xf32>
    %c0_3 = arith.constant 0 : index
    %c0_4 = arith.constant 0 : index
    %4 = vector.load %arg3[%c0_3, %c0_4] : memref<1x64xf32, #tpu.memory_space<vmem>>, vector<1x64xf32>
    %5 = vector.broadcast %4 : vector<1x64xf32> to vector<40x64xf32>
    %6 = arith.addf %3, %5 : vector<40x64xf32>
    %c0_5 = arith.constant 0 : index
    %c0_6 = arith.constant 0 : index
    %7 = vector.load %arg4[%c0_5, %c0_6] : memref<1x64xf32, #tpu.memory_space<vmem>>, vector<1x64xf32>
    %c0_7 = arith.constant 0 : index
    %c0_8 = arith.constant 0 : index
    %8 = vector.load %arg5[%c0_7, %c0_8] : memref<1x64xf32, #tpu.memory_space<vmem>>, vector<1x64xf32>
    %cst_9 = arith.constant dense<0.000000e+00> : vector<40xf32>
    %9 = vector.multi_reduction <add>, %6, %cst_9 [1] : vector<40x64xf32> to vector<40xf32>
    %10 = vector.shape_cast %9 : vector<40xf32> to vector<40x1xf32>
    %cst_10 = arith.constant 6.400000e+01 : f32
    %11 = vector.broadcast %cst_10 : f32 to vector<40x1xf32>
    %12 = arith.divf %10, %11 : vector<40x1xf32>
    %13 = vector.broadcast %12 : vector<40x1xf32> to vector<40x64xf32>
    %14 = arith.subf %6, %13 : vector<40x64xf32>
    %15 = arith.mulf %14, %14 : vector<40x64xf32>
    %cst_11 = arith.constant dense<0.000000e+00> : vector<40xf32>
    %16 = vector.multi_reduction <add>, %15, %cst_11 [1] : vector<40x64xf32> to vector<40xf32>
    %17 = vector.shape_cast %16 : vector<40xf32> to vector<40x1xf32>
    %cst_12 = arith.constant 6.400000e+01 : f32
    %18 = vector.broadcast %cst_12 : f32 to vector<40x1xf32>
    %19 = arith.divf %17, %18 : vector<40x1xf32>
    %20 = vector.broadcast %12 : vector<40x1xf32> to vector<40x64xf32>
    %21 = arith.subf %6, %20 : vector<40x64xf32>
    %cst_13 = arith.constant 9.99999974E-6 : f32
    %22 = vector.broadcast %cst_13 : f32 to vector<40x1xf32>
    %23 = arith.addf %19, %22 : vector<40x1xf32>
    %24 = math.rsqrt %23 : vector<40x1xf32>
    %25 = vector.broadcast %24 : vector<40x1xf32> to vector<40x64xf32>
    %26 = arith.mulf %21, %25 : vector<40x64xf32>
    %27 = vector.broadcast %7 : vector<1x64xf32> to vector<40x64xf32>
    %28 = arith.mulf %26, %27 : vector<40x64xf32>
    %29 = vector.broadcast %8 : vector<1x64xf32> to vector<40x64xf32>
    %30 = arith.addf %28, %29 : vector<40x64xf32>
    %c0_14 = arith.constant 0 : index
    %c0_15 = arith.constant 0 : index
    %31 = vector.load %arg10[%c0_14, %c0_15] : memref<40x64xf32, #tpu.memory_space<vmem>>, vector<40x64xf32>
    tpu.vector_store %arg10[%c0_14, %c0_15], %30 {strides = array<i32>} : memref<40x64xf32, #tpu.memory_space<vmem>>, vector<40x64xf32>,
    %32 = arith.truncf %30 : vector<40x64xf32> to vector<40x64xbf16>
    %c0_16 = arith.constant 0 : index
    %c0_17 = arith.constant 0 : index
    %33 = vector.load %arg6[%c0_16, %c0_17] : memref<64x64xbf16, #tpu.memory_space<vmem>>, vector<64x64xbf16>
    %cst_18 = arith.constant dense<0.000000e+00> : vector<40x64xf32>
    %34 = tpu.matmul %32, %33, %cst_18 {dimension_numbers = #tpu.dot_dimension_numbers<[1], [0], [0], [1], [0, 0, 1, 1], [], []>} : vector<40x64xbf16>, vector<64x64xbf16>, vector<40x64xf32> -> vector<40x64xf32>
    %c0_19 = arith.constant 0 : index
    %c0_20 = arith.constant 0 : index
    %35 = vector.load %arg7[%c0_19, %c0_20] : memref<1x64xf32, #tpu.memory_space<vmem>>, vector<1x64xf32>
    %36 = vector.broadcast %35 : vector<1x64xf32> to vector<40x64xf32>
    %37 = arith.addf %34, %36 : vector<40x64xf32>
    %cst_21 = arith.constant 0.000000e+00 : f32
    %38 = vector.broadcast %cst_21 : f32 to vector<40x64xf32>
    %39 = arith.maximumf %37, %38 : vector<40x64xf32>
    %40 = arith.truncf %39 : vector<40x64xf32> to vector<40x64xbf16>
    %c0_22 = arith.constant 0 : index
    %c0_23 = arith.constant 0 : index
    %41 = vector.load %arg8[%c0_22, %c0_23] : memref<64x64xbf16, #tpu.memory_space<vmem>>, vector<64x64xbf16>
    %cst_24 = arith.constant dense<0.000000e+00> : vector<40x64xf32>
    %42 = tpu.matmul %40, %41, %cst_24 {dimension_numbers = #tpu.dot_dimension_numbers<[1], [0], [0], [1], [0, 0, 1, 1], [], []>} : vector<40x64xbf16>, vector<64x64xbf16>, vector<40x64xf32> -> vector<40x64xf32>
    %c0_25 = arith.constant 0 : index
    %c0_26 = arith.constant 0 : index
    %43 = vector.load %arg9[%c0_25, %c0_26] : memref<1x64xf32, #tpu.memory_space<vmem>>, vector<1x64xf32>
    %44 = vector.broadcast %43 : vector<1x64xf32> to vector<40x64xf32>
    %45 = arith.addf %42, %44 : vector<40x64xf32>
    %cst_27 = arith.constant 0.000000e+00 : f32
    %46 = vector.broadcast %cst_27 : f32 to vector<40x64xf32>
    %47 = arith.maximumf %45, %46 : vector<40x64xf32>
    %c0_28 = arith.constant 0 : index
    %c0_29 = arith.constant 0 : index
    %48 = vector.load %arg11[%c0_28, %c0_29] : memref<40x64xf32, #tpu.memory_space<vmem>>, vector<40x64xf32>
    tpu.vector_store %arg11[%c0_28, %c0_29], %47 {strides = array<i32>} : memref<40x64xf32, #tpu.memory_space<vmem>>, vector<40x64xf32>,
    return
  }
  func.func @transform_0(%arg0: i32) -> (i32, i32) {
    %c0_i32 = arith.constant 0 : i32
    %c0_i32_0 = arith.constant 0 : i32
    return %arg0, %c0_i32 : i32, i32
  }
  func.func @transform_1(%arg0: i32) -> (i32, i32) {
    %c0_i32 = arith.constant 0 : i32
    %c0_i32_0 = arith.constant 0 : i32
    %c0_i32_1 = arith.constant 0 : i32
    return %c0_i32, %c0_i32_0 : i32, i32
  }
  func.func @transform_2(%arg0: i32) -> (i32, i32) {
    %c0_i32 = arith.constant 0 : i32
    %c0_i32_0 = arith.constant 0 : i32
    %c0_i32_1 = arith.constant 0 : i32
    return %c0_i32, %c0_i32_0 : i32, i32
  }
  func.func @transform_3(%arg0: i32) -> (i32, i32) {
    %c0_i32 = arith.constant 0 : i32
    %c0_i32_0 = arith.constant 0 : i32
    %c0_i32_1 = arith.constant 0 : i32
    return %c0_i32, %c0_i32_0 : i32, i32
  }
  func.func @transform_4(%arg0: i32) -> (i32, i32) {
    %c0_i32 = arith.constant 0 : i32
    %c0_i32_0 = arith.constant 0 : i32
    %c0_i32_1 = arith.constant 0 : i32
    return %c0_i32, %c0_i32_0 : i32, i32
  }
  func.func @transform_5(%arg0: i32) -> (i32, i32) {
    %c0_i32 = arith.constant 0 : i32
    %c0_i32_0 = arith.constant 0 : i32
    %c0_i32_1 = arith.constant 0 : i32
    return %c0_i32, %c0_i32_0 : i32, i32
  }
  func.func @transform_6(%arg0: i32) -> (i32, i32) {
    %c0_i32 = arith.constant 0 : i32
    %c0_i32_0 = arith.constant 0 : i32
    %c0_i32_1 = arith.constant 0 : i32
    return %c0_i32, %c0_i32_0 : i32, i32
  }
  func.func @transform_7(%arg0: i32) -> (i32, i32) {
    %c0_i32 = arith.constant 0 : i32
    %c0_i32_0 = arith.constant 0 : i32
    %c0_i32_1 = arith.constant 0 : i32
    return %c0_i32, %c0_i32_0 : i32, i32
  }
  func.func @transform_8(%arg0: i32) -> (i32, i32) {
    %c0_i32 = arith.constant 0 : i32
    %c0_i32_0 = arith.constant 0 : i32
    %c0_i32_1 = arith.constant 0 : i32
    return %c0_i32, %c0_i32_0 : i32, i32
  }
  func.func @transform_9(%arg0: i32) -> (i32, i32) {
    %c0_i32 = arith.constant 0 : i32
    %c0_i32_0 = arith.constant 0 : i32
    return %arg0, %c0_i32 : i32, i32
  }
  func.func @transform_10(%arg0: i32) -> (i32, i32) {
    %c0_i32 = arith.constant 0 : i32
    %c0_i32_0 = arith.constant 0 : i32
    return %arg0, %c0_i32 : i32, i32
  }
}

module attributes {stable_mosaic.version = 11 : i64} {
  func.func @_self_attn_block_kernel(%arg0: i32, %arg1: memref<1x16x64xf32, #tpu.memory_space<vmem>>, %arg2: memref<1x16x64xf32, #tpu.memory_space<vmem>>, %arg3: memref<64x128xbf16, #tpu.memory_space<vmem>>, %arg4: memref<1x128xf32, #tpu.memory_space<vmem>>, %arg5: memref<64x64xbf16, #tpu.memory_space<vmem>>, %arg6: memref<1x64xf32, #tpu.memory_space<vmem>>, %arg7: memref<64x64xbf16, #tpu.memory_space<vmem>>, %arg8: memref<1x64xf32, #tpu.memory_space<vmem>>, %arg9: memref<1x64xf32, #tpu.memory_space<vmem>>, %arg10: memref<1x64xf32, #tpu.memory_space<vmem>>, %arg11: memref<1x16x64xf32, #tpu.memory_space<vmem>>) attributes {dimension_semantics = [#tpu.dimension_semantics<parallel>], iteration_bounds = array<i64: 2>, scalar_prefetch = 0 : i64, scratch_operands = 0 : i64, tpu.core_type = #tpu.core_type<tc>, window_params = [{transform_indices = @transform_0, window_bounds = array<i64: 1, 16, 64>}, {transform_indices = @transform_1, window_bounds = array<i64: 1, 16, 64>}, {pipeline_mode = #tpu.pipeline_mode<synchronous>, transform_indices = @transform_2, window_bounds = array<i64: 64, 128>}, {pipeline_mode = #tpu.pipeline_mode<synchronous>, transform_indices = @transform_3, window_bounds = array<i64: 1, 128>}, {pipeline_mode = #tpu.pipeline_mode<synchronous>, transform_indices = @transform_4, window_bounds = array<i64: 64, 64>}, {pipeline_mode = #tpu.pipeline_mode<synchronous>, transform_indices = @transform_5, window_bounds = array<i64: 1, 64>}, {pipeline_mode = #tpu.pipeline_mode<synchronous>, transform_indices = @transform_6, window_bounds = array<i64: 64, 64>}, {pipeline_mode = #tpu.pipeline_mode<synchronous>, transform_indices = @transform_7, window_bounds = array<i64: 1, 64>}, {pipeline_mode = #tpu.pipeline_mode<synchronous>, transform_indices = @transform_8, window_bounds = array<i64: 1, 64>}, {pipeline_mode = #tpu.pipeline_mode<synchronous>, transform_indices = @transform_9, window_bounds = array<i64: 1, 64>}, {transform_indices = @transform_10, window_bounds = array<i64: 1, 16, 64>}]} {
    %c0 = arith.constant 0 : index
    %c0_0 = arith.constant 0 : index
    %c0_1 = arith.constant 0 : index
    %0 = vector.load %arg1[%c0, %c0_0, %c0_1] : memref<1x16x64xf32, #tpu.memory_space<vmem>>, vector<1x16x64xf32>
    %1 = vector.shape_cast %0 : vector<1x16x64xf32> to vector<16x64xf32>
    %c0_2 = arith.constant 0 : index
    %c0_3 = arith.constant 0 : index
    %c0_4 = arith.constant 0 : index
    %2 = vector.load %arg2[%c0_2, %c0_3, %c0_4] : memref<1x16x64xf32, #tpu.memory_space<vmem>>, vector<1x16x64xf32>
    %3 = vector.shape_cast %2 : vector<1x16x64xf32> to vector<16x64xf32>
    %4 = arith.addf %1, %3 : vector<16x64xf32>
    %5 = arith.truncf %4 : vector<16x64xf32> to vector<16x64xbf16>
    %c0_5 = arith.constant 0 : index
    %c0_6 = arith.constant 0 : index
    %6 = vector.load %arg3[%c0_5, %c0_6] : memref<64x128xbf16, #tpu.memory_space<vmem>>, vector<64x128xbf16>
    %cst = arith.constant dense<0.000000e+00> : vector<16x128xf32>
    %7 = tpu.matmul %5, %6, %cst {dimension_numbers = #tpu.dot_dimension_numbers<[1], [0], [0], [1], [0, 0, 1, 1], [], []>} : vector<16x64xbf16>, vector<64x128xbf16>, vector<16x128xf32> -> vector<16x128xf32>
    %c0_7 = arith.constant 0 : index
    %c0_8 = arith.constant 0 : index
    %8 = vector.load %arg4[%c0_7, %c0_8] : memref<1x128xf32, #tpu.memory_space<vmem>>, vector<1x128xf32>
    %9 = vector.broadcast %8 : vector<1x128xf32> to vector<16x128xf32>
    %10 = arith.addf %7, %9 : vector<16x128xf32>
    %11 = arith.truncf %1 : vector<16x64xf32> to vector<16x64xbf16>
    %c0_9 = arith.constant 0 : index
    %c0_10 = arith.constant 0 : index
    %12 = vector.load %arg5[%c0_9, %c0_10] : memref<64x64xbf16, #tpu.memory_space<vmem>>, vector<64x64xbf16>
    %cst_11 = arith.constant dense<0.000000e+00> : vector<16x64xf32>
    %13 = tpu.matmul %11, %12, %cst_11 {dimension_numbers = #tpu.dot_dimension_numbers<[1], [0], [0], [1], [0, 0, 1, 1], [], []>} : vector<16x64xbf16>, vector<64x64xbf16>, vector<16x64xf32> -> vector<16x64xf32>
    %c0_12 = arith.constant 0 : index
    %c0_13 = arith.constant 0 : index
    %14 = vector.load %arg6[%c0_12, %c0_13] : memref<1x64xf32, #tpu.memory_space<vmem>>, vector<1x64xf32>
    %15 = vector.broadcast %14 : vector<1x64xf32> to vector<16x64xf32>
    %16 = arith.addf %13, %15 : vector<16x64xf32>
    %17 = vector.extract_strided_slice %10 {offsets = [0, 0], sizes = [16, 64], strides = [1, 1]} : vector<16x128xf32> to vector<16x64xf32>
    %18 = vector.extract_strided_slice %10 {offsets = [0, 64], sizes = [16, 64], strides = [1, 1]} : vector<16x128xf32> to vector<16x64xf32>
    %19 = vector.extract_strided_slice %17 {offsets = [0, 0], sizes = [16, 16], strides = [1, 1]} : vector<16x64xf32> to vector<16x16xf32>
    %20 = arith.truncf %19 : vector<16x16xf32> to vector<16x16xbf16>
    %21 = vector.extract_strided_slice %18 {offsets = [0, 0], sizes = [16, 16], strides = [1, 1]} : vector<16x64xf32> to vector<16x16xf32>
    %22 = arith.truncf %21 : vector<16x16xf32> to vector<16x16xbf16>
    %23 = vector.extract_strided_slice %16 {offsets = [0, 0], sizes = [16, 16], strides = [1, 1]} : vector<16x64xf32> to vector<16x16xf32>
    %24 = arith.truncf %23 : vector<16x16xf32> to vector<16x16xbf16>
    %cst_14 = arith.constant dense<0.000000e+00> : vector<16x16xf32>
    %25 = tpu.matmul %20, %22, %cst_14 {dimension_numbers = #tpu.dot_dimension_numbers<[1], [1], [0], [0], [0, 0, 1, 0], [], []>} : vector<16x16xbf16>, vector<16x16xbf16>, vector<16x16xf32> -> vector<16x16xf32>
    %cst_15 = arith.constant 2.500000e-01 : f32
    %26 = vector.broadcast %cst_15 : f32 to vector<16x16xf32>
    %27 = arith.mulf %25, %26 : vector<16x16xf32>
    %cst_16 = arith.constant dense<0xFF800000> : vector<16xf32>
    %28 = vector.multi_reduction <maximumf>, %27, %cst_16 [1] : vector<16x16xf32> to vector<16xf32>
    %29 = vector.shape_cast %28 : vector<16xf32> to vector<16x1xf32>
    %30 = vector.broadcast %29 : vector<16x1xf32> to vector<16x16xf32>
    %31 = arith.subf %27, %30 : vector<16x16xf32>
    %32 = math.exp %31 : vector<16x16xf32>
    %cst_17 = arith.constant dense<0.000000e+00> : vector<16xf32>
    %33 = vector.multi_reduction <add>, %32, %cst_17 [1] : vector<16x16xf32> to vector<16xf32>
    %34 = vector.shape_cast %33 : vector<16xf32> to vector<16x1xf32>
    %35 = tpu.reciprocal %34 {approx = true} : vector<16x1xf32> -> vector<16x1xf32>
    %36 = vector.broadcast %35 : vector<16x1xf32> to vector<16x16xf32>
    %37 = arith.mulf %32, %36 : vector<16x16xf32>
    %38 = arith.truncf %37 : vector<16x16xf32> to vector<16x16xbf16>
    %cst_18 = arith.constant dense<0.000000e+00> : vector<16x16xf32>
    %39 = tpu.matmul %38, %24, %cst_18 {dimension_numbers = #tpu.dot_dimension_numbers<[1], [0], [0], [1], [0, 0, 1, 1], [], []>} : vector<16x16xbf16>, vector<16x16xbf16>, vector<16x16xf32> -> vector<16x16xf32>
    %40 = vector.extract_strided_slice %17 {offsets = [0, 16], sizes = [16, 16], strides = [1, 1]} : vector<16x64xf32> to vector<16x16xf32>
    %41 = arith.truncf %40 : vector<16x16xf32> to vector<16x16xbf16>
    %42 = vector.extract_strided_slice %18 {offsets = [0, 16], sizes = [16, 16], strides = [1, 1]} : vector<16x64xf32> to vector<16x16xf32>
    %43 = arith.truncf %42 : vector<16x16xf32> to vector<16x16xbf16>
    %44 = vector.extract_strided_slice %16 {offsets = [0, 16], sizes = [16, 16], strides = [1, 1]} : vector<16x64xf32> to vector<16x16xf32>
    %45 = arith.truncf %44 : vector<16x16xf32> to vector<16x16xbf16>
    %cst_19 = arith.constant dense<0.000000e+00> : vector<16x16xf32>
    %46 = tpu.matmul %41, %43, %cst_19 {dimension_numbers = #tpu.dot_dimension_numbers<[1], [1], [0], [0], [0, 0, 1, 0], [], []>} : vector<16x16xbf16>, vector<16x16xbf16>, vector<16x16xf32> -> vector<16x16xf32>
    %cst_20 = arith.constant 2.500000e-01 : f32
    %47 = vector.broadcast %cst_20 : f32 to vector<16x16xf32>
    %48 = arith.mulf %46, %47 : vector<16x16xf32>
    %cst_21 = arith.constant dense<0xFF800000> : vector<16xf32>
    %49 = vector.multi_reduction <maximumf>, %48, %cst_21 [1] : vector<16x16xf32> to vector<16xf32>
    %50 = vector.shape_cast %49 : vector<16xf32> to vector<16x1xf32>
    %51 = vector.broadcast %50 : vector<16x1xf32> to vector<16x16xf32>
    %52 = arith.subf %48, %51 : vector<16x16xf32>
    %53 = math.exp %52 : vector<16x16xf32>
    %cst_22 = arith.constant dense<0.000000e+00> : vector<16xf32>
    %54 = vector.multi_reduction <add>, %53, %cst_22 [1] : vector<16x16xf32> to vector<16xf32>
    %55 = vector.shape_cast %54 : vector<16xf32> to vector<16x1xf32>
    %56 = tpu.reciprocal %55 {approx = true} : vector<16x1xf32> -> vector<16x1xf32>
    %57 = vector.broadcast %56 : vector<16x1xf32> to vector<16x16xf32>
    %58 = arith.mulf %53, %57 : vector<16x16xf32>
    %59 = arith.truncf %58 : vector<16x16xf32> to vector<16x16xbf16>
    %cst_23 = arith.constant dense<0.000000e+00> : vector<16x16xf32>
    %60 = tpu.matmul %59, %45, %cst_23 {dimension_numbers = #tpu.dot_dimension_numbers<[1], [0], [0], [1], [0, 0, 1, 1], [], []>} : vector<16x16xbf16>, vector<16x16xbf16>, vector<16x16xf32> -> vector<16x16xf32>
    %61 = vector.extract_strided_slice %17 {offsets = [0, 32], sizes = [16, 16], strides = [1, 1]} : vector<16x64xf32> to vector<16x16xf32>
    %62 = arith.truncf %61 : vector<16x16xf32> to vector<16x16xbf16>
    %63 = vector.extract_strided_slice %18 {offsets = [0, 32], sizes = [16, 16], strides = [1, 1]} : vector<16x64xf32> to vector<16x16xf32>
    %64 = arith.truncf %63 : vector<16x16xf32> to vector<16x16xbf16>
    %65 = vector.extract_strided_slice %16 {offsets = [0, 32], sizes = [16, 16], strides = [1, 1]} : vector<16x64xf32> to vector<16x16xf32>
    %66 = arith.truncf %65 : vector<16x16xf32> to vector<16x16xbf16>
    %cst_24 = arith.constant dense<0.000000e+00> : vector<16x16xf32>
    %67 = tpu.matmul %62, %64, %cst_24 {dimension_numbers = #tpu.dot_dimension_numbers<[1], [1], [0], [0], [0, 0, 1, 0], [], []>} : vector<16x16xbf16>, vector<16x16xbf16>, vector<16x16xf32> -> vector<16x16xf32>
    %cst_25 = arith.constant 2.500000e-01 : f32
    %68 = vector.broadcast %cst_25 : f32 to vector<16x16xf32>
    %69 = arith.mulf %67, %68 : vector<16x16xf32>
    %cst_26 = arith.constant dense<0xFF800000> : vector<16xf32>
    %70 = vector.multi_reduction <maximumf>, %69, %cst_26 [1] : vector<16x16xf32> to vector<16xf32>
    %71 = vector.shape_cast %70 : vector<16xf32> to vector<16x1xf32>
    %72 = vector.broadcast %71 : vector<16x1xf32> to vector<16x16xf32>
    %73 = arith.subf %69, %72 : vector<16x16xf32>
    %74 = math.exp %73 : vector<16x16xf32>
    %cst_27 = arith.constant dense<0.000000e+00> : vector<16xf32>
    %75 = vector.multi_reduction <add>, %74, %cst_27 [1] : vector<16x16xf32> to vector<16xf32>
    %76 = vector.shape_cast %75 : vector<16xf32> to vector<16x1xf32>
    %77 = tpu.reciprocal %76 {approx = true} : vector<16x1xf32> -> vector<16x1xf32>
    %78 = vector.broadcast %77 : vector<16x1xf32> to vector<16x16xf32>
    %79 = arith.mulf %74, %78 : vector<16x16xf32>
    %80 = arith.truncf %79 : vector<16x16xf32> to vector<16x16xbf16>
    %cst_28 = arith.constant dense<0.000000e+00> : vector<16x16xf32>
    %81 = tpu.matmul %80, %66, %cst_28 {dimension_numbers = #tpu.dot_dimension_numbers<[1], [0], [0], [1], [0, 0, 1, 1], [], []>} : vector<16x16xbf16>, vector<16x16xbf16>, vector<16x16xf32> -> vector<16x16xf32>
    %82 = vector.extract_strided_slice %17 {offsets = [0, 48], sizes = [16, 16], strides = [1, 1]} : vector<16x64xf32> to vector<16x16xf32>
    %83 = arith.truncf %82 : vector<16x16xf32> to vector<16x16xbf16>
    %84 = vector.extract_strided_slice %18 {offsets = [0, 48], sizes = [16, 16], strides = [1, 1]} : vector<16x64xf32> to vector<16x16xf32>
    %85 = arith.truncf %84 : vector<16x16xf32> to vector<16x16xbf16>
    %86 = vector.extract_strided_slice %16 {offsets = [0, 48], sizes = [16, 16], strides = [1, 1]} : vector<16x64xf32> to vector<16x16xf32>
    %87 = arith.truncf %86 : vector<16x16xf32> to vector<16x16xbf16>
    %cst_29 = arith.constant dense<0.000000e+00> : vector<16x16xf32>
    %88 = tpu.matmul %83, %85, %cst_29 {dimension_numbers = #tpu.dot_dimension_numbers<[1], [1], [0], [0], [0, 0, 1, 0], [], []>} : vector<16x16xbf16>, vector<16x16xbf16>, vector<16x16xf32> -> vector<16x16xf32>
    %cst_30 = arith.constant 2.500000e-01 : f32
    %89 = vector.broadcast %cst_30 : f32 to vector<16x16xf32>
    %90 = arith.mulf %88, %89 : vector<16x16xf32>
    %cst_31 = arith.constant dense<0xFF800000> : vector<16xf32>
    %91 = vector.multi_reduction <maximumf>, %90, %cst_31 [1] : vector<16x16xf32> to vector<16xf32>
    %92 = vector.shape_cast %91 : vector<16xf32> to vector<16x1xf32>
    %93 = vector.broadcast %92 : vector<16x1xf32> to vector<16x16xf32>
    %94 = arith.subf %90, %93 : vector<16x16xf32>
    %95 = math.exp %94 : vector<16x16xf32>
    %cst_32 = arith.constant dense<0.000000e+00> : vector<16xf32>
    %96 = vector.multi_reduction <add>, %95, %cst_32 [1] : vector<16x16xf32> to vector<16xf32>
    %97 = vector.shape_cast %96 : vector<16xf32> to vector<16x1xf32>
    %98 = tpu.reciprocal %97 {approx = true} : vector<16x1xf32> -> vector<16x1xf32>
    %99 = vector.broadcast %98 : vector<16x1xf32> to vector<16x16xf32>
    %100 = arith.mulf %95, %99 : vector<16x16xf32>
    %101 = arith.truncf %100 : vector<16x16xf32> to vector<16x16xbf16>
    %cst_33 = arith.constant dense<0.000000e+00> : vector<16x16xf32>
    %102 = tpu.matmul %101, %87, %cst_33 {dimension_numbers = #tpu.dot_dimension_numbers<[1], [0], [0], [1], [0, 0, 1, 1], [], []>} : vector<16x16xbf16>, vector<16x16xbf16>, vector<16x16xf32> -> vector<16x16xf32>
    %103 = tpu.concatenate %39, %60, %81, %102 in 1 : vector<16x16xf32>, vector<16x16xf32>, vector<16x16xf32>, vector<16x16xf32> -> vector<16x64xf32>
    %104 = arith.truncf %103 : vector<16x64xf32> to vector<16x64xbf16>
    %c0_34 = arith.constant 0 : index
    %c0_35 = arith.constant 0 : index
    %105 = vector.load %arg7[%c0_34, %c0_35] : memref<64x64xbf16, #tpu.memory_space<vmem>>, vector<64x64xbf16>
    %cst_36 = arith.constant dense<0.000000e+00> : vector<16x64xf32>
    %106 = tpu.matmul %104, %105, %cst_36 {dimension_numbers = #tpu.dot_dimension_numbers<[1], [0], [0], [1], [0, 0, 1, 1], [], []>} : vector<16x64xbf16>, vector<64x64xbf16>, vector<16x64xf32> -> vector<16x64xf32>
    %c0_37 = arith.constant 0 : index
    %c0_38 = arith.constant 0 : index
    %107 = vector.load %arg8[%c0_37, %c0_38] : memref<1x64xf32, #tpu.memory_space<vmem>>, vector<1x64xf32>
    %108 = vector.broadcast %107 : vector<1x64xf32> to vector<16x64xf32>
    %109 = arith.addf %106, %108 : vector<16x64xf32>
    %110 = arith.addf %1, %109 : vector<16x64xf32>
    %c0_39 = arith.constant 0 : index
    %c0_40 = arith.constant 0 : index
    %111 = vector.load %arg9[%c0_39, %c0_40] : memref<1x64xf32, #tpu.memory_space<vmem>>, vector<1x64xf32>
    %c0_41 = arith.constant 0 : index
    %c0_42 = arith.constant 0 : index
    %112 = vector.load %arg10[%c0_41, %c0_42] : memref<1x64xf32, #tpu.memory_space<vmem>>, vector<1x64xf32>
    %cst_43 = arith.constant dense<0.000000e+00> : vector<16xf32>
    %113 = vector.multi_reduction <add>, %110, %cst_43 [1] : vector<16x64xf32> to vector<16xf32>
    %114 = vector.shape_cast %113 : vector<16xf32> to vector<16x1xf32>
    %cst_44 = arith.constant 6.400000e+01 : f32
    %115 = vector.broadcast %cst_44 : f32 to vector<16x1xf32>
    %116 = arith.divf %114, %115 : vector<16x1xf32>
    %117 = vector.broadcast %116 : vector<16x1xf32> to vector<16x64xf32>
    %118 = arith.subf %110, %117 : vector<16x64xf32>
    %119 = arith.mulf %118, %118 : vector<16x64xf32>
    %cst_45 = arith.constant dense<0.000000e+00> : vector<16xf32>
    %120 = vector.multi_reduction <add>, %119, %cst_45 [1] : vector<16x64xf32> to vector<16xf32>
    %121 = vector.shape_cast %120 : vector<16xf32> to vector<16x1xf32>
    %cst_46 = arith.constant 6.400000e+01 : f32
    %122 = vector.broadcast %cst_46 : f32 to vector<16x1xf32>
    %123 = arith.divf %121, %122 : vector<16x1xf32>
    %124 = vector.broadcast %116 : vector<16x1xf32> to vector<16x64xf32>
    %125 = arith.subf %110, %124 : vector<16x64xf32>
    %cst_47 = arith.constant 9.99999974E-6 : f32
    %126 = vector.broadcast %cst_47 : f32 to vector<16x1xf32>
    %127 = arith.addf %123, %126 : vector<16x1xf32>
    %128 = math.rsqrt %127 : vector<16x1xf32>
    %129 = vector.broadcast %128 : vector<16x1xf32> to vector<16x64xf32>
    %130 = arith.mulf %125, %129 : vector<16x64xf32>
    %131 = vector.broadcast %111 : vector<1x64xf32> to vector<16x64xf32>
    %132 = arith.mulf %130, %131 : vector<16x64xf32>
    %133 = vector.broadcast %112 : vector<1x64xf32> to vector<16x64xf32>
    %134 = arith.addf %132, %133 : vector<16x64xf32>
    %c0_48 = arith.constant 0 : index
    %c0_49 = arith.constant 0 : index
    %c0_50 = arith.constant 0 : index
    %135 = vector.load %arg11[%c0_48, %c0_49, %c0_50] : memref<1x16x64xf32, #tpu.memory_space<vmem>>, vector<1x16x64xf32>
    %136 = vector.shape_cast %135 : vector<1x16x64xf32> to vector<16x64xf32>
    %137 = vector.shape_cast %134 : vector<16x64xf32> to vector<1x16x64xf32>
    tpu.vector_store %arg11[%c0_48, %c0_49, %c0_50], %137 {strides = array<i32>} : memref<1x16x64xf32, #tpu.memory_space<vmem>>, vector<1x16x64xf32>,
    return
  }
  func.func @transform_0(%arg0: i32) -> (i32, i32, i32) {
    %c0_i32 = arith.constant 0 : i32
    %c0_i32_0 = arith.constant 0 : i32
    %c0_i32_1 = arith.constant 0 : i32
    return %arg0, %c0_i32, %c0_i32_0 : i32, i32, i32
  }
  func.func @transform_1(%arg0: i32) -> (i32, i32, i32) {
    %c0_i32 = arith.constant 0 : i32
    %c0_i32_0 = arith.constant 0 : i32
    %c0_i32_1 = arith.constant 0 : i32
    return %arg0, %c0_i32, %c0_i32_0 : i32, i32, i32
  }
  func.func @transform_2(%arg0: i32) -> (i32, i32) {
    %c0_i32 = arith.constant 0 : i32
    %c0_i32_0 = arith.constant 0 : i32
    %c0_i32_1 = arith.constant 0 : i32
    return %c0_i32, %c0_i32_0 : i32, i32
  }
  func.func @transform_3(%arg0: i32) -> (i32, i32) {
    %c0_i32 = arith.constant 0 : i32
    %c0_i32_0 = arith.constant 0 : i32
    %c0_i32_1 = arith.constant 0 : i32
    return %c0_i32, %c0_i32_0 : i32, i32
  }
  func.func @transform_4(%arg0: i32) -> (i32, i32) {
    %c0_i32 = arith.constant 0 : i32
    %c0_i32_0 = arith.constant 0 : i32
    %c0_i32_1 = arith.constant 0 : i32
    return %c0_i32, %c0_i32_0 : i32, i32
  }
  func.func @transform_5(%arg0: i32) -> (i32, i32) {
    %c0_i32 = arith.constant 0 : i32
    %c0_i32_0 = arith.constant 0 : i32
    %c0_i32_1 = arith.constant 0 : i32
    return %c0_i32, %c0_i32_0 : i32, i32
  }
  func.func @transform_6(%arg0: i32) -> (i32, i32) {
    %c0_i32 = arith.constant 0 : i32
    %c0_i32_0 = arith.constant 0 : i32
    %c0_i32_1 = arith.constant 0 : i32
    return %c0_i32, %c0_i32_0 : i32, i32
  }
  func.func @transform_7(%arg0: i32) -> (i32, i32) {
    %c0_i32 = arith.constant 0 : i32
    %c0_i32_0 = arith.constant 0 : i32
    %c0_i32_1 = arith.constant 0 : i32
    return %c0_i32, %c0_i32_0 : i32, i32
  }
  func.func @transform_8(%arg0: i32) -> (i32, i32) {
    %c0_i32 = arith.constant 0 : i32
    %c0_i32_0 = arith.constant 0 : i32
    %c0_i32_1 = arith.constant 0 : i32
    return %c0_i32, %c0_i32_0 : i32, i32
  }
  func.func @transform_9(%arg0: i32) -> (i32, i32) {
    %c0_i32 = arith.constant 0 : i32
    %c0_i32_0 = arith.constant 0 : i32
    %c0_i32_1 = arith.constant 0 : i32
    return %c0_i32, %c0_i32_0 : i32, i32
  }
  func.func @transform_10(%arg0: i32) -> (i32, i32, i32) {
    %c0_i32 = arith.constant 0 : i32
    %c0_i32_0 = arith.constant 0 : i32
    %c0_i32_1 = arith.constant 0 : i32
    return %arg0, %c0_i32, %c0_i32_0 : i32, i32, i32
  }
}

module attributes {stable_mosaic.version = 11 : i64} {
  func.func @_ffn_block_kernel(%arg0: i32, %arg1: memref<32x64xf32, #tpu.memory_space<vmem>>, %arg2: memref<64x128xbf16, #tpu.memory_space<vmem>>, %arg3: memref<1x128xf32, #tpu.memory_space<vmem>>, %arg4: memref<128x64xbf16, #tpu.memory_space<vmem>>, %arg5: memref<1x64xf32, #tpu.memory_space<vmem>>, %arg6: memref<1x64xf32, #tpu.memory_space<vmem>>, %arg7: memref<1x64xf32, #tpu.memory_space<vmem>>, %arg8: memref<32x64xf32, #tpu.memory_space<vmem>>) attributes {dimension_semantics = [#tpu.dimension_semantics<parallel>], iteration_bounds = array<i64: 1>, scalar_prefetch = 0 : i64, scratch_operands = 0 : i64, tpu.core_type = #tpu.core_type<tc>, window_params = [{transform_indices = @transform_0, window_bounds = array<i64: 32, 64>}, {pipeline_mode = #tpu.pipeline_mode<synchronous>, transform_indices = @transform_1, window_bounds = array<i64: 64, 128>}, {pipeline_mode = #tpu.pipeline_mode<synchronous>, transform_indices = @transform_2, window_bounds = array<i64: 1, 128>}, {pipeline_mode = #tpu.pipeline_mode<synchronous>, transform_indices = @transform_3, window_bounds = array<i64: 128, 64>}, {pipeline_mode = #tpu.pipeline_mode<synchronous>, transform_indices = @transform_4, window_bounds = array<i64: 1, 64>}, {pipeline_mode = #tpu.pipeline_mode<synchronous>, transform_indices = @transform_5, window_bounds = array<i64: 1, 64>}, {pipeline_mode = #tpu.pipeline_mode<synchronous>, transform_indices = @transform_6, window_bounds = array<i64: 1, 64>}, {transform_indices = @transform_7, window_bounds = array<i64: 32, 64>}]} {
    %c0 = arith.constant 0 : index
    %c0_0 = arith.constant 0 : index
    %0 = vector.load %arg1[%c0, %c0_0] : memref<32x64xf32, #tpu.memory_space<vmem>>, vector<32x64xf32>
    %1 = arith.truncf %0 : vector<32x64xf32> to vector<32x64xbf16>
    %c0_1 = arith.constant 0 : index
    %c0_2 = arith.constant 0 : index
    %2 = vector.load %arg2[%c0_1, %c0_2] : memref<64x128xbf16, #tpu.memory_space<vmem>>, vector<64x128xbf16>
    %cst = arith.constant dense<0.000000e+00> : vector<32x128xf32>
    %3 = tpu.matmul %1, %2, %cst {dimension_numbers = #tpu.dot_dimension_numbers<[1], [0], [0], [1], [0, 0, 1, 1], [], []>} : vector<32x64xbf16>, vector<64x128xbf16>, vector<32x128xf32> -> vector<32x128xf32>
    %c0_3 = arith.constant 0 : index
    %c0_4 = arith.constant 0 : index
    %4 = vector.load %arg3[%c0_3, %c0_4] : memref<1x128xf32, #tpu.memory_space<vmem>>, vector<1x128xf32>
    %5 = vector.broadcast %4 : vector<1x128xf32> to vector<32x128xf32>
    %6 = arith.addf %3, %5 : vector<32x128xf32>
    %cst_5 = arith.constant 0.000000e+00 : f32
    %7 = vector.broadcast %cst_5 : f32 to vector<32x128xf32>
    %8 = arith.maximumf %6, %7 : vector<32x128xf32>
    %9 = arith.truncf %8 : vector<32x128xf32> to vector<32x128xbf16>
    %c0_6 = arith.constant 0 : index
    %c0_7 = arith.constant 0 : index
    %10 = vector.load %arg4[%c0_6, %c0_7] : memref<128x64xbf16, #tpu.memory_space<vmem>>, vector<128x64xbf16>
    %cst_8 = arith.constant dense<0.000000e+00> : vector<32x64xf32>
    %11 = tpu.matmul %9, %10, %cst_8 {dimension_numbers = #tpu.dot_dimension_numbers<[1], [0], [0], [1], [0, 0, 1, 1], [], []>} : vector<32x128xbf16>, vector<128x64xbf16>, vector<32x64xf32> -> vector<32x64xf32>
    %c0_9 = arith.constant 0 : index
    %c0_10 = arith.constant 0 : index
    %12 = vector.load %arg5[%c0_9, %c0_10] : memref<1x64xf32, #tpu.memory_space<vmem>>, vector<1x64xf32>
    %13 = vector.broadcast %12 : vector<1x64xf32> to vector<32x64xf32>
    %14 = arith.addf %11, %13 : vector<32x64xf32>
    %15 = arith.addf %0, %14 : vector<32x64xf32>
    %c0_11 = arith.constant 0 : index
    %c0_12 = arith.constant 0 : index
    %16 = vector.load %arg6[%c0_11, %c0_12] : memref<1x64xf32, #tpu.memory_space<vmem>>, vector<1x64xf32>
    %c0_13 = arith.constant 0 : index
    %c0_14 = arith.constant 0 : index
    %17 = vector.load %arg7[%c0_13, %c0_14] : memref<1x64xf32, #tpu.memory_space<vmem>>, vector<1x64xf32>
    %cst_15 = arith.constant dense<0.000000e+00> : vector<32xf32>
    %18 = vector.multi_reduction <add>, %15, %cst_15 [1] : vector<32x64xf32> to vector<32xf32>
    %19 = vector.shape_cast %18 : vector<32xf32> to vector<32x1xf32>
    %cst_16 = arith.constant 6.400000e+01 : f32
    %20 = vector.broadcast %cst_16 : f32 to vector<32x1xf32>
    %21 = arith.divf %19, %20 : vector<32x1xf32>
    %22 = vector.broadcast %21 : vector<32x1xf32> to vector<32x64xf32>
    %23 = arith.subf %15, %22 : vector<32x64xf32>
    %24 = arith.mulf %23, %23 : vector<32x64xf32>
    %cst_17 = arith.constant dense<0.000000e+00> : vector<32xf32>
    %25 = vector.multi_reduction <add>, %24, %cst_17 [1] : vector<32x64xf32> to vector<32xf32>
    %26 = vector.shape_cast %25 : vector<32xf32> to vector<32x1xf32>
    %cst_18 = arith.constant 6.400000e+01 : f32
    %27 = vector.broadcast %cst_18 : f32 to vector<32x1xf32>
    %28 = arith.divf %26, %27 : vector<32x1xf32>
    %29 = vector.broadcast %21 : vector<32x1xf32> to vector<32x64xf32>
    %30 = arith.subf %15, %29 : vector<32x64xf32>
    %cst_19 = arith.constant 9.99999974E-6 : f32
    %31 = vector.broadcast %cst_19 : f32 to vector<32x1xf32>
    %32 = arith.addf %28, %31 : vector<32x1xf32>
    %33 = math.rsqrt %32 : vector<32x1xf32>
    %34 = vector.broadcast %33 : vector<32x1xf32> to vector<32x64xf32>
    %35 = arith.mulf %30, %34 : vector<32x64xf32>
    %36 = vector.broadcast %16 : vector<1x64xf32> to vector<32x64xf32>
    %37 = arith.mulf %35, %36 : vector<32x64xf32>
    %38 = vector.broadcast %17 : vector<1x64xf32> to vector<32x64xf32>
    %39 = arith.addf %37, %38 : vector<32x64xf32>
    %c0_20 = arith.constant 0 : index
    %c0_21 = arith.constant 0 : index
    %40 = vector.load %arg8[%c0_20, %c0_21] : memref<32x64xf32, #tpu.memory_space<vmem>>, vector<32x64xf32>
    tpu.vector_store %arg8[%c0_20, %c0_21], %39 {strides = array<i32>} : memref<32x64xf32, #tpu.memory_space<vmem>>, vector<32x64xf32>,
    return
  }
  func.func @transform_0(%arg0: i32) -> (i32, i32) {
    %c0_i32 = arith.constant 0 : i32
    %c0_i32_0 = arith.constant 0 : i32
    return %arg0, %c0_i32 : i32, i32
  }
  func.func @transform_1(%arg0: i32) -> (i32, i32) {
    %c0_i32 = arith.constant 0 : i32
    %c0_i32_0 = arith.constant 0 : i32
    %c0_i32_1 = arith.constant 0 : i32
    return %c0_i32, %c0_i32_0 : i32, i32
  }
  func.func @transform_2(%arg0: i32) -> (i32, i32) {
    %c0_i32 = arith.constant 0 : i32
    %c0_i32_0 = arith.constant 0 : i32
    %c0_i32_1 = arith.constant 0 : i32
    return %c0_i32, %c0_i32_0 : i32, i32
  }
  func.func @transform_3(%arg0: i32) -> (i32, i32) {
    %c0_i32 = arith.constant 0 : i32
    %c0_i32_0 = arith.constant 0 : i32
    %c0_i32_1 = arith.constant 0 : i32
    return %c0_i32, %c0_i32_0 : i32, i32
  }
  func.func @transform_4(%arg0: i32) -> (i32, i32) {
    %c0_i32 = arith.constant 0 : i32
    %c0_i32_0 = arith.constant 0 : i32
    %c0_i32_1 = arith.constant 0 : i32
    return %c0_i32, %c0_i32_0 : i32, i32
  }
  func.func @transform_5(%arg0: i32) -> (i32, i32) {
    %c0_i32 = arith.constant 0 : i32
    %c0_i32_0 = arith.constant 0 : i32
    %c0_i32_1 = arith.constant 0 : i32
    return %c0_i32, %c0_i32_0 : i32, i32
  }
  func.func @transform_6(%arg0: i32) -> (i32, i32) {
    %c0_i32 = arith.constant 0 : i32
    %c0_i32_0 = arith.constant 0 : i32
    %c0_i32_1 = arith.constant 0 : i32
    return %c0_i32, %c0_i32_0 : i32, i32
  }
  func.func @transform_7(%arg0: i32) -> (i32, i32) {
    %c0_i32 = arith.constant 0 : i32
    %c0_i32_0 = arith.constant 0 : i32
    return %arg0, %c0_i32 : i32, i32
  }
}

module attributes {stable_mosaic.version = 11 : i64} {
  func.func @_cross_attn_block_kernel(%arg0: i32, %arg1: memref<1x16x64xf32, #tpu.memory_space<vmem>>, %arg2: memref<1x16x64xf32, #tpu.memory_space<vmem>>, %arg3: memref<1x20x64xf32, #tpu.memory_space<vmem>>, %arg4: memref<1x20x64xf32, #tpu.memory_space<vmem>>, %arg5: memref<64x64xbf16, #tpu.memory_space<vmem>>, %arg6: memref<1x64xf32, #tpu.memory_space<vmem>>, %arg7: memref<64x64xbf16, #tpu.memory_space<vmem>>, %arg8: memref<1x64xf32, #tpu.memory_space<vmem>>, %arg9: memref<64x64xbf16, #tpu.memory_space<vmem>>, %arg10: memref<1x64xf32, #tpu.memory_space<vmem>>, %arg11: memref<64x64xbf16, #tpu.memory_space<vmem>>, %arg12: memref<1x64xf32, #tpu.memory_space<vmem>>, %arg13: memref<1x64xf32, #tpu.memory_space<vmem>>, %arg14: memref<1x64xf32, #tpu.memory_space<vmem>>, %arg15: memref<1x16x64xf32, #tpu.memory_space<vmem>>) attributes {dimension_semantics = [#tpu.dimension_semantics<parallel>], iteration_bounds = array<i64: 2>, scalar_prefetch = 0 : i64, scratch_operands = 0 : i64, tpu.core_type = #tpu.core_type<tc>, window_params = [{transform_indices = @transform_0, window_bounds = array<i64: 1, 16, 64>}, {transform_indices = @transform_1, window_bounds = array<i64: 1, 16, 64>}, {transform_indices = @transform_2, window_bounds = array<i64: 1, 20, 64>}, {transform_indices = @transform_3, window_bounds = array<i64: 1, 20, 64>}, {pipeline_mode = #tpu.pipeline_mode<synchronous>, transform_indices = @transform_4, window_bounds = array<i64: 64, 64>}, {pipeline_mode = #tpu.pipeline_mode<synchronous>, transform_indices = @transform_5, window_bounds = array<i64: 1, 64>}, {pipeline_mode = #tpu.pipeline_mode<synchronous>, transform_indices = @transform_6, window_bounds = array<i64: 64, 64>}, {pipeline_mode = #tpu.pipeline_mode<synchronous>, transform_indices = @transform_7, window_bounds = array<i64: 1, 64>}, {pipeline_mode = #tpu.pipeline_mode<synchronous>, transform_indices = @transform_8, window_bounds = array<i64: 64, 64>}, {pipeline_mode = #tpu.pipeline_mode<synchronous>, transform_indices = @transform_9, window_bounds = array<i64: 1, 64>}, {pipeline_mode = #tpu.pipeline_mode<synchronous>, transform_indices = @transform_10, window_bounds = array<i64: 64, 64>}, {pipeline_mode = #tpu.pipeline_mode<synchronous>, transform_indices = @transform_11, window_bounds = array<i64: 1, 64>}, {pipeline_mode = #tpu.pipeline_mode<synchronous>, transform_indices = @transform_12, window_bounds = array<i64: 1, 64>}, {pipeline_mode = #tpu.pipeline_mode<synchronous>, transform_indices = @transform_13, window_bounds = array<i64: 1, 64>}, {transform_indices = @transform_14, window_bounds = array<i64: 1, 16, 64>}]} {
    %c0 = arith.constant 0 : index
    %c0_0 = arith.constant 0 : index
    %c0_1 = arith.constant 0 : index
    %0 = vector.load %arg1[%c0, %c0_0, %c0_1] : memref<1x16x64xf32, #tpu.memory_space<vmem>>, vector<1x16x64xf32>
    %1 = vector.shape_cast %0 : vector<1x16x64xf32> to vector<16x64xf32>
    %c0_2 = arith.constant 0 : index
    %c0_3 = arith.constant 0 : index
    %c0_4 = arith.constant 0 : index
    %2 = vector.load %arg2[%c0_2, %c0_3, %c0_4] : memref<1x16x64xf32, #tpu.memory_space<vmem>>, vector<1x16x64xf32>
    %3 = vector.shape_cast %2 : vector<1x16x64xf32> to vector<16x64xf32>
    %c0_5 = arith.constant 0 : index
    %c0_6 = arith.constant 0 : index
    %c0_7 = arith.constant 0 : index
    %4 = vector.load %arg3[%c0_5, %c0_6, %c0_7] : memref<1x20x64xf32, #tpu.memory_space<vmem>>, vector<1x20x64xf32>
    %5 = vector.shape_cast %4 : vector<1x20x64xf32> to vector<20x64xf32>
    %c0_8 = arith.constant 0 : index
    %c0_9 = arith.constant 0 : index
    %c0_10 = arith.constant 0 : index
    %6 = vector.load %arg4[%c0_8, %c0_9, %c0_10] : memref<1x20x64xf32, #tpu.memory_space<vmem>>, vector<1x20x64xf32>
    %7 = vector.shape_cast %6 : vector<1x20x64xf32> to vector<20x64xf32>
    %8 = arith.addf %1, %3 : vector<16x64xf32>
    %9 = arith.truncf %8 : vector<16x64xf32> to vector<16x64xbf16>
    %c0_11 = arith.constant 0 : index
    %c0_12 = arith.constant 0 : index
    %10 = vector.load %arg5[%c0_11, %c0_12] : memref<64x64xbf16, #tpu.memory_space<vmem>>, vector<64x64xbf16>
    %cst = arith.constant dense<0.000000e+00> : vector<16x64xf32>
    %11 = tpu.matmul %9, %10, %cst {dimension_numbers = #tpu.dot_dimension_numbers<[1], [0], [0], [1], [0, 0, 1, 1], [], []>} : vector<16x64xbf16>, vector<64x64xbf16>, vector<16x64xf32> -> vector<16x64xf32>
    %c0_13 = arith.constant 0 : index
    %c0_14 = arith.constant 0 : index
    %12 = vector.load %arg6[%c0_13, %c0_14] : memref<1x64xf32, #tpu.memory_space<vmem>>, vector<1x64xf32>
    %13 = vector.broadcast %12 : vector<1x64xf32> to vector<16x64xf32>
    %14 = arith.addf %11, %13 : vector<16x64xf32>
    %15 = arith.addf %5, %7 : vector<20x64xf32>
    %16 = arith.truncf %15 : vector<20x64xf32> to vector<20x64xbf16>
    %c0_15 = arith.constant 0 : index
    %c0_16 = arith.constant 0 : index
    %17 = vector.load %arg7[%c0_15, %c0_16] : memref<64x64xbf16, #tpu.memory_space<vmem>>, vector<64x64xbf16>
    %cst_17 = arith.constant dense<0.000000e+00> : vector<20x64xf32>
    %18 = tpu.matmul %16, %17, %cst_17 {dimension_numbers = #tpu.dot_dimension_numbers<[1], [0], [0], [1], [0, 0, 1, 1], [], []>} : vector<20x64xbf16>, vector<64x64xbf16>, vector<20x64xf32> -> vector<20x64xf32>
    %c0_18 = arith.constant 0 : index
    %c0_19 = arith.constant 0 : index
    %19 = vector.load %arg8[%c0_18, %c0_19] : memref<1x64xf32, #tpu.memory_space<vmem>>, vector<1x64xf32>
    %20 = vector.broadcast %19 : vector<1x64xf32> to vector<20x64xf32>
    %21 = arith.addf %18, %20 : vector<20x64xf32>
    %22 = arith.truncf %5 : vector<20x64xf32> to vector<20x64xbf16>
    %c0_20 = arith.constant 0 : index
    %c0_21 = arith.constant 0 : index
    %23 = vector.load %arg9[%c0_20, %c0_21] : memref<64x64xbf16, #tpu.memory_space<vmem>>, vector<64x64xbf16>
    %cst_22 = arith.constant dense<0.000000e+00> : vector<20x64xf32>
    %24 = tpu.matmul %22, %23, %cst_22 {dimension_numbers = #tpu.dot_dimension_numbers<[1], [0], [0], [1], [0, 0, 1, 1], [], []>} : vector<20x64xbf16>, vector<64x64xbf16>, vector<20x64xf32> -> vector<20x64xf32>
    %c0_23 = arith.constant 0 : index
    %c0_24 = arith.constant 0 : index
    %25 = vector.load %arg10[%c0_23, %c0_24] : memref<1x64xf32, #tpu.memory_space<vmem>>, vector<1x64xf32>
    %26 = vector.broadcast %25 : vector<1x64xf32> to vector<20x64xf32>
    %27 = arith.addf %24, %26 : vector<20x64xf32>
    %28 = vector.extract_strided_slice %14 {offsets = [0, 0], sizes = [16, 16], strides = [1, 1]} : vector<16x64xf32> to vector<16x16xf32>
    %29 = arith.truncf %28 : vector<16x16xf32> to vector<16x16xbf16>
    %30 = vector.extract_strided_slice %21 {offsets = [0, 0], sizes = [20, 16], strides = [1, 1]} : vector<20x64xf32> to vector<20x16xf32>
    %31 = arith.truncf %30 : vector<20x16xf32> to vector<20x16xbf16>
    %32 = vector.extract_strided_slice %27 {offsets = [0, 0], sizes = [20, 16], strides = [1, 1]} : vector<20x64xf32> to vector<20x16xf32>
    %33 = arith.truncf %32 : vector<20x16xf32> to vector<20x16xbf16>
    %cst_25 = arith.constant dense<0.000000e+00> : vector<16x20xf32>
    %34 = tpu.matmul %29, %31, %cst_25 {dimension_numbers = #tpu.dot_dimension_numbers<[1], [1], [0], [0], [0, 0, 1, 0], [], []>} : vector<16x16xbf16>, vector<20x16xbf16>, vector<16x20xf32> -> vector<16x20xf32>
    %cst_26 = arith.constant 2.500000e-01 : f32
    %35 = vector.broadcast %cst_26 : f32 to vector<16x20xf32>
    %36 = arith.mulf %34, %35 : vector<16x20xf32>
    %cst_27 = arith.constant dense<0xFF800000> : vector<16xf32>
    %37 = vector.multi_reduction <maximumf>, %36, %cst_27 [1] : vector<16x20xf32> to vector<16xf32>
    %38 = vector.shape_cast %37 : vector<16xf32> to vector<16x1xf32>
    %39 = vector.broadcast %38 : vector<16x1xf32> to vector<16x20xf32>
    %40 = arith.subf %36, %39 : vector<16x20xf32>
    %41 = math.exp %40 : vector<16x20xf32>
    %cst_28 = arith.constant dense<0.000000e+00> : vector<16xf32>
    %42 = vector.multi_reduction <add>, %41, %cst_28 [1] : vector<16x20xf32> to vector<16xf32>
    %43 = vector.shape_cast %42 : vector<16xf32> to vector<16x1xf32>
    %44 = tpu.reciprocal %43 {approx = true} : vector<16x1xf32> -> vector<16x1xf32>
    %45 = vector.broadcast %44 : vector<16x1xf32> to vector<16x20xf32>
    %46 = arith.mulf %41, %45 : vector<16x20xf32>
    %47 = arith.truncf %46 : vector<16x20xf32> to vector<16x20xbf16>
    %cst_29 = arith.constant dense<0.000000e+00> : vector<16x16xf32>
    %48 = tpu.matmul %47, %33, %cst_29 {dimension_numbers = #tpu.dot_dimension_numbers<[1], [0], [0], [1], [0, 0, 1, 1], [], []>} : vector<16x20xbf16>, vector<20x16xbf16>, vector<16x16xf32> -> vector<16x16xf32>
    %49 = vector.extract_strided_slice %14 {offsets = [0, 16], sizes = [16, 16], strides = [1, 1]} : vector<16x64xf32> to vector<16x16xf32>
    %50 = arith.truncf %49 : vector<16x16xf32> to vector<16x16xbf16>
    %51 = vector.extract_strided_slice %21 {offsets = [0, 16], sizes = [20, 16], strides = [1, 1]} : vector<20x64xf32> to vector<20x16xf32>
    %52 = arith.truncf %51 : vector<20x16xf32> to vector<20x16xbf16>
    %53 = vector.extract_strided_slice %27 {offsets = [0, 16], sizes = [20, 16], strides = [1, 1]} : vector<20x64xf32> to vector<20x16xf32>
    %54 = arith.truncf %53 : vector<20x16xf32> to vector<20x16xbf16>
    %cst_30 = arith.constant dense<0.000000e+00> : vector<16x20xf32>
    %55 = tpu.matmul %50, %52, %cst_30 {dimension_numbers = #tpu.dot_dimension_numbers<[1], [1], [0], [0], [0, 0, 1, 0], [], []>} : vector<16x16xbf16>, vector<20x16xbf16>, vector<16x20xf32> -> vector<16x20xf32>
    %cst_31 = arith.constant 2.500000e-01 : f32
    %56 = vector.broadcast %cst_31 : f32 to vector<16x20xf32>
    %57 = arith.mulf %55, %56 : vector<16x20xf32>
    %cst_32 = arith.constant dense<0xFF800000> : vector<16xf32>
    %58 = vector.multi_reduction <maximumf>, %57, %cst_32 [1] : vector<16x20xf32> to vector<16xf32>
    %59 = vector.shape_cast %58 : vector<16xf32> to vector<16x1xf32>
    %60 = vector.broadcast %59 : vector<16x1xf32> to vector<16x20xf32>
    %61 = arith.subf %57, %60 : vector<16x20xf32>
    %62 = math.exp %61 : vector<16x20xf32>
    %cst_33 = arith.constant dense<0.000000e+00> : vector<16xf32>
    %63 = vector.multi_reduction <add>, %62, %cst_33 [1] : vector<16x20xf32> to vector<16xf32>
    %64 = vector.shape_cast %63 : vector<16xf32> to vector<16x1xf32>
    %65 = tpu.reciprocal %64 {approx = true} : vector<16x1xf32> -> vector<16x1xf32>
    %66 = vector.broadcast %65 : vector<16x1xf32> to vector<16x20xf32>
    %67 = arith.mulf %62, %66 : vector<16x20xf32>
    %68 = arith.truncf %67 : vector<16x20xf32> to vector<16x20xbf16>
    %cst_34 = arith.constant dense<0.000000e+00> : vector<16x16xf32>
    %69 = tpu.matmul %68, %54, %cst_34 {dimension_numbers = #tpu.dot_dimension_numbers<[1], [0], [0], [1], [0, 0, 1, 1], [], []>} : vector<16x20xbf16>, vector<20x16xbf16>, vector<16x16xf32> -> vector<16x16xf32>
    %70 = vector.extract_strided_slice %14 {offsets = [0, 32], sizes = [16, 16], strides = [1, 1]} : vector<16x64xf32> to vector<16x16xf32>
    %71 = arith.truncf %70 : vector<16x16xf32> to vector<16x16xbf16>
    %72 = vector.extract_strided_slice %21 {offsets = [0, 32], sizes = [20, 16], strides = [1, 1]} : vector<20x64xf32> to vector<20x16xf32>
    %73 = arith.truncf %72 : vector<20x16xf32> to vector<20x16xbf16>
    %74 = vector.extract_strided_slice %27 {offsets = [0, 32], sizes = [20, 16], strides = [1, 1]} : vector<20x64xf32> to vector<20x16xf32>
    %75 = arith.truncf %74 : vector<20x16xf32> to vector<20x16xbf16>
    %cst_35 = arith.constant dense<0.000000e+00> : vector<16x20xf32>
    %76 = tpu.matmul %71, %73, %cst_35 {dimension_numbers = #tpu.dot_dimension_numbers<[1], [1], [0], [0], [0, 0, 1, 0], [], []>} : vector<16x16xbf16>, vector<20x16xbf16>, vector<16x20xf32> -> vector<16x20xf32>
    %cst_36 = arith.constant 2.500000e-01 : f32
    %77 = vector.broadcast %cst_36 : f32 to vector<16x20xf32>
    %78 = arith.mulf %76, %77 : vector<16x20xf32>
    %cst_37 = arith.constant dense<0xFF800000> : vector<16xf32>
    %79 = vector.multi_reduction <maximumf>, %78, %cst_37 [1] : vector<16x20xf32> to vector<16xf32>
    %80 = vector.shape_cast %79 : vector<16xf32> to vector<16x1xf32>
    %81 = vector.broadcast %80 : vector<16x1xf32> to vector<16x20xf32>
    %82 = arith.subf %78, %81 : vector<16x20xf32>
    %83 = math.exp %82 : vector<16x20xf32>
    %cst_38 = arith.constant dense<0.000000e+00> : vector<16xf32>
    %84 = vector.multi_reduction <add>, %83, %cst_38 [1] : vector<16x20xf32> to vector<16xf32>
    %85 = vector.shape_cast %84 : vector<16xf32> to vector<16x1xf32>
    %86 = tpu.reciprocal %85 {approx = true} : vector<16x1xf32> -> vector<16x1xf32>
    %87 = vector.broadcast %86 : vector<16x1xf32> to vector<16x20xf32>
    %88 = arith.mulf %83, %87 : vector<16x20xf32>
    %89 = arith.truncf %88 : vector<16x20xf32> to vector<16x20xbf16>
    %cst_39 = arith.constant dense<0.000000e+00> : vector<16x16xf32>
    %90 = tpu.matmul %89, %75, %cst_39 {dimension_numbers = #tpu.dot_dimension_numbers<[1], [0], [0], [1], [0, 0, 1, 1], [], []>} : vector<16x20xbf16>, vector<20x16xbf16>, vector<16x16xf32> -> vector<16x16xf32>
    %91 = vector.extract_strided_slice %14 {offsets = [0, 48], sizes = [16, 16], strides = [1, 1]} : vector<16x64xf32> to vector<16x16xf32>
    %92 = arith.truncf %91 : vector<16x16xf32> to vector<16x16xbf16>
    %93 = vector.extract_strided_slice %21 {offsets = [0, 48], sizes = [20, 16], strides = [1, 1]} : vector<20x64xf32> to vector<20x16xf32>
    %94 = arith.truncf %93 : vector<20x16xf32> to vector<20x16xbf16>
    %95 = vector.extract_strided_slice %27 {offsets = [0, 48], sizes = [20, 16], strides = [1, 1]} : vector<20x64xf32> to vector<20x16xf32>
    %96 = arith.truncf %95 : vector<20x16xf32> to vector<20x16xbf16>
    %cst_40 = arith.constant dense<0.000000e+00> : vector<16x20xf32>
    %97 = tpu.matmul %92, %94, %cst_40 {dimension_numbers = #tpu.dot_dimension_numbers<[1], [1], [0], [0], [0, 0, 1, 0], [], []>} : vector<16x16xbf16>, vector<20x16xbf16>, vector<16x20xf32> -> vector<16x20xf32>
    %cst_41 = arith.constant 2.500000e-01 : f32
    %98 = vector.broadcast %cst_41 : f32 to vector<16x20xf32>
    %99 = arith.mulf %97, %98 : vector<16x20xf32>
    %cst_42 = arith.constant dense<0xFF800000> : vector<16xf32>
    %100 = vector.multi_reduction <maximumf>, %99, %cst_42 [1] : vector<16x20xf32> to vector<16xf32>
    %101 = vector.shape_cast %100 : vector<16xf32> to vector<16x1xf32>
    %102 = vector.broadcast %101 : vector<16x1xf32> to vector<16x20xf32>
    %103 = arith.subf %99, %102 : vector<16x20xf32>
    %104 = math.exp %103 : vector<16x20xf32>
    %cst_43 = arith.constant dense<0.000000e+00> : vector<16xf32>
    %105 = vector.multi_reduction <add>, %104, %cst_43 [1] : vector<16x20xf32> to vector<16xf32>
    %106 = vector.shape_cast %105 : vector<16xf32> to vector<16x1xf32>
    %107 = tpu.reciprocal %106 {approx = true} : vector<16x1xf32> -> vector<16x1xf32>
    %108 = vector.broadcast %107 : vector<16x1xf32> to vector<16x20xf32>
    %109 = arith.mulf %104, %108 : vector<16x20xf32>
    %110 = arith.truncf %109 : vector<16x20xf32> to vector<16x20xbf16>
    %cst_44 = arith.constant dense<0.000000e+00> : vector<16x16xf32>
    %111 = tpu.matmul %110, %96, %cst_44 {dimension_numbers = #tpu.dot_dimension_numbers<[1], [0], [0], [1], [0, 0, 1, 1], [], []>} : vector<16x20xbf16>, vector<20x16xbf16>, vector<16x16xf32> -> vector<16x16xf32>
    %112 = tpu.concatenate %48, %69, %90, %111 in 1 : vector<16x16xf32>, vector<16x16xf32>, vector<16x16xf32>, vector<16x16xf32> -> vector<16x64xf32>
    %113 = arith.truncf %112 : vector<16x64xf32> to vector<16x64xbf16>
    %c0_45 = arith.constant 0 : index
    %c0_46 = arith.constant 0 : index
    %114 = vector.load %arg11[%c0_45, %c0_46] : memref<64x64xbf16, #tpu.memory_space<vmem>>, vector<64x64xbf16>
    %cst_47 = arith.constant dense<0.000000e+00> : vector<16x64xf32>
    %115 = tpu.matmul %113, %114, %cst_47 {dimension_numbers = #tpu.dot_dimension_numbers<[1], [0], [0], [1], [0, 0, 1, 1], [], []>} : vector<16x64xbf16>, vector<64x64xbf16>, vector<16x64xf32> -> vector<16x64xf32>
    %c0_48 = arith.constant 0 : index
    %c0_49 = arith.constant 0 : index
    %116 = vector.load %arg12[%c0_48, %c0_49] : memref<1x64xf32, #tpu.memory_space<vmem>>, vector<1x64xf32>
    %117 = vector.broadcast %116 : vector<1x64xf32> to vector<16x64xf32>
    %118 = arith.addf %115, %117 : vector<16x64xf32>
    %119 = arith.addf %1, %118 : vector<16x64xf32>
    %c0_50 = arith.constant 0 : index
    %c0_51 = arith.constant 0 : index
    %120 = vector.load %arg13[%c0_50, %c0_51] : memref<1x64xf32, #tpu.memory_space<vmem>>, vector<1x64xf32>
    %c0_52 = arith.constant 0 : index
    %c0_53 = arith.constant 0 : index
    %121 = vector.load %arg14[%c0_52, %c0_53] : memref<1x64xf32, #tpu.memory_space<vmem>>, vector<1x64xf32>
    %cst_54 = arith.constant dense<0.000000e+00> : vector<16xf32>
    %122 = vector.multi_reduction <add>, %119, %cst_54 [1] : vector<16x64xf32> to vector<16xf32>
    %123 = vector.shape_cast %122 : vector<16xf32> to vector<16x1xf32>
    %cst_55 = arith.constant 6.400000e+01 : f32
    %124 = vector.broadcast %cst_55 : f32 to vector<16x1xf32>
    %125 = arith.divf %123, %124 : vector<16x1xf32>
    %126 = vector.broadcast %125 : vector<16x1xf32> to vector<16x64xf32>
    %127 = arith.subf %119, %126 : vector<16x64xf32>
    %128 = arith.mulf %127, %127 : vector<16x64xf32>
    %cst_56 = arith.constant dense<0.000000e+00> : vector<16xf32>
    %129 = vector.multi_reduction <add>, %128, %cst_56 [1] : vector<16x64xf32> to vector<16xf32>
    %130 = vector.shape_cast %129 : vector<16xf32> to vector<16x1xf32>
    %cst_57 = arith.constant 6.400000e+01 : f32
    %131 = vector.broadcast %cst_57 : f32 to vector<16x1xf32>
    %132 = arith.divf %130, %131 : vector<16x1xf32>
    %133 = vector.broadcast %125 : vector<16x1xf32> to vector<16x64xf32>
    %134 = arith.subf %119, %133 : vector<16x64xf32>
    %cst_58 = arith.constant 9.99999974E-6 : f32
    %135 = vector.broadcast %cst_58 : f32 to vector<16x1xf32>
    %136 = arith.addf %132, %135 : vector<16x1xf32>
    %137 = math.rsqrt %136 : vector<16x1xf32>
    %138 = vector.broadcast %137 : vector<16x1xf32> to vector<16x64xf32>
    %139 = arith.mulf %134, %138 : vector<16x64xf32>
    %140 = vector.broadcast %120 : vector<1x64xf32> to vector<16x64xf32>
    %141 = arith.mulf %139, %140 : vector<16x64xf32>
    %142 = vector.broadcast %121 : vector<1x64xf32> to vector<16x64xf32>
    %143 = arith.addf %141, %142 : vector<16x64xf32>
    %c0_59 = arith.constant 0 : index
    %c0_60 = arith.constant 0 : index
    %c0_61 = arith.constant 0 : index
    %144 = vector.load %arg15[%c0_59, %c0_60, %c0_61] : memref<1x16x64xf32, #tpu.memory_space<vmem>>, vector<1x16x64xf32>
    %145 = vector.shape_cast %144 : vector<1x16x64xf32> to vector<16x64xf32>
    %146 = vector.shape_cast %143 : vector<16x64xf32> to vector<1x16x64xf32>
    tpu.vector_store %arg15[%c0_59, %c0_60, %c0_61], %146 {strides = array<i32>} : memref<1x16x64xf32, #tpu.memory_space<vmem>>, vector<1x16x64xf32>,
    return
  }
  func.func @transform_0(%arg0: i32) -> (i32, i32, i32) {
    %c0_i32 = arith.constant 0 : i32
    %c0_i32_0 = arith.constant 0 : i32
    %c0_i32_1 = arith.constant 0 : i32
    return %arg0, %c0_i32, %c0_i32_0 : i32, i32, i32
  }
  func.func @transform_1(%arg0: i32) -> (i32, i32, i32) {
    %c0_i32 = arith.constant 0 : i32
    %c0_i32_0 = arith.constant 0 : i32
    %c0_i32_1 = arith.constant 0 : i32
    return %arg0, %c0_i32, %c0_i32_0 : i32, i32, i32
  }
  func.func @transform_2(%arg0: i32) -> (i32, i32, i32) {
    %c0_i32 = arith.constant 0 : i32
    %c0_i32_0 = arith.constant 0 : i32
    %c0_i32_1 = arith.constant 0 : i32
    return %arg0, %c0_i32, %c0_i32_0 : i32, i32, i32
  }
  func.func @transform_3(%arg0: i32) -> (i32, i32, i32) {
    %c0_i32 = arith.constant 0 : i32
    %c0_i32_0 = arith.constant 0 : i32
    %c0_i32_1 = arith.constant 0 : i32
    return %arg0, %c0_i32, %c0_i32_0 : i32, i32, i32
  }
  func.func @transform_4(%arg0: i32) -> (i32, i32) {
    %c0_i32 = arith.constant 0 : i32
    %c0_i32_0 = arith.constant 0 : i32
    %c0_i32_1 = arith.constant 0 : i32
    return %c0_i32, %c0_i32_0 : i32, i32
  }
  func.func @transform_5(%arg0: i32) -> (i32, i32) {
    %c0_i32 = arith.constant 0 : i32
    %c0_i32_0 = arith.constant 0 : i32
    %c0_i32_1 = arith.constant 0 : i32
    return %c0_i32, %c0_i32_0 : i32, i32
  }
  func.func @transform_6(%arg0: i32) -> (i32, i32) {
    %c0_i32 = arith.constant 0 : i32
    %c0_i32_0 = arith.constant 0 : i32
    %c0_i32_1 = arith.constant 0 : i32
    return %c0_i32, %c0_i32_0 : i32, i32
  }
  func.func @transform_7(%arg0: i32) -> (i32, i32) {
    %c0_i32 = arith.constant 0 : i32
    %c0_i32_0 = arith.constant 0 : i32
    %c0_i32_1 = arith.constant 0 : i32
    return %c0_i32, %c0_i32_0 : i32, i32
  }
  func.func @transform_8(%arg0: i32) -> (i32, i32) {
    %c0_i32 = arith.constant 0 : i32
    %c0_i32_0 = arith.constant 0 : i32
    %c0_i32_1 = arith.constant 0 : i32
    return %c0_i32, %c0_i32_0 : i32, i32
  }
  func.func @transform_9(%arg0: i32) -> (i32, i32) {
    %c0_i32 = arith.constant 0 : i32
    %c0_i32_0 = arith.constant 0 : i32
    %c0_i32_1 = arith.constant 0 : i32
    return %c0_i32, %c0_i32_0 : i32, i32
  }
  func.func @transform_10(%arg0: i32) -> (i32, i32) {
    %c0_i32 = arith.constant 0 : i32
    %c0_i32_0 = arith.constant 0 : i32
    %c0_i32_1 = arith.constant 0 : i32
    return %c0_i32, %c0_i32_0 : i32, i32
  }
  func.func @transform_11(%arg0: i32) -> (i32, i32) {
    %c0_i32 = arith.constant 0 : i32
    %c0_i32_0 = arith.constant 0 : i32
    %c0_i32_1 = arith.constant 0 : i32
    return %c0_i32, %c0_i32_0 : i32, i32
  }
  func.func @transform_12(%arg0: i32) -> (i32, i32) {
    %c0_i32 = arith.constant 0 : i32
    %c0_i32_0 = arith.constant 0 : i32
    %c0_i32_1 = arith.constant 0 : i32
    return %c0_i32, %c0_i32_0 : i32, i32
  }
  func.func @transform_13(%arg0: i32) -> (i32, i32) {
    %c0_i32 = arith.constant 0 : i32
    %c0_i32_0 = arith.constant 0 : i32
    %c0_i32_1 = arith.constant 0 : i32
    return %c0_i32, %c0_i32_0 : i32, i32
  }
  func.func @transform_14(%arg0: i32) -> (i32, i32, i32) {
    %c0_i32 = arith.constant 0 : i32
    %c0_i32_0 = arith.constant 0 : i32
    %c0_i32_1 = arith.constant 0 : i32
    return %arg0, %c0_i32, %c0_i32_0 : i32, i32, i32
  }
}

module attributes {stable_mosaic.version = 11 : i64} {
  func.func @_dec_head_kernel(%arg0: i32, %arg1: memref<32x64xf32, #tpu.memory_space<vmem>>, %arg2: memref<1x64xf32, #tpu.memory_space<vmem>>, %arg3: memref<1x64xf32, #tpu.memory_space<vmem>>, %arg4: memref<64x64xbf16, #tpu.memory_space<vmem>>, %arg5: memref<1x64xf32, #tpu.memory_space<vmem>>, %arg6: memref<64x64xbf16, #tpu.memory_space<vmem>>, %arg7: memref<1x64xf32, #tpu.memory_space<vmem>>, %arg8: memref<32x64xf32, #tpu.memory_space<vmem>>, %arg9: memref<32x64xf32, #tpu.memory_space<vmem>>) attributes {dimension_semantics = [#tpu.dimension_semantics<parallel>], iteration_bounds = array<i64: 1>, scalar_prefetch = 0 : i64, scratch_operands = 0 : i64, tpu.core_type = #tpu.core_type<tc>, window_params = [{transform_indices = @transform_0, window_bounds = array<i64: 32, 64>}, {pipeline_mode = #tpu.pipeline_mode<synchronous>, transform_indices = @transform_1, window_bounds = array<i64: 1, 64>}, {pipeline_mode = #tpu.pipeline_mode<synchronous>, transform_indices = @transform_2, window_bounds = array<i64: 1, 64>}, {pipeline_mode = #tpu.pipeline_mode<synchronous>, transform_indices = @transform_3, window_bounds = array<i64: 64, 64>}, {pipeline_mode = #tpu.pipeline_mode<synchronous>, transform_indices = @transform_4, window_bounds = array<i64: 1, 64>}, {pipeline_mode = #tpu.pipeline_mode<synchronous>, transform_indices = @transform_5, window_bounds = array<i64: 64, 64>}, {pipeline_mode = #tpu.pipeline_mode<synchronous>, transform_indices = @transform_6, window_bounds = array<i64: 1, 64>}, {transform_indices = @transform_7, window_bounds = array<i64: 32, 64>}, {transform_indices = @transform_8, window_bounds = array<i64: 32, 64>}]} {
    %c0 = arith.constant 0 : index
    %c0_0 = arith.constant 0 : index
    %0 = vector.load %arg1[%c0, %c0_0] : memref<32x64xf32, #tpu.memory_space<vmem>>, vector<32x64xf32>
    %c0_1 = arith.constant 0 : index
    %c0_2 = arith.constant 0 : index
    %1 = vector.load %arg2[%c0_1, %c0_2] : memref<1x64xf32, #tpu.memory_space<vmem>>, vector<1x64xf32>
    %c0_3 = arith.constant 0 : index
    %c0_4 = arith.constant 0 : index
    %2 = vector.load %arg3[%c0_3, %c0_4] : memref<1x64xf32, #tpu.memory_space<vmem>>, vector<1x64xf32>
    %cst = arith.constant dense<0.000000e+00> : vector<32xf32>
    %3 = vector.multi_reduction <add>, %0, %cst [1] : vector<32x64xf32> to vector<32xf32>
    %4 = vector.shape_cast %3 : vector<32xf32> to vector<32x1xf32>
    %cst_5 = arith.constant 6.400000e+01 : f32
    %5 = vector.broadcast %cst_5 : f32 to vector<32x1xf32>
    %6 = arith.divf %4, %5 : vector<32x1xf32>
    %7 = vector.broadcast %6 : vector<32x1xf32> to vector<32x64xf32>
    %8 = arith.subf %0, %7 : vector<32x64xf32>
    %9 = arith.mulf %8, %8 : vector<32x64xf32>
    %cst_6 = arith.constant dense<0.000000e+00> : vector<32xf32>
    %10 = vector.multi_reduction <add>, %9, %cst_6 [1] : vector<32x64xf32> to vector<32xf32>
    %11 = vector.shape_cast %10 : vector<32xf32> to vector<32x1xf32>
    %cst_7 = arith.constant 6.400000e+01 : f32
    %12 = vector.broadcast %cst_7 : f32 to vector<32x1xf32>
    %13 = arith.divf %11, %12 : vector<32x1xf32>
    %14 = vector.broadcast %6 : vector<32x1xf32> to vector<32x64xf32>
    %15 = arith.subf %0, %14 : vector<32x64xf32>
    %cst_8 = arith.constant 9.99999974E-6 : f32
    %16 = vector.broadcast %cst_8 : f32 to vector<32x1xf32>
    %17 = arith.addf %13, %16 : vector<32x1xf32>
    %18 = math.rsqrt %17 : vector<32x1xf32>
    %19 = vector.broadcast %18 : vector<32x1xf32> to vector<32x64xf32>
    %20 = arith.mulf %15, %19 : vector<32x64xf32>
    %21 = vector.broadcast %1 : vector<1x64xf32> to vector<32x64xf32>
    %22 = arith.mulf %20, %21 : vector<32x64xf32>
    %23 = vector.broadcast %2 : vector<1x64xf32> to vector<32x64xf32>
    %24 = arith.addf %22, %23 : vector<32x64xf32>
    %c0_9 = arith.constant 0 : index
    %c0_10 = arith.constant 0 : index
    %25 = vector.load %arg8[%c0_9, %c0_10] : memref<32x64xf32, #tpu.memory_space<vmem>>, vector<32x64xf32>
    tpu.vector_store %arg8[%c0_9, %c0_10], %24 {strides = array<i32>} : memref<32x64xf32, #tpu.memory_space<vmem>>, vector<32x64xf32>,
    %26 = arith.truncf %24 : vector<32x64xf32> to vector<32x64xbf16>
    %c0_11 = arith.constant 0 : index
    %c0_12 = arith.constant 0 : index
    %27 = vector.load %arg4[%c0_11, %c0_12] : memref<64x64xbf16, #tpu.memory_space<vmem>>, vector<64x64xbf16>
    %cst_13 = arith.constant dense<0.000000e+00> : vector<32x64xf32>
    %28 = tpu.matmul %26, %27, %cst_13 {dimension_numbers = #tpu.dot_dimension_numbers<[1], [0], [0], [1], [0, 0, 1, 1], [], []>} : vector<32x64xbf16>, vector<64x64xbf16>, vector<32x64xf32> -> vector<32x64xf32>
    %c0_14 = arith.constant 0 : index
    %c0_15 = arith.constant 0 : index
    %29 = vector.load %arg5[%c0_14, %c0_15] : memref<1x64xf32, #tpu.memory_space<vmem>>, vector<1x64xf32>
    %30 = vector.broadcast %29 : vector<1x64xf32> to vector<32x64xf32>
    %31 = arith.addf %28, %30 : vector<32x64xf32>
    %cst_16 = arith.constant 0.000000e+00 : f32
    %32 = vector.broadcast %cst_16 : f32 to vector<32x64xf32>
    %33 = arith.maximumf %31, %32 : vector<32x64xf32>
    %34 = arith.truncf %33 : vector<32x64xf32> to vector<32x64xbf16>
    %c0_17 = arith.constant 0 : index
    %c0_18 = arith.constant 0 : index
    %35 = vector.load %arg6[%c0_17, %c0_18] : memref<64x64xbf16, #tpu.memory_space<vmem>>, vector<64x64xbf16>
    %cst_19 = arith.constant dense<0.000000e+00> : vector<32x64xf32>
    %36 = tpu.matmul %34, %35, %cst_19 {dimension_numbers = #tpu.dot_dimension_numbers<[1], [0], [0], [1], [0, 0, 1, 1], [], []>} : vector<32x64xbf16>, vector<64x64xbf16>, vector<32x64xf32> -> vector<32x64xf32>
    %c0_20 = arith.constant 0 : index
    %c0_21 = arith.constant 0 : index
    %37 = vector.load %arg7[%c0_20, %c0_21] : memref<1x64xf32, #tpu.memory_space<vmem>>, vector<1x64xf32>
    %38 = vector.broadcast %37 : vector<1x64xf32> to vector<32x64xf32>
    %39 = arith.addf %36, %38 : vector<32x64xf32>
    %cst_22 = arith.constant 0.000000e+00 : f32
    %40 = vector.broadcast %cst_22 : f32 to vector<32x64xf32>
    %41 = arith.maximumf %39, %40 : vector<32x64xf32>
    %c0_23 = arith.constant 0 : index
    %c0_24 = arith.constant 0 : index
    %42 = vector.load %arg9[%c0_23, %c0_24] : memref<32x64xf32, #tpu.memory_space<vmem>>, vector<32x64xf32>
    tpu.vector_store %arg9[%c0_23, %c0_24], %41 {strides = array<i32>} : memref<32x64xf32, #tpu.memory_space<vmem>>, vector<32x64xf32>,
    return
  }
  func.func @transform_0(%arg0: i32) -> (i32, i32) {
    %c0_i32 = arith.constant 0 : i32
    %c0_i32_0 = arith.constant 0 : i32
    return %arg0, %c0_i32 : i32, i32
  }
  func.func @transform_1(%arg0: i32) -> (i32, i32) {
    %c0_i32 = arith.constant 0 : i32
    %c0_i32_0 = arith.constant 0 : i32
    %c0_i32_1 = arith.constant 0 : i32
    return %c0_i32, %c0_i32_0 : i32, i32
  }
  func.func @transform_2(%arg0: i32) -> (i32, i32) {
    %c0_i32 = arith.constant 0 : i32
    %c0_i32_0 = arith.constant 0 : i32
    %c0_i32_1 = arith.constant 0 : i32
    return %c0_i32, %c0_i32_0 : i32, i32
  }
  func.func @transform_3(%arg0: i32) -> (i32, i32) {
    %c0_i32 = arith.constant 0 : i32
    %c0_i32_0 = arith.constant 0 : i32
    %c0_i32_1 = arith.constant 0 : i32
    return %c0_i32, %c0_i32_0 : i32, i32
  }
  func.func @transform_4(%arg0: i32) -> (i32, i32) {
    %c0_i32 = arith.constant 0 : i32
    %c0_i32_0 = arith.constant 0 : i32
    %c0_i32_1 = arith.constant 0 : i32
    return %c0_i32, %c0_i32_0 : i32, i32
  }
  func.func @transform_5(%arg0: i32) -> (i32, i32) {
    %c0_i32 = arith.constant 0 : i32
    %c0_i32_0 = arith.constant 0 : i32
    %c0_i32_1 = arith.constant 0 : i32
    return %c0_i32, %c0_i32_0 : i32, i32
  }
  func.func @transform_6(%arg0: i32) -> (i32, i32) {
    %c0_i32 = arith.constant 0 : i32
    %c0_i32_0 = arith.constant 0 : i32
    %c0_i32_1 = arith.constant 0 : i32
    return %c0_i32, %c0_i32_0 : i32, i32
  }
  func.func @transform_7(%arg0: i32) -> (i32, i32) {
    %c0_i32 = arith.constant 0 : i32
    %c0_i32_0 = arith.constant 0 : i32
    return %arg0, %c0_i32 : i32, i32
  }
  func.func @transform_8(%arg0: i32) -> (i32, i32) {
    %c0_i32 = arith.constant 0 : i32
    %c0_i32_0 = arith.constant 0 : i32
    return %arg0, %c0_i32 : i32, i32
  }
}

</mosaic_0001>

<llo_original>
// kernel: dino_forward.17
$region0: #{dino_forward.17}
  #allocation0 [shape = 'u32[]', space=smem, size = 0x4, offset = 0x4, fixed_abs, tag = 'smem constant byte address 0x4 - core index']
  #allocation1 [shape = 'u32[144,128]{1,0:T(1,128)}', space=vmem, size = 0x12000, scoped, tag = 'internal scratch']
  %s0 = inlined_call_operand.vmem [shape: f32[32,192], index: 0, kind: input, shape index: {}]
  %s1 = inlined_call_operand.vmem [shape: bf16[192,32], index: 1, kind: input, shape index: {}]
  %s2 = inlined_call_operand.vmem [shape: f32[1,32], index: 2, kind: input, shape index: {}]
  %s3 = inlined_call_operand.vmem [shape: f32[32,32], index: 3, kind: output, shape index: {}]
  %s4 = sld [smem:[#allocation0]]
  $region22: #{dino_forward.17} parent=0
    _
  %s6 = ssub.s32 1, %s4
  %s7 = scalar_select 0, %s6, %s4
  // Predicated region
  $region2: #{dino_forward.17} parent=0 // pred_check
    _
  $region3: #{dino_forward.17} parent=0 // pred_check_branch
    %9 = sbr.rel (0) target = $region5
  $region4: #{dino_forward.17} parent=0 // pred_region
    _
  $region5: #{dino_forward.17} parent=0 // pred_fallthru
    _
  // Predicated region
  $region6: #{dino_forward.17} parent=0 // pred_check
    _
  $region7: #{dino_forward.17} parent=0 // pred_check_branch
    %11 = sbr.rel (0) target = $region9
  $region8: #{dino_forward.17} parent=0 // pred_region
    _
  $region9: #{dino_forward.17} parent=0 // pred_fallthru
    _
  // Predicated region
  $region10: #{dino_forward.17} parent=0 // pred_check
    _
  $region11: #{dino_forward.17} parent=0 // pred_check_branch
    %13 = sbr.rel (0) target = $region13
  $region12: #{dino_forward.17} parent=0 // pred_region
    _
  $region13: #{dino_forward.17} parent=0 // pred_fallthru
    _
  %v15 = vld [vmem:[%s0] sm:$0xff]
  %v16 = vld [vmem:[%s0 + $0x8] sm:$0xff]
  %v17 = vld [vmem:[%s0 + $0x10] sm:$0xff]
  %v18 = vld [vmem:[%s0 + $0x18] sm:$0xff]
  %v19 = vld [vmem:[%s0 + $0x20] sm:$0xff]
  %v20 = vld [vmem:[%s0 + $0x28] sm:$0xff]
  %v21 = vld [vmem:[%s0 + $0x30] sm:$0xff]
  %v22 = vld [vmem:[%s0 + $0x38] sm:$0xff]
  %v23 = vpack.c.bf16 %v17, %v15
  %v24 = vpack.c.bf16 %v18, %v16
  %v25 = vpack.c.bf16 %v21, %v19
  %v26 = vpack.c.bf16 %v22, %v20
  %v27 = vld [vmem:[%s1] sm:$0xf]
  %v28 = vld [vmem:[%s1 + $0x4] sm:$0xf]
  %v29 = vld [vmem:[%s1 + $0x8] sm:$0xf]
  %v30 = vld [vmem:[%s1 + $0xc] sm:$0xf]
  %v31 = vld [vmem:[%s1 + $0x10] sm:$0xf]
  %v32 = vld [vmem:[%s1 + $0x14] sm:$0xf]
  %v33 = vld [vmem:[%s1 + $0x18] sm:$0xf]
  %v34 = vld [vmem:[%s1 + $0x1c] sm:$0xf]
  %v35 = vld [vmem:[%s1 + $0x20] sm:$0xf]
  %v36 = vld [vmem:[%s1 + $0x24] sm:$0xf]
  %v37 = vld [vmem:[%s1 + $0x28] sm:$0xf]
  %v38 = vld [vmem:[%s1 + $0x2c] sm:$0xf]
  %v39 = vld [vmem:[%s1 + $0x30] sm:$0xf]
  %v40 = vld [vmem:[%s1 + $0x34] sm:$0xf]
  %v41 = vld [vmem:[%s1 + $0x38] sm:$0xf]
  %v42 = vld [vmem:[%s1 + $0x3c] sm:$0xf]
  %v43 = vld [vmem:[%s1 + $0x40] sm:$0xf]
  %v44 = vld [vmem:[%s1 + $0x44] sm:$0xf]
  %v45 = vld [vmem:[%s1 + $0x48] sm:$0xf]
  %v46 = vld [vmem:[%s1 + $0x4c] sm:$0xf]
  %v47 = vld [vmem:[%s1 + $0x50] sm:$0xf]
  %v48 = vld [vmem:[%s1 + $0x54] sm:$0xf]
  %v49 = vld [vmem:[%s1 + $0x58] sm:$0xf]
  %v50 = vld [vmem:[%s1 + $0x5c] sm:$0xf]
  %v51 = vld [vmem:[%s2] sm:$0x1]
  %v53 = vlaneseq
  %v54 = vshrl.u32 %v53, 7
  %v55 = vsub.s32 0, %v54
  %v56 = vrot.slane %v51, %v55
  %v82 = vunpack.c.l.b16 %v27
  %v83 = vunpack.c.l.b16 %v28
  %v84 = vunpack.c.l.b16 %v29
  %v85 = vunpack.c.l.b16 %v30
  %v86 = vunpack.c.l.b16 %v31
  %v87 = vunpack.c.l.b16 %v32
  %v88 = vunpack.c.l.b16 %v33
  %v89 = vunpack.c.l.b16 %v34
  %v90 = vunpack.c.l.b16 %v35
  %v91 = vunpack.c.l.b16 %v36
  %v92 = vunpack.c.l.b16 %v37
  %v93 = vunpack.c.l.b16 %v38
  %v94 = vunpack.c.l.b16 %v39
  %v95 = vunpack.c.l.b16 %v40
  %v96 = vunpack.c.l.b16 %v41
  %v97 = vunpack.c.l.b16 %v42
  %v98 = vunpack.c.l.b16 %v43
  %v99 = vunpack.c.l.b16 %v44
  %v100 = vunpack.c.l.b16 %v45
  %v101 = vunpack.c.l.b16 %v46
  %v102 = vunpack.c.l.b16 %v47
  %v103 = vunpack.c.l.b16 %v48
  %v104 = vunpack.c.l.b16 %v49
  %v105 = vunpack.c.l.b16 %v50
  %v106 = vpack.c.b16 %v83, %v82
  %v107 = vpack.c.b16 %v85, %v84
  %v108 = vpack.c.b16 %v87, %v86
  %v109 = vpack.c.b16 %v89, %v88
  %v110 = vpack.c.b16 %v91, %v90
  %v111 = vpack.c.b16 %v93, %v92
  %v112 = vpack.c.b16 %v95, %v94
  %v113 = vpack.c.b16 %v97, %v96
  %v114 = vpack.c.b16 %v99, %v98
  %v115 = vpack.c.b16 %v101, %v100
  %v116 = vpack.c.b16 %v103, %v102
  %v117 = vpack.c.b16 %v105, %v104
  %vm130 = vcmask 523264
  %v132 = vsel %vm130, %v24, 0
  %v135 = vsel %vm130, %v26, 0
  %137 = vmatprep.subr.bf16.mxu0 0
  %138 = vmatpush1.bf16.msra.mxu0 %v113
  %139 = vmatprep.subr.bf16.mxu0 0
  %140 = vmatpush1.bf16.msra.mxu0 %v112
  %141 = vmatprep.subr.bf16.mxu0 0
  %142 = vmatpush1.bf16.msra.mxu0 %v111
  %143 = vmatprep.subr.bf16.mxu0 0
  %144 = vmatpush1.bf16.msra.mxu0 %v110
  %145 = vmatprep.subr.bf16.mxu0 0
  %146 = vmatpush1.bf16.msra.mxu0 %v109
  %147 = vmatprep.subr.bf16.mxu0 0
  %148 = vmatpush1.bf16.msra.mxu0 %v108
  %149 = vmatprep.subr.bf16.mxu0 0
  %150 = vmatpush1.bf16.msra.mxu0 %v107
  %151 = vmatprep.subr.bf16.mxu0 0
  %152 = vmatpush1.bf16.msra.mxu0 %v106
  %153 = vmatprep.subr.bf16.mxu0 0
  %154 = vmatpush2.bf16.msra.mxu0 0
  %155 = vmatprep.subr.bf16.mxu0 0
  %156 = vmatpush2.bf16.msra.mxu0 0
  %157 = vmatprep.subr.bf16.mxu0 0
  %158 = vmatpush2.bf16.msra.mxu0 0
  %159 = vmatprep.subr.bf16.mxu0 0
  %160 = vmatpush2.bf16.msra.mxu0 0
  %161 = vmatprep.subr.bf16.mxu0 0
  %162 = vmatpush2.bf16.msra.mxu0 %v117
  %163 = vmatprep.subr.bf16.mxu0 0
  %164 = vmatpush2.bf16.msra.mxu0 %v116
  %165 = vmatprep.subr.bf16.mxu0 0
  %166 = vmatpush2.bf16.msra.mxu0 %v115
  %167 = vmatprep.subr.bf16.mxu0 0
  %168 = vmatpush2.bf16.msra.mxu0 %v114
  %169 = vmatprep.mubr.bf16.mxu0 %v132
  %170 = vmatmul.mubr.bf16.gmra.mxu0 %v23
  %v171 = vpop.f32.mrf.mxu0
  %v172 = vadd.f32 %v56, %v171
  %v173 = vpop.f32.mrf.mxu0
  %v174 = vpop.f32.mrf.mxu0
  %v175 = vadd.f32 %v56, %v174
  %v176 = vpop.f32.mrf.mxu0
  %177 = vmatprep.mubr.bf16.mxu0 %v135
  %178 = vmatmul.mubr.bf16.gmra.mxu0 %v25
  %v179 = vpop.f32.mrf.mxu0
  %v180 = vadd.f32 %v56, %v179
  %v181 = vpop.f32.mrf.mxu0
  %v182 = vpop.f32.mrf.mxu0
  %v183 = vadd.f32 %v56, %v182
  %v184 = vpop.f32.mrf.mxu0
  %185 = vdwg.mxu0
  %v186 = vmax.f32 %v172, 0.0
  %v187 = vmax.f32 %v175, 0.0
  %v188 = vmax.f32 %v180, 0.0
  %v189 = vmax.f32 %v183, 0.0
  %vm190 = vcmask 261120
  %191 = vst.msk [vmem:[%s3] sm:$0xff] %vm190, %v186
  %192 = vst.msk [vmem:[%s3 + $0x8] sm:$0xff] %vm190, %v187
  %193 = vst.msk [vmem:[%s3 + $0x10] sm:$0xff] %vm190, %v188
  %194 = vst.msk [vmem:[%s3 + $0x18] sm:$0xff] %vm190, %v189
  // Predicated region
  $region14: #{dino_forward.17} parent=0 // pred_check
    _
  $region15: #{dino_forward.17} parent=0 // pred_check_branch
    %196 = sbr.rel (0) target = $region17
  $region16: #{dino_forward.17} parent=0 // pred_region
    _
  $region17: #{dino_forward.17} parent=0 // pred_fallthru
    _
  // Predicated region
  $region18: #{dino_forward.17} parent=0 // pred_check
    _
  $region19: #{dino_forward.17} parent=0 // pred_check_branch
    %198 = sbr.rel (0) target = $region21
  $region20: #{dino_forward.17} parent=0 // pred_region
    _
  $region21: #{dino_forward.17} parent=0 // pred_fallthru
    _

// kernel: dino_forward.18
$region0: #{dino_forward.18}
  #allocation0 [shape = 'u32[]', space=smem, size = 0x4, offset = 0x4, fixed_abs, tag = 'smem constant byte address 0x4 - core index']
  #allocation1 [shape = 'u32[144,128]{1,0:T(1,128)}', space=vmem, size = 0x12000, scoped, tag = 'internal scratch']
  %s0 = inlined_call_operand.vmem [shape: f32[8,128], index: 0, kind: input, shape index: {}]
  %s1 = inlined_call_operand.vmem [shape: bf16[128,64], index: 1, kind: input, shape index: {}]
  %s2 = inlined_call_operand.vmem [shape: f32[1,64], index: 2, kind: input, shape index: {}]
  %s3 = inlined_call_operand.vmem [shape: f32[8,64], index: 3, kind: output, shape index: {}]
  %s4 = sld [smem:[#allocation0]]
  $region22: #{dino_forward.18} parent=0
    _
  %s6 = ssub.s32 1, %s4
  %s7 = scalar_select 0, %s6, %s4
  // Predicated region
  $region2: #{dino_forward.18} parent=0 // pred_check
    _
  $region3: #{dino_forward.18} parent=0 // pred_check_branch
    %9 = sbr.rel (0) target = $region5
  $region4: #{dino_forward.18} parent=0 // pred_region
    _
  $region5: #{dino_forward.18} parent=0 // pred_fallthru
    _
  // Predicated region
  $region6: #{dino_forward.18} parent=0 // pred_check
    _
  $region7: #{dino_forward.18} parent=0 // pred_check_branch
    %11 = sbr.rel (0) target = $region9
  $region8: #{dino_forward.18} parent=0 // pred_region
    _
  $region9: #{dino_forward.18} parent=0 // pred_fallthru
    _
  // Predicated region
  $region10: #{dino_forward.18} parent=0 // pred_check
    _
  $region11: #{dino_forward.18} parent=0 // pred_check_branch
    %13 = sbr.rel (0) target = $region13
  $region12: #{dino_forward.18} parent=0 // pred_region
    _
  $region13: #{dino_forward.18} parent=0 // pred_fallthru
    _
  %v15 = vld [vmem:[%s0] sm:$0xff]
  %v16 = vpack.c.bf16 %v15, %v15
  %v17 = vld [vmem:[%s1] sm:$0xf]
  %v18 = vld [vmem:[%s1 + $0x4] sm:$0xf]
  %v19 = vld [vmem:[%s1 + $0x8] sm:$0xf]
  %v20 = vld [vmem:[%s1 + $0xc] sm:$0xf]
  %v21 = vld [vmem:[%s1 + $0x10] sm:$0xf]
  %v22 = vld [vmem:[%s1 + $0x14] sm:$0xf]
  %v23 = vld [vmem:[%s1 + $0x18] sm:$0xf]
  %v24 = vld [vmem:[%s1 + $0x1c] sm:$0xf]
  %v25 = vld [vmem:[%s1 + $0x20] sm:$0xf]
  %v26 = vld [vmem:[%s1 + $0x24] sm:$0xf]
  %v27 = vld [vmem:[%s1 + $0x28] sm:$0xf]
  %v28 = vld [vmem:[%s1 + $0x2c] sm:$0xf]
  %v29 = vld [vmem:[%s1 + $0x30] sm:$0xf]
  %v30 = vld [vmem:[%s1 + $0x34] sm:$0xf]
  %v31 = vld [vmem:[%s1 + $0x38] sm:$0xf]
  %v32 = vld [vmem:[%s1 + $0x3c] sm:$0xf]
  %v33 = vld [vmem:[%s2] sm:$0x1]
  %v35 = vlaneseq
  %v36 = vshrl.u32 %v35, 7
  %v37 = vsub.s32 0, %v36
  %v38 = vrot.slane %v33, %v37
  %v56 = vunpack.c.l.b16 %v17
  %v57 = vunpack.c.l.b16 %v18
  %v58 = vunpack.c.l.b16 %v19
  %v59 = vunpack.c.l.b16 %v20
  %v60 = vunpack.c.l.b16 %v21
  %v61 = vunpack.c.l.b16 %v22
  %v62 = vunpack.c.l.b16 %v23
  %v63 = vunpack.c.l.b16 %v24
  %v64 = vunpack.c.l.b16 %v25
  %v65 = vunpack.c.l.b16 %v26
  %v66 = vunpack.c.l.b16 %v27
  %v67 = vunpack.c.l.b16 %v28
  %v68 = vunpack.c.l.b16 %v29
  %v69 = vunpack.c.l.b16 %v30
  %v70 = vunpack.c.l.b16 %v31
  %v71 = vunpack.c.l.b16 %v32
  %v72 = vpack.c.b16 %v57, %v56
  %v73 = vpack.c.b16 %v59, %v58
  %v74 = vpack.c.b16 %v61, %v60
  %v75 = vpack.c.b16 %v63, %v62
  %v76 = vpack.c.b16 %v65, %v64
  %v77 = vpack.c.b16 %v67, %v66
  %v78 = vpack.c.b16 %v69, %v68
  %v79 = vpack.c.b16 %v71, %v70
  %88 = vmatprep.subr.bf16.mxu0 0
  %89 = vmatpush1.bf16.msra.mxu0 %v79
  %90 = vmatprep.subr.bf16.mxu0 0
  %91 = vmatpush1.bf16.msra.mxu0 %v78
  %92 = vmatprep.subr.bf16.mxu0 0
  %93 = vmatpush1.bf16.msra.mxu0 %v77
  %94 = vmatprep.subr.bf16.mxu0 0
  %95 = vmatpush1.bf16.msra.mxu0 %v76
  %96 = vmatprep.subr.bf16.mxu0 0
  %97 = vmatpush1.bf16.msra.mxu0 %v75
  %98 = vmatprep.subr.bf16.mxu0 0
  %99 = vmatpush1.bf16.msra.mxu0 %v74
  %100 = vmatprep.subr.bf16.mxu0 0
  %101 = vmatpush1.bf16.msra.mxu0 %v73
  %102 = vmatprep.subr.bf16.mxu0 0
  %103 = vmatpush1.bf16.msra.mxu0 %v72
  %104 = vmatprep.subr.bf16.mxu0 0
  %105 = vmatpush2.bf16.msra.mxu0 0
  %106 = vmatprep.subr.bf16.mxu0 0
  %107 = vmatpush2.bf16.msra.mxu0 0
  %108 = vmatprep.subr.bf16.mxu0 0
  %109 = vmatpush2.bf16.msra.mxu0 0
  %110 = vmatprep.subr.bf16.mxu0 0
  %111 = vmatpush2.bf16.msra.mxu0 0
  %112 = vmatprep.subr.bf16.mxu0 0
  %113 = vmatpush2.bf16.msra.mxu0 0
  %114 = vmatprep.subr.bf16.mxu0 0
  %115 = vmatpush2.bf16.msra.mxu0 0
  %116 = vmatprep.subr.bf16.mxu0 0
  %117 = vmatpush2.bf16.msra.mxu0 0
  %118 = vmatprep.subr.bf16.mxu0 0
  %119 = vmatpush2.bf16.msra.mxu0 0
  %120 = vmatprep.mubr.bf16.mxu0 0
  %121 = vmatmul.mubr.bf16.gmra.mxu0 %v16
  %v122 = vpop.f32.mrf.mxu0
  %v123 = vadd.f32 %v38, %v122
  %v124 = vpop.f32.mrf.mxu0
  %v125 = vpop.f32.mrf.mxu0
  %v126 = vpop.f32.mrf.mxu0
  %127 = vdwg.mxu0
  %v128 = vmax.f32 %v123, 0.0
  %vm129 = vcmask 523264
  %130 = vst.msk [vmem:[%s3] sm:$0xff] %vm129, %v128
  // Predicated region
  $region14: #{dino_forward.18} parent=0 // pred_check
    _
  $region15: #{dino_forward.18} parent=0 // pred_check_branch
    %132 = sbr.rel (0) target = $region17
  $region16: #{dino_forward.18} parent=0 // pred_region
    _
  $region17: #{dino_forward.18} parent=0 // pred_fallthru
    _
  // Predicated region
  $region18: #{dino_forward.18} parent=0 // pred_check
    _
  $region19: #{dino_forward.18} parent=0 // pred_check_branch
    %134 = sbr.rel (0) target = $region21
  $region20: #{dino_forward.18} parent=0 // pred_region
    _
  $region21: #{dino_forward.18} parent=0 // pred_fallthru
    _

// kernel: dino_forward.20
$region0: #{dino_forward.20}
  #allocation0 [shape = 'u32[]', space=smem, size = 0x4, offset = 0x4, fixed_abs, tag = 'smem constant byte address 0x4 - core index']
  #allocation1 [shape = 'u32[144,128]{1,0:T(1,128)}', space=vmem, size = 0x12000, scoped, tag = 'internal scratch']
  %s0 = inlined_call_operand.vmem [shape: f32[8,64], index: 0, kind: input, shape index: {}]
  %s1 = inlined_call_operand.vmem [shape: bf16[64,64], index: 1, kind: input, shape index: {}]
  %s2 = inlined_call_operand.vmem [shape: f32[1,64], index: 2, kind: input, shape index: {}]
  %s3 = inlined_call_operand.vmem [shape: f32[8,64], index: 3, kind: output, shape index: {}]
  %s4 = sld [smem:[#allocation0]]
  $region22: #{dino_forward.20} parent=0
    _
  %s6 = ssub.s32 1, %s4
  %s7 = scalar_select 0, %s6, %s4
  // Predicated region
  $region2: #{dino_forward.20} parent=0 // pred_check
    _
  $region3: #{dino_forward.20} parent=0 // pred_check_branch
    %9 = sbr.rel (0) target = $region5
  $region4: #{dino_forward.20} parent=0 // pred_region
    _
  $region5: #{dino_forward.20} parent=0 // pred_fallthru
    _
  // Predicated region
  $region6: #{dino_forward.20} parent=0 // pred_check
    _
  $region7: #{dino_forward.20} parent=0 // pred_check_branch
    %11 = sbr.rel (0) target = $region9
  $region8: #{dino_forward.20} parent=0 // pred_region
    _
  $region9: #{dino_forward.20} parent=0 // pred_fallthru
    _
  // Predicated region
  $region10: #{dino_forward.20} parent=0 // pred_check
    _
  $region11: #{dino_forward.20} parent=0 // pred_check_branch
    %13 = sbr.rel (0) target = $region13
  $region12: #{dino_forward.20} parent=0 // pred_region
    _
  $region13: #{dino_forward.20} parent=0 // pred_fallthru
    _
  %v15 = vld [vmem:[%s0] sm:$0xff]
  %v16 = vpack.c.bf16 %v15, %v15
  %v17 = vld [vmem:[%s1] sm:$0xf]
  %v18 = vld [vmem:[%s1 + $0x4] sm:$0xf]
  %v19 = vld [vmem:[%s1 + $0x8] sm:$0xf]
  %v20 = vld [vmem:[%s1 + $0xc] sm:$0xf]
  %v21 = vld [vmem:[%s1 + $0x10] sm:$0xf]
  %v22 = vld [vmem:[%s1 + $0x14] sm:$0xf]
  %v23 = vld [vmem:[%s1 + $0x18] sm:$0xf]
  %v24 = vld [vmem:[%s1 + $0x1c] sm:$0xf]
  %v25 = vld [vmem:[%s2] sm:$0x1]
  %v27 = vlaneseq
  %v28 = vshrl.u32 %v27, 7
  %v29 = vsub.s32 0, %v28
  %v30 = vrot.slane %v25, %v29
  %v40 = vunpack.c.l.b16 %v17
  %v41 = vunpack.c.l.b16 %v18
  %v42 = vunpack.c.l.b16 %v19
  %v43 = vunpack.c.l.b16 %v20
  %v44 = vunpack.c.l.b16 %v21
  %v45 = vunpack.c.l.b16 %v22
  %v46 = vunpack.c.l.b16 %v23
  %v47 = vunpack.c.l.b16 %v24
  %v48 = vpack.c.b16 %v41, %v40
  %v49 = vpack.c.b16 %v43, %v42
  %v50 = vpack.c.b16 %v45, %v44
  %v51 = vpack.c.b16 %v47, %v46
  %vm56 = vcmask 523264
  %v58 = vsel %vm56, %v16, 0
  %60 = vmatprep.subr.bf16.mxu0 0
  %61 = vmatpush1.bf16.msra.mxu0 0
  %62 = vmatprep.subr.bf16.mxu0 0
  %63 = vmatpush1.bf16.msra.mxu0 0
  %64 = vmatprep.subr.bf16.mxu0 0
  %65 = vmatpush1.bf16.msra.mxu0 0
  %66 = vmatprep.subr.bf16.mxu0 0
  %67 = vmatpush1.bf16.msra.mxu0 0
  %68 = vmatprep.subr.bf16.mxu0 0
  %69 = vmatpush1.bf16.msra.mxu0 %v51
  %70 = vmatprep.subr.bf16.mxu0 0
  %71 = vmatpush1.bf16.msra.mxu0 %v50
  %72 = vmatprep.subr.bf16.mxu0 0
  %73 = vmatpush1.bf16.msra.mxu0 %v49
  %74 = vmatprep.subr.bf16.mxu0 0
  %75 = vmatpush1.bf16.msra.mxu0 %v48
  %76 = vmatprep.subr.bf16.mxu0 0
  %77 = vmatpush2.bf16.msra.mxu0 0
  %78 = vmatprep.subr.bf16.mxu0 0
  %79 = vmatpush2.bf16.msra.mxu0 0
  %80 = vmatprep.subr.bf16.mxu0 0
  %81 = vmatpush2.bf16.msra.mxu0 0
  %82 = vmatprep.subr.bf16.mxu0 0
  %83 = vmatpush2.bf16.msra.mxu0 0
  %84 = vmatprep.subr.bf16.mxu0 0
  %85 = vmatpush2.bf16.msra.mxu0 0
  %86 = vmatprep.subr.bf16.mxu0 0
  %87 = vmatpush2.bf16.msra.mxu0 0
  %88 = vmatprep.subr.bf16.mxu0 0
  %89 = vmatpush2.bf16.msra.mxu0 0
  %90 = vmatprep.subr.bf16.mxu0 0
  %91 = vmatpush2.bf16.msra.mxu0 0
  %92 = vmatprep.mubr.bf16.mxu0 0
  %93 = vmatmul.mubr.bf16.gmra.mxu0 %v58
  %v94 = vpop.f32.mrf.mxu0
  %v95 = vadd.f32 %v30, %v94
  %v96 = vpop.f32.mrf.mxu0
  %v97 = vpop.f32.mrf.mxu0
  %v98 = vpop.f32.mrf.mxu0
  %99 = vdwg.mxu0
  %100 = vst.msk [vmem:[%s3] sm:$0xff] %vm56, %v95
  // Predicated region
  $region14: #{dino_forward.20} parent=0 // pred_check
    _
  $region15: #{dino_forward.20} parent=0 // pred_check_branch
    %102 = sbr.rel (0) target = $region17
  $region16: #{dino_forward.20} parent=0 // pred_region
    _
  $region17: #{dino_forward.20} parent=0 // pred_fallthru
    _
  // Predicated region
  $region18: #{dino_forward.20} parent=0 // pred_check
    _
  $region19: #{dino_forward.20} parent=0 // pred_check_branch
    %104 = sbr.rel (0) target = $region21
  $region20: #{dino_forward.20} parent=0 // pred_region
    _
  $region21: #{dino_forward.20} parent=0 // pred_fallthru
    _

// kernel: dino_forward.19
$region0: #{dino_forward.19}
  #allocation0 [shape = 'u32[]', space=smem, size = 0x4, offset = 0x4, fixed_abs, tag = 'smem constant byte address 0x4 - core index']
  #allocation1 [shape = 'u32[144,128]{1,0:T(1,128)}', space=vmem, size = 0x12000, scoped, tag = 'internal scratch']
  %s0 = inlined_call_operand.vmem [shape: f32[32,32], index: 0, kind: input, shape index: {}]
  %s1 = inlined_call_operand.vmem [shape: bf16[32,64], index: 1, kind: input, shape index: {}]
  %s2 = inlined_call_operand.vmem [shape: f32[1,64], index: 2, kind: input, shape index: {}]
  %s3 = inlined_call_operand.vmem [shape: f32[32,64], index: 3, kind: output, shape index: {}]
  %s4 = sld [smem:[#allocation0]]
  $region22: #{dino_forward.19} parent=0
    _
  %s6 = ssub.s32 1, %s4
  %s7 = scalar_select 0, %s6, %s4
  // Predicated region
  $region2: #{dino_forward.19} parent=0 // pred_check
    _
  $region3: #{dino_forward.19} parent=0 // pred_check_branch
    %9 = sbr.rel (0) target = $region5
  $region4: #{dino_forward.19} parent=0 // pred_region
    _
  $region5: #{dino_forward.19} parent=0 // pred_fallthru
    _
  // Predicated region
  $region6: #{dino_forward.19} parent=0 // pred_check
    _
  $region7: #{dino_forward.19} parent=0 // pred_check_branch
    %11 = sbr.rel (0) target = $region9
  $region8: #{dino_forward.19} parent=0 // pred_region
    _
  $region9: #{dino_forward.19} parent=0 // pred_fallthru
    _
  // Predicated region
  $region10: #{dino_forward.19} parent=0 // pred_check
    _
  $region11: #{dino_forward.19} parent=0 // pred_check_branch
    %13 = sbr.rel (0) target = $region13
  $region12: #{dino_forward.19} parent=0 // pred_region
    _
  $region13: #{dino_forward.19} parent=0 // pred_fallthru
    _
  %v15 = vld [vmem:[%s0] sm:$0xff]
  %v16 = vld [vmem:[%s0 + $0x8] sm:$0xff]
  %v17 = vld [vmem:[%s0 + $0x10] sm:$0xff]
  %v18 = vld [vmem:[%s0 + $0x18] sm:$0xff]
  %v19 = vpack.c.bf16 %v16, %v15
  %v20 = vpack.c.bf16 %v18, %v17
  %v21 = vld [vmem:[%s1] sm:$0xf]
  %v22 = vld [vmem:[%s1 + $0x4] sm:$0xf]
  %v23 = vld [vmem:[%s1 + $0x8] sm:$0xf]
  %v24 = vld [vmem:[%s1 + $0xc] sm:$0xf]
  %v25 = vld [vmem:[%s2] sm:$0x1]
  %v27 = vlaneseq
  %v28 = vshrl.u32 %v27, 7
  %v29 = vsub.s32 0, %v28
  %v30 = vrot.slane %v25, %v29
  %v36 = vunpack.c.l.b16 %v21
  %v37 = vunpack.c.l.b16 %v22
  %v38 = vunpack.c.l.b16 %v23
  %v39 = vunpack.c.l.b16 %v24
  %v40 = vpack.c.b16 %v37, %v36
  %v41 = vpack.c.b16 %v39, %v38
  %vm44 = vcmask 261120
  %v46 = vsel %vm44, %v19, 0
  %v49 = vsel %vm44, %v20, 0
  %51 = vmatprep.subr.bf16.mxu0 0
  %52 = vmatpush1.bf16.msra.mxu0 0
  %53 = vmatprep.subr.bf16.mxu0 0
  %54 = vmatpush1.bf16.msra.mxu0 0
  %55 = vmatprep.subr.bf16.mxu0 0
  %56 = vmatpush1.bf16.msra.mxu0 0
  %57 = vmatprep.subr.bf16.mxu0 0
  %58 = vmatpush1.bf16.msra.mxu0 0
  %59 = vmatprep.subr.bf16.mxu0 0
  %60 = vmatpush1.bf16.msra.mxu0 0
  %61 = vmatprep.subr.bf16.mxu0 0
  %62 = vmatpush1.bf16.msra.mxu0 0
  %63 = vmatprep.subr.bf16.mxu0 0
  %64 = vmatpush1.bf16.msra.mxu0 %v41
  %65 = vmatprep.subr.bf16.mxu0 0
  %66 = vmatpush1.bf16.msra.mxu0 %v40
  %67 = vmatprep.subr.bf16.mxu0 0
  %68 = vmatpush2.bf16.msra.mxu0 0
  %69 = vmatprep.subr.bf16.mxu0 0
  %70 = vmatpush2.bf16.msra.mxu0 0
  %71 = vmatprep.subr.bf16.mxu0 0
  %72 = vmatpush2.bf16.msra.mxu0 0
  %73 = vmatprep.subr.bf16.mxu0 0
  %74 = vmatpush2.bf16.msra.mxu0 0
  %75 = vmatprep.subr.bf16.mxu0 0
  %76 = vmatpush2.bf16.msra.mxu0 0
  %77 = vmatprep.subr.bf16.mxu0 0
  %78 = vmatpush2.bf16.msra.mxu0 0
  %79 = vmatprep.subr.bf16.mxu0 0
  %80 = vmatpush2.bf16.msra.mxu0 0
  %81 = vmatprep.subr.bf16.mxu0 0
  %82 = vmatpush2.bf16.msra.mxu0 0
  %83 = vmatprep.mubr.bf16.mxu0 0
  %84 = vmatmul.mubr.bf16.gmra.mxu0 %v46
  %v85 = vpop.f32.mrf.mxu0
  %v86 = vadd.f32 %v30, %v85
  %v87 = vpop.f32.mrf.mxu0
  %v88 = vpop.f32.mrf.mxu0
  %v89 = vadd.f32 %v30, %v88
  %v90 = vpop.f32.mrf.mxu0
  %91 = vmatprep.mubr.bf16.mxu0 0
  %92 = vmatmul.mubr.bf16.gmra.mxu0 %v49
  %v93 = vpop.f32.mrf.mxu0
  %v94 = vadd.f32 %v30, %v93
  %v95 = vpop.f32.mrf.mxu0
  %v96 = vpop.f32.mrf.mxu0
  %v97 = vadd.f32 %v30, %v96
  %v98 = vpop.f32.mrf.mxu0
  %99 = vdwg.mxu0
  %vm100 = vcmask 523264
  %101 = vst.msk [vmem:[%s3] sm:$0xff] %vm100, %v86
  %102 = vst.msk [vmem:[%s3 + $0x8] sm:$0xff] %vm100, %v89
  %103 = vst.msk [vmem:[%s3 + $0x10] sm:$0xff] %vm100, %v94
  %104 = vst.msk [vmem:[%s3 + $0x18] sm:$0xff] %vm100, %v97
  // Predicated region
  $region14: #{dino_forward.19} parent=0 // pred_check
    _
  $region15: #{dino_forward.19} parent=0 // pred_check_branch
    %106 = sbr.rel (0) target = $region17
  $region16: #{dino_forward.19} parent=0 // pred_region
    _
  $region17: #{dino_forward.19} parent=0 // pred_fallthru
    _
  // Predicated region
  $region18: #{dino_forward.19} parent=0 // pred_check
    _
  $region19: #{dino_forward.19} parent=0 // pred_check_branch
    %108 = sbr.rel (0) target = $region21
  $region20: #{dino_forward.19} parent=0 // pred_region
    _
  $region21: #{dino_forward.19} parent=0 // pred_fallthru
    _

// kernel: dino_forward.22
$region0: #{dino_forward.22}
  #allocation0 [shape = 'u32[]', space=smem, size = 0x4, offset = 0x4, fixed_abs, tag = 'smem constant byte address 0x4 - core index']
  #allocation1 [shape = 'u32[144,128]{1,0:T(1,128)}', space=vmem, size = 0x12000, scoped, tag = 'internal scratch']
  %s0 = inlined_call_operand.vmem [shape: f32[40,64], index: 0, kind: input, shape index: {}]
  %s1 = inlined_call_operand.vmem [shape: bf16[64,128], index: 1, kind: input, shape index: {}]
  %s2 = inlined_call_operand.vmem [shape: f32[1,128], index: 2, kind: input, shape index: {}]
  %s3 = inlined_call_operand.vmem [shape: bf16[128,64], index: 3, kind: input, shape index: {}]
  %s4 = inlined_call_operand.vmem [shape: f32[1,64], index: 4, kind: input, shape index: {}]
  %s5 = inlined_call_operand.vmem [shape: f32[1,64], index: 5, kind: input, shape index: {}]
  %s6 = inlined_call_operand.vmem [shape: f32[1,64], index: 6, kind: input, shape index: {}]
  %s7 = inlined_call_operand.vmem [shape: f32[40,64], index: 7, kind: output, shape index: {}]
  %s8 = sld [smem:[#allocation0]]
  $region38: #{dino_forward.22} parent=0
    _
  %s10 = ssub.s32 1, %s8
  %s11 = scalar_select 0, %s10, %s8
  // Predicated region
  $region2: #{dino_forward.22} parent=0 // pred_check
    _
  $region3: #{dino_forward.22} parent=0 // pred_check_branch
    %13 = sbr.rel (0) target = $region5
  $region4: #{dino_forward.22} parent=0 // pred_region
    _
  $region5: #{dino_forward.22} parent=0 // pred_fallthru
    _
  // Predicated region
  $region6: #{dino_forward.22} parent=0 // pred_check
    _
  $region7: #{dino_forward.22} parent=0 // pred_check_branch
    %15 = sbr.rel (0) target = $region9
  $region8: #{dino_forward.22} parent=0 // pred_region
    _
  $region9: #{dino_forward.22} parent=0 // pred_fallthru
    _
  // Predicated region
  $region10: #{dino_forward.22} parent=0 // pred_check
    _
  $region11: #{dino_forward.22} parent=0 // pred_check_branch
    %17 = sbr.rel (0) target = $region13
  $region12: #{dino_forward.22} parent=0 // pred_region
    _
  $region13: #{dino_forward.22} parent=0 // pred_fallthru
    _
  // Predicated region
  $region14: #{dino_forward.22} parent=0 // pred_check
    _
  $region15: #{dino_forward.22} parent=0 // pred_check_branch
    %19 = sbr.rel (0) target = $region17
  $region16: #{dino_forward.22} parent=0 // pred_region
    _
  $region17: #{dino_forward.22} parent=0 // pred_fallthru
    _
  // Predicated region
  $region18: #{dino_forward.22} parent=0 // pred_check
    _
  $region19: #{dino_forward.22} parent=0 // pred_check_branch
    %21 = sbr.rel (0) target = $region21
  $region20: #{dino_forward.22} parent=0 // pred_region
    _
  $region21: #{dino_forward.22} parent=0 // pred_fallthru
    _
  // Predicated region
  $region22: #{dino_forward.22} parent=0 // pred_check
    _
  $region23: #{dino_forward.22} parent=0 // pred_check_branch
    %23 = sbr.rel (0) target = $region25
  $region24: #{dino_forward.22} parent=0 // pred_region
    _
  $region25: #{dino_forward.22} parent=0 // pred_fallthru
    _
  // Predicated region
  $region26: #{dino_forward.22} parent=0 // pred_check
    _
  $region27: #{dino_forward.22} parent=0 // pred_check_branch
    %25 = sbr.rel (0) target = $region29
  $region28: #{dino_forward.22} parent=0 // pred_region
    _
  $region29: #{dino_forward.22} parent=0 // pred_fallthru
    _
  %v27 = vld [vmem:[%s0] sm:$0xff]
  %v28 = vld [vmem:[%s0 + $0x8] sm:$0xff]
  %v29 = vld [vmem:[%s0 + $0x10] sm:$0xff]
  %v30 = vld [vmem:[%s0 + $0x18] sm:$0xff]
  %v31 = vld [vmem:[%s0 + $0x20] sm:$0xff]
  %v32 = vpack.c.bf16 %v28, %v27
  %v33 = vpack.c.bf16 %v30, %v29
  %v34 = vpack.c.bf16 %v31, %v31
  %v35 = vld [vmem:[%s1] sm:$0xf]
  %v36 = vld [vmem:[%s1 + $0x4] sm:$0xf]
  %v37 = vld [vmem:[%s1 + $0x8] sm:$0xf]
  %v38 = vld [vmem:[%s1 + $0xc] sm:$0xf]
  %v39 = vld [vmem:[%s1 + $0x10] sm:$0xf]
  %v40 = vld [vmem:[%s1 + $0x14] sm:$0xf]
  %v41 = vld [vmem:[%s1 + $0x18] sm:$0xf]
  %v42 = vld [vmem:[%s1 + $0x1c] sm:$0xf]
  %v43 = vld [vmem:[%s2] sm:$0x1]
  %v45 = vlaneseq
  %v46 = vshrl.u32 %v45, 7
  %v47 = vsub.s32 0, %v46
  %v48 = vrot.slane %v43, %v47
  %v58 = vunpack.c.l.b16 %v35
  %v59 = vunpack.c.l.b16 %v36
  %v60 = vunpack.c.l.b16 %v37
  %v61 = vunpack.c.l.b16 %v38
  %v62 = vunpack.c.l.b16 %v39
  %v63 = vunpack.c.l.b16 %v40
  %v64 = vunpack.c.l.b16 %v41
  %v65 = vunpack.c.l.b16 %v42
  %v66 = vpack.c.b16 %v59, %v58
  %v67 = vpack.c.b16 %v61, %v60
  %v68 = vpack.c.b16 %v63, %v62
  %v69 = vpack.c.b16 %v65, %v64
  %vm74 = vcmask 523264
  %v76 = vsel %vm74, %v32, 0
  %v79 = vsel %vm74, %v33, 0
  %v82 = vsel %vm74, %v34, 0
  %84 = vmatprep.subr.bf16.mxu0 0
  %85 = vmatpush1.bf16.msra.mxu0 0
  %86 = vmatprep.subr.bf16.mxu0 0
  %87 = vmatpush1.bf16.msra.mxu0 0
  %88 = vmatprep.subr.bf16.mxu0 0
  %89 = vmatpush1.bf16.msra.mxu0 0
  %90 = vmatprep.subr.bf16.mxu0 0
  %91 = vmatpush1.bf16.msra.mxu0 0
  %92 = vmatprep.subr.bf16.mxu0 0
  %93 = vmatpush1.bf16.msra.mxu0 %v69
  %94 = vmatprep.subr.bf16.mxu0 0
  %95 = vmatpush1.bf16.msra.mxu0 %v68
  %96 = vmatprep.subr.bf16.mxu0 0
  %97 = vmatpush1.bf16.msra.mxu0 %v67
  %98 = vmatprep.subr.bf16.mxu0 0
  %99 = vmatpush1.bf16.msra.mxu0 %v66
  %100 = vmatprep.subr.bf16.mxu0 0
  %101 = vmatpush2.bf16.msra.mxu0 0
  %102 = vmatprep.subr.bf16.mxu0 0
  %103 = vmatpush2.bf16.msra.mxu0 0
  %104 = vmatprep.subr.bf16.mxu0 0
  %105 = vmatpush2.bf16.msra.mxu0 0
  %106 = vmatprep.subr.bf16.mxu0 0
  %107 = vmatpush2.bf16.msra.mxu0 0
  %108 = vmatprep.subr.bf16.mxu0 0
  %109 = vmatpush2.bf16.msra.mxu0 0
  %110 = vmatprep.subr.bf16.mxu0 0
  %111 = vmatpush2.bf16.msra.mxu0 0
  %112 = vmatprep.subr.bf16.mxu0 0
  %113 = vmatpush2.bf16.msra.mxu0 0
  %114 = vmatprep.subr.bf16.mxu0 0
  %115 = vmatpush2.bf16.msra.mxu0 0
  %116 = vmatprep.mubr.bf16.mxu0 0
  %117 = vmatmul.mubr.bf16.gmra.mxu0 %v76
  %v118 = vpop.f32.mrf.mxu0
  %v119 = vadd.f32 %v48, %v118
  %v120 = vpop.f32.mrf.mxu0
  %v121 = vpop.f32.mrf.mxu0
  %v122 = vadd.f32 %v48, %v121
  %v123 = vpop.f32.mrf.mxu0
  %124 = vmatprep.mubr.bf16.mxu0 0
  %125 = vmatmul.mubr.bf16.gmra.mxu0 %v79
  %v126 = vpop.f32.mrf.mxu0
  %v127 = vadd.f32 %v48, %v126
  %v128 = vpop.f32.mrf.mxu0
  %v129 = vpop.f32.mrf.mxu0
  %v130 = vadd.f32 %v48, %v129
  %v131 = vpop.f32.mrf.mxu0
  %132 = vmatprep.mubr.bf16.mxu0 0
  %133 = vmatmul.mubr.bf16.gmra.mxu0 %v82
  %v134 = vpop.f32.mrf.mxu0
  %v135 = vadd.f32 %v48, %v134
  %v136 = vpop.f32.mrf.mxu0
  %v137 = vpop.f32.mrf.mxu0
  %v138 = vpop.f32.mrf.mxu0
  %139 = vdwg.mxu0
  %v140 = vmax.f32 %v119, 0.0
  %v141 = vmax.f32 %v122, 0.0
  %v142 = vmax.f32 %v127, 0.0
  %v143 = vmax.f32 %v130, 0.0
  %v144 = vmax.f32 %v135, 0.0
  %v145 = vpack.c.bf16 %v141, %v140
  %v146 = vpack.c.bf16 %v143, %v142
  %v147 = vpack.c.bf16 %v144, %v144
  %v148 = vld [vmem:[%s3] sm:$0xf]
  %v149 = vld [vmem:[%s3 + $0x4] sm:$0xf]
  %v150 = vld [vmem:[%s3 + $0x8] sm:$0xf]
  %v151 = vld [vmem:[%s3 + $0xc] sm:$0xf]
  %v152 = vld [vmem:[%s3 + $0x10] sm:$0xf]
  %v153 = vld [vmem:[%s3 + $0x14] sm:$0xf]
  %v154 = vld [vmem:[%s3 + $0x18] sm:$0xf]
  %v155 = vld [vmem:[%s3 + $0x1c] sm:$0xf]
  %v156 = vld [vmem:[%s3 + $0x20] sm:$0xf]
  %v157 = vld [vmem:[%s3 + $0x24] sm:$0xf]
  %v158 = vld [vmem:[%s3 + $0x28] sm:$0xf]
  %v159 = vld [vmem:[%s3 + $0x2c] sm:$0xf]
  %v160 = vld [vmem:[%s3 + $0x30] sm:$0xf]
  %v161 = vld [vmem:[%s3 + $0x34] sm:$0xf]
  %v162 = vld [vmem:[%s3 + $0x38] sm:$0xf]
  %v163 = vld [vmem:[%s3 + $0x3c] sm:$0xf]
  %v164 = vld [vmem:[%s4] sm:$0x1]
  %v166 = vlaneseq
  %v167 = vshrl.u32 %v166, 7
  %v168 = vsub.s32 0, %v167
  %v169 = vrot.slane %v164, %v168
  %v187 = vunpack.c.l.b16 %v148
  %v188 = vunpack.c.l.b16 %v149
  %v189 = vunpack.c.l.b16 %v150
  %v190 = vunpack.c.l.b16 %v151
  %v191 = vunpack.c.l.b16 %v152
  %v192 = vunpack.c.l.b16 %v153
  %v193 = vunpack.c.l.b16 %v154
  %v194 = vunpack.c.l.b16 %v155
  %v195 = vunpack.c.l.b16 %v156
  %v196 = vunpack.c.l.b16 %v157
  %v197 = vunpack.c.l.b16 %v158
  %v198 = vunpack.c.l.b16 %v159
  %v199 = vunpack.c.l.b16 %v160
  %v200 = vunpack.c.l.b16 %v161
  %v201 = vunpack.c.l.b16 %v162
  %v202 = vunpack.c.l.b16 %v163
  %v203 = vpack.c.b16 %v188, %v187
  %v204 = vpack.c.b16 %v190, %v189
  %v205 = vpack.c.b16 %v192, %v191
  %v206 = vpack.c.b16 %v194, %v193
  %v207 = vpack.c.b16 %v196, %v195
  %v208 = vpack.c.b16 %v198, %v197
  %v209 = vpack.c.b16 %v200, %v199
  %v210 = vpack.c.b16 %v202, %v201
  %219 = vmatprep.subr.bf16.mxu0 0
  %220 = vmatpush1.bf16.msra.mxu0 %v210
  %221 = vmatprep.subr.bf16.mxu0 0
  %222 = vmatpush1.bf16.msra.mxu0 %v209
  %223 = vmatprep.subr.bf16.mxu0 0
  %224 = vmatpush1.bf16.msra.mxu0 %v208
  %225 = vmatprep.subr.bf16.mxu0 0
  %226 = vmatpush1.bf16.msra.mxu0 %v207
  %227 = vmatprep.subr.bf16.mxu0 0
  %228 = vmatpush1.bf16.msra.mxu0 %v206
  %229 = vmatprep.subr.bf16.mxu0 0
  %230 = vmatpush1.bf16.msra.mxu0 %v205
  %231 = vmatprep.subr.bf16.mxu0 0
  %232 = vmatpush1.bf16.msra.mxu0 %v204
  %233 = vmatprep.subr.bf16.mxu0 0
  %234 = vmatpush1.bf16.msra.mxu0 %v203
  %235 = vmatprep.subr.bf16.mxu0 0
  %236 = vmatpush2.bf16.msra.mxu0 0
  %237 = vmatprep.subr.bf16.mxu0 0
  %238 = vmatpush2.bf16.msra.mxu0 0
  %239 = vmatprep.subr.bf16.mxu0 0
  %240 = vmatpush2.bf16.msra.mxu0 0
  %241 = vmatprep.subr.bf16.mxu0 0
  %242 = vmatpush2.bf16.msra.mxu0 0
  %243 = vmatprep.subr.bf16.mxu0 0
  %244 = vmatpush2.bf16.msra.mxu0 0
  %245 = vmatprep.subr.bf16.mxu0 0
  %246 = vmatpush2.bf16.msra.mxu0 0
  %247 = vmatprep.subr.bf16.mxu0 0
  %248 = vmatpush2.bf16.msra.mxu0 0
  %249 = vmatprep.subr.bf16.mxu0 0
  %250 = vmatpush2.bf16.msra.mxu0 0
  %251 = vmatprep.mubr.bf16.mxu0 0
  %252 = vmatmul.mubr.bf16.gmra.mxu0 %v145
  %v253 = vpop.f32.mrf.mxu0
  %v254 = vadd.f32 %v169, %v253
  %v255 = vpop.f32.mrf.mxu0
  %v256 = vpop.f32.mrf.mxu0
  %v257 = vadd.f32 %v169, %v256
  %v258 = vpop.f32.mrf.mxu0
  %259 = vmatprep.mubr.bf16.mxu0 0
  %260 = vmatmul.mubr.bf16.gmra.mxu0 %v146
  %v261 = vpop.f32.mrf.mxu0
  %v262 = vadd.f32 %v169, %v261
  %v263 = vpop.f32.mrf.mxu0
  %v264 = vpop.f32.mrf.mxu0
  %v265 = vadd.f32 %v169, %v264
  %v266 = vpop.f32.mrf.mxu0
  %267 = vmatprep.mubr.bf16.mxu0 0
  %268 = vmatmul.mubr.bf16.gmra.mxu0 %v147
  %v269 = vpop.f32.mrf.mxu0
  %v270 = vadd.f32 %v169, %v269
  %v271 = vpop.f32.mrf.mxu0
  %v272 = vpop.f32.mrf.mxu0
  %v273 = vpop.f32.mrf.mxu0
  %274 = vdwg.mxu0
  %v275 = vadd.f32 %v27, %v254
  %v276 = vadd.f32 %v28, %v257
  %v277 = vadd.f32 %v29, %v262
  %v278 = vadd.f32 %v30, %v265
  %v279 = vadd.f32 %v31, %v270
  %v280 = vld [vmem:[%s5] sm:$0x1]
  %v281 = vld [vmem:[%s6] sm:$0x1]
  %v282 = vsel %vm74, %v275, 0.0
  %283 = vadd.xlane.f32.xlu0 %v282
  %v284 = vpop.xlane.xlu0 %283
  %v285 = vsel %vm74, %v276, 0.0
  %286 = vadd.xlane.f32.xlu0 %v285
  %v287 = vpop.xlane.xlu0 %286
  %v288 = vsel %vm74, %v277, 0.0
  %289 = vadd.xlane.f32.xlu0 %v288
  %v290 = vpop.xlane.xlu0 %289
  %v291 = vsel %vm74, %v278, 0.0
  %292 = vadd.xlane.f32.xlu0 %v291
  %v293 = vpop.xlane.xlu0 %292
  %v294 = vsel %vm74, %v279, 0.0
  %295 = vadd.xlane.f32.xlu0 %v294
  %v296 = vpop.xlane.xlu0 %295
  %v297 = vrcp.pop 64.0
  %v298 = vmul.f32 %v284, %v297
  %v299 = vmul.f32 %v287, %v297
  %v300 = vmul.f32 %v290, %v297
  %v301 = vmul.f32 %v293, %v297
  %v302 = vmul.f32 %v296, %v297
  %v303 = vsub.f32 %v275, %v298
  %v304 = vsub.f32 %v276, %v299
  %v305 = vsub.f32 %v277, %v300
  %v306 = vsub.f32 %v278, %v301
  %v307 = vsub.f32 %v279, %v302
  %v308 = vmul.f32 %v303, %v303
  %v309 = vmul.f32 %v304, %v304
  %v310 = vmul.f32 %v305, %v305
  %v311 = vmul.f32 %v306, %v306
  %v312 = vmul.f32 %v307, %v307
  %v313 = vsel %vm74, %v308, 0.0
  %314 = vadd.xlane.f32.xlu0 %v313
  %v315 = vpop.xlane.xlu0 %314
  %v316 = vsel %vm74, %v309, 0.0
  %317 = vadd.xlane.f32.xlu0 %v316
  %v318 = vpop.xlane.xlu0 %317
  %v319 = vsel %vm74, %v310, 0.0
  %320 = vadd.xlane.f32.xlu0 %v319
  %v321 = vpop.xlane.xlu0 %320
  %v322 = vsel %vm74, %v311, 0.0
  %323 = vadd.xlane.f32.xlu0 %v322
  %v324 = vpop.xlane.xlu0 %323
  %v325 = vsel %vm74, %v312, 0.0
  %326 = vadd.xlane.f32.xlu0 %v325
  %v327 = vpop.xlane.xlu0 %326
  %v328 = vmul.f32 %v315, %v297
  %v329 = vmul.f32 %v318, %v297
  %v330 = vmul.f32 %v321, %v297
  %v331 = vmul.f32 %v324, %v297
  %v332 = vmul.f32 %v327, %v297
  %v333 = vadd.f32 %v328, 1e-05
  %v334 = vadd.f32 %v329, 1e-05
  %v335 = vadd.f32 %v330, 1e-05
  %v336 = vadd.f32 %v331, 1e-05
  %v337 = vadd.f32 %v332, 1e-05
  %v338 = vrsqrt.pop %v333
  %v339 = vrsqrt.pop %v334
  %v340 = vrsqrt.pop %v335
  %v341 = vrsqrt.pop %v336
  %v342 = vrsqrt.pop %v337
  %v343 = vmul.f32 %v303, %v338
  %v344 = vmul.f32 %v304, %v339
  %v345 = vmul.f32 %v305, %v340
  %v346 = vmul.f32 %v306, %v341
  %v347 = vmul.f32 %v307, %v342
  %v349 = vlaneseq
  %v350 = vshrl.u32 %v349, 7
  %v351 = vsub.s32 0, %v350
  %v352 = vrot.slane %v280, %v351
  %v354 = vmul.f32 %v343, %v352
  %v355 = vmul.f32 %v344, %v352
  %v356 = vmul.f32 %v345, %v352
  %v357 = vmul.f32 %v346, %v352
  %v358 = vmul.f32 %v347, %v352
  %v360 = vlaneseq
  %v361 = vshrl.u32 %v360, 7
  %v362 = vsub.s32 0, %v361
  %v363 = vrot.slane %v281, %v362
  %v365 = vadd.f32 %v354, %v363
  %v366 = vadd.f32 %v355, %v363
  %v367 = vadd.f32 %v356, %v363
  %v368 = vadd.f32 %v357, %v363
  %v369 = vadd.f32 %v358, %v363
  %370 = vst.msk [vmem:[%s7] sm:$0xff] %vm74, %v365
  %371 = vst.msk [vmem:[%s7 + $0x8] sm:$0xff] %vm74, %v366
  %372 = vst.msk [vmem:[%s7 + $0x10] sm:$0xff] %vm74, %v367
  %373 = vst.msk [vmem:[%s7 + $0x18] sm:$0xff] %vm74, %v368
  %374 = vst.msk [vmem:[%s7 + $0x20] sm:$0xff] %vm74, %v369
  // Predicated region
  $region30: #{dino_forward.22} parent=0 // pred_check
    _
  $region31: #{dino_forward.22} parent=0 // pred_check_branch
    %376 = sbr.rel (0) target = $region33
  $region32: #{dino_forward.22} parent=0 // pred_region
    _
  $region33: #{dino_forward.22} parent=0 // pred_fallthru
    _
  // Predicated region
  $region34: #{dino_forward.22} parent=0 // pred_check
    _
  $region35: #{dino_forward.22} parent=0 // pred_check_branch
    %378 = sbr.rel (0) target = $region37
  $region36: #{dino_forward.22} parent=0 // pred_region
    _
  $region37: #{dino_forward.22} parent=0 // pred_fallthru
    _

// kernel: dino_forward.25
$region0: #{dino_forward.25}
  #allocation0 [shape = 'u32[]', space=smem, size = 0x4, offset = 0x4, fixed_abs, tag = 'smem constant byte address 0x4 - core index']
  #allocation1 [shape = 'u32[144,128]{1,0:T(1,128)}', space=vmem, size = 0x12000, scoped, tag = 'internal scratch']
  %s0 = inlined_call_operand.vmem [shape: f32[40,64], index: 0, kind: input, shape index: {}]
  %s1 = inlined_call_operand.vmem [shape: bf16[64,64], index: 1, kind: input, shape index: {}]
  %s2 = inlined_call_operand.vmem [shape: f32[1,64], index: 2, kind: input, shape index: {}]
  %s3 = inlined_call_operand.vmem [shape: f32[1,64], index: 3, kind: input, shape index: {}]
  %s4 = inlined_call_operand.vmem [shape: f32[1,64], index: 4, kind: input, shape index: {}]
  %s5 = inlined_call_operand.vmem [shape: bf16[64,64], index: 5, kind: input, shape index: {}]
  %s6 = inlined_call_operand.vmem [shape: f32[1,64], index: 6, kind: input, shape index: {}]
  %s7 = inlined_call_operand.vmem [shape: bf16[64,64], index: 7, kind: input, shape index: {}]
  %s8 = inlined_call_operand.vmem [shape: f32[1,64], index: 8, kind: input, shape index: {}]
  %s9 = inlined_call_operand.vmem [shape: f32[40,64], index: 9, kind: output, shape index: {0}]
  %s10 = inlined_call_operand.vmem [shape: f32[40,64], index: 10, kind: output, shape index: {1}]
  %11 = xla_tuple %s9, %s10
  %s12 = sld [smem:[#allocation0]]
  $region54: #{dino_forward.25} parent=0
    _
  %s14 = ssub.s32 1, %s12
  %s15 = scalar_select 0, %s14, %s12
  // Predicated region
  $region2: #{dino_forward.25} parent=0 // pred_check
    _
  $region3: #{dino_forward.25} parent=0 // pred_check_branch
    %17 = sbr.rel (0) target = $region5
  $region4: #{dino_forward.25} parent=0 // pred_region
    _
  $region5: #{dino_forward.25} parent=0 // pred_fallthru
    _
  // Predicated region
  $region6: #{dino_forward.25} parent=0 // pred_check
    _
  $region7: #{dino_forward.25} parent=0 // pred_check_branch
    %19 = sbr.rel (0) target = $region9
  $region8: #{dino_forward.25} parent=0 // pred_region
    _
  $region9: #{dino_forward.25} parent=0 // pred_fallthru
    _
  // Predicated region
  $region10: #{dino_forward.25} parent=0 // pred_check
    _
  $region11: #{dino_forward.25} parent=0 // pred_check_branch
    %21 = sbr.rel (0) target = $region13
  $region12: #{dino_forward.25} parent=0 // pred_region
    _
  $region13: #{dino_forward.25} parent=0 // pred_fallthru
    _
  // Predicated region
  $region14: #{dino_forward.25} parent=0 // pred_check
    _
  $region15: #{dino_forward.25} parent=0 // pred_check_branch
    %23 = sbr.rel (0) target = $region17
  $region16: #{dino_forward.25} parent=0 // pred_region
    _
  $region17: #{dino_forward.25} parent=0 // pred_fallthru
    _
  // Predicated region
  $region18: #{dino_forward.25} parent=0 // pred_check
    _
  $region19: #{dino_forward.25} parent=0 // pred_check_branch
    %25 = sbr.rel (0) target = $region21
  $region20: #{dino_forward.25} parent=0 // pred_region
    _
  $region21: #{dino_forward.25} parent=0 // pred_fallthru
    _
  // Predicated region
  $region22: #{dino_forward.25} parent=0 // pred_check
    _
  $region23: #{dino_forward.25} parent=0 // pred_check_branch
    %27 = sbr.rel (0) target = $region25
  $region24: #{dino_forward.25} parent=0 // pred_region
    _
  $region25: #{dino_forward.25} parent=0 // pred_fallthru
    _
  // Predicated region
  $region26: #{dino_forward.25} parent=0 // pred_check
    _
  $region27: #{dino_forward.25} parent=0 // pred_check_branch
    %29 = sbr.rel (0) target = $region29
  $region28: #{dino_forward.25} parent=0 // pred_region
    _
  $region29: #{dino_forward.25} parent=0 // pred_fallthru
    _
  // Predicated region
  $region30: #{dino_forward.25} parent=0 // pred_check
    _
  $region31: #{dino_forward.25} parent=0 // pred_check_branch
    %31 = sbr.rel (0) target = $region33
  $region32: #{dino_forward.25} parent=0 // pred_region
    _
  $region33: #{dino_forward.25} parent=0 // pred_fallthru
    _
  // Predicated region
  $region34: #{dino_forward.25} parent=0 // pred_check
    _
  $region35: #{dino_forward.25} parent=0 // pred_check_branch
    %33 = sbr.rel (0) target = $region37
  $region36: #{dino_forward.25} parent=0 // pred_region
    _
  $region37: #{dino_forward.25} parent=0 // pred_fallthru
    _
  %v35 = vld [vmem:[%s0] sm:$0xff]
  %v36 = vld [vmem:[%s0 + $0x8] sm:$0xff]
  %v37 = vld [vmem:[%s0 + $0x10] sm:$0xff]
  %v38 = vld [vmem:[%s0 + $0x18] sm:$0xff]
  %v39 = vld [vmem:[%s0 + $0x20] sm:$0xff]
  %v40 = vpack.c.bf16 %v36, %v35
  %v41 = vpack.c.bf16 %v38, %v37
  %v42 = vpack.c.bf16 %v39, %v39
  %v43 = vld [vmem:[%s1] sm:$0xf]
  %v44 = vld [vmem:[%s1 + $0x4] sm:$0xf]
  %v45 = vld [vmem:[%s1 + $0x8] sm:$0xf]
  %v46 = vld [vmem:[%s1 + $0xc] sm:$0xf]
  %v47 = vld [vmem:[%s1 + $0x10] sm:$0xf]
  %v48 = vld [vmem:[%s1 + $0x14] sm:$0xf]
  %v49 = vld [vmem:[%s1 + $0x18] sm:$0xf]
  %v50 = vld [vmem:[%s1 + $0x1c] sm:$0xf]
  %v51 = vld [vmem:[%s2] sm:$0x1]
  %v53 = vlaneseq
  %v54 = vshrl.u32 %v53, 7
  %v55 = vsub.s32 0, %v54
  %v56 = vrot.slane %v51, %v55
  %v66 = vunpack.c.l.b16 %v43
  %v67 = vunpack.c.l.b16 %v44
  %v68 = vunpack.c.l.b16 %v45
  %v69 = vunpack.c.l.b16 %v46
  %v70 = vunpack.c.l.b16 %v47
  %v71 = vunpack.c.l.b16 %v48
  %v72 = vunpack.c.l.b16 %v49
  %v73 = vunpack.c.l.b16 %v50
  %v74 = vpack.c.b16 %v67, %v66
  %v75 = vpack.c.b16 %v69, %v68
  %v76 = vpack.c.b16 %v71, %v70
  %v77 = vpack.c.b16 %v73, %v72
  %vm82 = vcmask 523264
  %v84 = vsel %vm82, %v40, 0
  %v87 = vsel %vm82, %v41, 0
  %v90 = vsel %vm82, %v42, 0
  %92 = vmatprep.subr.bf16.mxu0 0
  %93 = vmatpush1.bf16.msra.mxu0 0
  %94 = vmatprep.subr.bf16.mxu0 0
  %95 = vmatpush1.bf16.msra.mxu0 0
  %96 = vmatprep.subr.bf16.mxu0 0
  %97 = vmatpush1.bf16.msra.mxu0 0
  %98 = vmatprep.subr.bf16.mxu0 0
  %99 = vmatpush1.bf16.msra.mxu0 0
  %100 = vmatprep.subr.bf16.mxu0 0
  %101 = vmatpush1.bf16.msra.mxu0 %v77
  %102 = vmatprep.subr.bf16.mxu0 0
  %103 = vmatpush1.bf16.msra.mxu0 %v76
  %104 = vmatprep.subr.bf16.mxu0 0
  %105 = vmatpush1.bf16.msra.mxu0 %v75
  %106 = vmatprep.subr.bf16.mxu0 0
  %107 = vmatpush1.bf16.msra.mxu0 %v74
  %108 = vmatprep.subr.bf16.mxu0 0
  %109 = vmatpush2.bf16.msra.mxu0 0
  %110 = vmatprep.subr.bf16.mxu0 0
  %111 = vmatpush2.bf16.msra.mxu0 0
  %112 = vmatprep.subr.bf16.mxu0 0
  %113 = vmatpush2.bf16.msra.mxu0 0
  %114 = vmatprep.subr.bf16.mxu0 0
  %115 = vmatpush2.bf16.msra.mxu0 0
  %116 = vmatprep.subr.bf16.mxu0 0
  %117 = vmatpush2.bf16.msra.mxu0 0
  %118 = vmatprep.subr.bf16.mxu0 0
  %119 = vmatpush2.bf16.msra.mxu0 0
  %120 = vmatprep.subr.bf16.mxu0 0
  %121 = vmatpush2.bf16.msra.mxu0 0
  %122 = vmatprep.subr.bf16.mxu0 0
  %123 = vmatpush2.bf16.msra.mxu0 0
  %124 = vmatprep.mubr.bf16.mxu0 0
  %125 = vmatmul.mubr.bf16.gmra.mxu0 %v84
  %v126 = vpop.f32.mrf.mxu0
  %v127 = vadd.f32 %v56, %v126
  %v128 = vpop.f32.mrf.mxu0
  %v129 = vpop.f32.mrf.mxu0
  %v130 = vadd.f32 %v56, %v129
  %v131 = vpop.f32.mrf.mxu0
  %132 = vmatprep.mubr.bf16.mxu0 0
  %133 = vmatmul.mubr.bf16.gmra.mxu0 %v87
  %v134 = vpop.f32.mrf.mxu0
  %v135 = vadd.f32 %v56, %v134
  %v136 = vpop.f32.mrf.mxu0
  %v137 = vpop.f32.mrf.mxu0
  %v138 = vadd.f32 %v56, %v137
  %v139 = vpop.f32.mrf.mxu0
  %140 = vmatprep.mubr.bf16.mxu0 0
  %141 = vmatmul.mubr.bf16.gmra.mxu0 %v90
  %v142 = vpop.f32.mrf.mxu0
  %v143 = vadd.f32 %v56, %v142
  %v144 = vpop.f32.mrf.mxu0
  %v145 = vpop.f32.mrf.mxu0
  %v146 = vpop.f32.mrf.mxu0
  %147 = vdwg.mxu0
  %v148 = vld [vmem:[%s3] sm:$0x1]
  %v149 = vld [vmem:[%s4] sm:$0x1]
  %v150 = vsel %vm82, %v127, 0.0
  %151 = vadd.xlane.f32.xlu0 %v150
  %v152 = vpop.xlane.xlu0 %151
  %v153 = vsel %vm82, %v130, 0.0
  %154 = vadd.xlane.f32.xlu0 %v153
  %v155 = vpop.xlane.xlu0 %154
  %v156 = vsel %vm82, %v135, 0.0
  %157 = vadd.xlane.f32.xlu0 %v156
  %v158 = vpop.xlane.xlu0 %157
  %v159 = vsel %vm82, %v138, 0.0
  %160 = vadd.xlane.f32.xlu0 %v159
  %v161 = vpop.xlane.xlu0 %160
  %v162 = vsel %vm82, %v143, 0.0
  %163 = vadd.xlane.f32.xlu0 %v162
  %v164 = vpop.xlane.xlu0 %163
  %v165 = vrcp.pop 64.0
  %v166 = vmul.f32 %v152, %v165
  %v167 = vmul.f32 %v155, %v165
  %v168 = vmul.f32 %v158, %v165
  %v169 = vmul.f32 %v161, %v165
  %v170 = vmul.f32 %v164, %v165
  %v171 = vsub.f32 %v127, %v166
  %v172 = vsub.f32 %v130, %v167
  %v173 = vsub.f32 %v135, %v168
  %v174 = vsub.f32 %v138, %v169
  %v175 = vsub.f32 %v143, %v170
  %v176 = vmul.f32 %v171, %v171
  %v177 = vmul.f32 %v172, %v172
  %v178 = vmul.f32 %v173, %v173
  %v179 = vmul.f32 %v174, %v174
  %v180 = vmul.f32 %v175, %v175
  %v181 = vsel %vm82, %v176, 0.0
  %182 = vadd.xlane.f32.xlu0 %v181
  %v183 = vpop.xlane.xlu0 %182
  %v184 = vsel %vm82, %v177, 0.0
  %185 = vadd.xlane.f32.xlu0 %v184
  %v186 = vpop.xlane.xlu0 %185
  %v187 = vsel %vm82, %v178, 0.0
  %188 = vadd.xlane.f32.xlu0 %v187
  %v189 = vpop.xlane.xlu0 %188
  %v190 = vsel %vm82, %v179, 0.0
  %191 = vadd.xlane.f32.xlu0 %v190
  %v192 = vpop.xlane.xlu0 %191
  %v193 = vsel %vm82, %v180, 0.0
  %194 = vadd.xlane.f32.xlu0 %v193
  %v195 = vpop.xlane.xlu0 %194
  %v196 = vmul.f32 %v183, %v165
  %v197 = vmul.f32 %v186, %v165
  %v198 = vmul.f32 %v189, %v165
  %v199 = vmul.f32 %v192, %v165
  %v200 = vmul.f32 %v195, %v165
  %v201 = vadd.f32 %v196, 1e-05
  %v202 = vadd.f32 %v197, 1e-05
  %v203 = vadd.f32 %v198, 1e-05
  %v204 = vadd.f32 %v199, 1e-05
  %v205 = vadd.f32 %v200, 1e-05
  %v206 = vrsqrt.pop %v201
  %v207 = vrsqrt.pop %v202
  %v208 = vrsqrt.pop %v203
  %v209 = vrsqrt.pop %v204
  %v210 = vrsqrt.pop %v205
  %v211 = vmul.f32 %v171, %v206
  %v212 = vmul.f32 %v172, %v207
  %v213 = vmul.f32 %v173, %v208
  %v214 = vmul.f32 %v174, %v209
  %v215 = vmul.f32 %v175, %v210
  %v217 = vlaneseq
  %v218 = vshrl.u32 %v217, 7
  %v219 = vsub.s32 0, %v218
  %v220 = vrot.slane %v148, %v219
  %v222 = vmul.f32 %v211, %v220
  %v223 = vmul.f32 %v212, %v220
  %v224 = vmul.f32 %v213, %v220
  %v225 = vmul.f32 %v214, %v220
  %v226 = vmul.f32 %v215, %v220
  %v228 = vlaneseq
  %v229 = vshrl.u32 %v228, 7
  %v230 = vsub.s32 0, %v229
  %v231 = vrot.slane %v149, %v230
  %v233 = vadd.f32 %v222, %v231
  %v234 = vadd.f32 %v223, %v231
  %v235 = vadd.f32 %v224, %v231
  %v236 = vadd.f32 %v225, %v231
  %v237 = vadd.f32 %v226, %v231
  %238 = vst.msk [vmem:[%s9] sm:$0xff] %vm82, %v233
  %239 = vst.msk [vmem:[%s9 + $0x8] sm:$0xff] %vm82, %v234
  %240 = vst.msk [vmem:[%s9 + $0x10] sm:$0xff] %vm82, %v235
  %241 = vst.msk [vmem:[%s9 + $0x18] sm:$0xff] %vm82, %v236
  %242 = vst.msk [vmem:[%s9 + $0x20] sm:$0xff] %vm82, %v237
  %v243 = vpack.c.bf16 %v234, %v233
  %v244 = vpack.c.bf16 %v236, %v235
  %v245 = vpack.c.bf16 %v237, %v237
  %v246 = vld [vmem:[%s5] sm:$0xf]
  %v247 = vld [vmem:[%s5 + $0x4] sm:$0xf]
  %v248 = vld [vmem:[%s5 + $0x8] sm:$0xf]
  %v249 = vld [vmem:[%s5 + $0xc] sm:$0xf]
  %v250 = vld [vmem:[%s5 + $0x10] sm:$0xf]
  %v251 = vld [vmem:[%s5 + $0x14] sm:$0xf]
  %v252 = vld [vmem:[%s5 + $0x18] sm:$0xf]
  %v253 = vld [vmem:[%s5 + $0x1c] sm:$0xf]
  %v254 = vld [vmem:[%s6] sm:$0x1]
  %v256 = vlaneseq
  %v257 = vshrl.u32 %v256, 7
  %v258 = vsub.s32 0, %v257
  %v259 = vrot.slane %v254, %v258
  %v269 = vunpack.c.l.b16 %v246
  %v270 = vunpack.c.l.b16 %v247
  %v271 = vunpack.c.l.b16 %v248
  %v272 = vunpack.c.l.b16 %v249
  %v273 = vunpack.c.l.b16 %v250
  %v274 = vunpack.c.l.b16 %v251
  %v275 = vunpack.c.l.b16 %v252
  %v276 = vunpack.c.l.b16 %v253
  %v277 = vpack.c.b16 %v270, %v269
  %v278 = vpack.c.b16 %v272, %v271
  %v279 = vpack.c.b16 %v274, %v273
  %v280 = vpack.c.b16 %v276, %v275
  %v286 = vsel %vm82, %v243, 0
  %v289 = vsel %vm82, %v244, 0
  %v292 = vsel %vm82, %v245, 0
  %294 = vmatprep.subr.bf16.mxu0 0
  %295 = vmatpush1.bf16.msra.mxu0 0
  %296 = vmatprep.subr.bf16.mxu0 0
  %297 = vmatpush1.bf16.msra.mxu0 0
  %298 = vmatprep.subr.bf16.mxu0 0
  %299 = vmatpush1.bf16.msra.mxu0 0
  %300 = vmatprep.subr.bf16.mxu0 0
  %301 = vmatpush1.bf16.msra.mxu0 0
  %302 = vmatprep.subr.bf16.mxu0 0
  %303 = vmatpush1.bf16.msra.mxu0 %v280
  %304 = vmatprep.subr.bf16.mxu0 0
  %305 = vmatpush1.bf16.msra.mxu0 %v279
  %306 = vmatprep.subr.bf16.mxu0 0
  %307 = vmatpush1.bf16.msra.mxu0 %v278
  %308 = vmatprep.subr.bf16.mxu0 0
  %309 = vmatpush1.bf16.msra.mxu0 %v277
  %310 = vmatprep.subr.bf16.mxu0 0
  %311 = vmatpush2.bf16.msra.mxu0 0
  %312 = vmatprep.subr.bf16.mxu0 0
  %313 = vmatpush2.bf16.msra.mxu0 0
  %314 = vmatprep.subr.bf16.mxu0 0
  %315 = vmatpush2.bf16.msra.mxu0 0
  %316 = vmatprep.subr.bf16.mxu0 0
  %317 = vmatpush2.bf16.msra.mxu0 0
  %318 = vmatprep.subr.bf16.mxu0 0
  %319 = vmatpush2.bf16.msra.mxu0 0
  %320 = vmatprep.subr.bf16.mxu0 0
  %321 = vmatpush2.bf16.msra.mxu0 0
  %322 = vmatprep.subr.bf16.mxu0 0
  %323 = vmatpush2.bf16.msra.mxu0 0
  %324 = vmatprep.subr.bf16.mxu0 0
  %325 = vmatpush2.bf16.msra.mxu0 0
  %326 = vmatprep.mubr.bf16.mxu0 0
  %327 = vmatmul.mubr.bf16.gmra.mxu0 %v286
  %v328 = vpop.f32.mrf.mxu0
  %v329 = vadd.f32 %v259, %v328
  %v330 = vpop.f32.mrf.mxu0
  %v331 = vpop.f32.mrf.mxu0
  %v332 = vadd.f32 %v259, %v331
  %v333 = vpop.f32.mrf.mxu0
  %334 = vmatprep.mubr.bf16.mxu0 0
  %335 = vmatmul.mubr.bf16.gmra.mxu0 %v289
  %v336 = vpop.f32.mrf.mxu0
  %v337 = vadd.f32 %v259, %v336
  %v338 = vpop.f32.mrf.mxu0
  %v339 = vpop.f32.mrf.mxu0
  %v340 = vadd.f32 %v259, %v339
  %v341 = vpop.f32.mrf.mxu0
  %342 = vmatprep.mubr.bf16.mxu0 0
  %343 = vmatmul.mubr.bf16.gmra.mxu0 %v292
  %v344 = vpop.f32.mrf.mxu0
  %v345 = vadd.f32 %v259, %v344
  %v346 = vpop.f32.mrf.mxu0
  %v347 = vpop.f32.mrf.mxu0
  %v348 = vpop.f32.mrf.mxu0
  %349 = vdwg.mxu0
  %v350 = vmax.f32 %v329, 0.0
  %v351 = vmax.f32 %v332, 0.0
  %v352 = vmax.f32 %v337, 0.0
  %v353 = vmax.f32 %v340, 0.0
  %v354 = vmax.f32 %v345, 0.0
  %v355 = vpack.c.bf16 %v351, %v350
  %v356 = vpack.c.bf16 %v353, %v352
  %v357 = vpack.c.bf16 %v354, %v354
  %v358 = vld [vmem:[%s7] sm:$0xf]
  %v359 = vld [vmem:[%s7 + $0x4] sm:$0xf]
  %v360 = vld [vmem:[%s7 + $0x8] sm:$0xf]
  %v361 = vld [vmem:[%s7 + $0xc] sm:$0xf]
  %v362 = vld [vmem:[%s7 + $0x10] sm:$0xf]
  %v363 = vld [vmem:[%s7 + $0x14] sm:$0xf]
  %v364 = vld [vmem:[%s7 + $0x18] sm:$0xf]
  %v365 = vld [vmem:[%s7 + $0x1c] sm:$0xf]
  %v366 = vld [vmem:[%s8] sm:$0x1]
  %v368 = vlaneseq
  %v369 = vshrl.u32 %v368, 7
  %v370 = vsub.s32 0, %v369
  %v371 = vrot.slane %v366, %v370
  %v381 = vunpack.c.l.b16 %v358
  %v382 = vunpack.c.l.b16 %v359
  %v383 = vunpack.c.l.b16 %v360
  %v384 = vunpack.c.l.b16 %v361
  %v385 = vunpack.c.l.b16 %v362
  %v386 = vunpack.c.l.b16 %v363
  %v387 = vunpack.c.l.b16 %v364
  %v388 = vunpack.c.l.b16 %v365
  %v389 = vpack.c.b16 %v382, %v381
  %v390 = vpack.c.b16 %v384, %v383
  %v391 = vpack.c.b16 %v386, %v385
  %v392 = vpack.c.b16 %v388, %v387
  %v398 = vsel %vm82, %v355, 0
  %v401 = vsel %vm82, %v356, 0
  %v404 = vsel %vm82, %v357, 0
  %406 = vmatprep.subr.bf16.mxu0 0
  %407 = vmatpush1.bf16.msra.mxu0 0
  %408 = vmatprep.subr.bf16.mxu0 0
  %409 = vmatpush1.bf16.msra.mxu0 0
  %410 = vmatprep.subr.bf16.mxu0 0
  %411 = vmatpush1.bf16.msra.mxu0 0
  %412 = vmatprep.subr.bf16.mxu0 0
  %413 = vmatpush1.bf16.msra.mxu0 0
  %414 = vmatprep.subr.bf16.mxu0 0
  %415 = vmatpush1.bf16.msra.mxu0 %v392
  %416 = vmatprep.subr.bf16.mxu0 0
  %417 = vmatpush1.bf16.msra.mxu0 %v391
  %418 = vmatprep.subr.bf16.mxu0 0
  %419 = vmatpush1.bf16.msra.mxu0 %v390
  %420 = vmatprep.subr.bf16.mxu0 0
  %421 = vmatpush1.bf16.msra.mxu0 %v389
  %422 = vmatprep.subr.bf16.mxu0 0
  %423 = vmatpush2.bf16.msra.mxu0 0
  %424 = vmatprep.subr.bf16.mxu0 0
  %425 = vmatpush2.bf16.msra.mxu0 0
  %426 = vmatprep.subr.bf16.mxu0 0
  %427 = vmatpush2.bf16.msra.mxu0 0
  %428 = vmatprep.subr.bf16.mxu0 0
  %429 = vmatpush2.bf16.msra.mxu0 0
  %430 = vmatprep.subr.bf16.mxu0 0
  %431 = vmatpush2.bf16.msra.mxu0 0
  %432 = vmatprep.subr.bf16.mxu0 0
  %433 = vmatpush2.bf16.msra.mxu0 0
  %434 = vmatprep.subr.bf16.mxu0 0
  %435 = vmatpush2.bf16.msra.mxu0 0
  %436 = vmatprep.subr.bf16.mxu0 0
  %437 = vmatpush2.bf16.msra.mxu0 0
  %438 = vmatprep.mubr.bf16.mxu0 0
  %439 = vmatmul.mubr.bf16.gmra.mxu0 %v398
  %v440 = vpop.f32.mrf.mxu0
  %v441 = vadd.f32 %v371, %v440
  %v442 = vpop.f32.mrf.mxu0
  %v443 = vpop.f32.mrf.mxu0
  %v444 = vadd.f32 %v371, %v443
  %v445 = vpop.f32.mrf.mxu0
  %446 = vmatprep.mubr.bf16.mxu0 0
  %447 = vmatmul.mubr.bf16.gmra.mxu0 %v401
  %v448 = vpop.f32.mrf.mxu0
  %v449 = vadd.f32 %v371, %v448
  %v450 = vpop.f32.mrf.mxu0
  %v451 = vpop.f32.mrf.mxu0
  %v452 = vadd.f32 %v371, %v451
  %v453 = vpop.f32.mrf.mxu0
  %454 = vmatprep.mubr.bf16.mxu0 0
  %455 = vmatmul.mubr.bf16.gmra.mxu0 %v404
  %v456 = vpop.f32.mrf.mxu0
  %v457 = vadd.f32 %v371, %v456
  %v458 = vpop.f32.mrf.mxu0
  %v459 = vpop.f32.mrf.mxu0
  %v460 = vpop.f32.mrf.mxu0
  %461 = vdwg.mxu0
  %v462 = vmax.f32 %v441, 0.0
  %v463 = vmax.f32 %v444, 0.0
  %v464 = vmax.f32 %v449, 0.0
  %v465 = vmax.f32 %v452, 0.0
  %v466 = vmax.f32 %v457, 0.0
  %467 = vst.msk [vmem:[%s10] sm:$0xff] %vm82, %v462
  %468 = vst.msk [vmem:[%s10 + $0x8] sm:$0xff] %vm82, %v463
  %469 = vst.msk [vmem:[%s10 + $0x10] sm:$0xff] %vm82, %v464
  %470 = vst.msk [vmem:[%s10 + $0x18] sm:$0xff] %vm82, %v465
  %471 = vst.msk [vmem:[%s10 + $0x20] sm:$0xff] %vm82, %v466
  // Predicated region
  $region38: #{dino_forward.25} parent=0 // pred_check
    _
  $region39: #{dino_forward.25} parent=0 // pred_check_branch
    %473 = sbr.rel (0) target = $region41
  $region40: #{dino_forward.25} parent=0 // pred_region
    _
  $region41: #{dino_forward.25} parent=0 // pred_fallthru
    _
  // Predicated region
  $region42: #{dino_forward.25} parent=0 // pred_check
    _
  $region43: #{dino_forward.25} parent=0 // pred_check_branch
    %475 = sbr.rel (0) target = $region45
  $region44: #{dino_forward.25} parent=0 // pred_region
    _
  $region45: #{dino_forward.25} parent=0 // pred_fallthru
    _
  // Predicated region
  $region46: #{dino_forward.25} parent=0 // pred_check
    _
  $region47: #{dino_forward.25} parent=0 // pred_check_branch
    %477 = sbr.rel (0) target = $region49
  $region48: #{dino_forward.25} parent=0 // pred_region
    _
  $region49: #{dino_forward.25} parent=0 // pred_fallthru
    _
  // Predicated region
  $region50: #{dino_forward.25} parent=0 // pred_check
    _
  $region51: #{dino_forward.25} parent=0 // pred_check_branch
    %479 = sbr.rel (0) target = $region53
  $region52: #{dino_forward.25} parent=0 // pred_region
    _
  $region53: #{dino_forward.25} parent=0 // pred_fallthru
    _

// kernel: dino_forward.21
$region0: #{dino_forward.21}
  #allocation0 [shape = 'u32[]', space=smem, size = 0x4, offset = 0x4, fixed_abs, tag = 'smem constant byte address 0x4 - core index']
  #allocation1 [shape = 'u32[144,128]{1,0:T(1,128)}', space=vmem, size = 0x12000, scoped, tag = 'internal scratch']
  %s0 = inlined_call_operand.vmem [shape: f32[2,20,64], index: 0, kind: input, shape index: {}]
  %s1 = inlined_call_operand.vmem [shape: f32[2,20,64], index: 1, kind: input, shape index: {}]
  %s2 = inlined_call_operand.vmem [shape: bf16[64,128], index: 2, kind: input, shape index: {}]
  %s3 = inlined_call_operand.vmem [shape: f32[1,128], index: 3, kind: input, shape index: {}]
  %s4 = inlined_call_operand.vmem [shape: bf16[64,64], index: 4, kind: input, shape index: {}]
  %s5 = inlined_call_operand.vmem [shape: f32[1,64], index: 5, kind: input, shape index: {}]
  %s6 = inlined_call_operand.vmem [shape: bf16[64,64], index: 6, kind: input, shape index: {}]
  %s7 = inlined_call_operand.vmem [shape: f32[1,64], index: 7, kind: input, shape index: {}]
  %s8 = inlined_call_operand.vmem [shape: f32[1,64], index: 8, kind: input, shape index: {}]
  %s9 = inlined_call_operand.vmem [shape: f32[1,64], index: 9, kind: input, shape index: {}]
  %s10 = inlined_call_operand.vmem [shape: f32[2,20,64], index: 10, kind: output, shape index: {}]
  %s11 = sld [smem:[#allocation0]]
  $region73: #{dino_forward.21} parent=0
    _
  %s13 = ssub.s32 1, %s11
  %s14 = scalar_select 0, %s13, %s11
  loop: start=0, step=1, limit=4
  $region2: #{dino_forward.21} parent=0 // loop_pre_header
    _
  $region3: #{dino_forward.21} parent=0 // loop_header
    %s16 = sphi 0, %s20
    %p17 = scmp.ge.s32.totalorder %s16, 4
    %s26 = sphi 0, %s28
    %s29 = sphi 0, %s26
    %s30 = sphi 0, %s29
    %s46 = sphi 0, %s30
    %s52 = sphi 0, %s54
    %s55 = sphi 0, %s52
    %s56 = sphi 0, %s55
    %s72 = sphi 0, %s56
    %s76 = sphi 0, %s76
    %s78 = sphi 0, %s76
    %s79 = sphi 0, %s78
    %s93 = sphi 0, %s79
    %s97 = sphi 0, %s97
    %s99 = sphi 0, %s97
    %s100 = sphi 0, %s99
    %s114 = sphi 0, %s100
    %s118 = sphi 0, %s118
    %s120 = sphi 0, %s118
    %s121 = sphi 0, %s120
    %s135 = sphi 0, %s121
    %s139 = sphi 0, %s139
    %s141 = sphi 0, %s139
    %s142 = sphi 0, %s141
    %s156 = sphi 0, %s142
    %s160 = sphi 0, %s160
    %s162 = sphi 0, %s160
    %s163 = sphi 0, %s162
    %s177 = sphi 0, %s163
    %s181 = sphi 0, %s181
    %s183 = sphi 0, %s181
    %s184 = sphi 0, %s183
    %s198 = sphi 0, %s184
    %s202 = sphi 0, %s202
    %s204 = sphi 0, %s202
    %s205 = sphi 0, %s204
    %s219 = sphi 0, %s205
    %s223 = sphi 0, %s223
    %s225 = sphi 0, %s223
    %s226 = sphi 0, %s225
    %s240 = sphi 0, %s226
    %s246 = sphi 0, %s248
    %s249 = sphi 0, %s246
    %s250 = sphi 0, %s249
    %s266 = sphi 0, %s250
  $region4: #{dino_forward.21} parent=0 // loop_header_branch
    %19 = sbr.rel (%p17) target = $region8
  $region5: #{dino_forward.21} parent=0 // loop_body
    %s21 = ssub.s32 %s16, 1
    %s22 = ssub.s32 %s16, 2
    %s23 = sadd.s32 %s16, 1
    %s24 = ssub.s32 %s16, %s23
    %p25 = scmp.eq.s32.totalorder %s24, 0
    %s27 = sadd.s32 %s26, 1
    %s28 = scalar_select %p25, %s26, %s27
    %p31 = pneg %p25
    %p32 = scmp.eq.s32.totalorder %s16, 1
    %p33 = por %p31, %p32
    %p34 = scmp.ne.s32.totalorder %s26, %s29
    %p35 = scmp.eq.s32.totalorder %s16, 0
    %p36 = por %p34, %p35
    %p37 = scmp.ne.s32.totalorder %s26, %s29
    %p38 = scmp.eq.s32.totalorder %s21, 1
    %p39 = por %p37, %p38
    %p40 = scmp.ne.s32.totalorder %s29, %s30
    %p41 = scmp.eq.s32.totalorder %s21, 0
    %p42 = por %p40, %p41
    %p43 = scmp.ne.s32.totalorder %s29, %s30
    %p44 = scmp.eq.s32.totalorder %s22, 1
    %p45 = por %p43, %p44
    %p47 = scmp.ne.s32.totalorder %s30, %s46
    %p48 = scmp.eq.s32.totalorder %s22, 0
    %p49 = por %p47, %p48
    %s50 = ssub.s32 %s16, %s23
    %p51 = scmp.eq.s32.totalorder %s50, 0
    %s53 = sadd.s32 %s52, 1
    %s54 = scalar_select %p51, %s52, %s53
    %p57 = pneg %p51
    %p58 = scmp.eq.s32.totalorder %s16, 1
    %p59 = por %p57, %p58
    %p60 = scmp.ne.s32.totalorder %s52, %s55
    %p61 = scmp.eq.s32.totalorder %s16, 0
    %p62 = por %p60, %p61
    %p63 = scmp.ne.s32.totalorder %s52, %s55
    %p64 = scmp.eq.s32.totalorder %s21, 1
    %p65 = por %p63, %p64
    %p66 = scmp.ne.s32.totalorder %s55, %s56
    %p67 = scmp.eq.s32.totalorder %s21, 0
    %p68 = por %p66, %p67
    %p69 = scmp.ne.s32.totalorder %s55, %s56
    %p70 = scmp.eq.s32.totalorder %s22, 1
    %p71 = por %p69, %p70
    %p73 = scmp.ne.s32.totalorder %s56, %s72
    %p74 = scmp.eq.s32.totalorder %s22, 0
    %p75 = por %p73, %p74
    %s77 = sadd.s32 %s76, 1
    %p80 = scmp.eq.s32.totalorder %s16, 1
    %p81 = scmp.ne.s32.totalorder %s76, %s78
    %p82 = scmp.eq.s32.totalorder %s16, 0
    %p83 = por %p81, %p82
    %p84 = scmp.ne.s32.totalorder %s76, %s78
    %p85 = scmp.eq.s32.totalorder %s21, 1
    %p86 = por %p84, %p85
    %p87 = scmp.ne.s32.totalorder %s78, %s79
    %p88 = scmp.eq.s32.totalorder %s21, 0
    %p89 = por %p87, %p88
    %p90 = scmp.ne.s32.totalorder %s78, %s79
    %p91 = scmp.eq.s32.totalorder %s22, 1
    %p92 = por %p90, %p91
    %p94 = scmp.ne.s32.totalorder %s79, %s93
    %p95 = scmp.eq.s32.totalorder %s22, 0
    %p96 = por %p94, %p95
    %s98 = sadd.s32 %s97, 1
    %p101 = scmp.eq.s32.totalorder %s16, 1
    %p102 = scmp.ne.s32.totalorder %s97, %s99
    %p103 = scmp.eq.s32.totalorder %s16, 0
    %p104 = por %p102, %p103
    %p105 = scmp.ne.s32.totalorder %s97, %s99
    %p106 = scmp.eq.s32.totalorder %s21, 1
    %p107 = por %p105, %p106
    %p108 = scmp.ne.s32.totalorder %s99, %s100
    %p109 = scmp.eq.s32.totalorder %s21, 0
    %p110 = por %p108, %p109
    %p111 = scmp.ne.s32.totalorder %s99, %s100
    %p112 = scmp.eq.s32.totalorder %s22, 1
    %p113 = por %p111, %p112
    %p115 = scmp.ne.s32.totalorder %s100, %s114
    %p116 = scmp.eq.s32.totalorder %s22, 0
    %p117 = por %p115, %p116
    %s119 = sadd.s32 %s118, 1
    %p122 = scmp.eq.s32.totalorder %s16, 1
    %p123 = scmp.ne.s32.totalorder %s118, %s120
    %p124 = scmp.eq.s32.totalorder %s16, 0
    %p125 = por %p123, %p124
    %p126 = scmp.ne.s32.totalorder %s118, %s120
    %p127 = scmp.eq.s32.totalorder %s21, 1
    %p128 = por %p126, %p127
    %p129 = scmp.ne.s32.totalorder %s120, %s121
    %p130 = scmp.eq.s32.totalorder %s21, 0
    %p131 = por %p129, %p130
    %p132 = scmp.ne.s32.totalorder %s120, %s121
    %p133 = scmp.eq.s32.totalorder %s22, 1
    %p134 = por %p132, %p133
    %p136 = scmp.ne.s32.totalorder %s121, %s135
    %p137 = scmp.eq.s32.totalorder %s22, 0
    %p138 = por %p136, %p137
    %s140 = sadd.s32 %s139, 1
    %p143 = scmp.eq.s32.totalorder %s16, 1
    %p144 = scmp.ne.s32.totalorder %s139, %s141
    %p145 = scmp.eq.s32.totalorder %s16, 0
    %p146 = por %p144, %p145
    %p147 = scmp.ne.s32.totalorder %s139, %s141
    %p148 = scmp.eq.s32.totalorder %s21, 1
    %p149 = por %p147, %p148
    %p150 = scmp.ne.s32.totalorder %s141, %s142
    %p151 = scmp.eq.s32.totalorder %s21, 0
    %p152 = por %p150, %p151
    %p153 = scmp.ne.s32.totalorder %s141, %s142
    %p154 = scmp.eq.s32.totalorder %s22, 1
    %p155 = por %p153, %p154
    %p157 = scmp.ne.s32.totalorder %s142, %s156
    %p158 = scmp.eq.s32.totalorder %s22, 0
    %p159 = por %p157, %p158
    %s161 = sadd.s32 %s160, 1
    %p164 = scmp.eq.s32.totalorder %s16, 1
    %p165 = scmp.ne.s32.totalorder %s160, %s162
    %p166 = scmp.eq.s32.totalorder %s16, 0
    %p167 = por %p165, %p166
    %p168 = scmp.ne.s32.totalorder %s160, %s162
    %p169 = scmp.eq.s32.totalorder %s21, 1
    %p170 = por %p168, %p169
    %p171 = scmp.ne.s32.totalorder %s162, %s163
    %p172 = scmp.eq.s32.totalorder %s21, 0
    %p173 = por %p171, %p172
    %p174 = scmp.ne.s32.totalorder %s162, %s163
    %p175 = scmp.eq.s32.totalorder %s22, 1
    %p176 = por %p174, %p175
    %p178 = scmp.ne.s32.totalorder %s163, %s177
    %p179 = scmp.eq.s32.totalorder %s22, 0
    %p180 = por %p178, %p179
    %s182 = sadd.s32 %s181, 1
    %p185 = scmp.eq.s32.totalorder %s16, 1
    %p186 = scmp.ne.s32.totalorder %s181, %s183
    %p187 = scmp.eq.s32.totalorder %s16, 0
    %p188 = por %p186, %p187
    %p189 = scmp.ne.s32.totalorder %s181, %s183
    %p190 = scmp.eq.s32.totalorder %s21, 1
    %p191 = por %p189, %p190
    %p192 = scmp.ne.s32.totalorder %s183, %s184
    %p193 = scmp.eq.s32.totalorder %s21, 0
    %p194 = por %p192, %p193
    %p195 = scmp.ne.s32.totalorder %s183, %s184
    %p196 = scmp.eq.s32.totalorder %s22, 1
    %p197 = por %p195, %p196
    %p199 = scmp.ne.s32.totalorder %s184, %s198
    %p200 = scmp.eq.s32.totalorder %s22, 0
    %p201 = por %p199, %p200
    %s203 = sadd.s32 %s202, 1
    %p206 = scmp.eq.s32.totalorder %s16, 1
    %p207 = scmp.ne.s32.totalorder %s202, %s204
    %p208 = scmp.eq.s32.totalorder %s16, 0
    %p209 = por %p207, %p208
    %p210 = scmp.ne.s32.totalorder %s202, %s204
    %p211 = scmp.eq.s32.totalorder %s21, 1
    %p212 = por %p210, %p211
    %p213 = scmp.ne.s32.totalorder %s204, %s205
    %p214 = scmp.eq.s32.totalorder %s21, 0
    %p215 = por %p213, %p214
    %p216 = scmp.ne.s32.totalorder %s204, %s205
    %p217 = scmp.eq.s32.totalorder %s22, 1
    %p218 = por %p216, %p217
    %p220 = scmp.ne.s32.totalorder %s205, %s219
    %p221 = scmp.eq.s32.totalorder %s22, 0
    %p222 = por %p220, %p221
    %s224 = sadd.s32 %s223, 1
    %p227 = scmp.eq.s32.totalorder %s16, 1
    %p228 = scmp.ne.s32.totalorder %s223, %s225
    %p229 = scmp.eq.s32.totalorder %s16, 0
    %p230 = por %p228, %p229
    %p231 = scmp.ne.s32.totalorder %s223, %s225
    %p232 = scmp.eq.s32.totalorder %s21, 1
    %p233 = por %p231, %p232
    %p234 = scmp.ne.s32.totalorder %s225, %s226
    %p235 = scmp.eq.s32.totalorder %s21, 0
    %p236 = por %p234, %p235
    %p237 = scmp.ne.s32.totalorder %s225, %s226
    %p238 = scmp.eq.s32.totalorder %s22, 1
    %p239 = por %p237, %p238
    %p241 = scmp.ne.s32.totalorder %s226, %s240
    %p242 = scmp.eq.s32.totalorder %s22, 0
    %p243 = por %p241, %p242
    %s244 = ssub.s32 %s16, %s23
    %p245 = scmp.eq.s32.totalorder %s244, 0
    %s247 = sadd.s32 %s246, 1
    %s248 = scalar_select %p245, %s246, %s247
    %p251 = pneg %p245
    %p252 = scmp.eq.s32.totalorder %s16, 1
    %p253 = por %p251, %p252
    %p254 = scmp.ne.s32.totalorder %s246, %s249
    %p255 = scmp.eq.s32.totalorder %s16, 0
    %p256 = por %p254, %p255
    %p257 = scmp.ne.s32.totalorder %s246, %s249
    %p258 = scmp.eq.s32.totalorder %s21, 1
    %p259 = por %p257, %p258
    %p260 = scmp.ne.s32.totalorder %s249, %s250
    %p261 = scmp.eq.s32.totalorder %s21, 0
    %p262 = por %p260, %p261
    %p263 = scmp.ne.s32.totalorder %s249, %s250
    %p264 = scmp.eq.s32.totalorder %s22, 1
    %p265 = por %p263, %p264
    %p267 = scmp.ne.s32.totalorder %s250, %s266
    %p268 = scmp.eq.s32.totalorder %s22, 0
    %p269 = por %p267, %p268
    %p270 = scmp.le.s32.totalorder 1, %s16
    %p271 = scmp.lt.s32.totalorder %s16, 3
    %p272 = pnand %p270, %p271
    %p273 = pneg %p272
    // Predicated region
    $region9: #{dino_forward.21} parent=5 // pred_check
      _
    $region10: #{dino_forward.21} parent=5 // pred_check_branch
      %275 = sbr.rel (%p272) target = $region12
    $region11: #{dino_forward.21} parent=5 // pred_region
      %s276 = ssub.s32 %s16, 1
      // Predicated region
      $region13: #{dino_forward.21} parent=11 // pred_check
        %p277 = pneg %p89
      $region14: #{dino_forward.21} parent=11 // pred_check_branch
        %279 = sbr.rel (%p277) target = $region16
      $region15: #{dino_forward.21} parent=11 // pred_region
        _
      $region16: #{dino_forward.21} parent=11 // pred_fallthru
        _
      // Predicated region
      $region17: #{dino_forward.21} parent=11 // pred_check
        %p280 = pneg %p110
      $region18: #{dino_forward.21} parent=11 // pred_check_branch
        %282 = sbr.rel (%p280) target = $region20
      $region19: #{dino_forward.21} parent=11 // pred_region
        _
      $region20: #{dino_forward.21} parent=11 // pred_fallthru
        _
      // Predicated region
      $region21: #{dino_forward.21} parent=11 // pred_check
        %p283 = pneg %p131
      $region22: #{dino_forward.21} parent=11 // pred_check_branch
        %285 = sbr.rel (%p283) target = $region24
      $region23: #{dino_forward.21} parent=11 // pred_region
        _
      $region24: #{dino_forward.21} parent=11 // pred_fallthru
        _
      // Predicated region
      $region25: #{dino_forward.21} parent=11 // pred_check
        %p286 = pneg %p152
      $region26: #{dino_forward.21} parent=11 // pred_check_branch
        %288 = sbr.rel (%p286) target = $region28
      $region27: #{dino_forward.21} parent=11 // pred_region
        _
      $region28: #{dino_forward.21} parent=11 // pred_fallthru
        _
      // Predicated region
      $region29: #{dino_forward.21} parent=11 // pred_check
        %p289 = pneg %p173
      $region30: #{dino_forward.21} parent=11 // pred_check_branch
        %291 = sbr.rel (%p289) target = $region32
      $region31: #{dino_forward.21} parent=11 // pred_region
        _
      $region32: #{dino_forward.21} parent=11 // pred_fallthru
        _
      // Predicated region
      $region33: #{dino_forward.21} parent=11 // pred_check
        %p292 = pneg %p194
      $region34: #{dino_forward.21} parent=11 // pred_check_branch
        %294 = sbr.rel (%p292) target = $region36
      $region35: #{dino_forward.21} parent=11 // pred_region
        _
      $region36: #{dino_forward.21} parent=11 // pred_fallthru
        _
      // Predicated region
      $region37: #{dino_forward.21} parent=11 // pred_check
        %p295 = pneg %p215
      $region38: #{dino_forward.21} parent=11 // pred_check_branch
        %297 = sbr.rel (%p295) target = $region40
      $region39: #{dino_forward.21} parent=11 // pred_region
        _
      $region40: #{dino_forward.21} parent=11 // pred_fallthru
        _
      // Predicated region
      $region41: #{dino_forward.21} parent=11 // pred_check
        %p298 = pneg %p236
      $region42: #{dino_forward.21} parent=11 // pred_check_branch
        %300 = sbr.rel (%p298) target = $region44
      $region43: #{dino_forward.21} parent=11 // pred_region
        _
      $region44: #{dino_forward.21} parent=11 // pred_fallthru
        _
    $region12: #{dino_forward.21} parent=5 // pred_fallthru
      _
    %p301 = scmp.lt.s32.totalorder %s16, 2
    // Predicated region
    $region45: #{dino_forward.21} parent=5 // pred_check
      %p302 = pneg %p301
    $region46: #{dino_forward.21} parent=5 // pred_check_branch
      %304 = sbr.rel (%p302) target = $region48
    $region47: #{dino_forward.21} parent=5 // pred_region
      // Predicated region
      $region49: #{dino_forward.21} parent=47 // pred_check
        %p305 = pneg %p36
      $region50: #{dino_forward.21} parent=47 // pred_check_branch
        %307 = sbr.rel (%p305) target = $region52
      $region51: #{dino_forward.21} parent=47 // pred_region
        %p308 = scmp.lt.s32.totalorder %s16, 1
        %s309 = scalar_select %p308, %s16, 1
        %s310 = smul.addr %s309, 3
        %s311 = smul.addr %s310, 8
        %s312 = scalar_lea.vmem %s0, %s311
      $region52: #{dino_forward.21} parent=47 // pred_fallthru
        _
      // Predicated region
      $region53: #{dino_forward.21} parent=47 // pred_check
        %p313 = pneg %p62
      $region54: #{dino_forward.21} parent=47 // pred_check_branch
        %315 = sbr.rel (%p313) target = $region56
      $region55: #{dino_forward.21} parent=47 // pred_region
        %p316 = scmp.lt.s32.totalorder %s16, 1
        %s317 = scalar_select %p316, %s16, 1
        %s318 = smul.addr %s317, 3
        %s319 = smul.addr %s318, 8
        %s320 = scalar_lea.vmem %s1, %s319
      $region56: #{dino_forward.21} parent=47 // pred_fallthru
        _
    $region48: #{dino_forward.21} parent=5 // pred_fallthru
      _
    %p321 = scmp.le.s32.totalorder 1, %s16
    %p322 = scmp.lt.s32.totalorder %s16, 3
    %p323 = pnand %p321, %p322
    %p324 = pneg %p323
    // Predicated region
    $region57: #{dino_forward.21} parent=5 // pred_check
      _
    $region58: #{dino_forward.21} parent=5 // pred_check_branch
      %326 = sbr.rel (%p323) target = $region60
    $region59: #{dino_forward.21} parent=5 // pred_region
      %s327 = ssub.s32 %s16, 1
      %p328 = scmp.lt.s32.totalorder %s21, 1
      %s329 = scalar_select %p328, %s21, 1
      %s330 = smul.addr %s329, 3
      %s331 = smul.addr %s330, 8
      %s332 = scalar_lea.vmem %s0, %s331
      %p333 = pneg %p42
      %p334 = pneg %p39
      %p335 = scmp.lt.s32.totalorder %s21, 1
      %s336 = scalar_select %p335, %s21, 1
      %s337 = smul.addr %s336, 3
      %s338 = smul.addr %s337, 8
      %s339 = scalar_lea.vmem %s1, %s338
      %p340 = pneg %p68
      %p341 = pneg %p65
      %p342 = pneg %p89
      %p343 = pneg %p86
      %p344 = pneg %p110
      %p345 = pneg %p107
      %p346 = pneg %p131
      %p347 = pneg %p128
      %p348 = pneg %p152
      %p349 = pneg %p149
      %p350 = pneg %p173
      %p351 = pneg %p170
      %p352 = pneg %p194
      %p353 = pneg %p191
      %p354 = pneg %p215
      %p355 = pneg %p212
      %p356 = pneg %p236
      %p357 = pneg %p233
      %p358 = pneg %p262
      %p359 = pneg %p259
      %p360 = scmp.lt.s32.totalorder %s21, 1
      %s361 = scalar_select %p360, %s21, 1
      %s362 = smul.addr %s361, 3
      %s363 = smul.addr %s362, 8
      %s364 = scalar_lea.vmem %s10, %s363
      %p365 = scmp.lt.s32.totalorder %s21, 1
      %s366 = scalar_select %p365, %s21, 1
      %s367 = smul.addr %s366, 3
      %s368 = smul.addr %s367, 8
      %s369 = scalar_lea.vmem %s0, %s368
      %p370 = scmp.lt.s32.totalorder %s21, 1
      %s371 = scalar_select %p370, %s21, 1
      %s372 = smul.addr %s371, 3
      %s373 = smul.addr %s372, 8
      %s374 = scalar_lea.vmem %s1, %s373
      %p375 = scmp.lt.s32.totalorder %s21, 1
      %s376 = scalar_select %p375, %s21, 1
      %s377 = smul.addr %s376, 3
      %s378 = smul.addr %s377, 8
      %s379 = scalar_lea.vmem %s10, %s378
      %v381 = vld [vmem:[%s369] sm:$0xff]
      %v382 = vld [vmem:[%s369 + $0x8] sm:$0xff]
      %v383 = vld [vmem:[%s369 + $0x10] sm:$0xf]
      %v384 = vld [vmem:[%s374] sm:$0xff]
      %v385 = vld [vmem:[%s374 + $0x8] sm:$0xff]
      %v386 = vld [vmem:[%s374 + $0x10] sm:$0xf]
      %v387 = vadd.f32 %v381, %v384
      %v388 = vadd.f32 %v382, %v385
      %v389 = vadd.f32 %v383, %v386
      %v390 = vpack.c.bf16 %v388, %v387
      %v391 = vpack.c.bf16 %v389, %v389
      %v392 = vld [vmem:[%s2] sm:$0xf]
      %v393 = vld [vmem:[%s2 + $0x4] sm:$0xf]
      %v394 = vld [vmem:[%s2 + $0x8] sm:$0xf]
      %v395 = vld [vmem:[%s2 + $0xc] sm:$0xf]
      %v396 = vld [vmem:[%s2 + $0x10] sm:$0xf]
      %v397 = vld [vmem:[%s2 + $0x14] sm:$0xf]
      %v398 = vld [vmem:[%s2 + $0x18] sm:$0xf]
      %v399 = vld [vmem:[%s2 + $0x1c] sm:$0xf]
      %v400 = vld [vmem:[%s3] sm:$0x1]
      %v402 = vlaneseq
      %v403 = vshrl.u32 %v402, 7
      %v404 = vsub.s32 0, %v403
      %v405 = vrot.slane %v400, %v404
      %v415 = vunpack.c.l.b16 %v392
      %v416 = vunpack.c.l.b16 %v393
      %v417 = vunpack.c.l.b16 %v394
      %v418 = vunpack.c.l.b16 %v395
      %v419 = vunpack.c.l.b16 %v396
      %v420 = vunpack.c.l.b16 %v397
      %v421 = vunpack.c.l.b16 %v398
      %v422 = vunpack.c.l.b16 %v399
      %v423 = vpack.c.b16 %v416, %v415
      %v424 = vpack.c.b16 %v418, %v417
      %v425 = vpack.c.b16 %v420, %v419
      %v426 = vpack.c.b16 %v422, %v421
      %vm431 = vcmask 523264
      %v433 = vsel %vm431, %v390, 0
      %v436 = vsel %vm431, %v391, 0
      %438 = vmatprep.subr.bf16.mxu0 0
      %439 = vmatpush1.bf16.msra.mxu0 0
      %440 = vmatprep.subr.bf16.mxu0 0
      %441 = vmatpush1.bf16.msra.mxu0 0
      %442 = vmatprep.subr.bf16.mxu0 0
      %443 = vmatpush1.bf16.msra.mxu0 0
      %444 = vmatprep.subr.bf16.mxu0 0
      %445 = vmatpush1.bf16.msra.mxu0 0
      %446 = vmatprep.subr.bf16.mxu0 0
      %447 = vmatpush1.bf16.msra.mxu0 %v426
      %448 = vmatprep.subr.bf16.mxu0 0
      %449 = vmatpush1.bf16.msra.mxu0 %v425
      %450 = vmatprep.subr.bf16.mxu0 0
      %451 = vmatpush1.bf16.msra.mxu0 %v424
      %452 = vmatprep.subr.bf16.mxu0 0
      %453 = vmatpush1.bf16.msra.mxu0 %v423
      %454 = vmatprep.subr.bf16.mxu0 0
      %455 = vmatpush2.bf16.msra.mxu0 0
      %456 = vmatprep.subr.bf16.mxu0 0
      %457 = vmatpush2.bf16.msra.mxu0 0
      %458 = vmatprep.subr.bf16.mxu0 0
      %459 = vmatpush2.bf16.msra.mxu0 0
      %460 = vmatprep.subr.bf16.mxu0 0
      %461 = vmatpush2.bf16.msra.mxu0 0
      %462 = vmatprep.subr.bf16.mxu0 0
      %463 = vmatpush2.bf16.msra.mxu0 0
      %464 = vmatprep.subr.bf16.mxu0 0
      %465 = vmatpush2.bf16.msra.mxu0 0
      %466 = vmatprep.subr.bf16.mxu0 0
      %467 = vmatpush2.bf16.msra.mxu0 0
      %468 = vmatprep.subr.bf16.mxu0 0
      %469 = vmatpush2.bf16.msra.mxu0 0
      %470 = vmatprep.mubr.bf16.mxu0 0
      %471 = vmatmul.mubr.bf16.gmra.mxu0 %v433
      %v472 = vpop.f32.mrf.mxu0
      %v473 = vadd.f32 %v405, %v472
      %v474 = vpop.f32.mrf.mxu0
      %v475 = vpop.f32.mrf.mxu0
      %v476 = vadd.f32 %v405, %v475
      %v477 = vpop.f32.mrf.mxu0
      %478 = vmatprep.mubr.bf16.mxu0 0
      %479 = vmatmul.mubr.bf16.gmra.mxu0 %v436
      %v480 = vpop.f32.mrf.mxu0
      %v481 = vadd.f32 %v405, %v480
      %v482 = vpop.f32.mrf.mxu0
      %v483 = vpop.f32.mrf.mxu0
      %v484 = vpop.f32.mrf.mxu0
      %485 = vdwg.mxu0
      %v486 = vpack.c.bf16 %v382, %v381
      %v487 = vpack.c.bf16 %v383, %v383
      %v488 = vld [vmem:[%s4] sm:$0xf]
      %v489 = vld [vmem:[%s4 + $0x4] sm:$0xf]
      %v490 = vld [vmem:[%s4 + $0x8] sm:$0xf]
      %v491 = vld [vmem:[%s4 + $0xc] sm:$0xf]
      %v492 = vld [vmem:[%s4 + $0x10] sm:$0xf]
      %v493 = vld [vmem:[%s4 + $0x14] sm:$0xf]
      %v494 = vld [vmem:[%s4 + $0x18] sm:$0xf]
      %v495 = vld [vmem:[%s4 + $0x1c] sm:$0xf]
      %v496 = vld [vmem:[%s5] sm:$0x1]
      %v498 = vlaneseq
      %v499 = vshrl.u32 %v498, 7
      %v500 = vsub.s32 0, %v499
      %v501 = vrot.slane %v496, %v500
      %v511 = vunpack.c.l.b16 %v488
      %v512 = vunpack.c.l.b16 %v489
      %v513 = vunpack.c.l.b16 %v490
      %v514 = vunpack.c.l.b16 %v491
      %v515 = vunpack.c.l.b16 %v492
      %v516 = vunpack.c.l.b16 %v493
      %v517 = vunpack.c.l.b16 %v494
      %v518 = vunpack.c.l.b16 %v495
      %v519 = vpack.c.b16 %v512, %v511
      %v520 = vpack.c.b16 %v514, %v513
      %v521 = vpack.c.b16 %v516, %v515
      %v522 = vpack.c.b16 %v518, %v517
      %v528 = vsel %vm431, %v486, 0
      %v531 = vsel %vm431, %v487, 0
      %533 = vmatprep.subr.bf16.mxu0 0
      %534 = vmatpush1.bf16.msra.mxu0 0
      %535 = vmatprep.subr.bf16.mxu0 0
      %536 = vmatpush1.bf16.msra.mxu0 0
      %537 = vmatprep.subr.bf16.mxu0 0
      %538 = vmatpush1.bf16.msra.mxu0 0
      %539 = vmatprep.subr.bf16.mxu0 0
      %540 = vmatpush1.bf16.msra.mxu0 0
      %541 = vmatprep.subr.bf16.mxu0 0
      %542 = vmatpush1.bf16.msra.mxu0 %v522
      %543 = vmatprep.subr.bf16.mxu0 0
      %544 = vmatpush1.bf16.msra.mxu0 %v521
      %545 = vmatprep.subr.bf16.mxu0 0
      %546 = vmatpush1.bf16.msra.mxu0 %v520
      %547 = vmatprep.subr.bf16.mxu0 0
      %548 = vmatpush1.bf16.msra.mxu0 %v519
      %549 = vmatprep.subr.bf16.mxu0 0
      %550 = vmatpush2.bf16.msra.mxu0 0
      %551 = vmatprep.subr.bf16.mxu0 0
      %552 = vmatpush2.bf16.msra.mxu0 0
      %553 = vmatprep.subr.bf16.mxu0 0
      %554 = vmatpush2.bf16.msra.mxu0 0
      %555 = vmatprep.subr.bf16.mxu0 0
      %556 = vmatpush2.bf16.msra.mxu0 0
      %557 = vmatprep.subr.bf16.mxu0 0
      %558 = vmatpush2.bf16.msra.mxu0 0
      %559 = vmatprep.subr.bf16.mxu0 0
      %560 = vmatpush2.bf16.msra.mxu0 0
      %561 = vmatprep.subr.bf16.mxu0 0
      %562 = vmatpush2.bf16.msra.mxu0 0
      %563 = vmatprep.subr.bf16.mxu0 0
      %564 = vmatpush2.bf16.msra.mxu0 0
      %565 = vmatprep.mubr.bf16.mxu0 0
      %566 = vmatmul.mubr.bf16.gmra.mxu0 %v528
      %v567 = vpop.f32.mrf.mxu0
      %v568 = vadd.f32 %v501, %v567
      %v569 = vpop.f32.mrf.mxu0
      %v570 = vpop.f32.mrf.mxu0
      %v571 = vadd.f32 %v501, %v570
      %v572 = vpop.f32.mrf.mxu0
      %573 = vmatprep.mubr.bf16.mxu0 0
      %574 = vmatmul.mubr.bf16.gmra.mxu0 %v531
      %v575 = vpop.f32.mrf.mxu0
      %v576 = vadd.f32 %v501, %v575
      %v577 = vpop.f32.mrf.mxu0
      %v578 = vpop.f32.mrf.mxu0
      %v579 = vpop.f32.mrf.mxu0
      %580 = vdwg.mxu0
      %v581 = vpack.c.bf16 %v476, %v473
      %v582 = vpack.c.bf16 %v481, %v481
      %v583 = vpack.c.bf16 %v571, %v568
      %v584 = vpack.c.bf16 %v576, %v576
      %587 = vrot.lane.b32.xlu0 %v581, 64
      %v588 = vpop.permute.xlu0 %587
      %589 = vrot.lane.b32.xlu0 %v582, 64
      %v590 = vpop.permute.xlu0 %589
      %vm591 = vcmask 130048
      %v593 = vsel %vm591, %v581, 0
      %v596 = vsel %vm591, %v582, 0
      %v599 = vsel %vm591, %v588, 0
      %v602 = vsel %vm591, %v590, 0
      %604 = vmatprep.subr.bf16.mxu0 0
      %605 = vmatpush1.bf16.xpose.msra.mxu0 0
      %606 = vmatprep.subr.bf16.mxu0 0
      %607 = vmatpush1.bf16.xpose.msra.mxu0 0
      %608 = vmatprep.subr.bf16.mxu0 0
      %609 = vmatpush1.bf16.xpose.msra.mxu0 0
      %610 = vmatprep.subr.bf16.mxu0 0
      %611 = vmatpush1.bf16.xpose.msra.mxu0 0
      %612 = vmatprep.subr.bf16.mxu0 0
      %613 = vmatpush1.bf16.xpose.msra.mxu0 0
      %614 = vmatprep.subr.bf16.mxu0 0
      %615 = vmatpush1.bf16.xpose.msra.mxu0 0
      %616 = vmatprep.subr.bf16.mxu0 0
      %617 = vmatpush1.bf16.xpose.msra.mxu0 %v602
      %618 = vmatprep.subr.bf16.mxu0 0
      %619 = vmatpush1.bf16.xpose.msra.mxu0 %v599
      %620 = vmatprep.subr.bf16.mxu0 0
      %621 = vmatpush2.bf16.xpose.msra.mxu0 0
      %622 = vmatprep.subr.bf16.mxu0 0
      %623 = vmatpush2.bf16.xpose.msra.mxu0 0
      %624 = vmatprep.subr.bf16.mxu0 0
      %625 = vmatpush2.bf16.xpose.msra.mxu0 0
      %626 = vmatprep.subr.bf16.mxu0 0
      %627 = vmatpush2.bf16.xpose.msra.mxu0 0
      %628 = vmatprep.subr.bf16.mxu0 0
      %629 = vmatpush2.bf16.xpose.msra.mxu0 0
      %630 = vmatprep.subr.bf16.mxu0 0
      %631 = vmatpush2.bf16.xpose.msra.mxu0 0
      %632 = vmatprep.subr.bf16.mxu0 0
      %633 = vmatpush2.bf16.xpose.msra.mxu0 0
      %634 = vmatprep.subr.bf16.mxu0 0
      %635 = vmatpush2.bf16.xpose.msra.mxu0 0
      %636 = vmatprep.mubr.bf16.mxu0 0
      %637 = vmatmul.mubr.bf16.gmra.mxu0 %v593
      %v638 = vpop.f32.mrf.mxu0
      %v639 = vadd.f32 0.0, %v638
      %v640 = vpop.f32.mrf.mxu0
      %v641 = vpop.f32.mrf.mxu0
      %v642 = vadd.f32 0.0, %v641
      %v643 = vpop.f32.mrf.mxu0
      %644 = vmatprep.mubr.bf16.mxu0 0
      %645 = vmatmul.mubr.bf16.gmra.mxu0 %v596
      %v646 = vpop.f32.mrf.mxu0
      %v647 = vadd.f32 0.0, %v646
      %v648 = vpop.f32.mrf.mxu0
      %v649 = vpop.f32.mrf.mxu0
      %v650 = vpop.f32.mrf.mxu0
      %651 = vdwg.mxu0
      %v652 = vmul.f32 %v639, 0.25
      %v653 = vmul.f32 %v642, 0.25
      %v654 = vmul.f32 %v647, 0.25
      %vm655 = vcmask 162816
      %v656 = vsel %vm655, %v652, -inf
      %657 = vmax.xlane.f32.xlu0 %v656
      %v658 = vpop.xlane.xlu0 %657
      %v659 = vsel %vm655, %v653, -inf
      %660 = vmax.xlane.f32.xlu0 %v659
      %v661 = vpop.xlane.xlu0 %660
      %vm662 = vcmask 158720
      %v663 = vsel %vm662, %v654, -inf
      %664 = vmax.xlane.f32.xlu0 %v663
      %v665 = vpop.xlane.xlu0 %664
      %v666 = vsub.f32 %v652, %v658
      %v667 = vsub.f32 %v653, %v661
      %v668 = vsub.f32 %v654, %v665
      %v669 = vmul.f32 %v666, 1.442695
      %v670 = vpow.pop %v669
      %v671 = vmul.f32 %v667, 1.442695
      %v672 = vpow.pop %v671
      %v673 = vmul.f32 %v668, 1.442695
      %v674 = vpow.pop %v673
      %v675 = vsel %vm655, %v670, 0.0
      %676 = vadd.xlane.f32.xlu0 %v675
      %v677 = vpop.xlane.xlu0 %676
      %v678 = vsel %vm655, %v672, 0.0
      %679 = vadd.xlane.f32.xlu0 %v678
      %v680 = vpop.xlane.xlu0 %679
      %v681 = vsel %vm662, %v674, 0.0
      %682 = vadd.xlane.f32.xlu0 %v681
      %v683 = vpop.xlane.xlu0 %682
      %v684 = vrcp.pop %v677
      %v685 = vrcp.pop %v680
      %v686 = vrcp.pop %v683
      %v687 = vmul.f32 %v670, %v684
      %v688 = vmul.f32 %v672, %v685
      %v689 = vmul.f32 %v674, %v686
      %v690 = vpack.c.bf16 %v688, %v687
      %v691 = vpack.c.bf16 %v689, %v689
      %v693 = vsel %vm655, %v690, 0
      %v696 = vsel %vm655, %v691, 0
      %vm698 = vcmask 1041408
      %v700 = vsel %vm698, %v584, 0
      %702 = vmatprep.subr.bf16.mxu0 0
      %703 = vmatpush1.bf16.msra.mxu0 0
      %704 = vmatprep.subr.bf16.mxu0 0
      %705 = vmatpush1.bf16.msra.mxu0 0
      %706 = vmatprep.subr.bf16.mxu0 0
      %707 = vmatpush1.bf16.msra.mxu0 0
      %708 = vmatprep.subr.bf16.mxu0 0
      %709 = vmatpush1.bf16.msra.mxu0 0
      %710 = vmatprep.subr.bf16.mxu0 0
      %711 = vmatpush1.bf16.msra.mxu0 0
      %712 = vmatprep.subr.bf16.mxu0 0
      %713 = vmatpush1.bf16.msra.mxu0 0
      %714 = vmatprep.subr.bf16.mxu0 0
      %715 = vmatpush1.bf16.msra.mxu0 %v700
      %716 = vmatprep.subr.bf16.mxu0 0
      %717 = vmatpush1.bf16.msra.mxu0 %v583
      %718 = vmatprep.subr.bf16.mxu0 0
      %719 = vmatpush2.bf16.msra.mxu0 0
      %720 = vmatprep.subr.bf16.mxu0 0
      %721 = vmatpush2.bf16.msra.mxu0 0
      %722 = vmatprep.subr.bf16.mxu0 0
      %723 = vmatpush2.bf16.msra.mxu0 0
      %724 = vmatprep.subr.bf16.mxu0 0
      %725 = vmatpush2.bf16.msra.mxu0 0
      %726 = vmatprep.subr.bf16.mxu0 0
      %727 = vmatpush2.bf16.msra.mxu0 0
      %728 = vmatprep.subr.bf16.mxu0 0
      %729 = vmatpush2.bf16.msra.mxu0 0
      %730 = vmatprep.subr.bf16.mxu0 0
      %731 = vmatpush2.bf16.msra.mxu0 0
      %732 = vmatprep.subr.bf16.mxu0 0
      %733 = vmatpush2.bf16.msra.mxu0 0
      %734 = vmatprep.mubr.bf16.mxu0 0
      %735 = vmatmul.mubr.bf16.gmra.mxu0 %v693
      %v736 = vpop.f32.mrf.mxu0
      %v737 = vadd.f32 0.0, %v736
      %v738 = vpop.f32.mrf.mxu0
      %v739 = vpop.f32.mrf.mxu0
      %v740 = vadd.f32 0.0, %v739
      %v741 = vpop.f32.mrf.mxu0
      %742 = vmatprep.mubr.bf16.mxu0 0
      %743 = vmatmul.mubr.bf16.gmra.mxu0 %v696
      %v744 = vpop.f32.mrf.mxu0
      %v745 = vadd.f32 0.0, %v744
      %v746 = vpop.f32.mrf.mxu0
      %v747 = vpop.f32.mrf.mxu0
      %v748 = vpop.f32.mrf.mxu0
      %749 = vdwg.mxu0
      %750 = vrot.lane.b32.xlu0 %v581, 112
      %v751 = vpop.permute.xlu0 %750
      %752 = vrot.lane.b32.xlu0 %v582, 112
      %v753 = vpop.permute.xlu0 %752
      %754 = vrot.lane.b32.xlu0 %v581, 48
      %v755 = vpop.permute.xlu0 %754
      %756 = vrot.lane.b32.xlu0 %v582, 48
      %v757 = vpop.permute.xlu0 %756
      %v759 = vsel %vm591, %v751, 0
      %v762 = vsel %vm591, %v753, 0
      %v765 = vsel %vm591, %v755, 0
      %v768 = vsel %vm591, %v757, 0
      %770 = vmatprep.subr.bf16.mxu0 0
      %771 = vmatpush1.bf16.xpose.msra.mxu0 0
      %772 = vmatprep.subr.bf16.mxu0 0
      %773 = vmatpush1.bf16.xpose.msra.mxu0 0
      %774 = vmatprep.subr.bf16.mxu0 0
      %775 = vmatpush1.bf16.xpose.msra.mxu0 0
      %776 = vmatprep.subr.bf16.mxu0 0
      %777 = vmatpush1.bf16.xpose.msra.mxu0 0
      %778 = vmatprep.subr.bf16.mxu0 0
      %779 = vmatpush1.bf16.xpose.msra.mxu0 0
      %780 = vmatprep.subr.bf16.mxu0 0
      %781 = vmatpush1.bf16.xpose.msra.mxu0 0
      %782 = vmatprep.subr.bf16.mxu0 0
      %783 = vmatpush1.bf16.xpose.msra.mxu0 %v768
      %784 = vmatprep.subr.bf16.mxu0 0
      %785 = vmatpush1.bf16.xpose.msra.mxu0 %v765
      %786 = vmatprep.subr.bf16.mxu0 0
      %787 = vmatpush2.bf16.xpose.msra.mxu0 0
      %788 = vmatprep.subr.bf16.mxu0 0
      %789 = vmatpush2.bf16.xpose.msra.mxu0 0
      %790 = vmatprep.subr.bf16.mxu0 0
      %791 = vmatpush2.bf16.xpose.msra.mxu0 0
      %792 = vmatprep.subr.bf16.mxu0 0
      %793 = vmatpush2.bf16.xpose.msra.mxu0 0
      %794 = vmatprep.subr.bf16.mxu0 0
      %795 = vmatpush2.bf16.xpose.msra.mxu0 0
      %796 = vmatprep.subr.bf16.mxu0 0
      %797 = vmatpush2.bf16.xpose.msra.mxu0 0
      %798 = vmatprep.subr.bf16.mxu0 0
      %799 = vmatpush2.bf16.xpose.msra.mxu0 0
      %800 = vmatprep.subr.bf16.mxu0 0
      %801 = vmatpush2.bf16.xpose.msra.mxu0 0
      %802 = vmatprep.mubr.bf16.mxu0 0
      %803 = vmatmul.mubr.bf16.gmra.mxu0 %v759
      %v804 = vpop.f32.mrf.mxu0
      %v805 = vadd.f32 0.0, %v804
      %v806 = vpop.f32.mrf.mxu0
      %v807 = vpop.f32.mrf.mxu0
      %v808 = vadd.f32 0.0, %v807
      %v809 = vpop.f32.mrf.mxu0
      %810 = vmatprep.mubr.bf16.mxu0 0
      %811 = vmatmul.mubr.bf16.gmra.mxu0 %v762
      %v812 = vpop.f32.mrf.mxu0
      %v813 = vadd.f32 0.0, %v812
      %v814 = vpop.f32.mrf.mxu0
      %v815 = vpop.f32.mrf.mxu0
      %v816 = vpop.f32.mrf.mxu0
      %817 = vdwg.mxu0
      %v818 = vmul.f32 %v805, 0.25
      %v819 = vmul.f32 %v808, 0.25
      %v820 = vmul.f32 %v813, 0.25
      %v821 = vsel %vm655, %v818, -inf
      %822 = vmax.xlane.f32.xlu0 %v821
      %v823 = vpop.xlane.xlu0 %822
      %v824 = vsel %vm655, %v819, -inf
      %825 = vmax.xlane.f32.xlu0 %v824
      %v826 = vpop.xlane.xlu0 %825
      %v827 = vsel %vm662, %v820, -inf
      %828 = vmax.xlane.f32.xlu0 %v827
      %v829 = vpop.xlane.xlu0 %828
      %v830 = vsub.f32 %v818, %v823
      %v831 = vsub.f32 %v819, %v826
      %v832 = vsub.f32 %v820, %v829
      %v833 = vmul.f32 %v830, 1.442695
      %v834 = vpow.pop %v833
      %v835 = vmul.f32 %v831, 1.442695
      %v836 = vpow.pop %v835
      %v837 = vmul.f32 %v832, 1.442695
      %v838 = vpow.pop %v837
      %v839 = vsel %vm655, %v834, 0.0
      %840 = vadd.xlane.f32.xlu0 %v839
      %v841 = vpop.xlane.xlu0 %840
      %v842 = vsel %vm655, %v836, 0.0
      %843 = vadd.xlane.f32.xlu0 %v842
      %v844 = vpop.xlane.xlu0 %843
      %v845 = vsel %vm662, %v838, 0.0
      %846 = vadd.xlane.f32.xlu0 %v845
      %v847 = vpop.xlane.xlu0 %846
      %v848 = vrcp.pop %v841
      %v849 = vrcp.pop %v844
      %v850 = vrcp.pop %v847
      %v851 = vmul.f32 %v834, %v848
      %v852 = vmul.f32 %v836, %v849
      %v853 = vmul.f32 %v838, %v850
      %v854 = vpack.c.bf16 %v852, %v851
      %v855 = vpack.c.bf16 %v853, %v853
      %858 = vrot.lane.b32.xlu0 %v583, 112
      %v859 = vpop.permute.xlu0 %858
      %860 = vrot.lane.b32.xlu0 %v584, 112
      %v861 = vpop.permute.xlu0 %860
      %v864 = vsel %vm655, %v854, 0
      %v867 = vsel %vm655, %v855, 0
      %v870 = vsel %vm698, %v861, 0
      %872 = vmatprep.subr.bf16.mxu0 0
      %873 = vmatpush1.bf16.msra.mxu0 0
      %874 = vmatprep.subr.bf16.mxu0 0
      %875 = vmatpush1.bf16.msra.mxu0 0
      %876 = vmatprep.subr.bf16.mxu0 0
      %877 = vmatpush1.bf16.msra.mxu0 0
      %878 = vmatprep.subr.bf16.mxu0 0
      %879 = vmatpush1.bf16.msra.mxu0 0
      %880 = vmatprep.subr.bf16.mxu0 0
      %881 = vmatpush1.bf16.msra.mxu0 0
      %882 = vmatprep.subr.bf16.mxu0 0
      %883 = vmatpush1.bf16.msra.mxu0 0
      %884 = vmatprep.subr.bf16.mxu0 0
      %885 = vmatpush1.bf16.msra.mxu0 %v870
      %886 = vmatprep.subr.bf16.mxu0 0
      %887 = vmatpush1.bf16.msra.mxu0 %v859
      %888 = vmatprep.subr.bf16.mxu0 0
      %889 = vmatpush2.bf16.msra.mxu0 0
      %890 = vmatprep.subr.bf16.mxu0 0
      %891 = vmatpush2.bf16.msra.mxu0 0
      %892 = vmatprep.subr.bf16.mxu0 0
      %893 = vmatpush2.bf16.msra.mxu0 0
      %894 = vmatprep.subr.bf16.mxu0 0
      %895 = vmatpush2.bf16.msra.mxu0 0
      %896 = vmatprep.subr.bf16.mxu0 0
      %897 = vmatpush2.bf16.msra.mxu0 0
      %898 = vmatprep.subr.bf16.mxu0 0
      %899 = vmatpush2.bf16.msra.mxu0 0
      %900 = vmatprep.subr.bf16.mxu0 0
      %901 = vmatpush2.bf16.msra.mxu0 0
      %902 = vmatprep.subr.bf16.mxu0 0
      %903 = vmatpush2.bf16.msra.mxu0 0
      %904 = vmatprep.mubr.bf16.mxu0 0
      %905 = vmatmul.mubr.bf16.gmra.mxu0 %v864
      %v906 = vpop.f32.mrf.mxu0
      %v907 = vadd.f32 0.0, %v906
      %v908 = vpop.f32.mrf.mxu0
      %v909 = vpop.f32.mrf.mxu0
      %v910 = vadd.f32 0.0, %v909
      %v911 = vpop.f32.mrf.mxu0
      %912 = vmatprep.mubr.bf16.mxu0 0
      %913 = vmatmul.mubr.bf16.gmra.mxu0 %v867
      %v914 = vpop.f32.mrf.mxu0
      %v915 = vadd.f32 0.0, %v914
      %v916 = vpop.f32.mrf.mxu0
      %v917 = vpop.f32.mrf.mxu0
      %v918 = vpop.f32.mrf.mxu0
      %919 = vdwg.mxu0
      %920 = vrot.lane.b32.xlu0 %v581, 96
      %v921 = vpop.permute.xlu0 %920
      %922 = vrot.lane.b32.xlu0 %v582, 96
      %v923 = vpop.permute.xlu0 %922
      %924 = vrot.lane.b32.xlu0 %v581, 32
      %v925 = vpop.permute.xlu0 %924
      %926 = vrot.lane.b32.xlu0 %v582, 32
      %v927 = vpop.permute.xlu0 %926
      %v929 = vsel %vm591, %v921, 0
      %v932 = vsel %vm591, %v923, 0
      %v935 = vsel %vm591, %v925, 0
      %v938 = vsel %vm591, %v927, 0
      %940 = vmatprep.subr.bf16.mxu0 0
      %941 = vmatpush1.bf16.xpose.msra.mxu0 0
      %942 = vmatprep.subr.bf16.mxu0 0
      %943 = vmatpush1.bf16.xpose.msra.mxu0 0
      %944 = vmatprep.subr.bf16.mxu0 0
      %945 = vmatpush1.bf16.xpose.msra.mxu0 0
      %946 = vmatprep.subr.bf16.mxu0 0
      %947 = vmatpush1.bf16.xpose.msra.mxu0 0
      %948 = vmatprep.subr.bf16.mxu0 0
      %949 = vmatpush1.bf16.xpose.msra.mxu0 0
      %950 = vmatprep.subr.bf16.mxu0 0
      %951 = vmatpush1.bf16.xpose.msra.mxu0 0
      %952 = vmatprep.subr.bf16.mxu0 0
      %953 = vmatpush1.bf16.xpose.msra.mxu0 %v938
      %954 = vmatprep.subr.bf16.mxu0 0
      %955 = vmatpush1.bf16.xpose.msra.mxu0 %v935
      %956 = vmatprep.subr.bf16.mxu0 0
      %957 = vmatpush2.bf16.xpose.msra.mxu0 0
      %958 = vmatprep.subr.bf16.mxu0 0
      %959 = vmatpush2.bf16.xpose.msra.mxu0 0
      %960 = vmatprep.subr.bf16.mxu0 0
      %961 = vmatpush2.bf16.xpose.msra.mxu0 0
      %962 = vmatprep.subr.bf16.mxu0 0
      %963 = vmatpush2.bf16.xpose.msra.mxu0 0
      %964 = vmatprep.subr.bf16.mxu0 0
      %965 = vmatpush2.bf16.xpose.msra.mxu0 0
      %966 = vmatprep.subr.bf16.mxu0 0
      %967 = vmatpush2.bf16.xpose.msra.mxu0 0
      %968 = vmatprep.subr.bf16.mxu0 0
      %969 = vmatpush2.bf16.xpose.msra.mxu0 0
      %970 = vmatprep.subr.bf16.mxu0 0
      %971 = vmatpush2.bf16.xpose.msra.mxu0 0
      %972 = vmatprep.mubr.bf16.mxu0 0
      %973 = vmatmul.mubr.bf16.gmra.mxu0 %v929
      %v974 = vpop.f32.mrf.mxu0
      %v975 = vadd.f32 0.0, %v974
      %v976 = vpop.f32.mrf.mxu0
      %v977 = vpop.f32.mrf.mxu0
      %v978 = vadd.f32 0.0, %v977
      %v979 = vpop.f32.mrf.mxu0
      %980 = vmatprep.mubr.bf16.mxu0 0
      %981 = vmatmul.mubr.bf16.gmra.mxu0 %v932
      %v982 = vpop.f32.mrf.mxu0
      %v983 = vadd.f32 0.0, %v982
      %v984 = vpop.f32.mrf.mxu0
      %v985 = vpop.f32.mrf.mxu0
      %v986 = vpop.f32.mrf.mxu0
      %987 = vdwg.mxu0
      %v988 = vmul.f32 %v975, 0.25
      %v989 = vmul.f32 %v978, 0.25
      %v990 = vmul.f32 %v983, 0.25
      %v991 = vsel %vm655, %v988, -inf
      %992 = vmax.xlane.f32.xlu0 %v991
      %v993 = vpop.xlane.xlu0 %992
      %v994 = vsel %vm655, %v989, -inf
      %995 = vmax.xlane.f32.xlu0 %v994
      %v996 = vpop.xlane.xlu0 %995
      %v997 = vsel %vm662, %v990, -inf
      %998 = vmax.xlane.f32.xlu0 %v997
      %v999 = vpop.xlane.xlu0 %998
      %v1000 = vsub.f32 %v988, %v993
      %v1001 = vsub.f32 %v989, %v996
      %v1002 = vsub.f32 %v990, %v999
      %v1003 = vmul.f32 %v1000, 1.442695
      %v1004 = vpow.pop %v1003
      %v1005 = vmul.f32 %v1001, 1.442695
      %v1006 = vpow.pop %v1005
      %v1007 = vmul.f32 %v1002, 1.442695
      %v1008 = vpow.pop %v1007
      %v1009 = vsel %vm655, %v1004, 0.0
      %1010 = vadd.xlane.f32.xlu0 %v1009
      %v1011 = vpop.xlane.xlu0 %1010
      %v1012 = vsel %vm655, %v1006, 0.0
      %1013 = vadd.xlane.f32.xlu0 %v1012
      %v1014 = vpop.xlane.xlu0 %1013
      %v1015 = vsel %vm662, %v1008, 0.0
      %1016 = vadd.xlane.f32.xlu0 %v1015
      %v1017 = vpop.xlane.xlu0 %1016
      %v1018 = vrcp.pop %v1011
      %v1019 = vrcp.pop %v1014
      %v1020 = vrcp.pop %v1017
      %v1021 = vmul.f32 %v1004, %v1018
      %v1022 = vmul.f32 %v1006, %v1019
      %v1023 = vmul.f32 %v1008, %v1020
      %v1024 = vpack.c.bf16 %v1022, %v1021
      %v1025 = vpack.c.bf16 %v1023, %v1023
      %1026 = vrot.lane.b32.xlu0 %v583, 96
      %v1027 = vpop.permute.xlu0 %1026
      %1028 = vrot.lane.b32.xlu0 %v584, 96
      %v1029 = vpop.permute.xlu0 %1028
      %v1032 = vsel %vm655, %v1024, 0
      %v1035 = vsel %vm655, %v1025, 0
      %v1038 = vsel %vm698, %v1029, 0
      %1040 = vmatprep.subr.bf16.mxu0 0
      %1041 = vmatpush1.bf16.msra.mxu0 0
      %1042 = vmatprep.subr.bf16.mxu0 0
      %1043 = vmatpush1.bf16.msra.mxu0 0
      %1044 = vmatprep.subr.bf16.mxu0 0
      %1045 = vmatpush1.bf16.msra.mxu0 0
      %1046 = vmatprep.subr.bf16.mxu0 0
      %1047 = vmatpush1.bf16.msra.mxu0 0
      %1048 = vmatprep.subr.bf16.mxu0 0
      %1049 = vmatpush1.bf16.msra.mxu0 0
      %1050 = vmatprep.subr.bf16.mxu0 0
      %1051 = vmatpush1.bf16.msra.mxu0 0
      %1052 = vmatprep.subr.bf16.mxu0 0
      %1053 = vmatpush1.bf16.msra.mxu0 %v1038
      %1054 = vmatprep.subr.bf16.mxu0 0
      %1055 = vmatpush1.bf16.msra.mxu0 %v1027
      %1056 = vmatprep.subr.bf16.mxu0 0
      %1057 = vmatpush2.bf16.msra.mxu0 0
      %1058 = vmatprep.subr.bf16.mxu0 0
      %1059 = vmatpush2.bf16.msra.mxu0 0
      %1060 = vmatprep.subr.bf16.mxu0 0
      %1061 = vmatpush2.bf16.msra.mxu0 0
      %1062 = vmatprep.subr.bf16.mxu0 0
      %1063 = vmatpush2.bf16.msra.mxu0 0
      %1064 = vmatprep.subr.bf16.mxu0 0
      %1065 = vmatpush2.bf16.msra.mxu0 0
      %1066 = vmatprep.subr.bf16.mxu0 0
      %1067 = vmatpush2.bf16.msra.mxu0 0
      %1068 = vmatprep.subr.bf16.mxu0 0
      %1069 = vmatpush2.bf16.msra.mxu0 0
      %1070 = vmatprep.subr.bf16.mxu0 0
      %1071 = vmatpush2.bf16.msra.mxu0 0
      %1072 = vmatprep.mubr.bf16.mxu0 0
      %1073 = vmatmul.mubr.bf16.gmra.mxu0 %v1032
      %v1074 = vpop.f32.mrf.mxu0
      %v1075 = vadd.f32 0.0, %v1074
      %v1076 = vpop.f32.mrf.mxu0
      %v1077 = vpop.f32.mrf.mxu0
      %v1078 = vadd.f32 0.0, %v1077
      %v1079 = vpop.f32.mrf.mxu0
      %1080 = vmatprep.mubr.bf16.mxu0 0
      %1081 = vmatmul.mubr.bf16.gmra.mxu0 %v1035
      %v1082 = vpop.f32.mrf.mxu0
      %v1083 = vadd.f32 0.0, %v1082
      %v1084 = vpop.f32.mrf.mxu0
      %v1085 = vpop.f32.mrf.mxu0
      %v1086 = vpop.f32.mrf.mxu0
      %1087 = vdwg.mxu0
      %1088 = vrot.lane.b32.xlu0 %v581, 80
      %v1089 = vpop.permute.xlu0 %1088
      %1090 = vrot.lane.b32.xlu0 %v582, 80
      %v1091 = vpop.permute.xlu0 %1090
      %1092 = vrot.lane.b32.xlu0 %v581, 16
      %v1093 = vpop.permute.xlu0 %1092
      %1094 = vrot.lane.b32.xlu0 %v582, 16
      %v1095 = vpop.permute.xlu0 %1094
      %v1097 = vsel %vm591, %v1089, 0
      %v1100 = vsel %vm591, %v1091, 0
      %v1103 = vsel %vm591, %v1093, 0
      %v1106 = vsel %vm591, %v1095, 0
      %1108 = vmatprep.subr.bf16.mxu0 0
      %1109 = vmatpush1.bf16.xpose.msra.mxu0 0
      %1110 = vmatprep.subr.bf16.mxu0 0
      %1111 = vmatpush1.bf16.xpose.msra.mxu0 0
      %1112 = vmatprep.subr.bf16.mxu0 0
      %1113 = vmatpush1.bf16.xpose.msra.mxu0 0
      %1114 = vmatprep.subr.bf16.mxu0 0
      %1115 = vmatpush1.bf16.xpose.msra.mxu0 0
      %1116 = vmatprep.subr.bf16.mxu0 0
      %1117 = vmatpush1.bf16.xpose.msra.mxu0 0
      %1118 = vmatprep.subr.bf16.mxu0 0
      %1119 = vmatpush1.bf16.xpose.msra.mxu0 0
      %1120 = vmatprep.subr.bf16.mxu0 0
      %1121 = vmatpush1.bf16.xpose.msra.mxu0 %v1106
      %1122 = vmatprep.subr.bf16.mxu0 0
      %1123 = vmatpush1.bf16.xpose.msra.mxu0 %v1103
      %1124 = vmatprep.subr.bf16.mxu0 0
      %1125 = vmatpush2.bf16.xpose.msra.mxu0 0
      %1126 = vmatprep.subr.bf16.mxu0 0
      %1127 = vmatpush2.bf16.xpose.msra.mxu0 0
      %1128 = vmatprep.subr.bf16.mxu0 0
      %1129 = vmatpush2.bf16.xpose.msra.mxu0 0
      %1130 = vmatprep.subr.bf16.mxu0 0
      %1131 = vmatpush2.bf16.xpose.msra.mxu0 0
      %1132 = vmatprep.subr.bf16.mxu0 0
      %1133 = vmatpush2.bf16.xpose.msra.mxu0 0
      %1134 = vmatprep.subr.bf16.mxu0 0
      %1135 = vmatpush2.bf16.xpose.msra.mxu0 0
      %1136 = vmatprep.subr.bf16.mxu0 0
      %1137 = vmatpush2.bf16.xpose.msra.mxu0 0
      %1138 = vmatprep.subr.bf16.mxu0 0
      %1139 = vmatpush2.bf16.xpose.msra.mxu0 0
      %1140 = vmatprep.mubr.bf16.mxu0 0
      %1141 = vmatmul.mubr.bf16.gmra.mxu0 %v1097
      %v1142 = vpop.f32.mrf.mxu0
      %v1143 = vadd.f32 0.0, %v1142
      %v1144 = vpop.f32.mrf.mxu0
      %v1145 = vpop.f32.mrf.mxu0
      %v1146 = vadd.f32 0.0, %v1145
      %v1147 = vpop.f32.mrf.mxu0
      %1148 = vmatprep.mubr.bf16.mxu0 0
      %1149 = vmatmul.mubr.bf16.gmra.mxu0 %v1100
      %v1150 = vpop.f32.mrf.mxu0
      %v1151 = vadd.f32 0.0, %v1150
      %v1152 = vpop.f32.mrf.mxu0
      %v1153 = vpop.f32.mrf.mxu0
      %v1154 = vpop.f32.mrf.mxu0
      %1155 = vdwg.mxu0
      %v1156 = vmul.f32 %v1143, 0.25
      %v1157 = vmul.f32 %v1146, 0.25
      %v1158 = vmul.f32 %v1151, 0.25
      %v1159 = vsel %vm655, %v1156, -inf
      %1160 = vmax.xlane.f32.xlu0 %v1159
      %v1161 = vpop.xlane.xlu0 %1160
      %v1162 = vsel %vm655, %v1157, -inf
      %1163 = vmax.xlane.f32.xlu0 %v1162
      %v1164 = vpop.xlane.xlu0 %1163
      %v1165 = vsel %vm662, %v1158, -inf
      %1166 = vmax.xlane.f32.xlu0 %v1165
      %v1167 = vpop.xlane.xlu0 %1166
      %v1168 = vsub.f32 %v1156, %v1161
      %v1169 = vsub.f32 %v1157, %v1164
      %v1170 = vsub.f32 %v1158, %v1167
      %v1171 = vmul.f32 %v1168, 1.442695
      %v1172 = vpow.pop %v1171
      %v1173 = vmul.f32 %v1169, 1.442695
      %v1174 = vpow.pop %v1173
      %v1175 = vmul.f32 %v1170, 1.442695
      %v1176 = vpow.pop %v1175
      %v1177 = vsel %vm655, %v1172, 0.0
      %1178 = vadd.xlane.f32.xlu0 %v1177
      %v1179 = vpop.xlane.xlu0 %1178
      %v1180 = vsel %vm655, %v1174, 0.0
      %1181 = vadd.xlane.f32.xlu0 %v1180
      %v1182 = vpop.xlane.xlu0 %1181
      %v1183 = vsel %vm662, %v1176, 0.0
      %1184 = vadd.xlane.f32.xlu0 %v1183
      %v1185 = vpop.xlane.xlu0 %1184
      %v1186 = vrcp.pop %v1179
      %v1187 = vrcp.pop %v1182
      %v1188 = vrcp.pop %v1185
      %v1189 = vmul.f32 %v1172, %v1186
      %v1190 = vmul.f32 %v1174, %v1187
      %v1191 = vmul.f32 %v1176, %v1188
      %v1192 = vpack.c.bf16 %v1190, %v1189
      %v1193 = vpack.c.bf16 %v1191, %v1191
      %1194 = vrot.lane.b32.xlu0 %v583, 80
      %v1195 = vpop.permute.xlu0 %1194
      %1196 = vrot.lane.b32.xlu0 %v584, 80
      %v1197 = vpop.permute.xlu0 %1196
      %v1200 = vsel %vm655, %v1192, 0
      %v1203 = vsel %vm655, %v1193, 0
      %v1206 = vsel %vm698, %v1197, 0
      %1208 = vmatprep.subr.bf16.mxu0 0
      %1209 = vmatpush1.bf16.msra.mxu0 0
      %1210 = vmatprep.subr.bf16.mxu0 0
      %1211 = vmatpush1.bf16.msra.mxu0 0
      %1212 = vmatprep.subr.bf16.mxu0 0
      %1213 = vmatpush1.bf16.msra.mxu0 0
      %1214 = vmatprep.subr.bf16.mxu0 0
      %1215 = vmatpush1.bf16.msra.mxu0 0
      %1216 = vmatprep.subr.bf16.mxu0 0
      %1217 = vmatpush1.bf16.msra.mxu0 0
      %1218 = vmatprep.subr.bf16.mxu0 0
      %1219 = vmatpush1.bf16.msra.mxu0 0
      %1220 = vmatprep.subr.bf16.mxu0 0
      %1221 = vmatpush1.bf16.msra.mxu0 %v1206
      %1222 = vmatprep.subr.bf16.mxu0 0
      %1223 = vmatpush1.bf16.msra.mxu0 %v1195
      %1224 = vmatprep.subr.bf16.mxu0 0
      %1225 = vmatpush2.bf16.msra.mxu0 0
      %1226 = vmatprep.subr.bf16.mxu0 0
      %1227 = vmatpush2.bf16.msra.mxu0 0
      %1228 = vmatprep.subr.bf16.mxu0 0
      %1229 = vmatpush2.bf16.msra.mxu0 0
      %1230 = vmatprep.subr.bf16.mxu0 0
      %1231 = vmatpush2.bf16.msra.mxu0 0
      %1232 = vmatprep.subr.bf16.mxu0 0
      %1233 = vmatpush2.bf16.msra.mxu0 0
      %1234 = vmatprep.subr.bf16.mxu0 0
      %1235 = vmatpush2.bf16.msra.mxu0 0
      %1236 = vmatprep.subr.bf16.mxu0 0
      %1237 = vmatpush2.bf16.msra.mxu0 0
      %1238 = vmatprep.subr.bf16.mxu0 0
      %1239 = vmatpush2.bf16.msra.mxu0 0
      %1240 = vmatprep.mubr.bf16.mxu0 0
      %1241 = vmatmul.mubr.bf16.gmra.mxu0 %v1200
      %v1242 = vpop.f32.mrf.mxu0
      %v1243 = vadd.f32 0.0, %v1242
      %v1244 = vpop.f32.mrf.mxu0
      %v1245 = vpop.f32.mrf.mxu0
      %v1246 = vadd.f32 0.0, %v1245
      %v1247 = vpop.f32.mrf.mxu0
      %1248 = vmatprep.mubr.bf16.mxu0 0
      %1249 = vmatmul.mubr.bf16.gmra.mxu0 %v1203
      %v1250 = vpop.f32.mrf.mxu0
      %v1251 = vadd.f32 0.0, %v1250
      %v1252 = vpop.f32.mrf.mxu0
      %v1253 = vpop.f32.mrf.mxu0
      %v1254 = vpop.f32.mrf.mxu0
      %1255 = vdwg.mxu0
      %1259 = vrot.lane.b32.xlu0 %v907, 16
      %v1260 = vpop.permute.xlu0 %1259
      %1261 = vrot.lane.b32.xlu0 %v910, 16
      %v1262 = vpop.permute.xlu0 %1261
      %1263 = vrot.lane.b32.xlu0 %v915, 16
      %v1264 = vpop.permute.xlu0 %1263
      %1271 = vrot.lane.b32.xlu0 %v1075, 32
      %v1272 = vpop.permute.xlu0 %1271
      %1273 = vrot.lane.b32.xlu0 %v1078, 32
      %v1274 = vpop.permute.xlu0 %1273
      %1275 = vrot.lane.b32.xlu0 %v1083, 32
      %v1276 = vpop.permute.xlu0 %1275
      %1283 = vrot.lane.b32.xlu0 %v1243, 48
      %v1284 = vpop.permute.xlu0 %1283
      %1285 = vrot.lane.b32.xlu0 %v1246, 48
      %v1286 = vpop.permute.xlu0 %1285
      %1287 = vrot.lane.b32.xlu0 %v1251, 48
      %v1288 = vpop.permute.xlu0 %1287
      %v1292 = vsel %vm591, %v737, %v1260
      %v1293 = vsel %vm591, %v740, %v1262
      %v1294 = vsel %vm591, %v745, %v1264
      %vm1295 = vcmask 261120
      %v1296 = vsel %vm1295, %v1292, %v1272
      %v1297 = vsel %vm1295, %v1293, %v1274
      %v1298 = vsel %vm1295, %v1294, %v1276
      %vm1299 = vcmask 392192
      %v1300 = vsel %vm1299, %v1296, %v1284
      %v1301 = vsel %vm1299, %v1297, %v1286
      %v1302 = vsel %vm1299, %v1298, %v1288
      %v1303 = vpack.c.bf16 %v1301, %v1300
      %v1304 = vpack.c.bf16 %v1302, %v1302
      %v1305 = vld [vmem:[%s6] sm:$0xf]
      %v1306 = vld [vmem:[%s6 + $0x4] sm:$0xf]
      %v1307 = vld [vmem:[%s6 + $0x8] sm:$0xf]
      %v1308 = vld [vmem:[%s6 + $0xc] sm:$0xf]
      %v1309 = vld [vmem:[%s6 + $0x10] sm:$0xf]
      %v1310 = vld [vmem:[%s6 + $0x14] sm:$0xf]
      %v1311 = vld [vmem:[%s6 + $0x18] sm:$0xf]
      %v1312 = vld [vmem:[%s6 + $0x1c] sm:$0xf]
      %v1313 = vld [vmem:[%s7] sm:$0x1]
      %v1315 = vlaneseq
      %v1316 = vshrl.u32 %v1315, 7
      %v1317 = vsub.s32 0, %v1316
      %v1318 = vrot.slane %v1313, %v1317
      %v1328 = vunpack.c.l.b16 %v1305
      %v1329 = vunpack.c.l.b16 %v1306
      %v1330 = vunpack.c.l.b16 %v1307
      %v1331 = vunpack.c.l.b16 %v1308
      %v1332 = vunpack.c.l.b16 %v1309
      %v1333 = vunpack.c.l.b16 %v1310
      %v1334 = vunpack.c.l.b16 %v1311
      %v1335 = vunpack.c.l.b16 %v1312
      %v1336 = vpack.c.b16 %v1329, %v1328
      %v1337 = vpack.c.b16 %v1331, %v1330
      %v1338 = vpack.c.b16 %v1333, %v1332
      %v1339 = vpack.c.b16 %v1335, %v1334
      %v1345 = vsel %vm431, %v1303, 0
      %v1348 = vsel %vm431, %v1304, 0
      %1350 = vmatprep.subr.bf16.mxu0 0
      %1351 = vmatpush1.bf16.msra.mxu0 0
      %1352 = vmatprep.subr.bf16.mxu0 0
      %1353 = vmatpush1.bf16.msra.mxu0 0
      %1354 = vmatprep.subr.bf16.mxu0 0
      %1355 = vmatpush1.bf16.msra.mxu0 0
      %1356 = vmatprep.subr.bf16.mxu0 0
      %1357 = vmatpush1.bf16.msra.mxu0 0
      %1358 = vmatprep.subr.bf16.mxu0 0
      %1359 = vmatpush1.bf16.msra.mxu0 %v1339
      %1360 = vmatprep.subr.bf16.mxu0 0
      %1361 = vmatpush1.bf16.msra.mxu0 %v1338
      %1362 = vmatprep.subr.bf16.mxu0 0
      %1363 = vmatpush1.bf16.msra.mxu0 %v1337
      %1364 = vmatprep.subr.bf16.mxu0 0
      %1365 = vmatpush1.bf16.msra.mxu0 %v1336
      %1366 = vmatprep.subr.bf16.mxu0 0
      %1367 = vmatpush2.bf16.msra.mxu0 0
      %1368 = vmatprep.subr.bf16.mxu0 0
      %1369 = vmatpush2.bf16.msra.mxu0 0
      %1370 = vmatprep.subr.bf16.mxu0 0
      %1371 = vmatpush2.bf16.msra.mxu0 0
      %1372 = vmatprep.subr.bf16.mxu0 0
      %1373 = vmatpush2.bf16.msra.mxu0 0
      %1374 = vmatprep.subr.bf16.mxu0 0
      %1375 = vmatpush2.bf16.msra.mxu0 0
      %1376 = vmatprep.subr.bf16.mxu0 0
      %1377 = vmatpush2.bf16.msra.mxu0 0
      %1378 = vmatprep.subr.bf16.mxu0 0
      %1379 = vmatpush2.bf16.msra.mxu0 0
      %1380 = vmatprep.subr.bf16.mxu0 0
      %1381 = vmatpush2.bf16.msra.mxu0 0
      %1382 = vmatprep.mubr.bf16.mxu0 0
      %1383 = vmatmul.mubr.bf16.gmra.mxu0 %v1345
      %v1384 = vpop.f32.mrf.mxu0
      %v1385 = vadd.f32 %v1318, %v1384
      %v1386 = vpop.f32.mrf.mxu0
      %v1387 = vpop.f32.mrf.mxu0
      %v1388 = vadd.f32 %v1318, %v1387
      %v1389 = vpop.f32.mrf.mxu0
      %1390 = vmatprep.mubr.bf16.mxu0 0
      %1391 = vmatmul.mubr.bf16.gmra.mxu0 %v1348
      %v1392 = vpop.f32.mrf.mxu0
      %v1393 = vadd.f32 %v1318, %v1392
      %v1394 = vpop.f32.mrf.mxu0
      %v1395 = vpop.f32.mrf.mxu0
      %v1396 = vpop.f32.mrf.mxu0
      %1397 = vdwg.mxu0
      %v1398 = vadd.f32 %v381, %v1385
      %v1399 = vadd.f32 %v382, %v1388
      %v1400 = vadd.f32 %v383, %v1393
      %v1401 = vld [vmem:[%s8] sm:$0x1]
      %v1402 = vld [vmem:[%s9] sm:$0x1]
      %v1403 = vsel %vm431, %v1398, 0.0
      %1404 = vadd.xlane.f32.xlu0 %v1403
      %v1405 = vpop.xlane.xlu0 %1404
      %v1406 = vsel %vm431, %v1399, 0.0
      %1407 = vadd.xlane.f32.xlu0 %v1406
      %v1408 = vpop.xlane.xlu0 %1407
      %vm1409 = vcmask 519168
      %v1410 = vsel %vm1409, %v1400, 0.0
      %1411 = vadd.xlane.f32.xlu0 %v1410
      %v1412 = vpop.xlane.xlu0 %1411
      %v1413 = vrcp.pop 64.0
      %v1414 = vmul.f32 %v1405, %v1413
      %v1415 = vmul.f32 %v1408, %v1413
      %v1416 = vmul.f32 %v1412, %v1413
      %v1417 = vsub.f32 %v1398, %v1414
      %v1418 = vsub.f32 %v1399, %v1415
      %v1419 = vsub.f32 %v1400, %v1416
      %v1420 = vmul.f32 %v1417, %v1417
      %v1421 = vmul.f32 %v1418, %v1418
      %v1422 = vmul.f32 %v1419, %v1419
      %v1423 = vsel %vm431, %v1420, 0.0
      %1424 = vadd.xlane.f32.xlu0 %v1423
      %v1425 = vpop.xlane.xlu0 %1424
      %v1426 = vsel %vm431, %v1421, 0.0
      %1427 = vadd.xlane.f32.xlu0 %v1426
      %v1428 = vpop.xlane.xlu0 %1427
      %v1429 = vsel %vm1409, %v1422, 0.0
      %1430 = vadd.xlane.f32.xlu0 %v1429
      %v1431 = vpop.xlane.xlu0 %1430
      %v1432 = vmul.f32 %v1425, %v1413
      %v1433 = vmul.f32 %v1428, %v1413
      %v1434 = vmul.f32 %v1431, %v1413
      %v1435 = vadd.f32 %v1432, 1e-05
      %v1436 = vadd.f32 %v1433, 1e-05
      %v1437 = vadd.f32 %v1434, 1e-05
      %v1438 = vrsqrt.pop %v1435
      %v1439 = vrsqrt.pop %v1436
      %v1440 = vrsqrt.pop %v1437
      %v1441 = vmul.f32 %v1417, %v1438
      %v1442 = vmul.f32 %v1418, %v1439
      %v1443 = vmul.f32 %v1419, %v1440
      %v1445 = vlaneseq
      %v1446 = vshrl.u32 %v1445, 7
      %v1447 = vsub.s32 0, %v1446
      %v1448 = vrot.slane %v1401, %v1447
      %v1450 = vmul.f32 %v1441, %v1448
      %v1451 = vmul.f32 %v1442, %v1448
      %v1452 = vmul.f32 %v1443, %v1448
      %v1454 = vlaneseq
      %v1455 = vshrl.u32 %v1454, 7
      %v1456 = vsub.s32 0, %v1455
      %v1457 = vrot.slane %v1402, %v1456
      %v1459 = vadd.f32 %v1450, %v1457
      %v1460 = vadd.f32 %v1451, %v1457
      %v1461 = vadd.f32 %v1452, %v1457
      %1462 = vst.msk [vmem:[%s379] sm:$0xff] %vm431, %v1459
      %1463 = vst.msk [vmem:[%s379 + $0x8] sm:$0xff] %vm431, %v1460
      %1464 = vst.msk [vmem:[%s379 + $0x10] sm:$0xf] %vm1409, %v1461
      %p1465 = scmp.lt.s32.totalorder %s21, 1
      %s1466 = scalar_select %p1465, %s21, 1
      %s1467 = smul.addr %s1466, 3
      %s1468 = smul.addr %s1467, 8
      %s1469 = scalar_lea.vmem %s10, %s1468
      // Predicated region
      $region61: #{dino_forward.21} parent=59 // pred_check
        %p1470 = pneg %p259
      $region62: #{dino_forward.21} parent=59 // pred_check_branch
        %1472 = sbr.rel (%p1470) target = $region64
      $region63: #{dino_forward.21} parent=59 // pred_region
        _
      $region64: #{dino_forward.21} parent=59 // pred_fallthru
        _
    $region60: #{dino_forward.21} parent=5 // pred_fallthru
      _
    %p1473 = scmp.le.s32.totalorder 2, %s16
    // Predicated region
    $region65: #{dino_forward.21} parent=5 // pred_check
      %p1474 = pneg %p1473
    $region66: #{dino_forward.21} parent=5 // pred_check_branch
      %1476 = sbr.rel (%p1474) target = $region68
    $region67: #{dino_forward.21} parent=5 // pred_region
      %s1477 = ssub.s32 %s16, 2
      // Predicated region
      $region69: #{dino_forward.21} parent=67 // pred_check
        %p1478 = pneg %p265
      $region70: #{dino_forward.21} parent=67 // pred_check_branch
        %1480 = sbr.rel (%p1478) target = $region72
      $region71: #{dino_forward.21} parent=67 // pred_region
        %p1481 = scmp.lt.s32.totalorder %s22, 1
        %s1482 = scalar_select %p1481, %s22, 1
        %s1483 = smul.addr %s1482, 3
        %s1484 = smul.addr %s1483, 8
        %s1485 = scalar_lea.vmem %s10, %s1484
      $region72: #{dino_forward.21} parent=67 // pred_fallthru
        _
    $region68: #{dino_forward.21} parent=5 // pred_fallthru
      _
  $region6: #{dino_forward.21} parent=0 // loop_footer
    %s20 = sadd.s32 1, %s16
  $region7: #{dino_forward.21} parent=0 // loop_footer_branch
    %15 = sbr.rel target = $region3
  $region8: #{dino_forward.21} parent=0 // loop_exit
    _

// kernel: dino_forward.28
$region0: #{dino_forward.28}
  #allocation0 [shape = 'u32[]', space=smem, size = 0x4, offset = 0x4, fixed_abs, tag = 'smem constant byte address 0x4 - core index']
  #allocation1 [shape = 'u32[144,128]{1,0:T(1,128)}', space=vmem, size = 0x12000, scoped, tag = 'internal scratch']
  %s0 = inlined_call_operand.vmem [shape: f32[32,64], index: 0, kind: input, shape index: {}]
  %s1 = inlined_call_operand.vmem [shape: bf16[64,128], index: 1, kind: input, shape index: {}]
  %s2 = inlined_call_operand.vmem [shape: f32[1,128], index: 2, kind: input, shape index: {}]
  %s3 = inlined_call_operand.vmem [shape: bf16[128,64], index: 3, kind: input, shape index: {}]
  %s4 = inlined_call_operand.vmem [shape: f32[1,64], index: 4, kind: input, shape index: {}]
  %s5 = inlined_call_operand.vmem [shape: f32[1,64], index: 5, kind: input, shape index: {}]
  %s6 = inlined_call_operand.vmem [shape: f32[1,64], index: 6, kind: input, shape index: {}]
  %s7 = inlined_call_operand.vmem [shape: f32[32,64], index: 7, kind: output, shape index: {}]
  %s8 = sld [smem:[#allocation0]]
  $region38: #{dino_forward.28} parent=0
    _
  %s10 = ssub.s32 1, %s8
  %s11 = scalar_select 0, %s10, %s8
  // Predicated region
  $region2: #{dino_forward.28} parent=0 // pred_check
    _
  $region3: #{dino_forward.28} parent=0 // pred_check_branch
    %13 = sbr.rel (0) target = $region5
  $region4: #{dino_forward.28} parent=0 // pred_region
    _
  $region5: #{dino_forward.28} parent=0 // pred_fallthru
    _
  // Predicated region
  $region6: #{dino_forward.28} parent=0 // pred_check
    _
  $region7: #{dino_forward.28} parent=0 // pred_check_branch
    %15 = sbr.rel (0) target = $region9
  $region8: #{dino_forward.28} parent=0 // pred_region
    _
  $region9: #{dino_forward.28} parent=0 // pred_fallthru
    _
  // Predicated region
  $region10: #{dino_forward.28} parent=0 // pred_check
    _
  $region11: #{dino_forward.28} parent=0 // pred_check_branch
    %17 = sbr.rel (0) target = $region13
  $region12: #{dino_forward.28} parent=0 // pred_region
    _
  $region13: #{dino_forward.28} parent=0 // pred_fallthru
    _
  // Predicated region
  $region14: #{dino_forward.28} parent=0 // pred_check
    _
  $region15: #{dino_forward.28} parent=0 // pred_check_branch
    %19 = sbr.rel (0) target = $region17
  $region16: #{dino_forward.28} parent=0 // pred_region
    _
  $region17: #{dino_forward.28} parent=0 // pred_fallthru
    _
  // Predicated region
  $region18: #{dino_forward.28} parent=0 // pred_check
    _
  $region19: #{dino_forward.28} parent=0 // pred_check_branch
    %21 = sbr.rel (0) target = $region21
  $region20: #{dino_forward.28} parent=0 // pred_region
    _
  $region21: #{dino_forward.28} parent=0 // pred_fallthru
    _
  // Predicated region
  $region22: #{dino_forward.28} parent=0 // pred_check
    _
  $region23: #{dino_forward.28} parent=0 // pred_check_branch
    %23 = sbr.rel (0) target = $region25
  $region24: #{dino_forward.28} parent=0 // pred_region
    _
  $region25: #{dino_forward.28} parent=0 // pred_fallthru
    _
  // Predicated region
  $region26: #{dino_forward.28} parent=0 // pred_check
    _
  $region27: #{dino_forward.28} parent=0 // pred_check_branch
    %25 = sbr.rel (0) target = $region29
  $region28: #{dino_forward.28} parent=0 // pred_region
    _
  $region29: #{dino_forward.28} parent=0 // pred_fallthru
    _
  %v27 = vld [vmem:[%s0] sm:$0xff]
  %v28 = vld [vmem:[%s0 + $0x8] sm:$0xff]
  %v29 = vld [vmem:[%s0 + $0x10] sm:$0xff]
  %v30 = vld [vmem:[%s0 + $0x18] sm:$0xff]
  %v31 = vpack.c.bf16 %v28, %v27
  %v32 = vpack.c.bf16 %v30, %v29
  %v33 = vld [vmem:[%s1] sm:$0xf]
  %v34 = vld [vmem:[%s1 + $0x4] sm:$0xf]
  %v35 = vld [vmem:[%s1 + $0x8] sm:$0xf]
  %v36 = vld [vmem:[%s1 + $0xc] sm:$0xf]
  %v37 = vld [vmem:[%s1 + $0x10] sm:$0xf]
  %v38 = vld [vmem:[%s1 + $0x14] sm:$0xf]
  %v39 = vld [vmem:[%s1 + $0x18] sm:$0xf]
  %v40 = vld [vmem:[%s1 + $0x1c] sm:$0xf]
  %v41 = vld [vmem:[%s2] sm:$0x1]
  %v43 = vlaneseq
  %v44 = vshrl.u32 %v43, 7
  %v45 = vsub.s32 0, %v44
  %v46 = vrot.slane %v41, %v45
  %v56 = vunpack.c.l.b16 %v33
  %v57 = vunpack.c.l.b16 %v34
  %v58 = vunpack.c.l.b16 %v35
  %v59 = vunpack.c.l.b16 %v36
  %v60 = vunpack.c.l.b16 %v37
  %v61 = vunpack.c.l.b16 %v38
  %v62 = vunpack.c.l.b16 %v39
  %v63 = vunpack.c.l.b16 %v40
  %v64 = vpack.c.b16 %v57, %v56
  %v65 = vpack.c.b16 %v59, %v58
  %v66 = vpack.c.b16 %v61, %v60
  %v67 = vpack.c.b16 %v63, %v62
  %vm72 = vcmask 523264
  %v74 = vsel %vm72, %v31, 0
  %v77 = vsel %vm72, %v32, 0
  %79 = vmatprep.subr.bf16.mxu0 0
  %80 = vmatpush1.bf16.msra.mxu0 0
  %81 = vmatprep.subr.bf16.mxu0 0
  %82 = vmatpush1.bf16.msra.mxu0 0
  %83 = vmatprep.subr.bf16.mxu0 0
  %84 = vmatpush1.bf16.msra.mxu0 0
  %85 = vmatprep.subr.bf16.mxu0 0
  %86 = vmatpush1.bf16.msra.mxu0 0
  %87 = vmatprep.subr.bf16.mxu0 0
  %88 = vmatpush1.bf16.msra.mxu0 %v67
  %89 = vmatprep.subr.bf16.mxu0 0
  %90 = vmatpush1.bf16.msra.mxu0 %v66
  %91 = vmatprep.subr.bf16.mxu0 0
  %92 = vmatpush1.bf16.msra.mxu0 %v65
  %93 = vmatprep.subr.bf16.mxu0 0
  %94 = vmatpush1.bf16.msra.mxu0 %v64
  %95 = vmatprep.subr.bf16.mxu0 0
  %96 = vmatpush2.bf16.msra.mxu0 0
  %97 = vmatprep.subr.bf16.mxu0 0
  %98 = vmatpush2.bf16.msra.mxu0 0
  %99 = vmatprep.subr.bf16.mxu0 0
  %100 = vmatpush2.bf16.msra.mxu0 0
  %101 = vmatprep.subr.bf16.mxu0 0
  %102 = vmatpush2.bf16.msra.mxu0 0
  %103 = vmatprep.subr.bf16.mxu0 0
  %104 = vmatpush2.bf16.msra.mxu0 0
  %105 = vmatprep.subr.bf16.mxu0 0
  %106 = vmatpush2.bf16.msra.mxu0 0
  %107 = vmatprep.subr.bf16.mxu0 0
  %108 = vmatpush2.bf16.msra.mxu0 0
  %109 = vmatprep.subr.bf16.mxu0 0
  %110 = vmatpush2.bf16.msra.mxu0 0
  %111 = vmatprep.mubr.bf16.mxu0 0
  %112 = vmatmul.mubr.bf16.gmra.mxu0 %v74
  %v113 = vpop.f32.mrf.mxu0
  %v114 = vadd.f32 %v46, %v113
  %v115 = vpop.f32.mrf.mxu0
  %v116 = vpop.f32.mrf.mxu0
  %v117 = vadd.f32 %v46, %v116
  %v118 = vpop.f32.mrf.mxu0
  %119 = vmatprep.mubr.bf16.mxu0 0
  %120 = vmatmul.mubr.bf16.gmra.mxu0 %v77
  %v121 = vpop.f32.mrf.mxu0
  %v122 = vadd.f32 %v46, %v121
  %v123 = vpop.f32.mrf.mxu0
  %v124 = vpop.f32.mrf.mxu0
  %v125 = vadd.f32 %v46, %v124
  %v126 = vpop.f32.mrf.mxu0
  %127 = vdwg.mxu0
  %v128 = vmax.f32 %v114, 0.0
  %v129 = vmax.f32 %v117, 0.0
  %v130 = vmax.f32 %v122, 0.0
  %v131 = vmax.f32 %v125, 0.0
  %v132 = vpack.c.bf16 %v129, %v128
  %v133 = vpack.c.bf16 %v131, %v130
  %v134 = vld [vmem:[%s3] sm:$0xf]
  %v135 = vld [vmem:[%s3 + $0x4] sm:$0xf]
  %v136 = vld [vmem:[%s3 + $0x8] sm:$0xf]
  %v137 = vld [vmem:[%s3 + $0xc] sm:$0xf]
  %v138 = vld [vmem:[%s3 + $0x10] sm:$0xf]
  %v139 = vld [vmem:[%s3 + $0x14] sm:$0xf]
  %v140 = vld [vmem:[%s3 + $0x18] sm:$0xf]
  %v141 = vld [vmem:[%s3 + $0x1c] sm:$0xf]
  %v142 = vld [vmem:[%s3 + $0x20] sm:$0xf]
  %v143 = vld [vmem:[%s3 + $0x24] sm:$0xf]
  %v144 = vld [vmem:[%s3 + $0x28] sm:$0xf]
  %v145 = vld [vmem:[%s3 + $0x2c] sm:$0xf]
  %v146 = vld [vmem:[%s3 + $0x30] sm:$0xf]
  %v147 = vld [vmem:[%s3 + $0x34] sm:$0xf]
  %v148 = vld [vmem:[%s3 + $0x38] sm:$0xf]
  %v149 = vld [vmem:[%s3 + $0x3c] sm:$0xf]
  %v150 = vld [vmem:[%s4] sm:$0x1]
  %v152 = vlaneseq
  %v153 = vshrl.u32 %v152, 7
  %v154 = vsub.s32 0, %v153
  %v155 = vrot.slane %v150, %v154
  %v173 = vunpack.c.l.b16 %v134
  %v174 = vunpack.c.l.b16 %v135
  %v175 = vunpack.c.l.b16 %v136
  %v176 = vunpack.c.l.b16 %v137
  %v177 = vunpack.c.l.b16 %v138
  %v178 = vunpack.c.l.b16 %v139
  %v179 = vunpack.c.l.b16 %v140
  %v180 = vunpack.c.l.b16 %v141
  %v181 = vunpack.c.l.b16 %v142
  %v182 = vunpack.c.l.b16 %v143
  %v183 = vunpack.c.l.b16 %v144
  %v184 = vunpack.c.l.b16 %v145
  %v185 = vunpack.c.l.b16 %v146
  %v186 = vunpack.c.l.b16 %v147
  %v187 = vunpack.c.l.b16 %v148
  %v188 = vunpack.c.l.b16 %v149
  %v189 = vpack.c.b16 %v174, %v173
  %v190 = vpack.c.b16 %v176, %v175
  %v191 = vpack.c.b16 %v178, %v177
  %v192 = vpack.c.b16 %v180, %v179
  %v193 = vpack.c.b16 %v182, %v181
  %v194 = vpack.c.b16 %v184, %v183
  %v195 = vpack.c.b16 %v186, %v185
  %v196 = vpack.c.b16 %v188, %v187
  %205 = vmatprep.subr.bf16.mxu0 0
  %206 = vmatpush1.bf16.msra.mxu0 %v196
  %207 = vmatprep.subr.bf16.mxu0 0
  %208 = vmatpush1.bf16.msra.mxu0 %v195
  %209 = vmatprep.subr.bf16.mxu0 0
  %210 = vmatpush1.bf16.msra.mxu0 %v194
  %211 = vmatprep.subr.bf16.mxu0 0
  %212 = vmatpush1.bf16.msra.mxu0 %v193
  %213 = vmatprep.subr.bf16.mxu0 0
  %214 = vmatpush1.bf16.msra.mxu0 %v192
  %215 = vmatprep.subr.bf16.mxu0 0
  %216 = vmatpush1.bf16.msra.mxu0 %v191
  %217 = vmatprep.subr.bf16.mxu0 0
  %218 = vmatpush1.bf16.msra.mxu0 %v190
  %219 = vmatprep.subr.bf16.mxu0 0
  %220 = vmatpush1.bf16.msra.mxu0 %v189
  %221 = vmatprep.subr.bf16.mxu0 0
  %222 = vmatpush2.bf16.msra.mxu0 0
  %223 = vmatprep.subr.bf16.mxu0 0
  %224 = vmatpush2.bf16.msra.mxu0 0
  %225 = vmatprep.subr.bf16.mxu0 0
  %226 = vmatpush2.bf16.msra.mxu0 0
  %227 = vmatprep.subr.bf16.mxu0 0
  %228 = vmatpush2.bf16.msra.mxu0 0
  %229 = vmatprep.subr.bf16.mxu0 0
  %230 = vmatpush2.bf16.msra.mxu0 0
  %231 = vmatprep.subr.bf16.mxu0 0
  %232 = vmatpush2.bf16.msra.mxu0 0
  %233 = vmatprep.subr.bf16.mxu0 0
  %234 = vmatpush2.bf16.msra.mxu0 0
  %235 = vmatprep.subr.bf16.mxu0 0
  %236 = vmatpush2.bf16.msra.mxu0 0
  %237 = vmatprep.mubr.bf16.mxu0 0
  %238 = vmatmul.mubr.bf16.gmra.mxu0 %v132
  %v239 = vpop.f32.mrf.mxu0
  %v240 = vadd.f32 %v155, %v239
  %v241 = vpop.f32.mrf.mxu0
  %v242 = vpop.f32.mrf.mxu0
  %v243 = vadd.f32 %v155, %v242
  %v244 = vpop.f32.mrf.mxu0
  %245 = vmatprep.mubr.bf16.mxu0 0
  %246 = vmatmul.mubr.bf16.gmra.mxu0 %v133
  %v247 = vpop.f32.mrf.mxu0
  %v248 = vadd.f32 %v155, %v247
  %v249 = vpop.f32.mrf.mxu0
  %v250 = vpop.f32.mrf.mxu0
  %v251 = vadd.f32 %v155, %v250
  %v252 = vpop.f32.mrf.mxu0
  %253 = vdwg.mxu0
  %v254 = vadd.f32 %v27, %v240
  %v255 = vadd.f32 %v28, %v243
  %v256 = vadd.f32 %v29, %v248
  %v257 = vadd.f32 %v30, %v251
  %v258 = vld [vmem:[%s5] sm:$0x1]
  %v259 = vld [vmem:[%s6] sm:$0x1]
  %v260 = vsel %vm72, %v254, 0.0
  %261 = vadd.xlane.f32.xlu0 %v260
  %v262 = vpop.xlane.xlu0 %261
  %v263 = vsel %vm72, %v255, 0.0
  %264 = vadd.xlane.f32.xlu0 %v263
  %v265 = vpop.xlane.xlu0 %264
  %v266 = vsel %vm72, %v256, 0.0
  %267 = vadd.xlane.f32.xlu0 %v266
  %v268 = vpop.xlane.xlu0 %267
  %v269 = vsel %vm72, %v257, 0.0
  %270 = vadd.xlane.f32.xlu0 %v269
  %v271 = vpop.xlane.xlu0 %270
  %v272 = vrcp.pop 64.0
  %v273 = vmul.f32 %v262, %v272
  %v274 = vmul.f32 %v265, %v272
  %v275 = vmul.f32 %v268, %v272
  %v276 = vmul.f32 %v271, %v272
  %v277 = vsub.f32 %v254, %v273
  %v278 = vsub.f32 %v255, %v274
  %v279 = vsub.f32 %v256, %v275
  %v280 = vsub.f32 %v257, %v276
  %v281 = vmul.f32 %v277, %v277
  %v282 = vmul.f32 %v278, %v278
  %v283 = vmul.f32 %v279, %v279
  %v284 = vmul.f32 %v280, %v280
  %v285 = vsel %vm72, %v281, 0.0
  %286 = vadd.xlane.f32.xlu0 %v285
  %v287 = vpop.xlane.xlu0 %286
  %v288 = vsel %vm72, %v282, 0.0
  %289 = vadd.xlane.f32.xlu0 %v288
  %v290 = vpop.xlane.xlu0 %289
  %v291 = vsel %vm72, %v283, 0.0
  %292 = vadd.xlane.f32.xlu0 %v291
  %v293 = vpop.xlane.xlu0 %292
  %v294 = vsel %vm72, %v284, 0.0
  %295 = vadd.xlane.f32.xlu0 %v294
  %v296 = vpop.xlane.xlu0 %295
  %v297 = vmul.f32 %v287, %v272
  %v298 = vmul.f32 %v290, %v272
  %v299 = vmul.f32 %v293, %v272
  %v300 = vmul.f32 %v296, %v272
  %v301 = vadd.f32 %v297, 1e-05
  %v302 = vadd.f32 %v298, 1e-05
  %v303 = vadd.f32 %v299, 1e-05
  %v304 = vadd.f32 %v300, 1e-05
  %v305 = vrsqrt.pop %v301
  %v306 = vrsqrt.pop %v302
  %v307 = vrsqrt.pop %v303
  %v308 = vrsqrt.pop %v304
  %v309 = vmul.f32 %v277, %v305
  %v310 = vmul.f32 %v278, %v306
  %v311 = vmul.f32 %v279, %v307
  %v312 = vmul.f32 %v280, %v308
  %v314 = vlaneseq
  %v315 = vshrl.u32 %v314, 7
  %v316 = vsub.s32 0, %v315
  %v317 = vrot.slane %v258, %v316
  %v319 = vmul.f32 %v309, %v317
  %v320 = vmul.f32 %v310, %v317
  %v321 = vmul.f32 %v311, %v317
  %v322 = vmul.f32 %v312, %v317
  %v324 = vlaneseq
  %v325 = vshrl.u32 %v324, 7
  %v326 = vsub.s32 0, %v325
  %v327 = vrot.slane %v259, %v326
  %v329 = vadd.f32 %v319, %v327
  %v330 = vadd.f32 %v320, %v327
  %v331 = vadd.f32 %v321, %v327
  %v332 = vadd.f32 %v322, %v327
  %333 = vst.msk [vmem:[%s7] sm:$0xff] %vm72, %v329
  %334 = vst.msk [vmem:[%s7 + $0x8] sm:$0xff] %vm72, %v330
  %335 = vst.msk [vmem:[%s7 + $0x10] sm:$0xff] %vm72, %v331
  %336 = vst.msk [vmem:[%s7 + $0x18] sm:$0xff] %vm72, %v332
  // Predicated region
  $region30: #{dino_forward.28} parent=0 // pred_check
    _
  $region31: #{dino_forward.28} parent=0 // pred_check_branch
    %338 = sbr.rel (0) target = $region33
  $region32: #{dino_forward.28} parent=0 // pred_region
    _
  $region33: #{dino_forward.28} parent=0 // pred_fallthru
    _
  // Predicated region
  $region34: #{dino_forward.28} parent=0 // pred_check
    _
  $region35: #{dino_forward.28} parent=0 // pred_check_branch
    %340 = sbr.rel (0) target = $region37
  $region36: #{dino_forward.28} parent=0 // pred_region
    _
  $region37: #{dino_forward.28} parent=0 // pred_fallthru
    _

// kernel: dino_forward.26
$region0: #{dino_forward.26}
  #allocation0 [shape = 'u32[]', space=smem, size = 0x4, offset = 0x4, fixed_abs, tag = 'smem constant byte address 0x4 - core index']
  #allocation1 [shape = 'u32[144,128]{1,0:T(1,128)}', space=vmem, size = 0x12000, scoped, tag = 'internal scratch']
  %s0 = inlined_call_operand.vmem [shape: f32[2,16,64], index: 0, kind: input, shape index: {}]
  %s1 = inlined_call_operand.vmem [shape: f32[2,16,64], index: 1, kind: input, shape index: {}]
  %s2 = inlined_call_operand.vmem [shape: bf16[64,128], index: 2, kind: input, shape index: {}]
  %s3 = inlined_call_operand.vmem [shape: f32[1,128], index: 3, kind: input, shape index: {}]
  %s4 = inlined_call_operand.vmem [shape: bf16[64,64], index: 4, kind: input, shape index: {}]
  %s5 = inlined_call_operand.vmem [shape: f32[1,64], index: 5, kind: input, shape index: {}]
  %s6 = inlined_call_operand.vmem [shape: bf16[64,64], index: 6, kind: input, shape index: {}]
  %s7 = inlined_call_operand.vmem [shape: f32[1,64], index: 7, kind: input, shape index: {}]
  %s8 = inlined_call_operand.vmem [shape: f32[1,64], index: 8, kind: input, shape index: {}]
  %s9 = inlined_call_operand.vmem [shape: f32[1,64], index: 9, kind: input, shape index: {}]
  %s10 = inlined_call_operand.vmem [shape: f32[2,16,64], index: 10, kind: output, shape index: {}]
  %s11 = sld [smem:[#allocation0]]
  $region73: #{dino_forward.26} parent=0
    _
  %s13 = ssub.s32 1, %s11
  %s14 = scalar_select 0, %s13, %s11
  loop: start=0, step=1, limit=4
  $region2: #{dino_forward.26} parent=0 // loop_pre_header
    _
  $region3: #{dino_forward.26} parent=0 // loop_header
    %s16 = sphi 0, %s20
    %p17 = scmp.ge.s32.totalorder %s16, 4
    %s26 = sphi 0, %s28
    %s29 = sphi 0, %s26
    %s30 = sphi 0, %s29
    %s46 = sphi 0, %s30
    %s52 = sphi 0, %s54
    %s55 = sphi 0, %s52
    %s56 = sphi 0, %s55
    %s72 = sphi 0, %s56
    %s76 = sphi 0, %s76
    %s78 = sphi 0, %s76
    %s79 = sphi 0, %s78
    %s93 = sphi 0, %s79
    %s97 = sphi 0, %s97
    %s99 = sphi 0, %s97
    %s100 = sphi 0, %s99
    %s114 = sphi 0, %s100
    %s118 = sphi 0, %s118
    %s120 = sphi 0, %s118
    %s121 = sphi 0, %s120
    %s135 = sphi 0, %s121
    %s139 = sphi 0, %s139
    %s141 = sphi 0, %s139
    %s142 = sphi 0, %s141
    %s156 = sphi 0, %s142
    %s160 = sphi 0, %s160
    %s162 = sphi 0, %s160
    %s163 = sphi 0, %s162
    %s177 = sphi 0, %s163
    %s181 = sphi 0, %s181
    %s183 = sphi 0, %s181
    %s184 = sphi 0, %s183
    %s198 = sphi 0, %s184
    %s202 = sphi 0, %s202
    %s204 = sphi 0, %s202
    %s205 = sphi 0, %s204
    %s219 = sphi 0, %s205
    %s223 = sphi 0, %s223
    %s225 = sphi 0, %s223
    %s226 = sphi 0, %s225
    %s240 = sphi 0, %s226
    %s246 = sphi 0, %s248
    %s249 = sphi 0, %s246
    %s250 = sphi 0, %s249
    %s266 = sphi 0, %s250
  $region4: #{dino_forward.26} parent=0 // loop_header_branch
    %19 = sbr.rel (%p17) target = $region8
  $region5: #{dino_forward.26} parent=0 // loop_body
    %s21 = ssub.s32 %s16, 1
    %s22 = ssub.s32 %s16, 2
    %s23 = sadd.s32 %s16, 1
    %s24 = ssub.s32 %s16, %s23
    %p25 = scmp.eq.s32.totalorder %s24, 0
    %s27 = sadd.s32 %s26, 1
    %s28 = scalar_select %p25, %s26, %s27
    %p31 = pneg %p25
    %p32 = scmp.eq.s32.totalorder %s16, 1
    %p33 = por %p31, %p32
    %p34 = scmp.ne.s32.totalorder %s26, %s29
    %p35 = scmp.eq.s32.totalorder %s16, 0
    %p36 = por %p34, %p35
    %p37 = scmp.ne.s32.totalorder %s26, %s29
    %p38 = scmp.eq.s32.totalorder %s21, 1
    %p39 = por %p37, %p38
    %p40 = scmp.ne.s32.totalorder %s29, %s30
    %p41 = scmp.eq.s32.totalorder %s21, 0
    %p42 = por %p40, %p41
    %p43 = scmp.ne.s32.totalorder %s29, %s30
    %p44 = scmp.eq.s32.totalorder %s22, 1
    %p45 = por %p43, %p44
    %p47 = scmp.ne.s32.totalorder %s30, %s46
    %p48 = scmp.eq.s32.totalorder %s22, 0
    %p49 = por %p47, %p48
    %s50 = ssub.s32 %s16, %s23
    %p51 = scmp.eq.s32.totalorder %s50, 0
    %s53 = sadd.s32 %s52, 1
    %s54 = scalar_select %p51, %s52, %s53
    %p57 = pneg %p51
    %p58 = scmp.eq.s32.totalorder %s16, 1
    %p59 = por %p57, %p58
    %p60 = scmp.ne.s32.totalorder %s52, %s55
    %p61 = scmp.eq.s32.totalorder %s16, 0
    %p62 = por %p60, %p61
    %p63 = scmp.ne.s32.totalorder %s52, %s55
    %p64 = scmp.eq.s32.totalorder %s21, 1
    %p65 = por %p63, %p64
    %p66 = scmp.ne.s32.totalorder %s55, %s56
    %p67 = scmp.eq.s32.totalorder %s21, 0
    %p68 = por %p66, %p67
    %p69 = scmp.ne.s32.totalorder %s55, %s56
    %p70 = scmp.eq.s32.totalorder %s22, 1
    %p71 = por %p69, %p70
    %p73 = scmp.ne.s32.totalorder %s56, %s72
    %p74 = scmp.eq.s32.totalorder %s22, 0
    %p75 = por %p73, %p74
    %s77 = sadd.s32 %s76, 1
    %p80 = scmp.eq.s32.totalorder %s16, 1
    %p81 = scmp.ne.s32.totalorder %s76, %s78
    %p82 = scmp.eq.s32.totalorder %s16, 0
    %p83 = por %p81, %p82
    %p84 = scmp.ne.s32.totalorder %s76, %s78
    %p85 = scmp.eq.s32.totalorder %s21, 1
    %p86 = por %p84, %p85
    %p87 = scmp.ne.s32.totalorder %s78, %s79
    %p88 = scmp.eq.s32.totalorder %s21, 0
    %p89 = por %p87, %p88
    %p90 = scmp.ne.s32.totalorder %s78, %s79
    %p91 = scmp.eq.s32.totalorder %s22, 1
    %p92 = por %p90, %p91
    %p94 = scmp.ne.s32.totalorder %s79, %s93
    %p95 = scmp.eq.s32.totalorder %s22, 0
    %p96 = por %p94, %p95
    %s98 = sadd.s32 %s97, 1
    %p101 = scmp.eq.s32.totalorder %s16, 1
    %p102 = scmp.ne.s32.totalorder %s97, %s99
    %p103 = scmp.eq.s32.totalorder %s16, 0
    %p104 = por %p102, %p103
    %p105 = scmp.ne.s32.totalorder %s97, %s99
    %p106 = scmp.eq.s32.totalorder %s21, 1
    %p107 = por %p105, %p106
    %p108 = scmp.ne.s32.totalorder %s99, %s100
    %p109 = scmp.eq.s32.totalorder %s21, 0
    %p110 = por %p108, %p109
    %p111 = scmp.ne.s32.totalorder %s99, %s100
    %p112 = scmp.eq.s32.totalorder %s22, 1
    %p113 = por %p111, %p112
    %p115 = scmp.ne.s32.totalorder %s100, %s114
    %p116 = scmp.eq.s32.totalorder %s22, 0
    %p117 = por %p115, %p116
    %s119 = sadd.s32 %s118, 1
    %p122 = scmp.eq.s32.totalorder %s16, 1
    %p123 = scmp.ne.s32.totalorder %s118, %s120
    %p124 = scmp.eq.s32.totalorder %s16, 0
    %p125 = por %p123, %p124
    %p126 = scmp.ne.s32.totalorder %s118, %s120
    %p127 = scmp.eq.s32.totalorder %s21, 1
    %p128 = por %p126, %p127
    %p129 = scmp.ne.s32.totalorder %s120, %s121
    %p130 = scmp.eq.s32.totalorder %s21, 0
    %p131 = por %p129, %p130
    %p132 = scmp.ne.s32.totalorder %s120, %s121
    %p133 = scmp.eq.s32.totalorder %s22, 1
    %p134 = por %p132, %p133
    %p136 = scmp.ne.s32.totalorder %s121, %s135
    %p137 = scmp.eq.s32.totalorder %s22, 0
    %p138 = por %p136, %p137
    %s140 = sadd.s32 %s139, 1
    %p143 = scmp.eq.s32.totalorder %s16, 1
    %p144 = scmp.ne.s32.totalorder %s139, %s141
    %p145 = scmp.eq.s32.totalorder %s16, 0
    %p146 = por %p144, %p145
    %p147 = scmp.ne.s32.totalorder %s139, %s141
    %p148 = scmp.eq.s32.totalorder %s21, 1
    %p149 = por %p147, %p148
    %p150 = scmp.ne.s32.totalorder %s141, %s142
    %p151 = scmp.eq.s32.totalorder %s21, 0
    %p152 = por %p150, %p151
    %p153 = scmp.ne.s32.totalorder %s141, %s142
    %p154 = scmp.eq.s32.totalorder %s22, 1
    %p155 = por %p153, %p154
    %p157 = scmp.ne.s32.totalorder %s142, %s156
    %p158 = scmp.eq.s32.totalorder %s22, 0
    %p159 = por %p157, %p158
    %s161 = sadd.s32 %s160, 1
    %p164 = scmp.eq.s32.totalorder %s16, 1
    %p165 = scmp.ne.s32.totalorder %s160, %s162
    %p166 = scmp.eq.s32.totalorder %s16, 0
    %p167 = por %p165, %p166
    %p168 = scmp.ne.s32.totalorder %s160, %s162
    %p169 = scmp.eq.s32.totalorder %s21, 1
    %p170 = por %p168, %p169
    %p171 = scmp.ne.s32.totalorder %s162, %s163
    %p172 = scmp.eq.s32.totalorder %s21, 0
    %p173 = por %p171, %p172
    %p174 = scmp.ne.s32.totalorder %s162, %s163
    %p175 = scmp.eq.s32.totalorder %s22, 1
    %p176 = por %p174, %p175
    %p178 = scmp.ne.s32.totalorder %s163, %s177
    %p179 = scmp.eq.s32.totalorder %s22, 0
    %p180 = por %p178, %p179
    %s182 = sadd.s32 %s181, 1
    %p185 = scmp.eq.s32.totalorder %s16, 1
    %p186 = scmp.ne.s32.totalorder %s181, %s183
    %p187 = scmp.eq.s32.totalorder %s16, 0
    %p188 = por %p186, %p187
    %p189 = scmp.ne.s32.totalorder %s181, %s183
    %p190 = scmp.eq.s32.totalorder %s21, 1
    %p191 = por %p189, %p190
    %p192 = scmp.ne.s32.totalorder %s183, %s184
    %p193 = scmp.eq.s32.totalorder %s21, 0
    %p194 = por %p192, %p193
    %p195 = scmp.ne.s32.totalorder %s183, %s184
    %p196 = scmp.eq.s32.totalorder %s22, 1
    %p197 = por %p195, %p196
    %p199 = scmp.ne.s32.totalorder %s184, %s198
    %p200 = scmp.eq.s32.totalorder %s22, 0
    %p201 = por %p199, %p200
    %s203 = sadd.s32 %s202, 1
    %p206 = scmp.eq.s32.totalorder %s16, 1
    %p207 = scmp.ne.s32.totalorder %s202, %s204
    %p208 = scmp.eq.s32.totalorder %s16, 0
    %p209 = por %p207, %p208
    %p210 = scmp.ne.s32.totalorder %s202, %s204
    %p211 = scmp.eq.s32.totalorder %s21, 1
    %p212 = por %p210, %p211
    %p213 = scmp.ne.s32.totalorder %s204, %s205
    %p214 = scmp.eq.s32.totalorder %s21, 0
    %p215 = por %p213, %p214
    %p216 = scmp.ne.s32.totalorder %s204, %s205
    %p217 = scmp.eq.s32.totalorder %s22, 1
    %p218 = por %p216, %p217
    %p220 = scmp.ne.s32.totalorder %s205, %s219
    %p221 = scmp.eq.s32.totalorder %s22, 0
    %p222 = por %p220, %p221
    %s224 = sadd.s32 %s223, 1
    %p227 = scmp.eq.s32.totalorder %s16, 1
    %p228 = scmp.ne.s32.totalorder %s223, %s225
    %p229 = scmp.eq.s32.totalorder %s16, 0
    %p230 = por %p228, %p229
    %p231 = scmp.ne.s32.totalorder %s223, %s225
    %p232 = scmp.eq.s32.totalorder %s21, 1
    %p233 = por %p231, %p232
    %p234 = scmp.ne.s32.totalorder %s225, %s226
    %p235 = scmp.eq.s32.totalorder %s21, 0
    %p236 = por %p234, %p235
    %p237 = scmp.ne.s32.totalorder %s225, %s226
    %p238 = scmp.eq.s32.totalorder %s22, 1
    %p239 = por %p237, %p238
    %p241 = scmp.ne.s32.totalorder %s226, %s240
    %p242 = scmp.eq.s32.totalorder %s22, 0
    %p243 = por %p241, %p242
    %s244 = ssub.s32 %s16, %s23
    %p245 = scmp.eq.s32.totalorder %s244, 0
    %s247 = sadd.s32 %s246, 1
    %s248 = scalar_select %p245, %s246, %s247
    %p251 = pneg %p245
    %p252 = scmp.eq.s32.totalorder %s16, 1
    %p253 = por %p251, %p252
    %p254 = scmp.ne.s32.totalorder %s246, %s249
    %p255 = scmp.eq.s32.totalorder %s16, 0
    %p256 = por %p254, %p255
    %p257 = scmp.ne.s32.totalorder %s246, %s249
    %p258 = scmp.eq.s32.totalorder %s21, 1
    %p259 = por %p257, %p258
    %p260 = scmp.ne.s32.totalorder %s249, %s250
    %p261 = scmp.eq.s32.totalorder %s21, 0
    %p262 = por %p260, %p261
    %p263 = scmp.ne.s32.totalorder %s249, %s250
    %p264 = scmp.eq.s32.totalorder %s22, 1
    %p265 = por %p263, %p264
    %p267 = scmp.ne.s32.totalorder %s250, %s266
    %p268 = scmp.eq.s32.totalorder %s22, 0
    %p269 = por %p267, %p268
    %p270 = scmp.le.s32.totalorder 1, %s16
    %p271 = scmp.lt.s32.totalorder %s16, 3
    %p272 = pnand %p270, %p271
    %p273 = pneg %p272
    // Predicated region
    $region9: #{dino_forward.26} parent=5 // pred_check
      _
    $region10: #{dino_forward.26} parent=5 // pred_check_branch
      %275 = sbr.rel (%p272) target = $region12
    $region11: #{dino_forward.26} parent=5 // pred_region
      %s276 = ssub.s32 %s16, 1
      // Predicated region
      $region13: #{dino_forward.26} parent=11 // pred_check
        %p277 = pneg %p89
      $region14: #{dino_forward.26} parent=11 // pred_check_branch
        %279 = sbr.rel (%p277) target = $region16
      $region15: #{dino_forward.26} parent=11 // pred_region
        _
      $region16: #{dino_forward.26} parent=11 // pred_fallthru
        _
      // Predicated region
      $region17: #{dino_forward.26} parent=11 // pred_check
        %p280 = pneg %p110
      $region18: #{dino_forward.26} parent=11 // pred_check_branch
        %282 = sbr.rel (%p280) target = $region20
      $region19: #{dino_forward.26} parent=11 // pred_region
        _
      $region20: #{dino_forward.26} parent=11 // pred_fallthru
        _
      // Predicated region
      $region21: #{dino_forward.26} parent=11 // pred_check
        %p283 = pneg %p131
      $region22: #{dino_forward.26} parent=11 // pred_check_branch
        %285 = sbr.rel (%p283) target = $region24
      $region23: #{dino_forward.26} parent=11 // pred_region
        _
      $region24: #{dino_forward.26} parent=11 // pred_fallthru
        _
      // Predicated region
      $region25: #{dino_forward.26} parent=11 // pred_check
        %p286 = pneg %p152
      $region26: #{dino_forward.26} parent=11 // pred_check_branch
        %288 = sbr.rel (%p286) target = $region28
      $region27: #{dino_forward.26} parent=11 // pred_region
        _
      $region28: #{dino_forward.26} parent=11 // pred_fallthru
        _
      // Predicated region
      $region29: #{dino_forward.26} parent=11 // pred_check
        %p289 = pneg %p173
      $region30: #{dino_forward.26} parent=11 // pred_check_branch
        %291 = sbr.rel (%p289) target = $region32
      $region31: #{dino_forward.26} parent=11 // pred_region
        _
      $region32: #{dino_forward.26} parent=11 // pred_fallthru
        _
      // Predicated region
      $region33: #{dino_forward.26} parent=11 // pred_check
        %p292 = pneg %p194
      $region34: #{dino_forward.26} parent=11 // pred_check_branch
        %294 = sbr.rel (%p292) target = $region36
      $region35: #{dino_forward.26} parent=11 // pred_region
        _
      $region36: #{dino_forward.26} parent=11 // pred_fallthru
        _
      // Predicated region
      $region37: #{dino_forward.26} parent=11 // pred_check
        %p295 = pneg %p215
      $region38: #{dino_forward.26} parent=11 // pred_check_branch
        %297 = sbr.rel (%p295) target = $region40
      $region39: #{dino_forward.26} parent=11 // pred_region
        _
      $region40: #{dino_forward.26} parent=11 // pred_fallthru
        _
      // Predicated region
      $region41: #{dino_forward.26} parent=11 // pred_check
        %p298 = pneg %p236
      $region42: #{dino_forward.26} parent=11 // pred_check_branch
        %300 = sbr.rel (%p298) target = $region44
      $region43: #{dino_forward.26} parent=11 // pred_region
        _
      $region44: #{dino_forward.26} parent=11 // pred_fallthru
        _
    $region12: #{dino_forward.26} parent=5 // pred_fallthru
      _
    %p301 = scmp.lt.s32.totalorder %s16, 2
    // Predicated region
    $region45: #{dino_forward.26} parent=5 // pred_check
      %p302 = pneg %p301
    $region46: #{dino_forward.26} parent=5 // pred_check_branch
      %304 = sbr.rel (%p302) target = $region48
    $region47: #{dino_forward.26} parent=5 // pred_region
      // Predicated region
      $region49: #{dino_forward.26} parent=47 // pred_check
        %p305 = pneg %p36
      $region50: #{dino_forward.26} parent=47 // pred_check_branch
        %307 = sbr.rel (%p305) target = $region52
      $region51: #{dino_forward.26} parent=47 // pred_region
        %p308 = scmp.lt.s32.totalorder %s16, 1
        %s309 = scalar_select %p308, %s16, 1
        %s310 = smul.addr %s309, 2
        %s311 = smul.addr %s310, 8
        %s312 = scalar_lea.vmem %s0, %s311
      $region52: #{dino_forward.26} parent=47 // pred_fallthru
        _
      // Predicated region
      $region53: #{dino_forward.26} parent=47 // pred_check
        %p313 = pneg %p62
      $region54: #{dino_forward.26} parent=47 // pred_check_branch
        %315 = sbr.rel (%p313) target = $region56
      $region55: #{dino_forward.26} parent=47 // pred_region
        %p316 = scmp.lt.s32.totalorder %s16, 1
        %s317 = scalar_select %p316, %s16, 1
        %s318 = smul.addr %s317, 2
        %s319 = smul.addr %s318, 8
        %s320 = scalar_lea.vmem %s1, %s319
      $region56: #{dino_forward.26} parent=47 // pred_fallthru
        _
    $region48: #{dino_forward.26} parent=5 // pred_fallthru
      _
    %p321 = scmp.le.s32.totalorder 1, %s16
    %p322 = scmp.lt.s32.totalorder %s16, 3
    %p323 = pnand %p321, %p322
    %p324 = pneg %p323
    // Predicated region
    $region57: #{dino_forward.26} parent=5 // pred_check
      _
    $region58: #{dino_forward.26} parent=5 // pred_check_branch
      %326 = sbr.rel (%p323) target = $region60
    $region59: #{dino_forward.26} parent=5 // pred_region
      %s327 = ssub.s32 %s16, 1
      %p328 = scmp.lt.s32.totalorder %s21, 1
      %s329 = scalar_select %p328, %s21, 1
      %s330 = smul.addr %s329, 2
      %s331 = smul.addr %s330, 8
      %s332 = scalar_lea.vmem %s0, %s331
      %p333 = pneg %p42
      %p334 = pneg %p39
      %p335 = scmp.lt.s32.totalorder %s21, 1
      %s336 = scalar_select %p335, %s21, 1
      %s337 = smul.addr %s336, 2
      %s338 = smul.addr %s337, 8
      %s339 = scalar_lea.vmem %s1, %s338
      %p340 = pneg %p68
      %p341 = pneg %p65
      %p342 = pneg %p89
      %p343 = pneg %p86
      %p344 = pneg %p110
      %p345 = pneg %p107
      %p346 = pneg %p131
      %p347 = pneg %p128
      %p348 = pneg %p152
      %p349 = pneg %p149
      %p350 = pneg %p173
      %p351 = pneg %p170
      %p352 = pneg %p194
      %p353 = pneg %p191
      %p354 = pneg %p215
      %p355 = pneg %p212
      %p356 = pneg %p236
      %p357 = pneg %p233
      %p358 = pneg %p262
      %p359 = pneg %p259
      %p360 = scmp.lt.s32.totalorder %s21, 1
      %s361 = scalar_select %p360, %s21, 1
      %s362 = smul.addr %s361, 2
      %s363 = smul.addr %s362, 8
      %s364 = scalar_lea.vmem %s10, %s363
      %p365 = scmp.lt.s32.totalorder %s21, 1
      %s366 = scalar_select %p365, %s21, 1
      %s367 = smul.addr %s366, 2
      %s368 = smul.addr %s367, 8
      %s369 = scalar_lea.vmem %s0, %s368
      %p370 = scmp.lt.s32.totalorder %s21, 1
      %s371 = scalar_select %p370, %s21, 1
      %s372 = smul.addr %s371, 2
      %s373 = smul.addr %s372, 8
      %s374 = scalar_lea.vmem %s1, %s373
      %p375 = scmp.lt.s32.totalorder %s21, 1
      %s376 = scalar_select %p375, %s21, 1
      %s377 = smul.addr %s376, 2
      %s378 = smul.addr %s377, 8
      %s379 = scalar_lea.vmem %s10, %s378
      %v381 = vld [vmem:[%s369] sm:$0xff]
      %v382 = vld [vmem:[%s369 + $0x8] sm:$0xff]
      %v383 = vld [vmem:[%s374] sm:$0xff]
      %v384 = vld [vmem:[%s374 + $0x8] sm:$0xff]
      %v385 = vadd.f32 %v381, %v383
      %v386 = vadd.f32 %v382, %v384
      %v387 = vpack.c.bf16 %v386, %v385
      %v388 = vld [vmem:[%s2] sm:$0xf]
      %v389 = vld [vmem:[%s2 + $0x4] sm:$0xf]
      %v390 = vld [vmem:[%s2 + $0x8] sm:$0xf]
      %v391 = vld [vmem:[%s2 + $0xc] sm:$0xf]
      %v392 = vld [vmem:[%s2 + $0x10] sm:$0xf]
      %v393 = vld [vmem:[%s2 + $0x14] sm:$0xf]
      %v394 = vld [vmem:[%s2 + $0x18] sm:$0xf]
      %v395 = vld [vmem:[%s2 + $0x1c] sm:$0xf]
      %v396 = vld [vmem:[%s3] sm:$0x1]
      %v398 = vlaneseq
      %v399 = vshrl.u32 %v398, 7
      %v400 = vsub.s32 0, %v399
      %v401 = vrot.slane %v396, %v400
      %v411 = vunpack.c.l.b16 %v388
      %v412 = vunpack.c.l.b16 %v389
      %v413 = vunpack.c.l.b16 %v390
      %v414 = vunpack.c.l.b16 %v391
      %v415 = vunpack.c.l.b16 %v392
      %v416 = vunpack.c.l.b16 %v393
      %v417 = vunpack.c.l.b16 %v394
      %v418 = vunpack.c.l.b16 %v395
      %v419 = vpack.c.b16 %v412, %v411
      %v420 = vpack.c.b16 %v414, %v413
      %v421 = vpack.c.b16 %v416, %v415
      %v422 = vpack.c.b16 %v418, %v417
      %vm427 = vcmask 523264
      %v429 = vsel %vm427, %v387, 0
      %431 = vmatprep.subr.bf16.mxu0 0
      %432 = vmatpush1.bf16.msra.mxu0 0
      %433 = vmatprep.subr.bf16.mxu0 0
      %434 = vmatpush1.bf16.msra.mxu0 0
      %435 = vmatprep.subr.bf16.mxu0 0
      %436 = vmatpush1.bf16.msra.mxu0 0
      %437 = vmatprep.subr.bf16.mxu0 0
      %438 = vmatpush1.bf16.msra.mxu0 0
      %439 = vmatprep.subr.bf16.mxu0 0
      %440 = vmatpush1.bf16.msra.mxu0 %v422
      %441 = vmatprep.subr.bf16.mxu0 0
      %442 = vmatpush1.bf16.msra.mxu0 %v421
      %443 = vmatprep.subr.bf16.mxu0 0
      %444 = vmatpush1.bf16.msra.mxu0 %v420
      %445 = vmatprep.subr.bf16.mxu0 0
      %446 = vmatpush1.bf16.msra.mxu0 %v419
      %447 = vmatprep.subr.bf16.mxu0 0
      %448 = vmatpush2.bf16.msra.mxu0 0
      %449 = vmatprep.subr.bf16.mxu0 0
      %450 = vmatpush2.bf16.msra.mxu0 0
      %451 = vmatprep.subr.bf16.mxu0 0
      %452 = vmatpush2.bf16.msra.mxu0 0
      %453 = vmatprep.subr.bf16.mxu0 0
      %454 = vmatpush2.bf16.msra.mxu0 0
      %455 = vmatprep.subr.bf16.mxu0 0
      %456 = vmatpush2.bf16.msra.mxu0 0
      %457 = vmatprep.subr.bf16.mxu0 0
      %458 = vmatpush2.bf16.msra.mxu0 0
      %459 = vmatprep.subr.bf16.mxu0 0
      %460 = vmatpush2.bf16.msra.mxu0 0
      %461 = vmatprep.subr.bf16.mxu0 0
      %462 = vmatpush2.bf16.msra.mxu0 0
      %463 = vmatprep.mubr.bf16.mxu0 0
      %464 = vmatmul.mubr.bf16.gmra.mxu0 %v429
      %v465 = vpop.f32.mrf.mxu0
      %v466 = vadd.f32 %v401, %v465
      %v467 = vpop.f32.mrf.mxu0
      %v468 = vpop.f32.mrf.mxu0
      %v469 = vadd.f32 %v401, %v468
      %v470 = vpop.f32.mrf.mxu0
      %471 = vdwg.mxu0
      %v472 = vpack.c.bf16 %v382, %v381
      %v473 = vld [vmem:[%s4] sm:$0xf]
      %v474 = vld [vmem:[%s4 + $0x4] sm:$0xf]
      %v475 = vld [vmem:[%s4 + $0x8] sm:$0xf]
      %v476 = vld [vmem:[%s4 + $0xc] sm:$0xf]
      %v477 = vld [vmem:[%s4 + $0x10] sm:$0xf]
      %v478 = vld [vmem:[%s4 + $0x14] sm:$0xf]
      %v479 = vld [vmem:[%s4 + $0x18] sm:$0xf]
      %v480 = vld [vmem:[%s4 + $0x1c] sm:$0xf]
      %v481 = vld [vmem:[%s5] sm:$0x1]
      %v483 = vlaneseq
      %v484 = vshrl.u32 %v483, 7
      %v485 = vsub.s32 0, %v484
      %v486 = vrot.slane %v481, %v485
      %v496 = vunpack.c.l.b16 %v473
      %v497 = vunpack.c.l.b16 %v474
      %v498 = vunpack.c.l.b16 %v475
      %v499 = vunpack.c.l.b16 %v476
      %v500 = vunpack.c.l.b16 %v477
      %v501 = vunpack.c.l.b16 %v478
      %v502 = vunpack.c.l.b16 %v479
      %v503 = vunpack.c.l.b16 %v480
      %v504 = vpack.c.b16 %v497, %v496
      %v505 = vpack.c.b16 %v499, %v498
      %v506 = vpack.c.b16 %v501, %v500
      %v507 = vpack.c.b16 %v503, %v502
      %v513 = vsel %vm427, %v472, 0
      %515 = vmatprep.subr.bf16.mxu0 0
      %516 = vmatpush1.bf16.msra.mxu0 0
      %517 = vmatprep.subr.bf16.mxu0 0
      %518 = vmatpush1.bf16.msra.mxu0 0
      %519 = vmatprep.subr.bf16.mxu0 0
      %520 = vmatpush1.bf16.msra.mxu0 0
      %521 = vmatprep.subr.bf16.mxu0 0
      %522 = vmatpush1.bf16.msra.mxu0 0
      %523 = vmatprep.subr.bf16.mxu0 0
      %524 = vmatpush1.bf16.msra.mxu0 %v507
      %525 = vmatprep.subr.bf16.mxu0 0
      %526 = vmatpush1.bf16.msra.mxu0 %v506
      %527 = vmatprep.subr.bf16.mxu0 0
      %528 = vmatpush1.bf16.msra.mxu0 %v505
      %529 = vmatprep.subr.bf16.mxu0 0
      %530 = vmatpush1.bf16.msra.mxu0 %v504
      %531 = vmatprep.subr.bf16.mxu0 0
      %532 = vmatpush2.bf16.msra.mxu0 0
      %533 = vmatprep.subr.bf16.mxu0 0
      %534 = vmatpush2.bf16.msra.mxu0 0
      %535 = vmatprep.subr.bf16.mxu0 0
      %536 = vmatpush2.bf16.msra.mxu0 0
      %537 = vmatprep.subr.bf16.mxu0 0
      %538 = vmatpush2.bf16.msra.mxu0 0
      %539 = vmatprep.subr.bf16.mxu0 0
      %540 = vmatpush2.bf16.msra.mxu0 0
      %541 = vmatprep.subr.bf16.mxu0 0
      %542 = vmatpush2.bf16.msra.mxu0 0
      %543 = vmatprep.subr.bf16.mxu0 0
      %544 = vmatpush2.bf16.msra.mxu0 0
      %545 = vmatprep.subr.bf16.mxu0 0
      %546 = vmatpush2.bf16.msra.mxu0 0
      %547 = vmatprep.mubr.bf16.mxu0 0
      %548 = vmatmul.mubr.bf16.gmra.mxu0 %v513
      %v549 = vpop.f32.mrf.mxu0
      %v550 = vadd.f32 %v486, %v549
      %v551 = vpop.f32.mrf.mxu0
      %v552 = vpop.f32.mrf.mxu0
      %v553 = vadd.f32 %v486, %v552
      %v554 = vpop.f32.mrf.mxu0
      %555 = vdwg.mxu0
      %v556 = vpack.c.bf16 %v469, %v466
      %v557 = vpack.c.bf16 %v553, %v550
      %559 = vrot.lane.b32.xlu0 %v556, 64
      %v560 = vpop.permute.xlu0 %559
      %vm561 = vcmask 130048
      %v563 = vsel %vm561, %v556, 0
      %v566 = vsel %vm561, %v560, 0
      %568 = vmatprep.subr.bf16.mxu0 0
      %569 = vmatpush1.bf16.xpose.msra.mxu0 0
      %570 = vmatprep.subr.bf16.mxu0 0
      %571 = vmatpush1.bf16.xpose.msra.mxu0 0
      %572 = vmatprep.subr.bf16.mxu0 0
      %573 = vmatpush1.bf16.xpose.msra.mxu0 0
      %574 = vmatprep.subr.bf16.mxu0 0
      %575 = vmatpush1.bf16.xpose.msra.mxu0 0
      %576 = vmatprep.subr.bf16.mxu0 0
      %577 = vmatpush1.bf16.xpose.msra.mxu0 0
      %578 = vmatprep.subr.bf16.mxu0 0
      %579 = vmatpush1.bf16.xpose.msra.mxu0 0
      %580 = vmatprep.subr.bf16.mxu0 0
      %581 = vmatpush1.bf16.xpose.msra.mxu0 0
      %582 = vmatprep.subr.bf16.mxu0 0
      %583 = vmatpush1.bf16.xpose.msra.mxu0 %v566
      %584 = vmatprep.subr.bf16.mxu0 0
      %585 = vmatpush2.bf16.xpose.msra.mxu0 0
      %586 = vmatprep.subr.bf16.mxu0 0
      %587 = vmatpush2.bf16.xpose.msra.mxu0 0
      %588 = vmatprep.subr.bf16.mxu0 0
      %589 = vmatpush2.bf16.xpose.msra.mxu0 0
      %590 = vmatprep.subr.bf16.mxu0 0
      %591 = vmatpush2.bf16.xpose.msra.mxu0 0
      %592 = vmatprep.subr.bf16.mxu0 0
      %593 = vmatpush2.bf16.xpose.msra.mxu0 0
      %594 = vmatprep.subr.bf16.mxu0 0
      %595 = vmatpush2.bf16.xpose.msra.mxu0 0
      %596 = vmatprep.subr.bf16.mxu0 0
      %597 = vmatpush2.bf16.xpose.msra.mxu0 0
      %598 = vmatprep.subr.bf16.mxu0 0
      %599 = vmatpush2.bf16.xpose.msra.mxu0 0
      %600 = vmatprep.mubr.bf16.mxu0 0
      %601 = vmatmul.mubr.bf16.gmra.mxu0 %v563
      %v602 = vpop.f32.mrf.mxu0
      %v603 = vadd.f32 0.0, %v602
      %v604 = vpop.f32.mrf.mxu0
      %v605 = vpop.f32.mrf.mxu0
      %v606 = vadd.f32 0.0, %v605
      %v607 = vpop.f32.mrf.mxu0
      %608 = vdwg.mxu0
      %v609 = vmul.f32 %v603, 0.25
      %v610 = vmul.f32 %v606, 0.25
      %v611 = vsel %vm561, %v609, -inf
      %612 = vmax.xlane.f32.xlu0 %v611
      %v613 = vpop.xlane.xlu0 %612
      %v614 = vsel %vm561, %v610, -inf
      %615 = vmax.xlane.f32.xlu0 %v614
      %v616 = vpop.xlane.xlu0 %615
      %v617 = vsub.f32 %v609, %v613
      %v618 = vsub.f32 %v610, %v616
      %v619 = vmul.f32 %v617, 1.442695
      %v620 = vpow.pop %v619
      %v621 = vmul.f32 %v618, 1.442695
      %v622 = vpow.pop %v621
      %v623 = vsel %vm561, %v620, 0.0
      %624 = vadd.xlane.f32.xlu0 %v623
      %v625 = vpop.xlane.xlu0 %624
      %v626 = vsel %vm561, %v622, 0.0
      %627 = vadd.xlane.f32.xlu0 %v626
      %v628 = vpop.xlane.xlu0 %627
      %v629 = vrcp.pop %v625
      %v630 = vrcp.pop %v628
      %v631 = vmul.f32 %v620, %v629
      %v632 = vmul.f32 %v622, %v630
      %v633 = vpack.c.bf16 %v632, %v631
      %v635 = vsel %vm561, %v633, 0
      %637 = vmatprep.subr.bf16.mxu0 0
      %638 = vmatpush1.bf16.msra.mxu0 0
      %639 = vmatprep.subr.bf16.mxu0 0
      %640 = vmatpush1.bf16.msra.mxu0 0
      %641 = vmatprep.subr.bf16.mxu0 0
      %642 = vmatpush1.bf16.msra.mxu0 0
      %643 = vmatprep.subr.bf16.mxu0 0
      %644 = vmatpush1.bf16.msra.mxu0 0
      %645 = vmatprep.subr.bf16.mxu0 0
      %646 = vmatpush1.bf16.msra.mxu0 0
      %647 = vmatprep.subr.bf16.mxu0 0
      %648 = vmatpush1.bf16.msra.mxu0 0
      %649 = vmatprep.subr.bf16.mxu0 0
      %650 = vmatpush1.bf16.msra.mxu0 0
      %651 = vmatprep.subr.bf16.mxu0 0
      %652 = vmatpush1.bf16.msra.mxu0 %v557
      %653 = vmatprep.subr.bf16.mxu0 0
      %654 = vmatpush2.bf16.msra.mxu0 0
      %655 = vmatprep.subr.bf16.mxu0 0
      %656 = vmatpush2.bf16.msra.mxu0 0
      %657 = vmatprep.subr.bf16.mxu0 0
      %658 = vmatpush2.bf16.msra.mxu0 0
      %659 = vmatprep.subr.bf16.mxu0 0
      %660 = vmatpush2.bf16.msra.mxu0 0
      %661 = vmatprep.subr.bf16.mxu0 0
      %662 = vmatpush2.bf16.msra.mxu0 0
      %663 = vmatprep.subr.bf16.mxu0 0
      %664 = vmatpush2.bf16.msra.mxu0 0
      %665 = vmatprep.subr.bf16.mxu0 0
      %666 = vmatpush2.bf16.msra.mxu0 0
      %667 = vmatprep.subr.bf16.mxu0 0
      %668 = vmatpush2.bf16.msra.mxu0 0
      %669 = vmatprep.mubr.bf16.mxu0 0
      %670 = vmatmul.mubr.bf16.gmra.mxu0 %v635
      %v671 = vpop.f32.mrf.mxu0
      %v672 = vadd.f32 0.0, %v671
      %v673 = vpop.f32.mrf.mxu0
      %v674 = vpop.f32.mrf.mxu0
      %v675 = vadd.f32 0.0, %v674
      %v676 = vpop.f32.mrf.mxu0
      %677 = vdwg.mxu0
      %678 = vrot.lane.b32.xlu0 %v556, 112
      %v679 = vpop.permute.xlu0 %678
      %680 = vrot.lane.b32.xlu0 %v556, 48
      %v681 = vpop.permute.xlu0 %680
      %v683 = vsel %vm561, %v679, 0
      %v686 = vsel %vm561, %v681, 0
      %688 = vmatprep.subr.bf16.mxu0 0
      %689 = vmatpush1.bf16.xpose.msra.mxu0 0
      %690 = vmatprep.subr.bf16.mxu0 0
      %691 = vmatpush1.bf16.xpose.msra.mxu0 0
      %692 = vmatprep.subr.bf16.mxu0 0
      %693 = vmatpush1.bf16.xpose.msra.mxu0 0
      %694 = vmatprep.subr.bf16.mxu0 0
      %695 = vmatpush1.bf16.xpose.msra.mxu0 0
      %696 = vmatprep.subr.bf16.mxu0 0
      %697 = vmatpush1.bf16.xpose.msra.mxu0 0
      %698 = vmatprep.subr.bf16.mxu0 0
      %699 = vmatpush1.bf16.xpose.msra.mxu0 0
      %700 = vmatprep.subr.bf16.mxu0 0
      %701 = vmatpush1.bf16.xpose.msra.mxu0 0
      %702 = vmatprep.subr.bf16.mxu0 0
      %703 = vmatpush1.bf16.xpose.msra.mxu0 %v686
      %704 = vmatprep.subr.bf16.mxu0 0
      %705 = vmatpush2.bf16.xpose.msra.mxu0 0
      %706 = vmatprep.subr.bf16.mxu0 0
      %707 = vmatpush2.bf16.xpose.msra.mxu0 0
      %708 = vmatprep.subr.bf16.mxu0 0
      %709 = vmatpush2.bf16.xpose.msra.mxu0 0
      %710 = vmatprep.subr.bf16.mxu0 0
      %711 = vmatpush2.bf16.xpose.msra.mxu0 0
      %712 = vmatprep.subr.bf16.mxu0 0
      %713 = vmatpush2.bf16.xpose.msra.mxu0 0
      %714 = vmatprep.subr.bf16.mxu0 0
      %715 = vmatpush2.bf16.xpose.msra.mxu0 0
      %716 = vmatprep.subr.bf16.mxu0 0
      %717 = vmatpush2.bf16.xpose.msra.mxu0 0
      %718 = vmatprep.subr.bf16.mxu0 0
      %719 = vmatpush2.bf16.xpose.msra.mxu0 0
      %720 = vmatprep.mubr.bf16.mxu0 0
      %721 = vmatmul.mubr.bf16.gmra.mxu0 %v683
      %v722 = vpop.f32.mrf.mxu0
      %v723 = vadd.f32 0.0, %v722
      %v724 = vpop.f32.mrf.mxu0
      %v725 = vpop.f32.mrf.mxu0
      %v726 = vadd.f32 0.0, %v725
      %v727 = vpop.f32.mrf.mxu0
      %728 = vdwg.mxu0
      %v729 = vmul.f32 %v723, 0.25
      %v730 = vmul.f32 %v726, 0.25
      %v731 = vsel %vm561, %v729, -inf
      %732 = vmax.xlane.f32.xlu0 %v731
      %v733 = vpop.xlane.xlu0 %732
      %v734 = vsel %vm561, %v730, -inf
      %735 = vmax.xlane.f32.xlu0 %v734
      %v736 = vpop.xlane.xlu0 %735
      %v737 = vsub.f32 %v729, %v733
      %v738 = vsub.f32 %v730, %v736
      %v739 = vmul.f32 %v737, 1.442695
      %v740 = vpow.pop %v739
      %v741 = vmul.f32 %v738, 1.442695
      %v742 = vpow.pop %v741
      %v743 = vsel %vm561, %v740, 0.0
      %744 = vadd.xlane.f32.xlu0 %v743
      %v745 = vpop.xlane.xlu0 %744
      %v746 = vsel %vm561, %v742, 0.0
      %747 = vadd.xlane.f32.xlu0 %v746
      %v748 = vpop.xlane.xlu0 %747
      %v749 = vrcp.pop %v745
      %v750 = vrcp.pop %v748
      %v751 = vmul.f32 %v740, %v749
      %v752 = vmul.f32 %v742, %v750
      %v753 = vpack.c.bf16 %v752, %v751
      %755 = vrot.lane.b32.xlu0 %v557, 112
      %v756 = vpop.permute.xlu0 %755
      %v759 = vsel %vm561, %v753, 0
      %761 = vmatprep.subr.bf16.mxu0 0
      %762 = vmatpush1.bf16.msra.mxu0 0
      %763 = vmatprep.subr.bf16.mxu0 0
      %764 = vmatpush1.bf16.msra.mxu0 0
      %765 = vmatprep.subr.bf16.mxu0 0
      %766 = vmatpush1.bf16.msra.mxu0 0
      %767 = vmatprep.subr.bf16.mxu0 0
      %768 = vmatpush1.bf16.msra.mxu0 0
      %769 = vmatprep.subr.bf16.mxu0 0
      %770 = vmatpush1.bf16.msra.mxu0 0
      %771 = vmatprep.subr.bf16.mxu0 0
      %772 = vmatpush1.bf16.msra.mxu0 0
      %773 = vmatprep.subr.bf16.mxu0 0
      %774 = vmatpush1.bf16.msra.mxu0 0
      %775 = vmatprep.subr.bf16.mxu0 0
      %776 = vmatpush1.bf16.msra.mxu0 %v756
      %777 = vmatprep.subr.bf16.mxu0 0
      %778 = vmatpush2.bf16.msra.mxu0 0
      %779 = vmatprep.subr.bf16.mxu0 0
      %780 = vmatpush2.bf16.msra.mxu0 0
      %781 = vmatprep.subr.bf16.mxu0 0
      %782 = vmatpush2.bf16.msra.mxu0 0
      %783 = vmatprep.subr.bf16.mxu0 0
      %784 = vmatpush2.bf16.msra.mxu0 0
      %785 = vmatprep.subr.bf16.mxu0 0
      %786 = vmatpush2.bf16.msra.mxu0 0
      %787 = vmatprep.subr.bf16.mxu0 0
      %788 = vmatpush2.bf16.msra.mxu0 0
      %789 = vmatprep.subr.bf16.mxu0 0
      %790 = vmatpush2.bf16.msra.mxu0 0
      %791 = vmatprep.subr.bf16.mxu0 0
      %792 = vmatpush2.bf16.msra.mxu0 0
      %793 = vmatprep.mubr.bf16.mxu0 0
      %794 = vmatmul.mubr.bf16.gmra.mxu0 %v759
      %v795 = vpop.f32.mrf.mxu0
      %v796 = vadd.f32 0.0, %v795
      %v797 = vpop.f32.mrf.mxu0
      %v798 = vpop.f32.mrf.mxu0
      %v799 = vadd.f32 0.0, %v798
      %v800 = vpop.f32.mrf.mxu0
      %801 = vdwg.mxu0
      %802 = vrot.lane.b32.xlu0 %v556, 96
      %v803 = vpop.permute.xlu0 %802
      %804 = vrot.lane.b32.xlu0 %v556, 32
      %v805 = vpop.permute.xlu0 %804
      %v807 = vsel %vm561, %v803, 0
      %v810 = vsel %vm561, %v805, 0
      %812 = vmatprep.subr.bf16.mxu0 0
      %813 = vmatpush1.bf16.xpose.msra.mxu0 0
      %814 = vmatprep.subr.bf16.mxu0 0
      %815 = vmatpush1.bf16.xpose.msra.mxu0 0
      %816 = vmatprep.subr.bf16.mxu0 0
      %817 = vmatpush1.bf16.xpose.msra.mxu0 0
      %818 = vmatprep.subr.bf16.mxu0 0
      %819 = vmatpush1.bf16.xpose.msra.mxu0 0
      %820 = vmatprep.subr.bf16.mxu0 0
      %821 = vmatpush1.bf16.xpose.msra.mxu0 0
      %822 = vmatprep.subr.bf16.mxu0 0
      %823 = vmatpush1.bf16.xpose.msra.mxu0 0
      %824 = vmatprep.subr.bf16.mxu0 0
      %825 = vmatpush1.bf16.xpose.msra.mxu0 0
      %826 = vmatprep.subr.bf16.mxu0 0
      %827 = vmatpush1.bf16.xpose.msra.mxu0 %v810
      %828 = vmatprep.subr.bf16.mxu0 0
      %829 = vmatpush2.bf16.xpose.msra.mxu0 0
      %830 = vmatprep.subr.bf16.mxu0 0
      %831 = vmatpush2.bf16.xpose.msra.mxu0 0
      %832 = vmatprep.subr.bf16.mxu0 0
      %833 = vmatpush2.bf16.xpose.msra.mxu0 0
      %834 = vmatprep.subr.bf16.mxu0 0
      %835 = vmatpush2.bf16.xpose.msra.mxu0 0
      %836 = vmatprep.subr.bf16.mxu0 0
      %837 = vmatpush2.bf16.xpose.msra.mxu0 0
      %838 = vmatprep.subr.bf16.mxu0 0
      %839 = vmatpush2.bf16.xpose.msra.mxu0 0
      %840 = vmatprep.subr.bf16.mxu0 0
      %841 = vmatpush2.bf16.xpose.msra.mxu0 0
      %842 = vmatprep.subr.bf16.mxu0 0
      %843 = vmatpush2.bf16.xpose.msra.mxu0 0
      %844 = vmatprep.mubr.bf16.mxu0 0
      %845 = vmatmul.mubr.bf16.gmra.mxu0 %v807
      %v846 = vpop.f32.mrf.mxu0
      %v847 = vadd.f32 0.0, %v846
      %v848 = vpop.f32.mrf.mxu0
      %v849 = vpop.f32.mrf.mxu0
      %v850 = vadd.f32 0.0, %v849
      %v851 = vpop.f32.mrf.mxu0
      %852 = vdwg.mxu0
      %v853 = vmul.f32 %v847, 0.25
      %v854 = vmul.f32 %v850, 0.25
      %v855 = vsel %vm561, %v853, -inf
      %856 = vmax.xlane.f32.xlu0 %v855
      %v857 = vpop.xlane.xlu0 %856
      %v858 = vsel %vm561, %v854, -inf
      %859 = vmax.xlane.f32.xlu0 %v858
      %v860 = vpop.xlane.xlu0 %859
      %v861 = vsub.f32 %v853, %v857
      %v862 = vsub.f32 %v854, %v860
      %v863 = vmul.f32 %v861, 1.442695
      %v864 = vpow.pop %v863
      %v865 = vmul.f32 %v862, 1.442695
      %v866 = vpow.pop %v865
      %v867 = vsel %vm561, %v864, 0.0
      %868 = vadd.xlane.f32.xlu0 %v867
      %v869 = vpop.xlane.xlu0 %868
      %v870 = vsel %vm561, %v866, 0.0
      %871 = vadd.xlane.f32.xlu0 %v870
      %v872 = vpop.xlane.xlu0 %871
      %v873 = vrcp.pop %v869
      %v874 = vrcp.pop %v872
      %v875 = vmul.f32 %v864, %v873
      %v876 = vmul.f32 %v866, %v874
      %v877 = vpack.c.bf16 %v876, %v875
      %878 = vrot.lane.b32.xlu0 %v557, 96
      %v879 = vpop.permute.xlu0 %878
      %v882 = vsel %vm561, %v877, 0
      %884 = vmatprep.subr.bf16.mxu0 0
      %885 = vmatpush1.bf16.msra.mxu0 0
      %886 = vmatprep.subr.bf16.mxu0 0
      %887 = vmatpush1.bf16.msra.mxu0 0
      %888 = vmatprep.subr.bf16.mxu0 0
      %889 = vmatpush1.bf16.msra.mxu0 0
      %890 = vmatprep.subr.bf16.mxu0 0
      %891 = vmatpush1.bf16.msra.mxu0 0
      %892 = vmatprep.subr.bf16.mxu0 0
      %893 = vmatpush1.bf16.msra.mxu0 0
      %894 = vmatprep.subr.bf16.mxu0 0
      %895 = vmatpush1.bf16.msra.mxu0 0
      %896 = vmatprep.subr.bf16.mxu0 0
      %897 = vmatpush1.bf16.msra.mxu0 0
      %898 = vmatprep.subr.bf16.mxu0 0
      %899 = vmatpush1.bf16.msra.mxu0 %v879
      %900 = vmatprep.subr.bf16.mxu0 0
      %901 = vmatpush2.bf16.msra.mxu0 0
      %902 = vmatprep.subr.bf16.mxu0 0
      %903 = vmatpush2.bf16.msra.mxu0 0
      %904 = vmatprep.subr.bf16.mxu0 0
      %905 = vmatpush2.bf16.msra.mxu0 0
      %906 = vmatprep.subr.bf16.mxu0 0
      %907 = vmatpush2.bf16.msra.mxu0 0
      %908 = vmatprep.subr.bf16.mxu0 0
      %909 = vmatpush2.bf16.msra.mxu0 0
      %910 = vmatprep.subr.bf16.mxu0 0
      %911 = vmatpush2.bf16.msra.mxu0 0
      %912 = vmatprep.subr.bf16.mxu0 0
      %913 = vmatpush2.bf16.msra.mxu0 0
      %914 = vmatprep.subr.bf16.mxu0 0
      %915 = vmatpush2.bf16.msra.mxu0 0
      %916 = vmatprep.mubr.bf16.mxu0 0
      %917 = vmatmul.mubr.bf16.gmra.mxu0 %v882
      %v918 = vpop.f32.mrf.mxu0
      %v919 = vadd.f32 0.0, %v918
      %v920 = vpop.f32.mrf.mxu0
      %v921 = vpop.f32.mrf.mxu0
      %v922 = vadd.f32 0.0, %v921
      %v923 = vpop.f32.mrf.mxu0
      %924 = vdwg.mxu0
      %925 = vrot.lane.b32.xlu0 %v556, 80
      %v926 = vpop.permute.xlu0 %925
      %927 = vrot.lane.b32.xlu0 %v556, 16
      %v928 = vpop.permute.xlu0 %927
      %v930 = vsel %vm561, %v926, 0
      %v933 = vsel %vm561, %v928, 0
      %935 = vmatprep.subr.bf16.mxu0 0
      %936 = vmatpush1.bf16.xpose.msra.mxu0 0
      %937 = vmatprep.subr.bf16.mxu0 0
      %938 = vmatpush1.bf16.xpose.msra.mxu0 0
      %939 = vmatprep.subr.bf16.mxu0 0
      %940 = vmatpush1.bf16.xpose.msra.mxu0 0
      %941 = vmatprep.subr.bf16.mxu0 0
      %942 = vmatpush1.bf16.xpose.msra.mxu0 0
      %943 = vmatprep.subr.bf16.mxu0 0
      %944 = vmatpush1.bf16.xpose.msra.mxu0 0
      %945 = vmatprep.subr.bf16.mxu0 0
      %946 = vmatpush1.bf16.xpose.msra.mxu0 0
      %947 = vmatprep.subr.bf16.mxu0 0
      %948 = vmatpush1.bf16.xpose.msra.mxu0 0
      %949 = vmatprep.subr.bf16.mxu0 0
      %950 = vmatpush1.bf16.xpose.msra.mxu0 %v933
      %951 = vmatprep.subr.bf16.mxu0 0
      %952 = vmatpush2.bf16.xpose.msra.mxu0 0
      %953 = vmatprep.subr.bf16.mxu0 0
      %954 = vmatpush2.bf16.xpose.msra.mxu0 0
      %955 = vmatprep.subr.bf16.mxu0 0
      %956 = vmatpush2.bf16.xpose.msra.mxu0 0
      %957 = vmatprep.subr.bf16.mxu0 0
      %958 = vmatpush2.bf16.xpose.msra.mxu0 0
      %959 = vmatprep.subr.bf16.mxu0 0
      %960 = vmatpush2.bf16.xpose.msra.mxu0 0
      %961 = vmatprep.subr.bf16.mxu0 0
      %962 = vmatpush2.bf16.xpose.msra.mxu0 0
      %963 = vmatprep.subr.bf16.mxu0 0
      %964 = vmatpush2.bf16.xpose.msra.mxu0 0
      %965 = vmatprep.subr.bf16.mxu0 0
      %966 = vmatpush2.bf16.xpose.msra.mxu0 0
      %967 = vmatprep.mubr.bf16.mxu0 0
      %968 = vmatmul.mubr.bf16.gmra.mxu0 %v930
      %v969 = vpop.f32.mrf.mxu0
      %v970 = vadd.f32 0.0, %v969
      %v971 = vpop.f32.mrf.mxu0
      %v972 = vpop.f32.mrf.mxu0
      %v973 = vadd.f32 0.0, %v972
      %v974 = vpop.f32.mrf.mxu0
      %975 = vdwg.mxu0
      %v976 = vmul.f32 %v970, 0.25
      %v977 = vmul.f32 %v973, 0.25
      %v978 = vsel %vm561, %v976, -inf
      %979 = vmax.xlane.f32.xlu0 %v978
      %v980 = vpop.xlane.xlu0 %979
      %v981 = vsel %vm561, %v977, -inf
      %982 = vmax.xlane.f32.xlu0 %v981
      %v983 = vpop.xlane.xlu0 %982
      %v984 = vsub.f32 %v976, %v980
      %v985 = vsub.f32 %v977, %v983
      %v986 = vmul.f32 %v984, 1.442695
      %v987 = vpow.pop %v986
      %v988 = vmul.f32 %v985, 1.442695
      %v989 = vpow.pop %v988
      %v990 = vsel %vm561, %v987, 0.0
      %991 = vadd.xlane.f32.xlu0 %v990
      %v992 = vpop.xlane.xlu0 %991
      %v993 = vsel %vm561, %v989, 0.0
      %994 = vadd.xlane.f32.xlu0 %v993
      %v995 = vpop.xlane.xlu0 %994
      %v996 = vrcp.pop %v992
      %v997 = vrcp.pop %v995
      %v998 = vmul.f32 %v987, %v996
      %v999 = vmul.f32 %v989, %v997
      %v1000 = vpack.c.bf16 %v999, %v998
      %1001 = vrot.lane.b32.xlu0 %v557, 80
      %v1002 = vpop.permute.xlu0 %1001
      %v1005 = vsel %vm561, %v1000, 0
      %1007 = vmatprep.subr.bf16.mxu0 0
      %1008 = vmatpush1.bf16.msra.mxu0 0
      %1009 = vmatprep.subr.bf16.mxu0 0
      %1010 = vmatpush1.bf16.msra.mxu0 0
      %1011 = vmatprep.subr.bf16.mxu0 0
      %1012 = vmatpush1.bf16.msra.mxu0 0
      %1013 = vmatprep.subr.bf16.mxu0 0
      %1014 = vmatpush1.bf16.msra.mxu0 0
      %1015 = vmatprep.subr.bf16.mxu0 0
      %1016 = vmatpush1.bf16.msra.mxu0 0
      %1017 = vmatprep.subr.bf16.mxu0 0
      %1018 = vmatpush1.bf16.msra.mxu0 0
      %1019 = vmatprep.subr.bf16.mxu0 0
      %1020 = vmatpush1.bf16.msra.mxu0 0
      %1021 = vmatprep.subr.bf16.mxu0 0
      %1022 = vmatpush1.bf16.msra.mxu0 %v1002
      %1023 = vmatprep.subr.bf16.mxu0 0
      %1024 = vmatpush2.bf16.msra.mxu0 0
      %1025 = vmatprep.subr.bf16.mxu0 0
      %1026 = vmatpush2.bf16.msra.mxu0 0
      %1027 = vmatprep.subr.bf16.mxu0 0
      %1028 = vmatpush2.bf16.msra.mxu0 0
      %1029 = vmatprep.subr.bf16.mxu0 0
      %1030 = vmatpush2.bf16.msra.mxu0 0
      %1031 = vmatprep.subr.bf16.mxu0 0
      %1032 = vmatpush2.bf16.msra.mxu0 0
      %1033 = vmatprep.subr.bf16.mxu0 0
      %1034 = vmatpush2.bf16.msra.mxu0 0
      %1035 = vmatprep.subr.bf16.mxu0 0
      %1036 = vmatpush2.bf16.msra.mxu0 0
      %1037 = vmatprep.subr.bf16.mxu0 0
      %1038 = vmatpush2.bf16.msra.mxu0 0
      %1039 = vmatprep.mubr.bf16.mxu0 0
      %1040 = vmatmul.mubr.bf16.gmra.mxu0 %v1005
      %v1041 = vpop.f32.mrf.mxu0
      %v1042 = vadd.f32 0.0, %v1041
      %v1043 = vpop.f32.mrf.mxu0
      %v1044 = vpop.f32.mrf.mxu0
      %v1045 = vadd.f32 0.0, %v1044
      %v1046 = vpop.f32.mrf.mxu0
      %1047 = vdwg.mxu0
      %1050 = vrot.lane.b32.xlu0 %v796, 16
      %v1051 = vpop.permute.xlu0 %1050
      %1052 = vrot.lane.b32.xlu0 %v799, 16
      %v1053 = vpop.permute.xlu0 %1052
      %1058 = vrot.lane.b32.xlu0 %v919, 32
      %v1059 = vpop.permute.xlu0 %1058
      %1060 = vrot.lane.b32.xlu0 %v922, 32
      %v1061 = vpop.permute.xlu0 %1060
      %1066 = vrot.lane.b32.xlu0 %v1042, 48
      %v1067 = vpop.permute.xlu0 %1066
      %1068 = vrot.lane.b32.xlu0 %v1045, 48
      %v1069 = vpop.permute.xlu0 %1068
      %v1072 = vsel %vm561, %v672, %v1051
      %v1073 = vsel %vm561, %v675, %v1053
      %vm1074 = vcmask 261120
      %v1075 = vsel %vm1074, %v1072, %v1059
      %v1076 = vsel %vm1074, %v1073, %v1061
      %vm1077 = vcmask 392192
      %v1078 = vsel %vm1077, %v1075, %v1067
      %v1079 = vsel %vm1077, %v1076, %v1069
      %v1080 = vpack.c.bf16 %v1079, %v1078
      %v1081 = vld [vmem:[%s6] sm:$0xf]
      %v1082 = vld [vmem:[%s6 + $0x4] sm:$0xf]
      %v1083 = vld [vmem:[%s6 + $0x8] sm:$0xf]
      %v1084 = vld [vmem:[%s6 + $0xc] sm:$0xf]
      %v1085 = vld [vmem:[%s6 + $0x10] sm:$0xf]
      %v1086 = vld [vmem:[%s6 + $0x14] sm:$0xf]
      %v1087 = vld [vmem:[%s6 + $0x18] sm:$0xf]
      %v1088 = vld [vmem:[%s6 + $0x1c] sm:$0xf]
      %v1089 = vld [vmem:[%s7] sm:$0x1]
      %v1091 = vlaneseq
      %v1092 = vshrl.u32 %v1091, 7
      %v1093 = vsub.s32 0, %v1092
      %v1094 = vrot.slane %v1089, %v1093
      %v1104 = vunpack.c.l.b16 %v1081
      %v1105 = vunpack.c.l.b16 %v1082
      %v1106 = vunpack.c.l.b16 %v1083
      %v1107 = vunpack.c.l.b16 %v1084
      %v1108 = vunpack.c.l.b16 %v1085
      %v1109 = vunpack.c.l.b16 %v1086
      %v1110 = vunpack.c.l.b16 %v1087
      %v1111 = vunpack.c.l.b16 %v1088
      %v1112 = vpack.c.b16 %v1105, %v1104
      %v1113 = vpack.c.b16 %v1107, %v1106
      %v1114 = vpack.c.b16 %v1109, %v1108
      %v1115 = vpack.c.b16 %v1111, %v1110
      %v1121 = vsel %vm427, %v1080, 0
      %1123 = vmatprep.subr.bf16.mxu0 0
      %1124 = vmatpush1.bf16.msra.mxu0 0
      %1125 = vmatprep.subr.bf16.mxu0 0
      %1126 = vmatpush1.bf16.msra.mxu0 0
      %1127 = vmatprep.subr.bf16.mxu0 0
      %1128 = vmatpush1.bf16.msra.mxu0 0
      %1129 = vmatprep.subr.bf16.mxu0 0
      %1130 = vmatpush1.bf16.msra.mxu0 0
      %1131 = vmatprep.subr.bf16.mxu0 0
      %1132 = vmatpush1.bf16.msra.mxu0 %v1115
      %1133 = vmatprep.subr.bf16.mxu0 0
      %1134 = vmatpush1.bf16.msra.mxu0 %v1114
      %1135 = vmatprep.subr.bf16.mxu0 0
      %1136 = vmatpush1.bf16.msra.mxu0 %v1113
      %1137 = vmatprep.subr.bf16.mxu0 0
      %1138 = vmatpush1.bf16.msra.mxu0 %v1112
      %1139 = vmatprep.subr.bf16.mxu0 0
      %1140 = vmatpush2.bf16.msra.mxu0 0
      %1141 = vmatprep.subr.bf16.mxu0 0
      %1142 = vmatpush2.bf16.msra.mxu0 0
      %1143 = vmatprep.subr.bf16.mxu0 0
      %1144 = vmatpush2.bf16.msra.mxu0 0
      %1145 = vmatprep.subr.bf16.mxu0 0
      %1146 = vmatpush2.bf16.msra.mxu0 0
      %1147 = vmatprep.subr.bf16.mxu0 0
      %1148 = vmatpush2.bf16.msra.mxu0 0
      %1149 = vmatprep.subr.bf16.mxu0 0
      %1150 = vmatpush2.bf16.msra.mxu0 0
      %1151 = vmatprep.subr.bf16.mxu0 0
      %1152 = vmatpush2.bf16.msra.mxu0 0
      %1153 = vmatprep.subr.bf16.mxu0 0
      %1154 = vmatpush2.bf16.msra.mxu0 0
      %1155 = vmatprep.mubr.bf16.mxu0 0
      %1156 = vmatmul.mubr.bf16.gmra.mxu0 %v1121
      %v1157 = vpop.f32.mrf.mxu0
      %v1158 = vadd.f32 %v1094, %v1157
      %v1159 = vpop.f32.mrf.mxu0
      %v1160 = vpop.f32.mrf.mxu0
      %v1161 = vadd.f32 %v1094, %v1160
      %v1162 = vpop.f32.mrf.mxu0
      %1163 = vdwg.mxu0
      %v1164 = vadd.f32 %v381, %v1158
      %v1165 = vadd.f32 %v382, %v1161
      %v1166 = vld [vmem:[%s8] sm:$0x1]
      %v1167 = vld [vmem:[%s9] sm:$0x1]
      %v1168 = vsel %vm427, %v1164, 0.0
      %1169 = vadd.xlane.f32.xlu0 %v1168
      %v1170 = vpop.xlane.xlu0 %1169
      %v1171 = vsel %vm427, %v1165, 0.0
      %1172 = vadd.xlane.f32.xlu0 %v1171
      %v1173 = vpop.xlane.xlu0 %1172
      %v1174 = vrcp.pop 64.0
      %v1175 = vmul.f32 %v1170, %v1174
      %v1176 = vmul.f32 %v1173, %v1174
      %v1177 = vsub.f32 %v1164, %v1175
      %v1178 = vsub.f32 %v1165, %v1176
      %v1179 = vmul.f32 %v1177, %v1177
      %v1180 = vmul.f32 %v1178, %v1178
      %v1181 = vsel %vm427, %v1179, 0.0
      %1182 = vadd.xlane.f32.xlu0 %v1181
      %v1183 = vpop.xlane.xlu0 %1182
      %v1184 = vsel %vm427, %v1180, 0.0
      %1185 = vadd.xlane.f32.xlu0 %v1184
      %v1186 = vpop.xlane.xlu0 %1185
      %v1187 = vmul.f32 %v1183, %v1174
      %v1188 = vmul.f32 %v1186, %v1174
      %v1189 = vadd.f32 %v1187, 1e-05
      %v1190 = vadd.f32 %v1188, 1e-05
      %v1191 = vrsqrt.pop %v1189
      %v1192 = vrsqrt.pop %v1190
      %v1193 = vmul.f32 %v1177, %v1191
      %v1194 = vmul.f32 %v1178, %v1192
      %v1196 = vlaneseq
      %v1197 = vshrl.u32 %v1196, 7
      %v1198 = vsub.s32 0, %v1197
      %v1199 = vrot.slane %v1166, %v1198
      %v1201 = vmul.f32 %v1193, %v1199
      %v1202 = vmul.f32 %v1194, %v1199
      %v1204 = vlaneseq
      %v1205 = vshrl.u32 %v1204, 7
      %v1206 = vsub.s32 0, %v1205
      %v1207 = vrot.slane %v1167, %v1206
      %v1209 = vadd.f32 %v1201, %v1207
      %v1210 = vadd.f32 %v1202, %v1207
      %1211 = vst.msk [vmem:[%s379] sm:$0xff] %vm427, %v1209
      %1212 = vst.msk [vmem:[%s379 + $0x8] sm:$0xff] %vm427, %v1210
      %p1213 = scmp.lt.s32.totalorder %s21, 1
      %s1214 = scalar_select %p1213, %s21, 1
      %s1215 = smul.addr %s1214, 2
      %s1216 = smul.addr %s1215, 8
      %s1217 = scalar_lea.vmem %s10, %s1216
      // Predicated region
      $region61: #{dino_forward.26} parent=59 // pred_check
        %p1218 = pneg %p259
      $region62: #{dino_forward.26} parent=59 // pred_check_branch
        %1220 = sbr.rel (%p1218) target = $region64
      $region63: #{dino_forward.26} parent=59 // pred_region
        _
      $region64: #{dino_forward.26} parent=59 // pred_fallthru
        _
    $region60: #{dino_forward.26} parent=5 // pred_fallthru
      _
    %p1221 = scmp.le.s32.totalorder 2, %s16
    // Predicated region
    $region65: #{dino_forward.26} parent=5 // pred_check
      %p1222 = pneg %p1221
    $region66: #{dino_forward.26} parent=5 // pred_check_branch
      %1224 = sbr.rel (%p1222) target = $region68
    $region67: #{dino_forward.26} parent=5 // pred_region
      %s1225 = ssub.s32 %s16, 2
      // Predicated region
      $region69: #{dino_forward.26} parent=67 // pred_check
        %p1226 = pneg %p265
      $region70: #{dino_forward.26} parent=67 // pred_check_branch
        %1228 = sbr.rel (%p1226) target = $region72
      $region71: #{dino_forward.26} parent=67 // pred_region
        %p1229 = scmp.lt.s32.totalorder %s22, 1
        %s1230 = scalar_select %p1229, %s22, 1
        %s1231 = smul.addr %s1230, 2
        %s1232 = smul.addr %s1231, 8
        %s1233 = scalar_lea.vmem %s10, %s1232
      $region72: #{dino_forward.26} parent=67 // pred_fallthru
        _
    $region68: #{dino_forward.26} parent=5 // pred_fallthru
      _
  $region6: #{dino_forward.26} parent=0 // loop_footer
    %s20 = sadd.s32 1, %s16
  $region7: #{dino_forward.26} parent=0 // loop_footer_branch
    %15 = sbr.rel target = $region3
  $region8: #{dino_forward.26} parent=0 // loop_exit
    _

// kernel: dino_forward.27
$region0: #{dino_forward.27}
  #allocation0 [shape = 'u32[]', space=smem, size = 0x4, offset = 0x4, fixed_abs, tag = 'smem constant byte address 0x4 - core index']
  #allocation1 [shape = 'u32[144,128]{1,0:T(1,128)}', space=vmem, size = 0x12000, scoped, tag = 'internal scratch']
  %s0 = inlined_call_operand.vmem [shape: f32[2,16,64], index: 0, kind: input, shape index: {}]
  %s1 = inlined_call_operand.vmem [shape: f32[2,16,64], index: 1, kind: input, shape index: {}]
  %s2 = inlined_call_operand.vmem [shape: f32[2,20,64], index: 2, kind: input, shape index: {}]
  %s3 = inlined_call_operand.vmem [shape: f32[2,20,64], index: 3, kind: input, shape index: {}]
  %s4 = inlined_call_operand.vmem [shape: bf16[64,64], index: 4, kind: input, shape index: {}]
  %s5 = inlined_call_operand.vmem [shape: f32[1,64], index: 5, kind: input, shape index: {}]
  %s6 = inlined_call_operand.vmem [shape: bf16[64,64], index: 6, kind: input, shape index: {}]
  %s7 = inlined_call_operand.vmem [shape: f32[1,64], index: 7, kind: input, shape index: {}]
  %s8 = inlined_call_operand.vmem [shape: bf16[64,64], index: 8, kind: input, shape index: {}]
  %s9 = inlined_call_operand.vmem [shape: f32[1,64], index: 9, kind: input, shape index: {}]
  %s10 = inlined_call_operand.vmem [shape: bf16[64,64], index: 10, kind: input, shape index: {}]
  %s11 = inlined_call_operand.vmem [shape: f32[1,64], index: 11, kind: input, shape index: {}]
  %s12 = inlined_call_operand.vmem [shape: f32[1,64], index: 12, kind: input, shape index: {}]
  %s13 = inlined_call_operand.vmem [shape: f32[1,64], index: 13, kind: input, shape index: {}]
  %s14 = inlined_call_operand.vmem [shape: f32[2,16,64], index: 14, kind: output, shape index: {}]
  %s15 = sld [smem:[#allocation0]]
  $region89: #{dino_forward.27} parent=0
    _
  %s17 = ssub.s32 1, %s15
  %s18 = scalar_select 0, %s17, %s15
  loop: start=0, step=1, limit=4
  $region2: #{dino_forward.27} parent=0 // loop_pre_header
    _
  $region3: #{dino_forward.27} parent=0 // loop_header
    %s20 = sphi 0, %s24
    %p21 = scmp.ge.s32.totalorder %s20, 4
    %s30 = sphi 0, %s32
    %s33 = sphi 0, %s30
    %s34 = sphi 0, %s33
    %s50 = sphi 0, %s34
    %s56 = sphi 0, %s58
    %s59 = sphi 0, %s56
    %s60 = sphi 0, %s59
    %s76 = sphi 0, %s60
    %s82 = sphi 0, %s84
    %s85 = sphi 0, %s82
    %s86 = sphi 0, %s85
    %s102 = sphi 0, %s86
    %s108 = sphi 0, %s110
    %s111 = sphi 0, %s108
    %s112 = sphi 0, %s111
    %s128 = sphi 0, %s112
    %s132 = sphi 0, %s132
    %s134 = sphi 0, %s132
    %s135 = sphi 0, %s134
    %s149 = sphi 0, %s135
    %s153 = sphi 0, %s153
    %s155 = sphi 0, %s153
    %s156 = sphi 0, %s155
    %s170 = sphi 0, %s156
    %s174 = sphi 0, %s174
    %s176 = sphi 0, %s174
    %s177 = sphi 0, %s176
    %s191 = sphi 0, %s177
    %s195 = sphi 0, %s195
    %s197 = sphi 0, %s195
    %s198 = sphi 0, %s197
    %s212 = sphi 0, %s198
    %s216 = sphi 0, %s216
    %s218 = sphi 0, %s216
    %s219 = sphi 0, %s218
    %s233 = sphi 0, %s219
    %s237 = sphi 0, %s237
    %s239 = sphi 0, %s237
    %s240 = sphi 0, %s239
    %s254 = sphi 0, %s240
    %s258 = sphi 0, %s258
    %s260 = sphi 0, %s258
    %s261 = sphi 0, %s260
    %s275 = sphi 0, %s261
    %s279 = sphi 0, %s279
    %s281 = sphi 0, %s279
    %s282 = sphi 0, %s281
    %s296 = sphi 0, %s282
    %s300 = sphi 0, %s300
    %s302 = sphi 0, %s300
    %s303 = sphi 0, %s302
    %s317 = sphi 0, %s303
    %s321 = sphi 0, %s321
    %s323 = sphi 0, %s321
    %s324 = sphi 0, %s323
    %s338 = sphi 0, %s324
    %s344 = sphi 0, %s346
    %s347 = sphi 0, %s344
    %s348 = sphi 0, %s347
    %s364 = sphi 0, %s348
  $region4: #{dino_forward.27} parent=0 // loop_header_branch
    %23 = sbr.rel (%p21) target = $region8
  $region5: #{dino_forward.27} parent=0 // loop_body
    %s25 = ssub.s32 %s20, 1
    %s26 = ssub.s32 %s20, 2
    %s27 = sadd.s32 %s20, 1
    %s28 = ssub.s32 %s20, %s27
    %p29 = scmp.eq.s32.totalorder %s28, 0
    %s31 = sadd.s32 %s30, 1
    %s32 = scalar_select %p29, %s30, %s31
    %p35 = pneg %p29
    %p36 = scmp.eq.s32.totalorder %s20, 1
    %p37 = por %p35, %p36
    %p38 = scmp.ne.s32.totalorder %s30, %s33
    %p39 = scmp.eq.s32.totalorder %s20, 0
    %p40 = por %p38, %p39
    %p41 = scmp.ne.s32.totalorder %s30, %s33
    %p42 = scmp.eq.s32.totalorder %s25, 1
    %p43 = por %p41, %p42
    %p44 = scmp.ne.s32.totalorder %s33, %s34
    %p45 = scmp.eq.s32.totalorder %s25, 0
    %p46 = por %p44, %p45
    %p47 = scmp.ne.s32.totalorder %s33, %s34
    %p48 = scmp.eq.s32.totalorder %s26, 1
    %p49 = por %p47, %p48
    %p51 = scmp.ne.s32.totalorder %s34, %s50
    %p52 = scmp.eq.s32.totalorder %s26, 0
    %p53 = por %p51, %p52
    %s54 = ssub.s32 %s20, %s27
    %p55 = scmp.eq.s32.totalorder %s54, 0
    %s57 = sadd.s32 %s56, 1
    %s58 = scalar_select %p55, %s56, %s57
    %p61 = pneg %p55
    %p62 = scmp.eq.s32.totalorder %s20, 1
    %p63 = por %p61, %p62
    %p64 = scmp.ne.s32.totalorder %s56, %s59
    %p65 = scmp.eq.s32.totalorder %s20, 0
    %p66 = por %p64, %p65
    %p67 = scmp.ne.s32.totalorder %s56, %s59
    %p68 = scmp.eq.s32.totalorder %s25, 1
    %p69 = por %p67, %p68
    %p70 = scmp.ne.s32.totalorder %s59, %s60
    %p71 = scmp.eq.s32.totalorder %s25, 0
    %p72 = por %p70, %p71
    %p73 = scmp.ne.s32.totalorder %s59, %s60
    %p74 = scmp.eq.s32.totalorder %s26, 1
    %p75 = por %p73, %p74
    %p77 = scmp.ne.s32.totalorder %s60, %s76
    %p78 = scmp.eq.s32.totalorder %s26, 0
    %p79 = por %p77, %p78
    %s80 = ssub.s32 %s20, %s27
    %p81 = scmp.eq.s32.totalorder %s80, 0
    %s83 = sadd.s32 %s82, 1
    %s84 = scalar_select %p81, %s82, %s83
    %p87 = pneg %p81
    %p88 = scmp.eq.s32.totalorder %s20, 1
    %p89 = por %p87, %p88
    %p90 = scmp.ne.s32.totalorder %s82, %s85
    %p91 = scmp.eq.s32.totalorder %s20, 0
    %p92 = por %p90, %p91
    %p93 = scmp.ne.s32.totalorder %s82, %s85
    %p94 = scmp.eq.s32.totalorder %s25, 1
    %p95 = por %p93, %p94
    %p96 = scmp.ne.s32.totalorder %s85, %s86
    %p97 = scmp.eq.s32.totalorder %s25, 0
    %p98 = por %p96, %p97
    %p99 = scmp.ne.s32.totalorder %s85, %s86
    %p100 = scmp.eq.s32.totalorder %s26, 1
    %p101 = por %p99, %p100
    %p103 = scmp.ne.s32.totalorder %s86, %s102
    %p104 = scmp.eq.s32.totalorder %s26, 0
    %p105 = por %p103, %p104
    %s106 = ssub.s32 %s20, %s27
    %p107 = scmp.eq.s32.totalorder %s106, 0
    %s109 = sadd.s32 %s108, 1
    %s110 = scalar_select %p107, %s108, %s109
    %p113 = pneg %p107
    %p114 = scmp.eq.s32.totalorder %s20, 1
    %p115 = por %p113, %p114
    %p116 = scmp.ne.s32.totalorder %s108, %s111
    %p117 = scmp.eq.s32.totalorder %s20, 0
    %p118 = por %p116, %p117
    %p119 = scmp.ne.s32.totalorder %s108, %s111
    %p120 = scmp.eq.s32.totalorder %s25, 1
    %p121 = por %p119, %p120
    %p122 = scmp.ne.s32.totalorder %s111, %s112
    %p123 = scmp.eq.s32.totalorder %s25, 0
    %p124 = por %p122, %p123
    %p125 = scmp.ne.s32.totalorder %s111, %s112
    %p126 = scmp.eq.s32.totalorder %s26, 1
    %p127 = por %p125, %p126
    %p129 = scmp.ne.s32.totalorder %s112, %s128
    %p130 = scmp.eq.s32.totalorder %s26, 0
    %p131 = por %p129, %p130
    %s133 = sadd.s32 %s132, 1
    %p136 = scmp.eq.s32.totalorder %s20, 1
    %p137 = scmp.ne.s32.totalorder %s132, %s134
    %p138 = scmp.eq.s32.totalorder %s20, 0
    %p139 = por %p137, %p138
    %p140 = scmp.ne.s32.totalorder %s132, %s134
    %p141 = scmp.eq.s32.totalorder %s25, 1
    %p142 = por %p140, %p141
    %p143 = scmp.ne.s32.totalorder %s134, %s135
    %p144 = scmp.eq.s32.totalorder %s25, 0
    %p145 = por %p143, %p144
    %p146 = scmp.ne.s32.totalorder %s134, %s135
    %p147 = scmp.eq.s32.totalorder %s26, 1
    %p148 = por %p146, %p147
    %p150 = scmp.ne.s32.totalorder %s135, %s149
    %p151 = scmp.eq.s32.totalorder %s26, 0
    %p152 = por %p150, %p151
    %s154 = sadd.s32 %s153, 1
    %p157 = scmp.eq.s32.totalorder %s20, 1
    %p158 = scmp.ne.s32.totalorder %s153, %s155
    %p159 = scmp.eq.s32.totalorder %s20, 0
    %p160 = por %p158, %p159
    %p161 = scmp.ne.s32.totalorder %s153, %s155
    %p162 = scmp.eq.s32.totalorder %s25, 1
    %p163 = por %p161, %p162
    %p164 = scmp.ne.s32.totalorder %s155, %s156
    %p165 = scmp.eq.s32.totalorder %s25, 0
    %p166 = por %p164, %p165
    %p167 = scmp.ne.s32.totalorder %s155, %s156
    %p168 = scmp.eq.s32.totalorder %s26, 1
    %p169 = por %p167, %p168
    %p171 = scmp.ne.s32.totalorder %s156, %s170
    %p172 = scmp.eq.s32.totalorder %s26, 0
    %p173 = por %p171, %p172
    %s175 = sadd.s32 %s174, 1
    %p178 = scmp.eq.s32.totalorder %s20, 1
    %p179 = scmp.ne.s32.totalorder %s174, %s176
    %p180 = scmp.eq.s32.totalorder %s20, 0
    %p181 = por %p179, %p180
    %p182 = scmp.ne.s32.totalorder %s174, %s176
    %p183 = scmp.eq.s32.totalorder %s25, 1
    %p184 = por %p182, %p183
    %p185 = scmp.ne.s32.totalorder %s176, %s177
    %p186 = scmp.eq.s32.totalorder %s25, 0
    %p187 = por %p185, %p186
    %p188 = scmp.ne.s32.totalorder %s176, %s177
    %p189 = scmp.eq.s32.totalorder %s26, 1
    %p190 = por %p188, %p189
    %p192 = scmp.ne.s32.totalorder %s177, %s191
    %p193 = scmp.eq.s32.totalorder %s26, 0
    %p194 = por %p192, %p193
    %s196 = sadd.s32 %s195, 1
    %p199 = scmp.eq.s32.totalorder %s20, 1
    %p200 = scmp.ne.s32.totalorder %s195, %s197
    %p201 = scmp.eq.s32.totalorder %s20, 0
    %p202 = por %p200, %p201
    %p203 = scmp.ne.s32.totalorder %s195, %s197
    %p204 = scmp.eq.s32.totalorder %s25, 1
    %p205 = por %p203, %p204
    %p206 = scmp.ne.s32.totalorder %s197, %s198
    %p207 = scmp.eq.s32.totalorder %s25, 0
    %p208 = por %p206, %p207
    %p209 = scmp.ne.s32.totalorder %s197, %s198
    %p210 = scmp.eq.s32.totalorder %s26, 1
    %p211 = por %p209, %p210
    %p213 = scmp.ne.s32.totalorder %s198, %s212
    %p214 = scmp.eq.s32.totalorder %s26, 0
    %p215 = por %p213, %p214
    %s217 = sadd.s32 %s216, 1
    %p220 = scmp.eq.s32.totalorder %s20, 1
    %p221 = scmp.ne.s32.totalorder %s216, %s218
    %p222 = scmp.eq.s32.totalorder %s20, 0
    %p223 = por %p221, %p222
    %p224 = scmp.ne.s32.totalorder %s216, %s218
    %p225 = scmp.eq.s32.totalorder %s25, 1
    %p226 = por %p224, %p225
    %p227 = scmp.ne.s32.totalorder %s218, %s219
    %p228 = scmp.eq.s32.totalorder %s25, 0
    %p229 = por %p227, %p228
    %p230 = scmp.ne.s32.totalorder %s218, %s219
    %p231 = scmp.eq.s32.totalorder %s26, 1
    %p232 = por %p230, %p231
    %p234 = scmp.ne.s32.totalorder %s219, %s233
    %p235 = scmp.eq.s32.totalorder %s26, 0
    %p236 = por %p234, %p235
    %s238 = sadd.s32 %s237, 1
    %p241 = scmp.eq.s32.totalorder %s20, 1
    %p242 = scmp.ne.s32.totalorder %s237, %s239
    %p243 = scmp.eq.s32.totalorder %s20, 0
    %p244 = por %p242, %p243
    %p245 = scmp.ne.s32.totalorder %s237, %s239
    %p246 = scmp.eq.s32.totalorder %s25, 1
    %p247 = por %p245, %p246
    %p248 = scmp.ne.s32.totalorder %s239, %s240
    %p249 = scmp.eq.s32.totalorder %s25, 0
    %p250 = por %p248, %p249
    %p251 = scmp.ne.s32.totalorder %s239, %s240
    %p252 = scmp.eq.s32.totalorder %s26, 1
    %p253 = por %p251, %p252
    %p255 = scmp.ne.s32.totalorder %s240, %s254
    %p256 = scmp.eq.s32.totalorder %s26, 0
    %p257 = por %p255, %p256
    %s259 = sadd.s32 %s258, 1
    %p262 = scmp.eq.s32.totalorder %s20, 1
    %p263 = scmp.ne.s32.totalorder %s258, %s260
    %p264 = scmp.eq.s32.totalorder %s20, 0
    %p265 = por %p263, %p264
    %p266 = scmp.ne.s32.totalorder %s258, %s260
    %p267 = scmp.eq.s32.totalorder %s25, 1
    %p268 = por %p266, %p267
    %p269 = scmp.ne.s32.totalorder %s260, %s261
    %p270 = scmp.eq.s32.totalorder %s25, 0
    %p271 = por %p269, %p270
    %p272 = scmp.ne.s32.totalorder %s260, %s261
    %p273 = scmp.eq.s32.totalorder %s26, 1
    %p274 = por %p272, %p273
    %p276 = scmp.ne.s32.totalorder %s261, %s275
    %p277 = scmp.eq.s32.totalorder %s26, 0
    %p278 = por %p276, %p277
    %s280 = sadd.s32 %s279, 1
    %p283 = scmp.eq.s32.totalorder %s20, 1
    %p284 = scmp.ne.s32.totalorder %s279, %s281
    %p285 = scmp.eq.s32.totalorder %s20, 0
    %p286 = por %p284, %p285
    %p287 = scmp.ne.s32.totalorder %s279, %s281
    %p288 = scmp.eq.s32.totalorder %s25, 1
    %p289 = por %p287, %p288
    %p290 = scmp.ne.s32.totalorder %s281, %s282
    %p291 = scmp.eq.s32.totalorder %s25, 0
    %p292 = por %p290, %p291
    %p293 = scmp.ne.s32.totalorder %s281, %s282
    %p294 = scmp.eq.s32.totalorder %s26, 1
    %p295 = por %p293, %p294
    %p297 = scmp.ne.s32.totalorder %s282, %s296
    %p298 = scmp.eq.s32.totalorder %s26, 0
    %p299 = por %p297, %p298
    %s301 = sadd.s32 %s300, 1
    %p304 = scmp.eq.s32.totalorder %s20, 1
    %p305 = scmp.ne.s32.totalorder %s300, %s302
    %p306 = scmp.eq.s32.totalorder %s20, 0
    %p307 = por %p305, %p306
    %p308 = scmp.ne.s32.totalorder %s300, %s302
    %p309 = scmp.eq.s32.totalorder %s25, 1
    %p310 = por %p308, %p309
    %p311 = scmp.ne.s32.totalorder %s302, %s303
    %p312 = scmp.eq.s32.totalorder %s25, 0
    %p313 = por %p311, %p312
    %p314 = scmp.ne.s32.totalorder %s302, %s303
    %p315 = scmp.eq.s32.totalorder %s26, 1
    %p316 = por %p314, %p315
    %p318 = scmp.ne.s32.totalorder %s303, %s317
    %p319 = scmp.eq.s32.totalorder %s26, 0
    %p320 = por %p318, %p319
    %s322 = sadd.s32 %s321, 1
    %p325 = scmp.eq.s32.totalorder %s20, 1
    %p326 = scmp.ne.s32.totalorder %s321, %s323
    %p327 = scmp.eq.s32.totalorder %s20, 0
    %p328 = por %p326, %p327
    %p329 = scmp.ne.s32.totalorder %s321, %s323
    %p330 = scmp.eq.s32.totalorder %s25, 1
    %p331 = por %p329, %p330
    %p332 = scmp.ne.s32.totalorder %s323, %s324
    %p333 = scmp.eq.s32.totalorder %s25, 0
    %p334 = por %p332, %p333
    %p335 = scmp.ne.s32.totalorder %s323, %s324
    %p336 = scmp.eq.s32.totalorder %s26, 1
    %p337 = por %p335, %p336
    %p339 = scmp.ne.s32.totalorder %s324, %s338
    %p340 = scmp.eq.s32.totalorder %s26, 0
    %p341 = por %p339, %p340
    %s342 = ssub.s32 %s20, %s27
    %p343 = scmp.eq.s32.totalorder %s342, 0
    %s345 = sadd.s32 %s344, 1
    %s346 = scalar_select %p343, %s344, %s345
    %p349 = pneg %p343
    %p350 = scmp.eq.s32.totalorder %s20, 1
    %p351 = por %p349, %p350
    %p352 = scmp.ne.s32.totalorder %s344, %s347
    %p353 = scmp.eq.s32.totalorder %s20, 0
    %p354 = por %p352, %p353
    %p355 = scmp.ne.s32.totalorder %s344, %s347
    %p356 = scmp.eq.s32.totalorder %s25, 1
    %p357 = por %p355, %p356
    %p358 = scmp.ne.s32.totalorder %s347, %s348
    %p359 = scmp.eq.s32.totalorder %s25, 0
    %p360 = por %p358, %p359
    %p361 = scmp.ne.s32.totalorder %s347, %s348
    %p362 = scmp.eq.s32.totalorder %s26, 1
    %p363 = por %p361, %p362
    %p365 = scmp.ne.s32.totalorder %s348, %s364
    %p366 = scmp.eq.s32.totalorder %s26, 0
    %p367 = por %p365, %p366
    %p368 = scmp.le.s32.totalorder 1, %s20
    %p369 = scmp.lt.s32.totalorder %s20, 3
    %p370 = pnand %p368, %p369
    %p371 = pneg %p370
    // Predicated region
    $region9: #{dino_forward.27} parent=5 // pred_check
      _
    $region10: #{dino_forward.27} parent=5 // pred_check_branch
      %373 = sbr.rel (%p370) target = $region12
    $region11: #{dino_forward.27} parent=5 // pred_region
      %s374 = ssub.s32 %s20, 1
      // Predicated region
      $region13: #{dino_forward.27} parent=11 // pred_check
        %p375 = pneg %p145
      $region14: #{dino_forward.27} parent=11 // pred_check_branch
        %377 = sbr.rel (%p375) target = $region16
      $region15: #{dino_forward.27} parent=11 // pred_region
        _
      $region16: #{dino_forward.27} parent=11 // pred_fallthru
        _
      // Predicated region
      $region17: #{dino_forward.27} parent=11 // pred_check
        %p378 = pneg %p166
      $region18: #{dino_forward.27} parent=11 // pred_check_branch
        %380 = sbr.rel (%p378) target = $region20
      $region19: #{dino_forward.27} parent=11 // pred_region
        _
      $region20: #{dino_forward.27} parent=11 // pred_fallthru
        _
      // Predicated region
      $region21: #{dino_forward.27} parent=11 // pred_check
        %p381 = pneg %p187
      $region22: #{dino_forward.27} parent=11 // pred_check_branch
        %383 = sbr.rel (%p381) target = $region24
      $region23: #{dino_forward.27} parent=11 // pred_region
        _
      $region24: #{dino_forward.27} parent=11 // pred_fallthru
        _
      // Predicated region
      $region25: #{dino_forward.27} parent=11 // pred_check
        %p384 = pneg %p208
      $region26: #{dino_forward.27} parent=11 // pred_check_branch
        %386 = sbr.rel (%p384) target = $region28
      $region27: #{dino_forward.27} parent=11 // pred_region
        _
      $region28: #{dino_forward.27} parent=11 // pred_fallthru
        _
      // Predicated region
      $region29: #{dino_forward.27} parent=11 // pred_check
        %p387 = pneg %p229
      $region30: #{dino_forward.27} parent=11 // pred_check_branch
        %389 = sbr.rel (%p387) target = $region32
      $region31: #{dino_forward.27} parent=11 // pred_region
        _
      $region32: #{dino_forward.27} parent=11 // pred_fallthru
        _
      // Predicated region
      $region33: #{dino_forward.27} parent=11 // pred_check
        %p390 = pneg %p250
      $region34: #{dino_forward.27} parent=11 // pred_check_branch
        %392 = sbr.rel (%p390) target = $region36
      $region35: #{dino_forward.27} parent=11 // pred_region
        _
      $region36: #{dino_forward.27} parent=11 // pred_fallthru
        _
      // Predicated region
      $region37: #{dino_forward.27} parent=11 // pred_check
        %p393 = pneg %p271
      $region38: #{dino_forward.27} parent=11 // pred_check_branch
        %395 = sbr.rel (%p393) target = $region40
      $region39: #{dino_forward.27} parent=11 // pred_region
        _
      $region40: #{dino_forward.27} parent=11 // pred_fallthru
        _
      // Predicated region
      $region41: #{dino_forward.27} parent=11 // pred_check
        %p396 = pneg %p292
      $region42: #{dino_forward.27} parent=11 // pred_check_branch
        %398 = sbr.rel (%p396) target = $region44
      $region43: #{dino_forward.27} parent=11 // pred_region
        _
      $region44: #{dino_forward.27} parent=11 // pred_fallthru
        _
      // Predicated region
      $region45: #{dino_forward.27} parent=11 // pred_check
        %p399 = pneg %p313
      $region46: #{dino_forward.27} parent=11 // pred_check_branch
        %401 = sbr.rel (%p399) target = $region48
      $region47: #{dino_forward.27} parent=11 // pred_region
        _
      $region48: #{dino_forward.27} parent=11 // pred_fallthru
        _
      // Predicated region
      $region49: #{dino_forward.27} parent=11 // pred_check
        %p402 = pneg %p334
      $region50: #{dino_forward.27} parent=11 // pred_check_branch
        %404 = sbr.rel (%p402) target = $region52
      $region51: #{dino_forward.27} parent=11 // pred_region
        _
      $region52: #{dino_forward.27} parent=11 // pred_fallthru
        _
    $region12: #{dino_forward.27} parent=5 // pred_fallthru
      _
    %p405 = scmp.lt.s32.totalorder %s20, 2
    // Predicated region
    $region53: #{dino_forward.27} parent=5 // pred_check
      %p406 = pneg %p405
    $region54: #{dino_forward.27} parent=5 // pred_check_branch
      %408 = sbr.rel (%p406) target = $region56
    $region55: #{dino_forward.27} parent=5 // pred_region
      // Predicated region
      $region57: #{dino_forward.27} parent=55 // pred_check
        %p409 = pneg %p40
      $region58: #{dino_forward.27} parent=55 // pred_check_branch
        %411 = sbr.rel (%p409) target = $region60
      $region59: #{dino_forward.27} parent=55 // pred_region
        %p412 = scmp.lt.s32.totalorder %s20, 1
        %s413 = scalar_select %p412, %s20, 1
        %s414 = smul.addr %s413, 2
        %s415 = smul.addr %s414, 8
        %s416 = scalar_lea.vmem %s0, %s415
      $region60: #{dino_forward.27} parent=55 // pred_fallthru
        _
      // Predicated region
      $region61: #{dino_forward.27} parent=55 // pred_check
        %p417 = pneg %p66
      $region62: #{dino_forward.27} parent=55 // pred_check_branch
        %419 = sbr.rel (%p417) target = $region64
      $region63: #{dino_forward.27} parent=55 // pred_region
        %p420 = scmp.lt.s32.totalorder %s20, 1
        %s421 = scalar_select %p420, %s20, 1
        %s422 = smul.addr %s421, 2
        %s423 = smul.addr %s422, 8
        %s424 = scalar_lea.vmem %s1, %s423
      $region64: #{dino_forward.27} parent=55 // pred_fallthru
        _
      // Predicated region
      $region65: #{dino_forward.27} parent=55 // pred_check
        %p425 = pneg %p92
      $region66: #{dino_forward.27} parent=55 // pred_check_branch
        %427 = sbr.rel (%p425) target = $region68
      $region67: #{dino_forward.27} parent=55 // pred_region
        %p428 = scmp.lt.s32.totalorder %s20, 1
        %s429 = scalar_select %p428, %s20, 1
        %s430 = smul.addr %s429, 3
        %s431 = smul.addr %s430, 8
        %s432 = scalar_lea.vmem %s2, %s431
      $region68: #{dino_forward.27} parent=55 // pred_fallthru
        _
      // Predicated region
      $region69: #{dino_forward.27} parent=55 // pred_check
        %p433 = pneg %p118
      $region70: #{dino_forward.27} parent=55 // pred_check_branch
        %435 = sbr.rel (%p433) target = $region72
      $region71: #{dino_forward.27} parent=55 // pred_region
        %p436 = scmp.lt.s32.totalorder %s20, 1
        %s437 = scalar_select %p436, %s20, 1
        %s438 = smul.addr %s437, 3
        %s439 = smul.addr %s438, 8
        %s440 = scalar_lea.vmem %s3, %s439
      $region72: #{dino_forward.27} parent=55 // pred_fallthru
        _
    $region56: #{dino_forward.27} parent=5 // pred_fallthru
      _
    %p441 = scmp.le.s32.totalorder 1, %s20
    %p442 = scmp.lt.s32.totalorder %s20, 3
    %p443 = pnand %p441, %p442
    %p444 = pneg %p443
    // Predicated region
    $region73: #{dino_forward.27} parent=5 // pred_check
      _
    $region74: #{dino_forward.27} parent=5 // pred_check_branch
      %446 = sbr.rel (%p443) target = $region76
    $region75: #{dino_forward.27} parent=5 // pred_region
      %s447 = ssub.s32 %s20, 1
      %p448 = scmp.lt.s32.totalorder %s25, 1
      %s449 = scalar_select %p448, %s25, 1
      %s450 = smul.addr %s449, 2
      %s451 = smul.addr %s450, 8
      %s452 = scalar_lea.vmem %s0, %s451
      %p453 = pneg %p46
      %p454 = pneg %p43
      %p455 = scmp.lt.s32.totalorder %s25, 1
      %s456 = scalar_select %p455, %s25, 1
      %s457 = smul.addr %s456, 2
      %s458 = smul.addr %s457, 8
      %s459 = scalar_lea.vmem %s1, %s458
      %p460 = pneg %p72
      %p461 = pneg %p69
      %p462 = scmp.lt.s32.totalorder %s25, 1
      %s463 = scalar_select %p462, %s25, 1
      %s464 = smul.addr %s463, 3
      %s465 = smul.addr %s464, 8
      %s466 = scalar_lea.vmem %s2, %s465
      %p467 = pneg %p98
      %p468 = pneg %p95
      %p469 = scmp.lt.s32.totalorder %s25, 1
      %s470 = scalar_select %p469, %s25, 1
      %s471 = smul.addr %s470, 3
      %s472 = smul.addr %s471, 8
      %s473 = scalar_lea.vmem %s3, %s472
      %p474 = pneg %p124
      %p475 = pneg %p121
      %p476 = pneg %p145
      %p477 = pneg %p142
      %p478 = pneg %p166
      %p479 = pneg %p163
      %p480 = pneg %p187
      %p481 = pneg %p184
      %p482 = pneg %p208
      %p483 = pneg %p205
      %p484 = pneg %p229
      %p485 = pneg %p226
      %p486 = pneg %p250
      %p487 = pneg %p247
      %p488 = pneg %p271
      %p489 = pneg %p268
      %p490 = pneg %p292
      %p491 = pneg %p289
      %p492 = pneg %p313
      %p493 = pneg %p310
      %p494 = pneg %p334
      %p495 = pneg %p331
      %p496 = pneg %p360
      %p497 = pneg %p357
      %p498 = scmp.lt.s32.totalorder %s25, 1
      %s499 = scalar_select %p498, %s25, 1
      %s500 = smul.addr %s499, 2
      %s501 = smul.addr %s500, 8
      %s502 = scalar_lea.vmem %s14, %s501
      %p503 = scmp.lt.s32.totalorder %s25, 1
      %s504 = scalar_select %p503, %s25, 1
      %s505 = smul.addr %s504, 2
      %s506 = smul.addr %s505, 8
      %s507 = scalar_lea.vmem %s0, %s506
      %p508 = scmp.lt.s32.totalorder %s25, 1
      %s509 = scalar_select %p508, %s25, 1
      %s510 = smul.addr %s509, 2
      %s511 = smul.addr %s510, 8
      %s512 = scalar_lea.vmem %s1, %s511
      %p513 = scmp.lt.s32.totalorder %s25, 1
      %s514 = scalar_select %p513, %s25, 1
      %s515 = smul.addr %s514, 3
      %s516 = smul.addr %s515, 8
      %s517 = scalar_lea.vmem %s2, %s516
      %p518 = scmp.lt.s32.totalorder %s25, 1
      %s519 = scalar_select %p518, %s25, 1
      %s520 = smul.addr %s519, 3
      %s521 = smul.addr %s520, 8
      %s522 = scalar_lea.vmem %s3, %s521
      %p523 = scmp.lt.s32.totalorder %s25, 1
      %s524 = scalar_select %p523, %s25, 1
      %s525 = smul.addr %s524, 2
      %s526 = smul.addr %s525, 8
      %s527 = scalar_lea.vmem %s14, %s526
      %v529 = vld [vmem:[%s507] sm:$0xff]
      %v530 = vld [vmem:[%s507 + $0x8] sm:$0xff]
      %v531 = vld [vmem:[%s512] sm:$0xff]
      %v532 = vld [vmem:[%s512 + $0x8] sm:$0xff]
      %v533 = vld [vmem:[%s517] sm:$0xff]
      %v534 = vld [vmem:[%s517 + $0x8] sm:$0xff]
      %v535 = vld [vmem:[%s517 + $0x10] sm:$0xf]
      %v536 = vld [vmem:[%s522] sm:$0xff]
      %v537 = vld [vmem:[%s522 + $0x8] sm:$0xff]
      %v538 = vld [vmem:[%s522 + $0x10] sm:$0xf]
      %v539 = vadd.f32 %v529, %v531
      %v540 = vadd.f32 %v530, %v532
      %v541 = vpack.c.bf16 %v540, %v539
      %v542 = vld [vmem:[%s4] sm:$0xf]
      %v543 = vld [vmem:[%s4 + $0x4] sm:$0xf]
      %v544 = vld [vmem:[%s4 + $0x8] sm:$0xf]
      %v545 = vld [vmem:[%s4 + $0xc] sm:$0xf]
      %v546 = vld [vmem:[%s4 + $0x10] sm:$0xf]
      %v547 = vld [vmem:[%s4 + $0x14] sm:$0xf]
      %v548 = vld [vmem:[%s4 + $0x18] sm:$0xf]
      %v549 = vld [vmem:[%s4 + $0x1c] sm:$0xf]
      %v550 = vld [vmem:[%s5] sm:$0x1]
      %v552 = vlaneseq
      %v553 = vshrl.u32 %v552, 7
      %v554 = vsub.s32 0, %v553
      %v555 = vrot.slane %v550, %v554
      %v565 = vunpack.c.l.b16 %v542
      %v566 = vunpack.c.l.b16 %v543
      %v567 = vunpack.c.l.b16 %v544
      %v568 = vunpack.c.l.b16 %v545
      %v569 = vunpack.c.l.b16 %v546
      %v570 = vunpack.c.l.b16 %v547
      %v571 = vunpack.c.l.b16 %v548
      %v572 = vunpack.c.l.b16 %v549
      %v573 = vpack.c.b16 %v566, %v565
      %v574 = vpack.c.b16 %v568, %v567
      %v575 = vpack.c.b16 %v570, %v569
      %v576 = vpack.c.b16 %v572, %v571
      %vm581 = vcmask 523264
      %v583 = vsel %vm581, %v541, 0
      %585 = vmatprep.subr.bf16.mxu0 0
      %586 = vmatpush1.bf16.msra.mxu0 0
      %587 = vmatprep.subr.bf16.mxu0 0
      %588 = vmatpush1.bf16.msra.mxu0 0
      %589 = vmatprep.subr.bf16.mxu0 0
      %590 = vmatpush1.bf16.msra.mxu0 0
      %591 = vmatprep.subr.bf16.mxu0 0
      %592 = vmatpush1.bf16.msra.mxu0 0
      %593 = vmatprep.subr.bf16.mxu0 0
      %594 = vmatpush1.bf16.msra.mxu0 %v576
      %595 = vmatprep.subr.bf16.mxu0 0
      %596 = vmatpush1.bf16.msra.mxu0 %v575
      %597 = vmatprep.subr.bf16.mxu0 0
      %598 = vmatpush1.bf16.msra.mxu0 %v574
      %599 = vmatprep.subr.bf16.mxu0 0
      %600 = vmatpush1.bf16.msra.mxu0 %v573
      %601 = vmatprep.subr.bf16.mxu0 0
      %602 = vmatpush2.bf16.msra.mxu0 0
      %603 = vmatprep.subr.bf16.mxu0 0
      %604 = vmatpush2.bf16.msra.mxu0 0
      %605 = vmatprep.subr.bf16.mxu0 0
      %606 = vmatpush2.bf16.msra.mxu0 0
      %607 = vmatprep.subr.bf16.mxu0 0
      %608 = vmatpush2.bf16.msra.mxu0 0
      %609 = vmatprep.subr.bf16.mxu0 0
      %610 = vmatpush2.bf16.msra.mxu0 0
      %611 = vmatprep.subr.bf16.mxu0 0
      %612 = vmatpush2.bf16.msra.mxu0 0
      %613 = vmatprep.subr.bf16.mxu0 0
      %614 = vmatpush2.bf16.msra.mxu0 0
      %615 = vmatprep.subr.bf16.mxu0 0
      %616 = vmatpush2.bf16.msra.mxu0 0
      %617 = vmatprep.mubr.bf16.mxu0 0
      %618 = vmatmul.mubr.bf16.gmra.mxu0 %v583
      %v619 = vpop.f32.mrf.mxu0
      %v620 = vadd.f32 %v555, %v619
      %v621 = vpop.f32.mrf.mxu0
      %v622 = vpop.f32.mrf.mxu0
      %v623 = vadd.f32 %v555, %v622
      %v624 = vpop.f32.mrf.mxu0
      %625 = vdwg.mxu0
      %v626 = vadd.f32 %v533, %v536
      %v627 = vadd.f32 %v534, %v537
      %v628 = vadd.f32 %v535, %v538
      %v629 = vpack.c.bf16 %v627, %v626
      %v630 = vpack.c.bf16 %v628, %v628
      %v631 = vld [vmem:[%s6] sm:$0xf]
      %v632 = vld [vmem:[%s6 + $0x4] sm:$0xf]
      %v633 = vld [vmem:[%s6 + $0x8] sm:$0xf]
      %v634 = vld [vmem:[%s6 + $0xc] sm:$0xf]
      %v635 = vld [vmem:[%s6 + $0x10] sm:$0xf]
      %v636 = vld [vmem:[%s6 + $0x14] sm:$0xf]
      %v637 = vld [vmem:[%s6 + $0x18] sm:$0xf]
      %v638 = vld [vmem:[%s6 + $0x1c] sm:$0xf]
      %v639 = vld [vmem:[%s7] sm:$0x1]
      %v641 = vlaneseq
      %v642 = vshrl.u32 %v641, 7
      %v643 = vsub.s32 0, %v642
      %v644 = vrot.slane %v639, %v643
      %v654 = vunpack.c.l.b16 %v631
      %v655 = vunpack.c.l.b16 %v632
      %v656 = vunpack.c.l.b16 %v633
      %v657 = vunpack.c.l.b16 %v634
      %v658 = vunpack.c.l.b16 %v635
      %v659 = vunpack.c.l.b16 %v636
      %v660 = vunpack.c.l.b16 %v637
      %v661 = vunpack.c.l.b16 %v638
      %v662 = vpack.c.b16 %v655, %v654
      %v663 = vpack.c.b16 %v657, %v656
      %v664 = vpack.c.b16 %v659, %v658
      %v665 = vpack.c.b16 %v661, %v660
      %v671 = vsel %vm581, %v629, 0
      %v674 = vsel %vm581, %v630, 0
      %676 = vmatprep.subr.bf16.mxu0 0
      %677 = vmatpush1.bf16.msra.mxu0 0
      %678 = vmatprep.subr.bf16.mxu0 0
      %679 = vmatpush1.bf16.msra.mxu0 0
      %680 = vmatprep.subr.bf16.mxu0 0
      %681 = vmatpush1.bf16.msra.mxu0 0
      %682 = vmatprep.subr.bf16.mxu0 0
      %683 = vmatpush1.bf16.msra.mxu0 0
      %684 = vmatprep.subr.bf16.mxu0 0
      %685 = vmatpush1.bf16.msra.mxu0 %v665
      %686 = vmatprep.subr.bf16.mxu0 0
      %687 = vmatpush1.bf16.msra.mxu0 %v664
      %688 = vmatprep.subr.bf16.mxu0 0
      %689 = vmatpush1.bf16.msra.mxu0 %v663
      %690 = vmatprep.subr.bf16.mxu0 0
      %691 = vmatpush1.bf16.msra.mxu0 %v662
      %692 = vmatprep.subr.bf16.mxu0 0
      %693 = vmatpush2.bf16.msra.mxu0 0
      %694 = vmatprep.subr.bf16.mxu0 0
      %695 = vmatpush2.bf16.msra.mxu0 0
      %696 = vmatprep.subr.bf16.mxu0 0
      %697 = vmatpush2.bf16.msra.mxu0 0
      %698 = vmatprep.subr.bf16.mxu0 0
      %699 = vmatpush2.bf16.msra.mxu0 0
      %700 = vmatprep.subr.bf16.mxu0 0
      %701 = vmatpush2.bf16.msra.mxu0 0
      %702 = vmatprep.subr.bf16.mxu0 0
      %703 = vmatpush2.bf16.msra.mxu0 0
      %704 = vmatprep.subr.bf16.mxu0 0
      %705 = vmatpush2.bf16.msra.mxu0 0
      %706 = vmatprep.subr.bf16.mxu0 0
      %707 = vmatpush2.bf16.msra.mxu0 0
      %708 = vmatprep.mubr.bf16.mxu0 0
      %709 = vmatmul.mubr.bf16.gmra.mxu0 %v671
      %v710 = vpop.f32.mrf.mxu0
      %v711 = vadd.f32 %v644, %v710
      %v712 = vpop.f32.mrf.mxu0
      %v713 = vpop.f32.mrf.mxu0
      %v714 = vadd.f32 %v644, %v713
      %v715 = vpop.f32.mrf.mxu0
      %716 = vmatprep.mubr.bf16.mxu0 0
      %717 = vmatmul.mubr.bf16.gmra.mxu0 %v674
      %v718 = vpop.f32.mrf.mxu0
      %v719 = vadd.f32 %v644, %v718
      %v720 = vpop.f32.mrf.mxu0
      %v721 = vpop.f32.mrf.mxu0
      %v722 = vpop.f32.mrf.mxu0
      %723 = vdwg.mxu0
      %v724 = vpack.c.bf16 %v534, %v533
      %v725 = vpack.c.bf16 %v535, %v535
      %v726 = vld [vmem:[%s8] sm:$0xf]
      %v727 = vld [vmem:[%s8 + $0x4] sm:$0xf]
      %v728 = vld [vmem:[%s8 + $0x8] sm:$0xf]
      %v729 = vld [vmem:[%s8 + $0xc] sm:$0xf]
      %v730 = vld [vmem:[%s8 + $0x10] sm:$0xf]
      %v731 = vld [vmem:[%s8 + $0x14] sm:$0xf]
      %v732 = vld [vmem:[%s8 + $0x18] sm:$0xf]
      %v733 = vld [vmem:[%s8 + $0x1c] sm:$0xf]
      %v734 = vld [vmem:[%s9] sm:$0x1]
      %v736 = vlaneseq
      %v737 = vshrl.u32 %v736, 7
      %v738 = vsub.s32 0, %v737
      %v739 = vrot.slane %v734, %v738
      %v749 = vunpack.c.l.b16 %v726
      %v750 = vunpack.c.l.b16 %v727
      %v751 = vunpack.c.l.b16 %v728
      %v752 = vunpack.c.l.b16 %v729
      %v753 = vunpack.c.l.b16 %v730
      %v754 = vunpack.c.l.b16 %v731
      %v755 = vunpack.c.l.b16 %v732
      %v756 = vunpack.c.l.b16 %v733
      %v757 = vpack.c.b16 %v750, %v749
      %v758 = vpack.c.b16 %v752, %v751
      %v759 = vpack.c.b16 %v754, %v753
      %v760 = vpack.c.b16 %v756, %v755
      %v766 = vsel %vm581, %v724, 0
      %v769 = vsel %vm581, %v725, 0
      %771 = vmatprep.subr.bf16.mxu0 0
      %772 = vmatpush1.bf16.msra.mxu0 0
      %773 = vmatprep.subr.bf16.mxu0 0
      %774 = vmatpush1.bf16.msra.mxu0 0
      %775 = vmatprep.subr.bf16.mxu0 0
      %776 = vmatpush1.bf16.msra.mxu0 0
      %777 = vmatprep.subr.bf16.mxu0 0
      %778 = vmatpush1.bf16.msra.mxu0 0
      %779 = vmatprep.subr.bf16.mxu0 0
      %780 = vmatpush1.bf16.msra.mxu0 %v760
      %781 = vmatprep.subr.bf16.mxu0 0
      %782 = vmatpush1.bf16.msra.mxu0 %v759
      %783 = vmatprep.subr.bf16.mxu0 0
      %784 = vmatpush1.bf16.msra.mxu0 %v758
      %785 = vmatprep.subr.bf16.mxu0 0
      %786 = vmatpush1.bf16.msra.mxu0 %v757
      %787 = vmatprep.subr.bf16.mxu0 0
      %788 = vmatpush2.bf16.msra.mxu0 0
      %789 = vmatprep.subr.bf16.mxu0 0
      %790 = vmatpush2.bf16.msra.mxu0 0
      %791 = vmatprep.subr.bf16.mxu0 0
      %792 = vmatpush2.bf16.msra.mxu0 0
      %793 = vmatprep.subr.bf16.mxu0 0
      %794 = vmatpush2.bf16.msra.mxu0 0
      %795 = vmatprep.subr.bf16.mxu0 0
      %796 = vmatpush2.bf16.msra.mxu0 0
      %797 = vmatprep.subr.bf16.mxu0 0
      %798 = vmatpush2.bf16.msra.mxu0 0
      %799 = vmatprep.subr.bf16.mxu0 0
      %800 = vmatpush2.bf16.msra.mxu0 0
      %801 = vmatprep.subr.bf16.mxu0 0
      %802 = vmatpush2.bf16.msra.mxu0 0
      %803 = vmatprep.mubr.bf16.mxu0 0
      %804 = vmatmul.mubr.bf16.gmra.mxu0 %v766
      %v805 = vpop.f32.mrf.mxu0
      %v806 = vadd.f32 %v739, %v805
      %v807 = vpop.f32.mrf.mxu0
      %v808 = vpop.f32.mrf.mxu0
      %v809 = vadd.f32 %v739, %v808
      %v810 = vpop.f32.mrf.mxu0
      %811 = vmatprep.mubr.bf16.mxu0 0
      %812 = vmatmul.mubr.bf16.gmra.mxu0 %v769
      %v813 = vpop.f32.mrf.mxu0
      %v814 = vadd.f32 %v739, %v813
      %v815 = vpop.f32.mrf.mxu0
      %v816 = vpop.f32.mrf.mxu0
      %v817 = vpop.f32.mrf.mxu0
      %818 = vdwg.mxu0
      %v819 = vpack.c.bf16 %v623, %v620
      %v820 = vpack.c.bf16 %v714, %v711
      %v821 = vpack.c.bf16 %v719, %v719
      %v822 = vpack.c.bf16 %v809, %v806
      %v823 = vpack.c.bf16 %v814, %v814
      %vm824 = vcmask 130048
      %v826 = vsel %vm824, %v819, 0
      %v829 = vsel %vm824, %v820, 0
      %v832 = vsel %vm824, %v821, 0
      %834 = vmatprep.subr.bf16.mxu0 0
      %835 = vmatpush1.bf16.xpose.msra.mxu0 0
      %836 = vmatprep.subr.bf16.mxu0 0
      %837 = vmatpush1.bf16.xpose.msra.mxu0 0
      %838 = vmatprep.subr.bf16.mxu0 0
      %839 = vmatpush1.bf16.xpose.msra.mxu0 0
      %840 = vmatprep.subr.bf16.mxu0 0
      %841 = vmatpush1.bf16.xpose.msra.mxu0 0
      %842 = vmatprep.subr.bf16.mxu0 0
      %843 = vmatpush1.bf16.xpose.msra.mxu0 0
      %844 = vmatprep.subr.bf16.mxu0 0
      %845 = vmatpush1.bf16.xpose.msra.mxu0 0
      %846 = vmatprep.subr.bf16.mxu0 0
      %847 = vmatpush1.bf16.xpose.msra.mxu0 %v832
      %848 = vmatprep.subr.bf16.mxu0 0
      %849 = vmatpush1.bf16.xpose.msra.mxu0 %v829
      %850 = vmatprep.subr.bf16.mxu0 0
      %851 = vmatpush2.bf16.xpose.msra.mxu0 0
      %852 = vmatprep.subr.bf16.mxu0 0
      %853 = vmatpush2.bf16.xpose.msra.mxu0 0
      %854 = vmatprep.subr.bf16.mxu0 0
      %855 = vmatpush2.bf16.xpose.msra.mxu0 0
      %856 = vmatprep.subr.bf16.mxu0 0
      %857 = vmatpush2.bf16.xpose.msra.mxu0 0
      %858 = vmatprep.subr.bf16.mxu0 0
      %859 = vmatpush2.bf16.xpose.msra.mxu0 0
      %860 = vmatprep.subr.bf16.mxu0 0
      %861 = vmatpush2.bf16.xpose.msra.mxu0 0
      %862 = vmatprep.subr.bf16.mxu0 0
      %863 = vmatpush2.bf16.xpose.msra.mxu0 0
      %864 = vmatprep.subr.bf16.mxu0 0
      %865 = vmatpush2.bf16.xpose.msra.mxu0 0
      %866 = vmatprep.mubr.bf16.mxu0 0
      %867 = vmatmul.mubr.bf16.gmra.mxu0 %v826
      %v868 = vpop.f32.mrf.mxu0
      %v869 = vadd.f32 0.0, %v868
      %v870 = vpop.f32.mrf.mxu0
      %v871 = vpop.f32.mrf.mxu0
      %v872 = vadd.f32 0.0, %v871
      %v873 = vpop.f32.mrf.mxu0
      %874 = vdwg.mxu0
      %v875 = vmul.f32 %v869, 0.25
      %v876 = vmul.f32 %v872, 0.25
      %vm877 = vcmask 162816
      %v878 = vsel %vm877, %v875, -inf
      %879 = vmax.xlane.f32.xlu0 %v878
      %v880 = vpop.xlane.xlu0 %879
      %v881 = vsel %vm877, %v876, -inf
      %882 = vmax.xlane.f32.xlu0 %v881
      %v883 = vpop.xlane.xlu0 %882
      %v884 = vsub.f32 %v875, %v880
      %v885 = vsub.f32 %v876, %v883
      %v886 = vmul.f32 %v884, 1.442695
      %v887 = vpow.pop %v886
      %v888 = vmul.f32 %v885, 1.442695
      %v889 = vpow.pop %v888
      %v890 = vsel %vm877, %v887, 0.0
      %891 = vadd.xlane.f32.xlu0 %v890
      %v892 = vpop.xlane.xlu0 %891
      %v893 = vsel %vm877, %v889, 0.0
      %894 = vadd.xlane.f32.xlu0 %v893
      %v895 = vpop.xlane.xlu0 %894
      %v896 = vrcp.pop %v892
      %v897 = vrcp.pop %v895
      %v898 = vmul.f32 %v887, %v896
      %v899 = vmul.f32 %v889, %v897
      %v900 = vpack.c.bf16 %v899, %v898
      %v902 = vsel %vm877, %v900, 0
      %vm904 = vcmask 1041408
      %v906 = vsel %vm904, %v823, 0
      %908 = vmatprep.subr.bf16.mxu0 0
      %909 = vmatpush1.bf16.msra.mxu0 0
      %910 = vmatprep.subr.bf16.mxu0 0
      %911 = vmatpush1.bf16.msra.mxu0 0
      %912 = vmatprep.subr.bf16.mxu0 0
      %913 = vmatpush1.bf16.msra.mxu0 0
      %914 = vmatprep.subr.bf16.mxu0 0
      %915 = vmatpush1.bf16.msra.mxu0 0
      %916 = vmatprep.subr.bf16.mxu0 0
      %917 = vmatpush1.bf16.msra.mxu0 0
      %918 = vmatprep.subr.bf16.mxu0 0
      %919 = vmatpush1.bf16.msra.mxu0 0
      %920 = vmatprep.subr.bf16.mxu0 0
      %921 = vmatpush1.bf16.msra.mxu0 %v906
      %922 = vmatprep.subr.bf16.mxu0 0
      %923 = vmatpush1.bf16.msra.mxu0 %v822
      %924 = vmatprep.subr.bf16.mxu0 0
      %925 = vmatpush2.bf16.msra.mxu0 0
      %926 = vmatprep.subr.bf16.mxu0 0
      %927 = vmatpush2.bf16.msra.mxu0 0
      %928 = vmatprep.subr.bf16.mxu0 0
      %929 = vmatpush2.bf16.msra.mxu0 0
      %930 = vmatprep.subr.bf16.mxu0 0
      %931 = vmatpush2.bf16.msra.mxu0 0
      %932 = vmatprep.subr.bf16.mxu0 0
      %933 = vmatpush2.bf16.msra.mxu0 0
      %934 = vmatprep.subr.bf16.mxu0 0
      %935 = vmatpush2.bf16.msra.mxu0 0
      %936 = vmatprep.subr.bf16.mxu0 0
      %937 = vmatpush2.bf16.msra.mxu0 0
      %938 = vmatprep.subr.bf16.mxu0 0
      %939 = vmatpush2.bf16.msra.mxu0 0
      %940 = vmatprep.mubr.bf16.mxu0 0
      %941 = vmatmul.mubr.bf16.gmra.mxu0 %v902
      %v942 = vpop.f32.mrf.mxu0
      %v943 = vadd.f32 0.0, %v942
      %v944 = vpop.f32.mrf.mxu0
      %v945 = vpop.f32.mrf.mxu0
      %v946 = vadd.f32 0.0, %v945
      %v947 = vpop.f32.mrf.mxu0
      %948 = vdwg.mxu0
      %950 = vrot.lane.b32.xlu0 %v819, 112
      %v951 = vpop.permute.xlu0 %950
      %954 = vrot.lane.b32.xlu0 %v820, 112
      %v955 = vpop.permute.xlu0 %954
      %956 = vrot.lane.b32.xlu0 %v821, 112
      %v957 = vpop.permute.xlu0 %956
      %v959 = vsel %vm824, %v951, 0
      %v962 = vsel %vm824, %v955, 0
      %v965 = vsel %vm824, %v957, 0
      %967 = vmatprep.subr.bf16.mxu0 0
      %968 = vmatpush1.bf16.xpose.msra.mxu0 0
      %969 = vmatprep.subr.bf16.mxu0 0
      %970 = vmatpush1.bf16.xpose.msra.mxu0 0
      %971 = vmatprep.subr.bf16.mxu0 0
      %972 = vmatpush1.bf16.xpose.msra.mxu0 0
      %973 = vmatprep.subr.bf16.mxu0 0
      %974 = vmatpush1.bf16.xpose.msra.mxu0 0
      %975 = vmatprep.subr.bf16.mxu0 0
      %976 = vmatpush1.bf16.xpose.msra.mxu0 0
      %977 = vmatprep.subr.bf16.mxu0 0
      %978 = vmatpush1.bf16.xpose.msra.mxu0 0
      %979 = vmatprep.subr.bf16.mxu0 0
      %980 = vmatpush1.bf16.xpose.msra.mxu0 %v965
      %981 = vmatprep.subr.bf16.mxu0 0
      %982 = vmatpush1.bf16.xpose.msra.mxu0 %v962
      %983 = vmatprep.subr.bf16.mxu0 0
      %984 = vmatpush2.bf16.xpose.msra.mxu0 0
      %985 = vmatprep.subr.bf16.mxu0 0
      %986 = vmatpush2.bf16.xpose.msra.mxu0 0
      %987 = vmatprep.subr.bf16.mxu0 0
      %988 = vmatpush2.bf16.xpose.msra.mxu0 0
      %989 = vmatprep.subr.bf16.mxu0 0
      %990 = vmatpush2.bf16.xpose.msra.mxu0 0
      %991 = vmatprep.subr.bf16.mxu0 0
      %992 = vmatpush2.bf16.xpose.msra.mxu0 0
      %993 = vmatprep.subr.bf16.mxu0 0
      %994 = vmatpush2.bf16.xpose.msra.mxu0 0
      %995 = vmatprep.subr.bf16.mxu0 0
      %996 = vmatpush2.bf16.xpose.msra.mxu0 0
      %997 = vmatprep.subr.bf16.mxu0 0
      %998 = vmatpush2.bf16.xpose.msra.mxu0 0
      %999 = vmatprep.mubr.bf16.mxu0 0
      %1000 = vmatmul.mubr.bf16.gmra.mxu0 %v959
      %v1001 = vpop.f32.mrf.mxu0
      %v1002 = vadd.f32 0.0, %v1001
      %v1003 = vpop.f32.mrf.mxu0
      %v1004 = vpop.f32.mrf.mxu0
      %v1005 = vadd.f32 0.0, %v1004
      %v1006 = vpop.f32.mrf.mxu0
      %1007 = vdwg.mxu0
      %v1008 = vmul.f32 %v1002, 0.25
      %v1009 = vmul.f32 %v1005, 0.25
      %v1010 = vsel %vm877, %v1008, -inf
      %1011 = vmax.xlane.f32.xlu0 %v1010
      %v1012 = vpop.xlane.xlu0 %1011
      %v1013 = vsel %vm877, %v1009, -inf
      %1014 = vmax.xlane.f32.xlu0 %v1013
      %v1015 = vpop.xlane.xlu0 %1014
      %v1016 = vsub.f32 %v1008, %v1012
      %v1017 = vsub.f32 %v1009, %v1015
      %v1018 = vmul.f32 %v1016, 1.442695
      %v1019 = vpow.pop %v1018
      %v1020 = vmul.f32 %v1017, 1.442695
      %v1021 = vpow.pop %v1020
      %v1022 = vsel %vm877, %v1019, 0.0
      %1023 = vadd.xlane.f32.xlu0 %v1022
      %v1024 = vpop.xlane.xlu0 %1023
      %v1025 = vsel %vm877, %v1021, 0.0
      %1026 = vadd.xlane.f32.xlu0 %v1025
      %v1027 = vpop.xlane.xlu0 %1026
      %v1028 = vrcp.pop %v1024
      %v1029 = vrcp.pop %v1027
      %v1030 = vmul.f32 %v1019, %v1028
      %v1031 = vmul.f32 %v1021, %v1029
      %v1032 = vpack.c.bf16 %v1031, %v1030
      %1035 = vrot.lane.b32.xlu0 %v822, 112
      %v1036 = vpop.permute.xlu0 %1035
      %1037 = vrot.lane.b32.xlu0 %v823, 112
      %v1038 = vpop.permute.xlu0 %1037
      %v1041 = vsel %vm877, %v1032, 0
      %v1044 = vsel %vm904, %v1038, 0
      %1046 = vmatprep.subr.bf16.mxu0 0
      %1047 = vmatpush1.bf16.msra.mxu0 0
      %1048 = vmatprep.subr.bf16.mxu0 0
      %1049 = vmatpush1.bf16.msra.mxu0 0
      %1050 = vmatprep.subr.bf16.mxu0 0
      %1051 = vmatpush1.bf16.msra.mxu0 0
      %1052 = vmatprep.subr.bf16.mxu0 0
      %1053 = vmatpush1.bf16.msra.mxu0 0
      %1054 = vmatprep.subr.bf16.mxu0 0
      %1055 = vmatpush1.bf16.msra.mxu0 0
      %1056 = vmatprep.subr.bf16.mxu0 0
      %1057 = vmatpush1.bf16.msra.mxu0 0
      %1058 = vmatprep.subr.bf16.mxu0 0
      %1059 = vmatpush1.bf16.msra.mxu0 %v1044
      %1060 = vmatprep.subr.bf16.mxu0 0
      %1061 = vmatpush1.bf16.msra.mxu0 %v1036
      %1062 = vmatprep.subr.bf16.mxu0 0
      %1063 = vmatpush2.bf16.msra.mxu0 0
      %1064 = vmatprep.subr.bf16.mxu0 0
      %1065 = vmatpush2.bf16.msra.mxu0 0
      %1066 = vmatprep.subr.bf16.mxu0 0
      %1067 = vmatpush2.bf16.msra.mxu0 0
      %1068 = vmatprep.subr.bf16.mxu0 0
      %1069 = vmatpush2.bf16.msra.mxu0 0
      %1070 = vmatprep.subr.bf16.mxu0 0
      %1071 = vmatpush2.bf16.msra.mxu0 0
      %1072 = vmatprep.subr.bf16.mxu0 0
      %1073 = vmatpush2.bf16.msra.mxu0 0
      %1074 = vmatprep.subr.bf16.mxu0 0
      %1075 = vmatpush2.bf16.msra.mxu0 0
      %1076 = vmatprep.subr.bf16.mxu0 0
      %1077 = vmatpush2.bf16.msra.mxu0 0
      %1078 = vmatprep.mubr.bf16.mxu0 0
      %1079 = vmatmul.mubr.bf16.gmra.mxu0 %v1041
      %v1080 = vpop.f32.mrf.mxu0
      %v1081 = vadd.f32 0.0, %v1080
      %v1082 = vpop.f32.mrf.mxu0
      %v1083 = vpop.f32.mrf.mxu0
      %v1084 = vadd.f32 0.0, %v1083
      %v1085 = vpop.f32.mrf.mxu0
      %1086 = vdwg.mxu0
      %1087 = vrot.lane.b32.xlu0 %v819, 96
      %v1088 = vpop.permute.xlu0 %1087
      %1089 = vrot.lane.b32.xlu0 %v820, 96
      %v1090 = vpop.permute.xlu0 %1089
      %1091 = vrot.lane.b32.xlu0 %v821, 96
      %v1092 = vpop.permute.xlu0 %1091
      %v1094 = vsel %vm824, %v1088, 0
      %v1097 = vsel %vm824, %v1090, 0
      %v1100 = vsel %vm824, %v1092, 0
      %1102 = vmatprep.subr.bf16.mxu0 0
      %1103 = vmatpush1.bf16.xpose.msra.mxu0 0
      %1104 = vmatprep.subr.bf16.mxu0 0
      %1105 = vmatpush1.bf16.xpose.msra.mxu0 0
      %1106 = vmatprep.subr.bf16.mxu0 0
      %1107 = vmatpush1.bf16.xpose.msra.mxu0 0
      %1108 = vmatprep.subr.bf16.mxu0 0
      %1109 = vmatpush1.bf16.xpose.msra.mxu0 0
      %1110 = vmatprep.subr.bf16.mxu0 0
      %1111 = vmatpush1.bf16.xpose.msra.mxu0 0
      %1112 = vmatprep.subr.bf16.mxu0 0
      %1113 = vmatpush1.bf16.xpose.msra.mxu0 0
      %1114 = vmatprep.subr.bf16.mxu0 0
      %1115 = vmatpush1.bf16.xpose.msra.mxu0 %v1100
      %1116 = vmatprep.subr.bf16.mxu0 0
      %1117 = vmatpush1.bf16.xpose.msra.mxu0 %v1097
      %1118 = vmatprep.subr.bf16.mxu0 0
      %1119 = vmatpush2.bf16.xpose.msra.mxu0 0
      %1120 = vmatprep.subr.bf16.mxu0 0
      %1121 = vmatpush2.bf16.xpose.msra.mxu0 0
      %1122 = vmatprep.subr.bf16.mxu0 0
      %1123 = vmatpush2.bf16.xpose.msra.mxu0 0
      %1124 = vmatprep.subr.bf16.mxu0 0
      %1125 = vmatpush2.bf16.xpose.msra.mxu0 0
      %1126 = vmatprep.subr.bf16.mxu0 0
      %1127 = vmatpush2.bf16.xpose.msra.mxu0 0
      %1128 = vmatprep.subr.bf16.mxu0 0
      %1129 = vmatpush2.bf16.xpose.msra.mxu0 0
      %1130 = vmatprep.subr.bf16.mxu0 0
      %1131 = vmatpush2.bf16.xpose.msra.mxu0 0
      %1132 = vmatprep.subr.bf16.mxu0 0
      %1133 = vmatpush2.bf16.xpose.msra.mxu0 0
      %1134 = vmatprep.mubr.bf16.mxu0 0
      %1135 = vmatmul.mubr.bf16.gmra.mxu0 %v1094
      %v1136 = vpop.f32.mrf.mxu0
      %v1137 = vadd.f32 0.0, %v1136
      %v1138 = vpop.f32.mrf.mxu0
      %v1139 = vpop.f32.mrf.mxu0
      %v1140 = vadd.f32 0.0, %v1139
      %v1141 = vpop.f32.mrf.mxu0
      %1142 = vdwg.mxu0
      %v1143 = vmul.f32 %v1137, 0.25
      %v1144 = vmul.f32 %v1140, 0.25
      %v1145 = vsel %vm877, %v1143, -inf
      %1146 = vmax.xlane.f32.xlu0 %v1145
      %v1147 = vpop.xlane.xlu0 %1146
      %v1148 = vsel %vm877, %v1144, -inf
      %1149 = vmax.xlane.f32.xlu0 %v1148
      %v1150 = vpop.xlane.xlu0 %1149
      %v1151 = vsub.f32 %v1143, %v1147
      %v1152 = vsub.f32 %v1144, %v1150
      %v1153 = vmul.f32 %v1151, 1.442695
      %v1154 = vpow.pop %v1153
      %v1155 = vmul.f32 %v1152, 1.442695
      %v1156 = vpow.pop %v1155
      %v1157 = vsel %vm877, %v1154, 0.0
      %1158 = vadd.xlane.f32.xlu0 %v1157
      %v1159 = vpop.xlane.xlu0 %1158
      %v1160 = vsel %vm877, %v1156, 0.0
      %1161 = vadd.xlane.f32.xlu0 %v1160
      %v1162 = vpop.xlane.xlu0 %1161
      %v1163 = vrcp.pop %v1159
      %v1164 = vrcp.pop %v1162
      %v1165 = vmul.f32 %v1154, %v1163
      %v1166 = vmul.f32 %v1156, %v1164
      %v1167 = vpack.c.bf16 %v1166, %v1165
      %1168 = vrot.lane.b32.xlu0 %v822, 96
      %v1169 = vpop.permute.xlu0 %1168
      %1170 = vrot.lane.b32.xlu0 %v823, 96
      %v1171 = vpop.permute.xlu0 %1170
      %v1174 = vsel %vm877, %v1167, 0
      %v1177 = vsel %vm904, %v1171, 0
      %1179 = vmatprep.subr.bf16.mxu0 0
      %1180 = vmatpush1.bf16.msra.mxu0 0
      %1181 = vmatprep.subr.bf16.mxu0 0
      %1182 = vmatpush1.bf16.msra.mxu0 0
      %1183 = vmatprep.subr.bf16.mxu0 0
      %1184 = vmatpush1.bf16.msra.mxu0 0
      %1185 = vmatprep.subr.bf16.mxu0 0
      %1186 = vmatpush1.bf16.msra.mxu0 0
      %1187 = vmatprep.subr.bf16.mxu0 0
      %1188 = vmatpush1.bf16.msra.mxu0 0
      %1189 = vmatprep.subr.bf16.mxu0 0
      %1190 = vmatpush1.bf16.msra.mxu0 0
      %1191 = vmatprep.subr.bf16.mxu0 0
      %1192 = vmatpush1.bf16.msra.mxu0 %v1177
      %1193 = vmatprep.subr.bf16.mxu0 0
      %1194 = vmatpush1.bf16.msra.mxu0 %v1169
      %1195 = vmatprep.subr.bf16.mxu0 0
      %1196 = vmatpush2.bf16.msra.mxu0 0
      %1197 = vmatprep.subr.bf16.mxu0 0
      %1198 = vmatpush2.bf16.msra.mxu0 0
      %1199 = vmatprep.subr.bf16.mxu0 0
      %1200 = vmatpush2.bf16.msra.mxu0 0
      %1201 = vmatprep.subr.bf16.mxu0 0
      %1202 = vmatpush2.bf16.msra.mxu0 0
      %1203 = vmatprep.subr.bf16.mxu0 0
      %1204 = vmatpush2.bf16.msra.mxu0 0
      %1205 = vmatprep.subr.bf16.mxu0 0
      %1206 = vmatpush2.bf16.msra.mxu0 0
      %1207 = vmatprep.subr.bf16.mxu0 0
      %1208 = vmatpush2.bf16.msra.mxu0 0
      %1209 = vmatprep.subr.bf16.mxu0 0
      %1210 = vmatpush2.bf16.msra.mxu0 0
      %1211 = vmatprep.mubr.bf16.mxu0 0
      %1212 = vmatmul.mubr.bf16.gmra.mxu0 %v1174
      %v1213 = vpop.f32.mrf.mxu0
      %v1214 = vadd.f32 0.0, %v1213
      %v1215 = vpop.f32.mrf.mxu0
      %v1216 = vpop.f32.mrf.mxu0
      %v1217 = vadd.f32 0.0, %v1216
      %v1218 = vpop.f32.mrf.mxu0
      %1219 = vdwg.mxu0
      %1220 = vrot.lane.b32.xlu0 %v819, 80
      %v1221 = vpop.permute.xlu0 %1220
      %1222 = vrot.lane.b32.xlu0 %v820, 80
      %v1223 = vpop.permute.xlu0 %1222
      %1224 = vrot.lane.b32.xlu0 %v821, 80
      %v1225 = vpop.permute.xlu0 %1224
      %v1227 = vsel %vm824, %v1221, 0
      %v1230 = vsel %vm824, %v1223, 0
      %v1233 = vsel %vm824, %v1225, 0
      %1235 = vmatprep.subr.bf16.mxu0 0
      %1236 = vmatpush1.bf16.xpose.msra.mxu0 0
      %1237 = vmatprep.subr.bf16.mxu0 0
      %1238 = vmatpush1.bf16.xpose.msra.mxu0 0
      %1239 = vmatprep.subr.bf16.mxu0 0
      %1240 = vmatpush1.bf16.xpose.msra.mxu0 0
      %1241 = vmatprep.subr.bf16.mxu0 0
      %1242 = vmatpush1.bf16.xpose.msra.mxu0 0
      %1243 = vmatprep.subr.bf16.mxu0 0
      %1244 = vmatpush1.bf16.xpose.msra.mxu0 0
      %1245 = vmatprep.subr.bf16.mxu0 0
      %1246 = vmatpush1.bf16.xpose.msra.mxu0 0
      %1247 = vmatprep.subr.bf16.mxu0 0
      %1248 = vmatpush1.bf16.xpose.msra.mxu0 %v1233
      %1249 = vmatprep.subr.bf16.mxu0 0
      %1250 = vmatpush1.bf16.xpose.msra.mxu0 %v1230
      %1251 = vmatprep.subr.bf16.mxu0 0
      %1252 = vmatpush2.bf16.xpose.msra.mxu0 0
      %1253 = vmatprep.subr.bf16.mxu0 0
      %1254 = vmatpush2.bf16.xpose.msra.mxu0 0
      %1255 = vmatprep.subr.bf16.mxu0 0
      %1256 = vmatpush2.bf16.xpose.msra.mxu0 0
      %1257 = vmatprep.subr.bf16.mxu0 0
      %1258 = vmatpush2.bf16.xpose.msra.mxu0 0
      %1259 = vmatprep.subr.bf16.mxu0 0
      %1260 = vmatpush2.bf16.xpose.msra.mxu0 0
      %1261 = vmatprep.subr.bf16.mxu0 0
      %1262 = vmatpush2.bf16.xpose.msra.mxu0 0
      %1263 = vmatprep.subr.bf16.mxu0 0
      %1264 = vmatpush2.bf16.xpose.msra.mxu0 0
      %1265 = vmatprep.subr.bf16.mxu0 0
      %1266 = vmatpush2.bf16.xpose.msra.mxu0 0
      %1267 = vmatprep.mubr.bf16.mxu0 0
      %1268 = vmatmul.mubr.bf16.gmra.mxu0 %v1227
      %v1269 = vpop.f32.mrf.mxu0
      %v1270 = vadd.f32 0.0, %v1269
      %v1271 = vpop.f32.mrf.mxu0
      %v1272 = vpop.f32.mrf.mxu0
      %v1273 = vadd.f32 0.0, %v1272
      %v1274 = vpop.f32.mrf.mxu0
      %1275 = vdwg.mxu0
      %v1276 = vmul.f32 %v1270, 0.25
      %v1277 = vmul.f32 %v1273, 0.25
      %v1278 = vsel %vm877, %v1276, -inf
      %1279 = vmax.xlane.f32.xlu0 %v1278
      %v1280 = vpop.xlane.xlu0 %1279
      %v1281 = vsel %vm877, %v1277, -inf
      %1282 = vmax.xlane.f32.xlu0 %v1281
      %v1283 = vpop.xlane.xlu0 %1282
      %v1284 = vsub.f32 %v1276, %v1280
      %v1285 = vsub.f32 %v1277, %v1283
      %v1286 = vmul.f32 %v1284, 1.442695
      %v1287 = vpow.pop %v1286
      %v1288 = vmul.f32 %v1285, 1.442695
      %v1289 = vpow.pop %v1288
      %v1290 = vsel %vm877, %v1287, 0.0
      %1291 = vadd.xlane.f32.xlu0 %v1290
      %v1292 = vpop.xlane.xlu0 %1291
      %v1293 = vsel %vm877, %v1289, 0.0
      %1294 = vadd.xlane.f32.xlu0 %v1293
      %v1295 = vpop.xlane.xlu0 %1294
      %v1296 = vrcp.pop %v1292
      %v1297 = vrcp.pop %v1295
      %v1298 = vmul.f32 %v1287, %v1296
      %v1299 = vmul.f32 %v1289, %v1297
      %v1300 = vpack.c.bf16 %v1299, %v1298
      %1301 = vrot.lane.b32.xlu0 %v822, 80
      %v1302 = vpop.permute.xlu0 %1301
      %1303 = vrot.lane.b32.xlu0 %v823, 80
      %v1304 = vpop.permute.xlu0 %1303
      %v1307 = vsel %vm877, %v1300, 0
      %v1310 = vsel %vm904, %v1304, 0
      %1312 = vmatprep.subr.bf16.mxu0 0
      %1313 = vmatpush1.bf16.msra.mxu0 0
      %1314 = vmatprep.subr.bf16.mxu0 0
      %1315 = vmatpush1.bf16.msra.mxu0 0
      %1316 = vmatprep.subr.bf16.mxu0 0
      %1317 = vmatpush1.bf16.msra.mxu0 0
      %1318 = vmatprep.subr.bf16.mxu0 0
      %1319 = vmatpush1.bf16.msra.mxu0 0
      %1320 = vmatprep.subr.bf16.mxu0 0
      %1321 = vmatpush1.bf16.msra.mxu0 0
      %1322 = vmatprep.subr.bf16.mxu0 0
      %1323 = vmatpush1.bf16.msra.mxu0 0
      %1324 = vmatprep.subr.bf16.mxu0 0
      %1325 = vmatpush1.bf16.msra.mxu0 %v1310
      %1326 = vmatprep.subr.bf16.mxu0 0
      %1327 = vmatpush1.bf16.msra.mxu0 %v1302
      %1328 = vmatprep.subr.bf16.mxu0 0
      %1329 = vmatpush2.bf16.msra.mxu0 0
      %1330 = vmatprep.subr.bf16.mxu0 0
      %1331 = vmatpush2.bf16.msra.mxu0 0
      %1332 = vmatprep.subr.bf16.mxu0 0
      %1333 = vmatpush2.bf16.msra.mxu0 0
      %1334 = vmatprep.subr.bf16.mxu0 0
      %1335 = vmatpush2.bf16.msra.mxu0 0
      %1336 = vmatprep.subr.bf16.mxu0 0
      %1337 = vmatpush2.bf16.msra.mxu0 0
      %1338 = vmatprep.subr.bf16.mxu0 0
      %1339 = vmatpush2.bf16.msra.mxu0 0
      %1340 = vmatprep.subr.bf16.mxu0 0
      %1341 = vmatpush2.bf16.msra.mxu0 0
      %1342 = vmatprep.subr.bf16.mxu0 0
      %1343 = vmatpush2.bf16.msra.mxu0 0
      %1344 = vmatprep.mubr.bf16.mxu0 0
      %1345 = vmatmul.mubr.bf16.gmra.mxu0 %v1307
      %v1346 = vpop.f32.mrf.mxu0
      %v1347 = vadd.f32 0.0, %v1346
      %v1348 = vpop.f32.mrf.mxu0
      %v1349 = vpop.f32.mrf.mxu0
      %v1350 = vadd.f32 0.0, %v1349
      %v1351 = vpop.f32.mrf.mxu0
      %1352 = vdwg.mxu0
      %1355 = vrot.lane.b32.xlu0 %v1081, 16
      %v1356 = vpop.permute.xlu0 %1355
      %1357 = vrot.lane.b32.xlu0 %v1084, 16
      %v1358 = vpop.permute.xlu0 %1357
      %1363 = vrot.lane.b32.xlu0 %v1214, 32
      %v1364 = vpop.permute.xlu0 %1363
      %1365 = vrot.lane.b32.xlu0 %v1217, 32
      %v1366 = vpop.permute.xlu0 %1365
      %1371 = vrot.lane.b32.xlu0 %v1347, 48
      %v1372 = vpop.permute.xlu0 %1371
      %1373 = vrot.lane.b32.xlu0 %v1350, 48
      %v1374 = vpop.permute.xlu0 %1373
      %v1377 = vsel %vm824, %v943, %v1356
      %v1378 = vsel %vm824, %v946, %v1358
      %vm1379 = vcmask 261120
      %v1380 = vsel %vm1379, %v1377, %v1364
      %v1381 = vsel %vm1379, %v1378, %v1366
      %vm1382 = vcmask 392192
      %v1383 = vsel %vm1382, %v1380, %v1372
      %v1384 = vsel %vm1382, %v1381, %v1374
      %v1385 = vpack.c.bf16 %v1384, %v1383
      %v1386 = vld [vmem:[%s10] sm:$0xf]
      %v1387 = vld [vmem:[%s10 + $0x4] sm:$0xf]
      %v1388 = vld [vmem:[%s10 + $0x8] sm:$0xf]
      %v1389 = vld [vmem:[%s10 + $0xc] sm:$0xf]
      %v1390 = vld [vmem:[%s10 + $0x10] sm:$0xf]
      %v1391 = vld [vmem:[%s10 + $0x14] sm:$0xf]
      %v1392 = vld [vmem:[%s10 + $0x18] sm:$0xf]
      %v1393 = vld [vmem:[%s10 + $0x1c] sm:$0xf]
      %v1394 = vld [vmem:[%s11] sm:$0x1]
      %v1396 = vlaneseq
      %v1397 = vshrl.u32 %v1396, 7
      %v1398 = vsub.s32 0, %v1397
      %v1399 = vrot.slane %v1394, %v1398
      %v1409 = vunpack.c.l.b16 %v1386
      %v1410 = vunpack.c.l.b16 %v1387
      %v1411 = vunpack.c.l.b16 %v1388
      %v1412 = vunpack.c.l.b16 %v1389
      %v1413 = vunpack.c.l.b16 %v1390
      %v1414 = vunpack.c.l.b16 %v1391
      %v1415 = vunpack.c.l.b16 %v1392
      %v1416 = vunpack.c.l.b16 %v1393
      %v1417 = vpack.c.b16 %v1410, %v1409
      %v1418 = vpack.c.b16 %v1412, %v1411
      %v1419 = vpack.c.b16 %v1414, %v1413
      %v1420 = vpack.c.b16 %v1416, %v1415
      %v1426 = vsel %vm581, %v1385, 0
      %1428 = vmatprep.subr.bf16.mxu0 0
      %1429 = vmatpush1.bf16.msra.mxu0 0
      %1430 = vmatprep.subr.bf16.mxu0 0
      %1431 = vmatpush1.bf16.msra.mxu0 0
      %1432 = vmatprep.subr.bf16.mxu0 0
      %1433 = vmatpush1.bf16.msra.mxu0 0
      %1434 = vmatprep.subr.bf16.mxu0 0
      %1435 = vmatpush1.bf16.msra.mxu0 0
      %1436 = vmatprep.subr.bf16.mxu0 0
      %1437 = vmatpush1.bf16.msra.mxu0 %v1420
      %1438 = vmatprep.subr.bf16.mxu0 0
      %1439 = vmatpush1.bf16.msra.mxu0 %v1419
      %1440 = vmatprep.subr.bf16.mxu0 0
      %1441 = vmatpush1.bf16.msra.mxu0 %v1418
      %1442 = vmatprep.subr.bf16.mxu0 0
      %1443 = vmatpush1.bf16.msra.mxu0 %v1417
      %1444 = vmatprep.subr.bf16.mxu0 0
      %1445 = vmatpush2.bf16.msra.mxu0 0
      %1446 = vmatprep.subr.bf16.mxu0 0
      %1447 = vmatpush2.bf16.msra.mxu0 0
      %1448 = vmatprep.subr.bf16.mxu0 0
      %1449 = vmatpush2.bf16.msra.mxu0 0
      %1450 = vmatprep.subr.bf16.mxu0 0
      %1451 = vmatpush2.bf16.msra.mxu0 0
      %1452 = vmatprep.subr.bf16.mxu0 0
      %1453 = vmatpush2.bf16.msra.mxu0 0
      %1454 = vmatprep.subr.bf16.mxu0 0
      %1455 = vmatpush2.bf16.msra.mxu0 0
      %1456 = vmatprep.subr.bf16.mxu0 0
      %1457 = vmatpush2.bf16.msra.mxu0 0
      %1458 = vmatprep.subr.bf16.mxu0 0
      %1459 = vmatpush2.bf16.msra.mxu0 0
      %1460 = vmatprep.mubr.bf16.mxu0 0
      %1461 = vmatmul.mubr.bf16.gmra.mxu0 %v1426
      %v1462 = vpop.f32.mrf.mxu0
      %v1463 = vadd.f32 %v1399, %v1462
      %v1464 = vpop.f32.mrf.mxu0
      %v1465 = vpop.f32.mrf.mxu0
      %v1466 = vadd.f32 %v1399, %v1465
      %v1467 = vpop.f32.mrf.mxu0
      %1468 = vdwg.mxu0
      %v1469 = vadd.f32 %v529, %v1463
      %v1470 = vadd.f32 %v530, %v1466
      %v1471 = vld [vmem:[%s12] sm:$0x1]
      %v1472 = vld [vmem:[%s13] sm:$0x1]
      %v1473 = vsel %vm581, %v1469, 0.0
      %1474 = vadd.xlane.f32.xlu0 %v1473
      %v1475 = vpop.xlane.xlu0 %1474
      %v1476 = vsel %vm581, %v1470, 0.0
      %1477 = vadd.xlane.f32.xlu0 %v1476
      %v1478 = vpop.xlane.xlu0 %1477
      %v1479 = vrcp.pop 64.0
      %v1480 = vmul.f32 %v1475, %v1479
      %v1481 = vmul.f32 %v1478, %v1479
      %v1482 = vsub.f32 %v1469, %v1480
      %v1483 = vsub.f32 %v1470, %v1481
      %v1484 = vmul.f32 %v1482, %v1482
      %v1485 = vmul.f32 %v1483, %v1483
      %v1486 = vsel %vm581, %v1484, 0.0
      %1487 = vadd.xlane.f32.xlu0 %v1486
      %v1488 = vpop.xlane.xlu0 %1487
      %v1489 = vsel %vm581, %v1485, 0.0
      %1490 = vadd.xlane.f32.xlu0 %v1489
      %v1491 = vpop.xlane.xlu0 %1490
      %v1492 = vmul.f32 %v1488, %v1479
      %v1493 = vmul.f32 %v1491, %v1479
      %v1494 = vadd.f32 %v1492, 1e-05
      %v1495 = vadd.f32 %v1493, 1e-05
      %v1496 = vrsqrt.pop %v1494
      %v1497 = vrsqrt.pop %v1495
      %v1498 = vmul.f32 %v1482, %v1496
      %v1499 = vmul.f32 %v1483, %v1497
      %v1501 = vlaneseq
      %v1502 = vshrl.u32 %v1501, 7
      %v1503 = vsub.s32 0, %v1502
      %v1504 = vrot.slane %v1471, %v1503
      %v1506 = vmul.f32 %v1498, %v1504
      %v1507 = vmul.f32 %v1499, %v1504
      %v1509 = vlaneseq
      %v1510 = vshrl.u32 %v1509, 7
      %v1511 = vsub.s32 0, %v1510
      %v1512 = vrot.slane %v1472, %v1511
      %v1514 = vadd.f32 %v1506, %v1512
      %v1515 = vadd.f32 %v1507, %v1512
      %1516 = vst.msk [vmem:[%s527] sm:$0xff] %vm581, %v1514
      %1517 = vst.msk [vmem:[%s527 + $0x8] sm:$0xff] %vm581, %v1515
      %p1518 = scmp.lt.s32.totalorder %s25, 1
      %s1519 = scalar_select %p1518, %s25, 1
      %s1520 = smul.addr %s1519, 2
      %s1521 = smul.addr %s1520, 8
      %s1522 = scalar_lea.vmem %s14, %s1521
      // Predicated region
      $region77: #{dino_forward.27} parent=75 // pred_check
        %p1523 = pneg %p357
      $region78: #{dino_forward.27} parent=75 // pred_check_branch
        %1525 = sbr.rel (%p1523) target = $region80
      $region79: #{dino_forward.27} parent=75 // pred_region
        _
      $region80: #{dino_forward.27} parent=75 // pred_fallthru
        _
    $region76: #{dino_forward.27} parent=5 // pred_fallthru
      _
    %p1526 = scmp.le.s32.totalorder 2, %s20
    // Predicated region
    $region81: #{dino_forward.27} parent=5 // pred_check
      %p1527 = pneg %p1526
    $region82: #{dino_forward.27} parent=5 // pred_check_branch
      %1529 = sbr.rel (%p1527) target = $region84
    $region83: #{dino_forward.27} parent=5 // pred_region
      %s1530 = ssub.s32 %s20, 2
      // Predicated region
      $region85: #{dino_forward.27} parent=83 // pred_check
        %p1531 = pneg %p363
      $region86: #{dino_forward.27} parent=83 // pred_check_branch
        %1533 = sbr.rel (%p1531) target = $region88
      $region87: #{dino_forward.27} parent=83 // pred_region
        %p1534 = scmp.lt.s32.totalorder %s26, 1
        %s1535 = scalar_select %p1534, %s26, 1
        %s1536 = smul.addr %s1535, 2
        %s1537 = smul.addr %s1536, 8
        %s1538 = scalar_lea.vmem %s14, %s1537
      $region88: #{dino_forward.27} parent=83 // pred_fallthru
        _
    $region84: #{dino_forward.27} parent=5 // pred_fallthru
      _
  $region6: #{dino_forward.27} parent=0 // loop_footer
    %s24 = sadd.s32 1, %s20
  $region7: #{dino_forward.27} parent=0 // loop_footer_branch
    %19 = sbr.rel target = $region3
  $region8: #{dino_forward.27} parent=0 // loop_exit
    _

// kernel: dino_forward.29
$region0: #{dino_forward.29}
  #allocation0 [shape = 'u32[]', space=smem, size = 0x4, offset = 0x4, fixed_abs, tag = 'smem constant byte address 0x4 - core index']
  #allocation1 [shape = 'u32[144,128]{1,0:T(1,128)}', space=vmem, size = 0x12000, scoped, tag = 'internal scratch']
  %s0 = inlined_call_operand.vmem [shape: f32[32,64], index: 0, kind: input, shape index: {}]
  %s1 = inlined_call_operand.vmem [shape: f32[1,64], index: 1, kind: input, shape index: {}]
  %s2 = inlined_call_operand.vmem [shape: f32[1,64], index: 2, kind: input, shape index: {}]
  %s3 = inlined_call_operand.vmem [shape: bf16[64,64], index: 3, kind: input, shape index: {}]
  %s4 = inlined_call_operand.vmem [shape: f32[1,64], index: 4, kind: input, shape index: {}]
  %s5 = inlined_call_operand.vmem [shape: bf16[64,64], index: 5, kind: input, shape index: {}]
  %s6 = inlined_call_operand.vmem [shape: f32[1,64], index: 6, kind: input, shape index: {}]
  %s7 = inlined_call_operand.vmem [shape: f32[32,64], index: 7, kind: output, shape index: {0}]
  %s8 = inlined_call_operand.vmem [shape: f32[32,64], index: 8, kind: output, shape index: {1}]
  %9 = xla_tuple %s7, %s8
  %s10 = sld [smem:[#allocation0]]
  $region46: #{dino_forward.29} parent=0
    _
  %s12 = ssub.s32 1, %s10
  %s13 = scalar_select 0, %s12, %s10
  // Predicated region
  $region2: #{dino_forward.29} parent=0 // pred_check
    _
  $region3: #{dino_forward.29} parent=0 // pred_check_branch
    %15 = sbr.rel (0) target = $region5
  $region4: #{dino_forward.29} parent=0 // pred_region
    _
  $region5: #{dino_forward.29} parent=0 // pred_fallthru
    _
  // Predicated region
  $region6: #{dino_forward.29} parent=0 // pred_check
    _
  $region7: #{dino_forward.29} parent=0 // pred_check_branch
    %17 = sbr.rel (0) target = $region9
  $region8: #{dino_forward.29} parent=0 // pred_region
    _
  $region9: #{dino_forward.29} parent=0 // pred_fallthru
    _
  // Predicated region
  $region10: #{dino_forward.29} parent=0 // pred_check
    _
  $region11: #{dino_forward.29} parent=0 // pred_check_branch
    %19 = sbr.rel (0) target = $region13
  $region12: #{dino_forward.29} parent=0 // pred_region
    _
  $region13: #{dino_forward.29} parent=0 // pred_fallthru
    _
  // Predicated region
  $region14: #{dino_forward.29} parent=0 // pred_check
    _
  $region15: #{dino_forward.29} parent=0 // pred_check_branch
    %21 = sbr.rel (0) target = $region17
  $region16: #{dino_forward.29} parent=0 // pred_region
    _
  $region17: #{dino_forward.29} parent=0 // pred_fallthru
    _
  // Predicated region
  $region18: #{dino_forward.29} parent=0 // pred_check
    _
  $region19: #{dino_forward.29} parent=0 // pred_check_branch
    %23 = sbr.rel (0) target = $region21
  $region20: #{dino_forward.29} parent=0 // pred_region
    _
  $region21: #{dino_forward.29} parent=0 // pred_fallthru
    _
  // Predicated region
  $region22: #{dino_forward.29} parent=0 // pred_check
    _
  $region23: #{dino_forward.29} parent=0 // pred_check_branch
    %25 = sbr.rel (0) target = $region25
  $region24: #{dino_forward.29} parent=0 // pred_region
    _
  $region25: #{dino_forward.29} parent=0 // pred_fallthru
    _
  // Predicated region
  $region26: #{dino_forward.29} parent=0 // pred_check
    _
  $region27: #{dino_forward.29} parent=0 // pred_check_branch
    %27 = sbr.rel (0) target = $region29
  $region28: #{dino_forward.29} parent=0 // pred_region
    _
  $region29: #{dino_forward.29} parent=0 // pred_fallthru
    _
  %v29 = vld [vmem:[%s0] sm:$0xff]
  %v30 = vld [vmem:[%s0 + $0x8] sm:$0xff]
  %v31 = vld [vmem:[%s0 + $0x10] sm:$0xff]
  %v32 = vld [vmem:[%s0 + $0x18] sm:$0xff]
  %v33 = vld [vmem:[%s1] sm:$0x1]
  %v34 = vld [vmem:[%s2] sm:$0x1]
  %vm35 = vcmask 523264
  %v36 = vsel %vm35, %v29, 0.0
  %37 = vadd.xlane.f32.xlu0 %v36
  %v38 = vpop.xlane.xlu0 %37
  %v39 = vsel %vm35, %v30, 0.0
  %40 = vadd.xlane.f32.xlu0 %v39
  %v41 = vpop.xlane.xlu0 %40
  %v42 = vsel %vm35, %v31, 0.0
  %43 = vadd.xlane.f32.xlu0 %v42
  %v44 = vpop.xlane.xlu0 %43
  %v45 = vsel %vm35, %v32, 0.0
  %46 = vadd.xlane.f32.xlu0 %v45
  %v47 = vpop.xlane.xlu0 %46
  %v48 = vrcp.pop 64.0
  %v49 = vmul.f32 %v38, %v48
  %v50 = vmul.f32 %v41, %v48
  %v51 = vmul.f32 %v44, %v48
  %v52 = vmul.f32 %v47, %v48
  %v53 = vsub.f32 %v29, %v49
  %v54 = vsub.f32 %v30, %v50
  %v55 = vsub.f32 %v31, %v51
  %v56 = vsub.f32 %v32, %v52
  %v57 = vmul.f32 %v53, %v53
  %v58 = vmul.f32 %v54, %v54
  %v59 = vmul.f32 %v55, %v55
  %v60 = vmul.f32 %v56, %v56
  %v61 = vsel %vm35, %v57, 0.0
  %62 = vadd.xlane.f32.xlu0 %v61
  %v63 = vpop.xlane.xlu0 %62
  %v64 = vsel %vm35, %v58, 0.0
  %65 = vadd.xlane.f32.xlu0 %v64
  %v66 = vpop.xlane.xlu0 %65
  %v67 = vsel %vm35, %v59, 0.0
  %68 = vadd.xlane.f32.xlu0 %v67
  %v69 = vpop.xlane.xlu0 %68
  %v70 = vsel %vm35, %v60, 0.0
  %71 = vadd.xlane.f32.xlu0 %v70
  %v72 = vpop.xlane.xlu0 %71
  %v73 = vmul.f32 %v63, %v48
  %v74 = vmul.f32 %v66, %v48
  %v75 = vmul.f32 %v69, %v48
  %v76 = vmul.f32 %v72, %v48
  %v77 = vadd.f32 %v73, 1e-05
  %v78 = vadd.f32 %v74, 1e-05
  %v79 = vadd.f32 %v75, 1e-05
  %v80 = vadd.f32 %v76, 1e-05
  %v81 = vrsqrt.pop %v77
  %v82 = vrsqrt.pop %v78
  %v83 = vrsqrt.pop %v79
  %v84 = vrsqrt.pop %v80
  %v85 = vmul.f32 %v53, %v81
  %v86 = vmul.f32 %v54, %v82
  %v87 = vmul.f32 %v55, %v83
  %v88 = vmul.f32 %v56, %v84
  %v90 = vlaneseq
  %v91 = vshrl.u32 %v90, 7
  %v92 = vsub.s32 0, %v91
  %v93 = vrot.slane %v33, %v92
  %v95 = vmul.f32 %v85, %v93
  %v96 = vmul.f32 %v86, %v93
  %v97 = vmul.f32 %v87, %v93
  %v98 = vmul.f32 %v88, %v93
  %v100 = vlaneseq
  %v101 = vshrl.u32 %v100, 7
  %v102 = vsub.s32 0, %v101
  %v103 = vrot.slane %v34, %v102
  %v105 = vadd.f32 %v95, %v103
  %v106 = vadd.f32 %v96, %v103
  %v107 = vadd.f32 %v97, %v103
  %v108 = vadd.f32 %v98, %v103
  %109 = vst.msk [vmem:[%s7] sm:$0xff] %vm35, %v105
  %110 = vst.msk [vmem:[%s7 + $0x8] sm:$0xff] %vm35, %v106
  %111 = vst.msk [vmem:[%s7 + $0x10] sm:$0xff] %vm35, %v107
  %112 = vst.msk [vmem:[%s7 + $0x18] sm:$0xff] %vm35, %v108
  %v113 = vpack.c.bf16 %v106, %v105
  %v114 = vpack.c.bf16 %v108, %v107
  %v115 = vld [vmem:[%s3] sm:$0xf]
  %v116 = vld [vmem:[%s3 + $0x4] sm:$0xf]
  %v117 = vld [vmem:[%s3 + $0x8] sm:$0xf]
  %v118 = vld [vmem:[%s3 + $0xc] sm:$0xf]
  %v119 = vld [vmem:[%s3 + $0x10] sm:$0xf]
  %v120 = vld [vmem:[%s3 + $0x14] sm:$0xf]
  %v121 = vld [vmem:[%s3 + $0x18] sm:$0xf]
  %v122 = vld [vmem:[%s3 + $0x1c] sm:$0xf]
  %v123 = vld [vmem:[%s4] sm:$0x1]
  %v125 = vlaneseq
  %v126 = vshrl.u32 %v125, 7
  %v127 = vsub.s32 0, %v126
  %v128 = vrot.slane %v123, %v127
  %v138 = vunpack.c.l.b16 %v115
  %v139 = vunpack.c.l.b16 %v116
  %v140 = vunpack.c.l.b16 %v117
  %v141 = vunpack.c.l.b16 %v118
  %v142 = vunpack.c.l.b16 %v119
  %v143 = vunpack.c.l.b16 %v120
  %v144 = vunpack.c.l.b16 %v121
  %v145 = vunpack.c.l.b16 %v122
  %v146 = vpack.c.b16 %v139, %v138
  %v147 = vpack.c.b16 %v141, %v140
  %v148 = vpack.c.b16 %v143, %v142
  %v149 = vpack.c.b16 %v145, %v144
  %v155 = vsel %vm35, %v113, 0
  %v158 = vsel %vm35, %v114, 0
  %160 = vmatprep.subr.bf16.mxu0 0
  %161 = vmatpush1.bf16.msra.mxu0 0
  %162 = vmatprep.subr.bf16.mxu0 0
  %163 = vmatpush1.bf16.msra.mxu0 0
  %164 = vmatprep.subr.bf16.mxu0 0
  %165 = vmatpush1.bf16.msra.mxu0 0
  %166 = vmatprep.subr.bf16.mxu0 0
  %167 = vmatpush1.bf16.msra.mxu0 0
  %168 = vmatprep.subr.bf16.mxu0 0
  %169 = vmatpush1.bf16.msra.mxu0 %v149
  %170 = vmatprep.subr.bf16.mxu0 0
  %171 = vmatpush1.bf16.msra.mxu0 %v148
  %172 = vmatprep.subr.bf16.mxu0 0
  %173 = vmatpush1.bf16.msra.mxu0 %v147
  %174 = vmatprep.subr.bf16.mxu0 0
  %175 = vmatpush1.bf16.msra.mxu0 %v146
  %176 = vmatprep.subr.bf16.mxu0 0
  %177 = vmatpush2.bf16.msra.mxu0 0
  %178 = vmatprep.subr.bf16.mxu0 0
  %179 = vmatpush2.bf16.msra.mxu0 0
  %180 = vmatprep.subr.bf16.mxu0 0
  %181 = vmatpush2.bf16.msra.mxu0 0
  %182 = vmatprep.subr.bf16.mxu0 0
  %183 = vmatpush2.bf16.msra.mxu0 0
  %184 = vmatprep.subr.bf16.mxu0 0
  %185 = vmatpush2.bf16.msra.mxu0 0
  %186 = vmatprep.subr.bf16.mxu0 0
  %187 = vmatpush2.bf16.msra.mxu0 0
  %188 = vmatprep.subr.bf16.mxu0 0
  %189 = vmatpush2.bf16.msra.mxu0 0
  %190 = vmatprep.subr.bf16.mxu0 0
  %191 = vmatpush2.bf16.msra.mxu0 0
  %192 = vmatprep.mubr.bf16.mxu0 0
  %193 = vmatmul.mubr.bf16.gmra.mxu0 %v155
  %v194 = vpop.f32.mrf.mxu0
  %v195 = vadd.f32 %v128, %v194
  %v196 = vpop.f32.mrf.mxu0
  %v197 = vpop.f32.mrf.mxu0
  %v198 = vadd.f32 %v128, %v197
  %v199 = vpop.f32.mrf.mxu0
  %200 = vmatprep.mubr.bf16.mxu0 0
  %201 = vmatmul.mubr.bf16.gmra.mxu0 %v158
  %v202 = vpop.f32.mrf.mxu0
  %v203 = vadd.f32 %v128, %v202
  %v204 = vpop.f32.mrf.mxu0
  %v205 = vpop.f32.mrf.mxu0
  %v206 = vadd.f32 %v128, %v205
  %v207 = vpop.f32.mrf.mxu0
  %208 = vdwg.mxu0
  %v209 = vmax.f32 %v195, 0.0
  %v210 = vmax.f32 %v198, 0.0
  %v211 = vmax.f32 %v203, 0.0
  %v212 = vmax.f32 %v206, 0.0
  %v213 = vpack.c.bf16 %v210, %v209
  %v214 = vpack.c.bf16 %v212, %v211
  %v215 = vld [vmem:[%s5] sm:$0xf]
  %v216 = vld [vmem:[%s5 + $0x4] sm:$0xf]
  %v217 = vld [vmem:[%s5 + $0x8] sm:$0xf]
  %v218 = vld [vmem:[%s5 + $0xc] sm:$0xf]
  %v219 = vld [vmem:[%s5 + $0x10] sm:$0xf]
  %v220 = vld [vmem:[%s5 + $0x14] sm:$0xf]
  %v221 = vld [vmem:[%s5 + $0x18] sm:$0xf]
  %v222 = vld [vmem:[%s5 + $0x1c] sm:$0xf]
  %v223 = vld [vmem:[%s6] sm:$0x1]
  %v225 = vlaneseq
  %v226 = vshrl.u32 %v225, 7
  %v227 = vsub.s32 0, %v226
  %v228 = vrot.slane %v223, %v227
  %v238 = vunpack.c.l.b16 %v215
  %v239 = vunpack.c.l.b16 %v216
  %v240 = vunpack.c.l.b16 %v217
  %v241 = vunpack.c.l.b16 %v218
  %v242 = vunpack.c.l.b16 %v219
  %v243 = vunpack.c.l.b16 %v220
  %v244 = vunpack.c.l.b16 %v221
  %v245 = vunpack.c.l.b16 %v222
  %v246 = vpack.c.b16 %v239, %v238
  %v247 = vpack.c.b16 %v241, %v240
  %v248 = vpack.c.b16 %v243, %v242
  %v249 = vpack.c.b16 %v245, %v244
  %v255 = vsel %vm35, %v213, 0
  %v258 = vsel %vm35, %v214, 0
  %260 = vmatprep.subr.bf16.mxu0 0
  %261 = vmatpush1.bf16.msra.mxu0 0
  %262 = vmatprep.subr.bf16.mxu0 0
  %263 = vmatpush1.bf16.msra.mxu0 0
  %264 = vmatprep.subr.bf16.mxu0 0
  %265 = vmatpush1.bf16.msra.mxu0 0
  %266 = vmatprep.subr.bf16.mxu0 0
  %267 = vmatpush1.bf16.msra.mxu0 0
  %268 = vmatprep.subr.bf16.mxu0 0
  %269 = vmatpush1.bf16.msra.mxu0 %v249
  %270 = vmatprep.subr.bf16.mxu0 0
  %271 = vmatpush1.bf16.msra.mxu0 %v248
  %272 = vmatprep.subr.bf16.mxu0 0
  %273 = vmatpush1.bf16.msra.mxu0 %v247
  %274 = vmatprep.subr.bf16.mxu0 0
  %275 = vmatpush1.bf16.msra.mxu0 %v246
  %276 = vmatprep.subr.bf16.mxu0 0
  %277 = vmatpush2.bf16.msra.mxu0 0
  %278 = vmatprep.subr.bf16.mxu0 0
  %279 = vmatpush2.bf16.msra.mxu0 0
  %280 = vmatprep.subr.bf16.mxu0 0
  %281 = vmatpush2.bf16.msra.mxu0 0
  %282 = vmatprep.subr.bf16.mxu0 0
  %283 = vmatpush2.bf16.msra.mxu0 0
  %284 = vmatprep.subr.bf16.mxu0 0
  %285 = vmatpush2.bf16.msra.mxu0 0
  %286 = vmatprep.subr.bf16.mxu0 0
  %287 = vmatpush2.bf16.msra.mxu0 0
  %288 = vmatprep.subr.bf16.mxu0 0
  %289 = vmatpush2.bf16.msra.mxu0 0
  %290 = vmatprep.subr.bf16.mxu0 0
  %291 = vmatpush2.bf16.msra.mxu0 0
  %292 = vmatprep.mubr.bf16.mxu0 0
  %293 = vmatmul.mubr.bf16.gmra.mxu0 %v255
  %v294 = vpop.f32.mrf.mxu0
  %v295 = vadd.f32 %v228, %v294
  %v296 = vpop.f32.mrf.mxu0
  %v297 = vpop.f32.mrf.mxu0
  %v298 = vadd.f32 %v228, %v297
  %v299 = vpop.f32.mrf.mxu0
  %300 = vmatprep.mubr.bf16.mxu0 0
  %301 = vmatmul.mubr.bf16.gmra.mxu0 %v258
  %v302 = vpop.f32.mrf.mxu0
  %v303 = vadd.f32 %v228, %v302
  %v304 = vpop.f32.mrf.mxu0
  %v305 = vpop.f32.mrf.mxu0
  %v306 = vadd.f32 %v228, %v305
  %v307 = vpop.f32.mrf.mxu0
  %308 = vdwg.mxu0
  %v309 = vmax.f32 %v295, 0.0
  %v310 = vmax.f32 %v298, 0.0
  %v311 = vmax.f32 %v303, 0.0
  %v312 = vmax.f32 %v306, 0.0
  %313 = vst.msk [vmem:[%s8] sm:$0xff] %vm35, %v309
  %314 = vst.msk [vmem:[%s8 + $0x8] sm:$0xff] %vm35, %v310
  %315 = vst.msk [vmem:[%s8 + $0x10] sm:$0xff] %vm35, %v311
  %316 = vst.msk [vmem:[%s8 + $0x18] sm:$0xff] %vm35, %v312
  // Predicated region
  $region30: #{dino_forward.29} parent=0 // pred_check
    _
  $region31: #{dino_forward.29} parent=0 // pred_check_branch
    %318 = sbr.rel (0) target = $region33
  $region32: #{dino_forward.29} parent=0 // pred_region
    _
  $region33: #{dino_forward.29} parent=0 // pred_fallthru
    _
  // Predicated region
  $region34: #{dino_forward.29} parent=0 // pred_check
    _
  $region35: #{dino_forward.29} parent=0 // pred_check_branch
    %320 = sbr.rel (0) target = $region37
  $region36: #{dino_forward.29} parent=0 // pred_region
    _
  $region37: #{dino_forward.29} parent=0 // pred_fallthru
    _
  // Predicated region
  $region38: #{dino_forward.29} parent=0 // pred_check
    _
  $region39: #{dino_forward.29} parent=0 // pred_check_branch
    %322 = sbr.rel (0) target = $region41
  $region40: #{dino_forward.29} parent=0 // pred_region
    _
  $region41: #{dino_forward.29} parent=0 // pred_fallthru
    _
  // Predicated region
  $region42: #{dino_forward.29} parent=0 // pred_check
    _
  $region43: #{dino_forward.29} parent=0 // pred_check_branch
    %324 = sbr.rel (0) target = $region45
  $region44: #{dino_forward.29} parent=0 // pred_region
    _
  $region45: #{dino_forward.29} parent=0 // pred_fallthru
    _

</llo_original>
